<compile_context>
chip_gen: v7x
topology: tpu7x:2x2x1
jax: 0.10.0
libtpu: 0.0.40
codegen_flags: <defaults>
</compile_context>

<pallas_src>
import functools

import jax
import jax.numpy as jnp
from jax.experimental import pallas as pl
from jax.experimental.pallas import tpu as pltpu

# Left halo slack inside the padded-input scratch.  16 is a multiple of the bf16
# sublane tile, so the interior store lands tile-aligned (no relayout shift).
_LPAD = 16


@functools.lru_cache(maxsize=None)
def _vmem_limit_bytes():
    # v5e/v6e: 128 MiB physical -> 96 MiB scoped; v7x: 64 MiB -> 48 MiB.
    try:
        cap = int(pltpu.get_tpu_info().vmem_capacity_bytes)
        return int(min((3 * cap) // 4, 96 * 1024 * 1024))
    except Exception:
        return 48 * 1024 * 1024


# ---------------- fused per-block Pallas kernel ----------------

def _make_block_kernel(N, H, W, Cin, Cout, k, pool, eps=1e-5):
    M = H * W
    pad = k // 2
    Ho, Wo = (H // 2, W // 2) if pool else (H, W)
    inv_cnt = 1.0 / float(N * M)

    def kernel(x_ref, w_ref, gamma_ref, beta_ref, o_ref,
               xp_scr, y_scr, sum_scr, scale_scr, shift_scr):
        p = pl.program_id(0)   # 0: conv phase, 1: bn+relu(+pool) phase
        n = pl.program_id(1)   # batch index

        @pl.when(p == 0)
        def _conv():
            @pl.when(n == 0)
            def _init():
                # Zero once: the halo border stays zero for every batch (the interior
                # is overwritten below).  Also reset the BN column-sum accumulator.
                xp_scr[...] = jnp.zeros_like(xp_scr)
                sum_scr[...] = jnp.zeros_like(sum_scr)

            # In-kernel halo: place the unpadded image at sublane offset _LPAD
            # (tile-aligned) inside the zero-bordered scratch -> no HBM pad pass.
            xp_scr[pl.ds(pad, H), pl.ds(_LPAD, W), :] = x_ref[0]

            # im2col patch slab [M, k*k*Cin]: concatenate the k*k shifted views along
            # the channel axis, then ONE MXU matmul against [k*k*Cin, Cout] weights.
            xp = xp_scr[...]
            taps = []
            for dh in range(k):
                for dw in range(k):
                    c0 = _LPAD - pad + dw
                    taps.append(xp[dh:dh + H, c0:c0 + W, :].reshape(M, Cin))
            slab = jnp.concatenate(taps, axis=1)                    # [M, k*k*Cin] bf16
            acc = jnp.dot(slab, w_ref[...],
                          preferred_element_type=jnp.float32)       # [M, Cout] f32
            # (conv bias omitted: cancelled exactly by train-mode BatchNorm)
            y_scr[n] = acc                                           # stays in VMEM
            # Overlap the BN mean reduction with the conv phase (VPU/XLU slack under MXU).
            sum_scr[...] = sum_scr[...] + jnp.sum(acc, axis=0, keepdims=True)

        @pl.when(p == 1)
        def _norm():
            @pl.when(n == 0)
            def _stats():
                mean = sum_scr[...] * inv_cnt                        # (1, Cout)
                d = y_scr[...] - mean                                # (N, M, Cout)
                var = jnp.sum(jnp.sum(d * d, axis=0), axis=0,
                              keepdims=True) * inv_cnt
                var = jnp.maximum(var, 0.0)                          # numerical safety
                invstd = jax.lax.rsqrt(var + eps)
                scale = gamma_ref[...] * invstd                      # folded BN
                scale_scr[...] = scale
                shift_scr[...] = beta_ref[...] - mean * scale

            # normalize + ReLU (one mul/add per element), then fused 2x2 max-pool
            z = jnp.maximum(y_scr[n] * scale_scr[...] + shift_scr[...], 0.0)  # [M, Cout]
            if pool:
                zh = jnp.max(z.reshape(M // 2, 2, Cout), axis=1)     # max over (w, w+1)
                zp = jnp.max(zh.reshape(Ho, 2, Wo, Cout), axis=1)    # max over (h, h+1)
                o_ref[0] = zp.astype(o_ref.dtype)
            else:
                o_ref[0] = z.reshape(H, W, Cout).astype(o_ref.dtype)

    return kernel


def conv_bn_relu_block(x, w, gamma, beta, k, pool):
    """x: [N, H, W, Cin] NHWC bf16 (unpadded); w: [k, k, Cin, Cout] HWIO f32.
    Returns NHWC bf16, 2x2-max-pooled when `pool`."""
    N, H, W, Cin = x.shape
    Cout = w.shape[-1]
    if pool:
        assert H % 2 == 0 and W % 2 == 0, "MaxPool2d(2) needs even spatial dims"
    pad = k // 2
    Hp = H + 2 * pad
    WP = _LPAD + W + pad           # aligned zero slack on the left, halo on the right
    Ho, Wo = (H // 2, W // 2) if pool else (H, W)
    M = H * W

    wt = w.reshape(k * k * Cin, Cout).astype(jnp.bfloat16)  # (dh, dw, cin)-major = slab order
    kernel = _make_block_kernel(N, H, W, Cin, Cout, k, pool)

    return pl.pallas_call(
        kernel,
        out_shape=jax.ShapeDtypeStruct((N, Ho, Wo, Cout), jnp.bfloat16),
        grid=(2, N),
        in_specs=[
            # phase 0 streams batch n; phase 1 never reads x, so pin it to the
            # last-fetched block (N-1) -> no wasted DMA at the phase transition.
            pl.BlockSpec((1, H, W, Cin),
                         lambda p, n: (n * (1 - p) + (N - 1) * p, 0, 0, 0)),
            pl.BlockSpec((k * k * Cin, Cout), lambda p, n: (0, 0)),
            pl.BlockSpec((1, Cout), lambda p, n: (0, 0)),
            pl.BlockSpec((1, Cout), lambda p, n: (0, 0)),
        ],
        # Output written only in phase 1.  Index p*n keeps every phase-0 step on block 0
        # so no output block is flushed to HBM before its phase-1 write lands.
        # INVARIANT: both grid axes must stay "arbitrary" (strictly serial on one TC):
        # the cross-iteration y_scr/sum_scr reduction and this index trick rely on it.
        out_specs=pl.BlockSpec((1, Ho, Wo, Cout), lambda p, n: (p * n, 0, 0, 0)),
        scratch_shapes=[
            pltpu.VMEM((Hp, WP, Cin), jnp.bfloat16),   # zero-bordered (halo) input image
            pltpu.VMEM((N, M, Cout), jnp.float32),     # conv activation (never hits HBM)
            pltpu.VMEM((1, Cout), jnp.float32),        # running column sums (BN mean)
            pltpu.VMEM((1, Cout), jnp.float32),        # folded BN scale
            pltpu.VMEM((1, Cout), jnp.float32),        # folded BN shift
        ],
        compiler_params=pltpu.CompilerParams(
            dimension_semantics=("arbitrary", "arbitrary"),
            vmem_limit_bytes=_vmem_limit_bytes(),
        ),
    )(x, wt, gamma.reshape(1, Cout), beta.reshape(1, Cout))


# ---------------- parameters & encoder ----------------

def init_params(key, kernel, num_filters, num_in_channels):
    dims = [(num_in_channels, num_filters),
            (num_filters, num_filters * 2),
            (num_filters * 2, num_filters * 4),
            (num_filters * 4, num_filters * 4)]
    params = []
    for cin, cout in dims:
        key, kw, kb = jax.random.split(key, 3)
        w = 0.1 * jax.random.normal(kw, (kernel, kernel, cin, cout), jnp.float32)
        b = 0.01 * jax.random.normal(kb, (cout,), jnp.float32)  # cancelled by train-mode BN
        gamma = jnp.ones((cout,), jnp.float32)
        beta = jnp.zeros((cout,), jnp.float32)
        params.append((w, b, gamma, beta))
    return params


def unet_encoder(x_nchw, params, kernel):
    # x_nchw: [N, C, H, W] (PyTorch layout) f32
    x = jnp.transpose(x_nchw, (0, 2, 3, 1)).astype(jnp.bfloat16)   # NHWC bf16 (MXU operands)
    (w1, _, g1, be1), (w2, _, g2, be2), (w3, _, g3, be3), (w4, _, g4, be4) = params
    # conv bias is dropped: under train-mode BatchNorm it cancels exactly.
    x1 = conv_bn_relu_block(x,  w1, g1, be1, kernel, pool=True)
    x2 = conv_bn_relu_block(x1, w2, g2, be2, kernel, pool=True)
    x3 = conv_bn_relu_block(x2, w3, g3, be3, kernel, pool=True)
    xr = conv_bn_relu_block(x3, w4, g4, be4, kernel, pool=False)
    to_nchw = lambda a: jnp.transpose(a, (0, 3, 1, 2)).astype(jnp.float32)
    return to_nchw(x1), to_nchw(x2), to_nchw(x3), to_nchw(xr)


# ---------------- pure-JAX reference (same bf16 MXU-operand precision) ----------------

def _ref_block(x, w, b, gamma, beta, k, pool):
    pad = k // 2
    y = jax.lax.conv_general_dilated(
        x.astype(jnp.bfloat16), w.astype(jnp.bfloat16),
        window_strides=(1, 1), padding=[(pad, pad), (pad, pad)],
        dimension_numbers=("NHWC", "HWIO", "NHWC"),
        preferred_element_type=jnp.float32) + b          # bias kept here: BN cancels it
    mean = jnp.mean(y, axis=(0, 1, 2))
    var = jnp.mean((y - mean) ** 2, axis=(0, 1, 2))
    y = (y - mean) / jnp.sqrt(var + 1e-5) * gamma + beta
    y = jnp.maximum(y, 0.0)
    if pool:
        N, H, W, C = y.shape
        y = y.reshape(N, H // 2, 2, W // 2, 2, C).max(axis=(2, 4))
    return y


def _ref_encoder(x_nchw, params, kernel):
    x = jnp.transpose(x_nchw, (0, 2, 3, 1))
    outs = []
    for i, (w, b, g, be) in enumerate(params):
        x = _ref_block(x, w, b, g, be, kernel, pool=(i < 3))
        outs.append(jnp.transpose(x, (0, 3, 1, 2)))
    return tuple(outs)


if __name__ == "__main__":
    kernel = 3
    num_filters = 4
    num_in_channels = 3
    N, H, W = 2, 16, 16

    key = jax.random.PRNGKey(0)
    key, kx = jax.random.split(key)
    x = jax.random.normal(kx, (N, num_in_channels, H, W), jnp.float32)  # NCHW like PyTorch
    params = init_params(key, kernel, num_filters, num_in_channels)

    encoder = jax.jit(unet_encoder, static_argnums=2)
    outs = encoder(x, params, kernel)
    outs = jax.block_until_ready(outs)

    # shape checks vs PyTorch semantics
    assert outs[0].shape == (N, num_filters, H // 2, W // 2)
    assert outs[1].shape == (N, num_filters * 2, H // 4, W // 4)
    assert outs[2].shape == (N, num_filters * 4, H // 8, W // 8)
    assert outs[3].shape == (N, num_filters * 4, H // 8, W // 8)

    # numeric check against a pure-JAX reference (bf16 conv operands, f32 accum/BN)
    refs = _ref_encoder(x, params, kernel)
    for o, r in zip(outs, refs):
        assert jnp.allclose(o, r, rtol=1e-2, atol=1e-2), "mismatch vs reference"

    print("KERNEL_OK")
</pallas_src>

<mosaic_0001>
module attributes {stable_mosaic.version = 11 : i64} {
  func.func @kernel(%arg0: i32, %arg1: i32, %arg2: memref<1x16x16x3xbf16, #tpu.memory_space<vmem>>, %arg3: memref<27x4xbf16, #tpu.memory_space<vmem>>, %arg4: memref<1x4xf32, #tpu.memory_space<vmem>>, %arg5: memref<1x4xf32, #tpu.memory_space<vmem>>, %arg6: memref<1x8x8x4xbf16, #tpu.memory_space<vmem>>, %arg7: memref<18x33x3xbf16, #tpu.memory_space<vmem>>, %arg8: memref<2x256x4xf32, #tpu.memory_space<vmem>>, %arg9: memref<1x4xf32, #tpu.memory_space<vmem>>, %arg10: memref<1x4xf32, #tpu.memory_space<vmem>>, %arg11: memref<1x4xf32, #tpu.memory_space<vmem>>) attributes {dimension_semantics = [#tpu.dimension_semantics<arbitrary>, #tpu.dimension_semantics<arbitrary>], iteration_bounds = array<i64: 2, 2>, scalar_prefetch = 0 : i64, scratch_operands = 5 : i64, tpu.core_type = #tpu.core_type<tc>, window_params = [{transform_indices = @transform_0, window_bounds = array<i64: 1, 16, 16, 3>}, {pipeline_mode = #tpu.pipeline_mode<synchronous>, transform_indices = @transform_1, window_bounds = array<i64: 27, 4>}, {pipeline_mode = #tpu.pipeline_mode<synchronous>, transform_indices = @transform_2, window_bounds = array<i64: 1, 4>}, {pipeline_mode = #tpu.pipeline_mode<synchronous>, transform_indices = @transform_3, window_bounds = array<i64: 1, 4>}, {transform_indices = @transform_4, window_bounds = array<i64: 1, 8, 8, 4>}]} {
    %c0_i32 = arith.constant 0 : i32
    %0 = arith.cmpi eq, %arg0, %c0_i32 : i32
    %1 = arith.extui %0 : i1 to i32
    %c0_i32_0 = arith.constant 0 : i32
    %2 = arith.cmpi ne, %1, %c0_i32_0 : i32
    scf.if %2 {
      %c0_i32_2 = arith.constant 0 : i32
      %6 = arith.cmpi eq, %arg1, %c0_i32_2 : i32
      %7 = arith.extui %6 : i1 to i32
      %c0_i32_3 = arith.constant 0 : i32
      %8 = arith.cmpi ne, %7, %c0_i32_3 : i32
      scf.if %8 {
        %cst_20 = arith.constant 0.000000e+00 : bf16
        %43 = vector.broadcast %cst_20 : bf16 to vector<18x33x3xbf16>
        %c0_21 = arith.constant 0 : index
        %c0_22 = arith.constant 0 : index
        %c0_23 = arith.constant 0 : index
        %44 = vector.load %arg7[%c0_21, %c0_22, %c0_23] : memref<18x33x3xbf16, #tpu.memory_space<vmem>>, vector<18x33x3xbf16>
        tpu.vector_store %arg7[%c0_21, %c0_22, %c0_23], %43 {strides = array<i32>} : memref<18x33x3xbf16, #tpu.memory_space<vmem>>, vector<18x33x3xbf16>,
        %cst_24 = arith.constant 0.000000e+00 : f32
        %45 = vector.broadcast %cst_24 : f32 to vector<1x4xf32>
        %c0_25 = arith.constant 0 : index
        %c0_26 = arith.constant 0 : index
        %46 = vector.load %arg9[%c0_25, %c0_26] : memref<1x4xf32, #tpu.memory_space<vmem>>, vector<1x4xf32>
        tpu.vector_store %arg9[%c0_25, %c0_26], %45 {strides = array<i32>} : memref<1x4xf32, #tpu.memory_space<vmem>>, vector<1x4xf32>,
      } else {
      }
      %c0 = arith.constant 0 : index
      %c0_4 = arith.constant 0 : index
      %c0_5 = arith.constant 0 : index
      %c0_6 = arith.constant 0 : index
      %9 = vector.load %arg2[%c0, %c0_4, %c0_5, %c0_6] : memref<1x16x16x3xbf16, #tpu.memory_space<vmem>>, vector<1x16x16x3xbf16>
      %10 = vector.shape_cast %9 : vector<1x16x16x3xbf16> to vector<16x16x3xbf16>
      %c1 = arith.constant 1 : index
      %c16 = arith.constant 16 : index
      %c0_7 = arith.constant 0 : index
      %11 = vector.load %arg7[%c1, %c16, %c0_7] : memref<18x33x3xbf16, #tpu.memory_space<vmem>>, vector<16x16x3xbf16>
      tpu.vector_store %arg7[%c1, %c16, %c0_7], %10 {strides = array<i32>} : memref<18x33x3xbf16, #tpu.memory_space<vmem>>, vector<16x16x3xbf16>,
      %c0_8 = arith.constant 0 : index
      %c0_9 = arith.constant 0 : index
      %c0_10 = arith.constant 0 : index
      %12 = vector.load %arg7[%c0_8, %c0_9, %c0_10] : memref<18x33x3xbf16, #tpu.memory_space<vmem>>, vector<18x33x3xbf16>
      %13 = vector.extract_strided_slice %12 {offsets = [0, 15, 0], sizes = [16, 16, 3], strides = [1, 1, 1]} : vector<18x33x3xbf16> to vector<16x16x3xbf16>
      %14 = vector.shape_cast %13 : vector<16x16x3xbf16> to vector<256x3xbf16>
      %15 = vector.extract_strided_slice %12 {offsets = [0, 16, 0], sizes = [16, 16, 3], strides = [1, 1, 1]} : vector<18x33x3xbf16> to vector<16x16x3xbf16>
      %16 = vector.shape_cast %15 : vector<16x16x3xbf16> to vector<256x3xbf16>
      %17 = vector.extract_strided_slice %12 {offsets = [0, 17, 0], sizes = [16, 16, 3], strides = [1, 1, 1]} : vector<18x33x3xbf16> to vector<16x16x3xbf16>
      %18 = vector.shape_cast %17 : vector<16x16x3xbf16> to vector<256x3xbf16>
      %19 = vector.extract_strided_slice %12 {offsets = [1, 15, 0], sizes = [16, 16, 3], strides = [1, 1, 1]} : vector<18x33x3xbf16> to vector<16x16x3xbf16>
      %20 = vector.shape_cast %19 : vector<16x16x3xbf16> to vector<256x3xbf16>
      %21 = vector.extract_strided_slice %12 {offsets = [1, 16, 0], sizes = [16, 16, 3], strides = [1, 1, 1]} : vector<18x33x3xbf16> to vector<16x16x3xbf16>
      %22 = vector.shape_cast %21 : vector<16x16x3xbf16> to vector<256x3xbf16>
      %23 = vector.extract_strided_slice %12 {offsets = [1, 17, 0], sizes = [16, 16, 3], strides = [1, 1, 1]} : vector<18x33x3xbf16> to vector<16x16x3xbf16>
      %24 = vector.shape_cast %23 : vector<16x16x3xbf16> to vector<256x3xbf16>
      %25 = vector.extract_strided_slice %12 {offsets = [2, 15, 0], sizes = [16, 16, 3], strides = [1, 1, 1]} : vector<18x33x3xbf16> to vector<16x16x3xbf16>
      %26 = vector.shape_cast %25 : vector<16x16x3xbf16> to vector<256x3xbf16>
      %27 = vector.extract_strided_slice %12 {offsets = [2, 16, 0], sizes = [16, 16, 3], strides = [1, 1, 1]} : vector<18x33x3xbf16> to vector<16x16x3xbf16>
      %28 = vector.shape_cast %27 : vector<16x16x3xbf16> to vector<256x3xbf16>
      %29 = vector.extract_strided_slice %12 {offsets = [2, 17, 0], sizes = [16, 16, 3], strides = [1, 1, 1]} : vector<18x33x3xbf16> to vector<16x16x3xbf16>
      %30 = vector.shape_cast %29 : vector<16x16x3xbf16> to vector<256x3xbf16>
      %31 = tpu.concatenate %14, %16, %18, %20, %22, %24, %26, %28, %30 in 1 : vector<256x3xbf16>, vector<256x3xbf16>, vector<256x3xbf16>, vector<256x3xbf16>, vector<256x3xbf16>, vector<256x3xbf16>, vector<256x3xbf16>, vector<256x3xbf16>, vector<256x3xbf16> -> vector<256x27xbf16>
      %c0_11 = arith.constant 0 : index
      %c0_12 = arith.constant 0 : index
      %32 = vector.load %arg3[%c0_11, %c0_12] : memref<27x4xbf16, #tpu.memory_space<vmem>>, vector<27x4xbf16>
      %cst = arith.constant dense<0.000000e+00> : vector<256x4xf32>
      %33 = tpu.matmul %31, %32, %cst {dimension_numbers = #tpu.dot_dimension_numbers<[1], [0], [0], [1], [0, 0, 1, 1], [], []>} : vector<256x27xbf16>, vector<27x4xbf16>, vector<256x4xf32> -> vector<256x4xf32>
      %34 = arith.index_cast %arg1 : i32 to index
      %c0_13 = arith.constant 0 : index
      %c0_14 = arith.constant 0 : index
      %35 = vector.load %arg8[%34, %c0_13, %c0_14] : memref<2x256x4xf32, #tpu.memory_space<vmem>>, vector<1x256x4xf32>
      %36 = vector.shape_cast %35 : vector<1x256x4xf32> to vector<256x4xf32>
      %37 = vector.shape_cast %33 : vector<256x4xf32> to vector<1x256x4xf32>
      tpu.vector_store %arg8[%34, %c0_13, %c0_14], %37 {strides = array<i32>} : memref<2x256x4xf32, #tpu.memory_space<vmem>>, vector<1x256x4xf32>,
      %c0_15 = arith.constant 0 : index
      %c0_16 = arith.constant 0 : index
      %38 = vector.load %arg9[%c0_15, %c0_16] : memref<1x4xf32, #tpu.memory_space<vmem>>, vector<1x4xf32>
      %cst_17 = arith.constant dense<0.000000e+00> : vector<4xf32>
      %39 = vector.multi_reduction <add>, %33, %cst_17 [0] : vector<256x4xf32> to vector<4xf32>
      %40 = vector.shape_cast %39 : vector<4xf32> to vector<1x4xf32>
      %41 = arith.addf %38, %40 : vector<1x4xf32>
      %c0_18 = arith.constant 0 : index
      %c0_19 = arith.constant 0 : index
      %42 = vector.load %arg9[%c0_18, %c0_19] : memref<1x4xf32, #tpu.memory_space<vmem>>, vector<1x4xf32>
      tpu.vector_store %arg9[%c0_18, %c0_19], %41 {strides = array<i32>} : memref<1x4xf32, #tpu.memory_space<vmem>>, vector<1x4xf32>,
    } else {
    }
    %c1_i32 = arith.constant 1 : i32
    %3 = arith.cmpi eq, %arg0, %c1_i32 : i32
    %4 = arith.extui %3 : i1 to i32
    %c0_i32_1 = arith.constant 0 : i32
    %5 = arith.cmpi ne, %4, %c0_i32_1 : i32
    scf.if %5 {
      %c0_i32_2 = arith.constant 0 : i32
      %6 = arith.cmpi eq, %arg1, %c0_i32_2 : i32
      %7 = arith.extui %6 : i1 to i32
      %c0_i32_3 = arith.constant 0 : i32
      %8 = arith.cmpi ne, %7, %c0_i32_3 : i32
      scf.if %8 {
        %c0_15 = arith.constant 0 : index
        %c0_16 = arith.constant 0 : index
        %28 = vector.load %arg9[%c0_15, %c0_16] : memref<1x4xf32, #tpu.memory_space<vmem>>, vector<1x4xf32>
        %cst_17 = arith.constant 0.001953125 : f32
        %29 = vector.broadcast %cst_17 : f32 to vector<1x4xf32>
        %30 = arith.mulf %28, %29 : vector<1x4xf32>
        %c0_18 = arith.constant 0 : index
        %c0_19 = arith.constant 0 : index
        %c0_20 = arith.constant 0 : index
        %31 = vector.load %arg8[%c0_18, %c0_19, %c0_20] : memref<2x256x4xf32, #tpu.memory_space<vmem>>, vector<2x256x4xf32>
        %32 = vector.shape_cast %30 : vector<1x4xf32> to vector<1x1x4xf32>
        %33 = vector.broadcast %32 : vector<1x1x4xf32> to vector<2x256x4xf32>
        %34 = arith.subf %31, %33 : vector<2x256x4xf32>
        %35 = arith.mulf %34, %34 : vector<2x256x4xf32>
        %cst_21 = arith.constant dense<0.000000e+00> : vector<256x4xf32>
        %36 = vector.multi_reduction <add>, %35, %cst_21 [0] : vector<2x256x4xf32> to vector<256x4xf32>
        %cst_22 = arith.constant dense<0.000000e+00> : vector<4xf32>
        %37 = vector.multi_reduction <add>, %36, %cst_22 [0] : vector<256x4xf32> to vector<4xf32>
        %38 = vector.shape_cast %37 : vector<4xf32> to vector<1x4xf32>
        %cst_23 = arith.constant 0.001953125 : f32
        %39 = vector.broadcast %cst_23 : f32 to vector<1x4xf32>
        %40 = arith.mulf %38, %39 : vector<1x4xf32>
        %cst_24 = arith.constant 0.000000e+00 : f32
        %41 = vector.broadcast %cst_24 : f32 to vector<1x4xf32>
        %42 = arith.maximumf %40, %41 : vector<1x4xf32>
        %cst_25 = arith.constant 9.99999974E-6 : f32
        %43 = vector.broadcast %cst_25 : f32 to vector<1x4xf32>
        %44 = arith.addf %42, %43 : vector<1x4xf32>
        %45 = math.rsqrt %44 : vector<1x4xf32>
        %c0_26 = arith.constant 0 : index
        %c0_27 = arith.constant 0 : index
        %46 = vector.load %arg4[%c0_26, %c0_27] : memref<1x4xf32, #tpu.memory_space<vmem>>, vector<1x4xf32>
        %47 = arith.mulf %46, %45 : vector<1x4xf32>
        %c0_28 = arith.constant 0 : index
        %c0_29 = arith.constant 0 : index
        %48 = vector.load %arg10[%c0_28, %c0_29] : memref<1x4xf32, #tpu.memory_space<vmem>>, vector<1x4xf32>
        tpu.vector_store %arg10[%c0_28, %c0_29], %47 {strides = array<i32>} : memref<1x4xf32, #tpu.memory_space<vmem>>, vector<1x4xf32>,
        %c0_30 = arith.constant 0 : index
        %c0_31 = arith.constant 0 : index
        %49 = vector.load %arg5[%c0_30, %c0_31] : memref<1x4xf32, #tpu.memory_space<vmem>>, vector<1x4xf32>
        %50 = arith.mulf %30, %47 : vector<1x4xf32>
        %51 = arith.subf %49, %50 : vector<1x4xf32>
        %c0_32 = arith.constant 0 : index
        %c0_33 = arith.constant 0 : index
        %52 = vector.load %arg11[%c0_32, %c0_33] : memref<1x4xf32, #tpu.memory_space<vmem>>, vector<1x4xf32>
        tpu.vector_store %arg11[%c0_32, %c0_33], %51 {strides = array<i32>} : memref<1x4xf32, #tpu.memory_space<vmem>>, vector<1x4xf32>,
      } else {
      }
      %9 = arith.index_cast %arg1 : i32 to index
      %c0 = arith.constant 0 : index
      %c0_4 = arith.constant 0 : index
      %10 = vector.load %arg8[%9, %c0, %c0_4] : memref<2x256x4xf32, #tpu.memory_space<vmem>>, vector<1x256x4xf32>
      %11 = vector.shape_cast %10 : vector<1x256x4xf32> to vector<256x4xf32>
      %c0_5 = arith.constant 0 : index
      %c0_6 = arith.constant 0 : index
      %12 = vector.load %arg10[%c0_5, %c0_6] : memref<1x4xf32, #tpu.memory_space<vmem>>, vector<1x4xf32>
      %13 = vector.broadcast %12 : vector<1x4xf32> to vector<256x4xf32>
      %14 = arith.mulf %11, %13 : vector<256x4xf32>
      %c0_7 = arith.constant 0 : index
      %c0_8 = arith.constant 0 : index
      %15 = vector.load %arg11[%c0_7, %c0_8] : memref<1x4xf32, #tpu.memory_space<vmem>>, vector<1x4xf32>
      %16 = vector.broadcast %15 : vector<1x4xf32> to vector<256x4xf32>
      %17 = arith.addf %14, %16 : vector<256x4xf32>
      %cst = arith.constant 0.000000e+00 : f32
      %18 = vector.broadcast %cst : f32 to vector<256x4xf32>
      %19 = arith.maximumf %17, %18 : vector<256x4xf32>
      %20 = vector.shape_cast %19 : vector<256x4xf32> to vector<128x2x4xf32>
      %cst_9 = arith.constant dense<0xFF800000> : vector<128x4xf32>
      %21 = vector.multi_reduction <maximumf>, %20, %cst_9 [1] : vector<128x2x4xf32> to vector<128x4xf32>
      %22 = vector.shape_cast %21 : vector<128x4xf32> to vector<8x2x8x4xf32>
      %cst_10 = arith.constant dense<0xFF800000> : vector<8x8x4xf32>
      %23 = vector.multi_reduction <maximumf>, %22, %cst_10 [1] : vector<8x2x8x4xf32> to vector<8x8x4xf32>
      %24 = arith.truncf %23 : vector<8x8x4xf32> to vector<8x8x4xbf16>
      %c0_11 = arith.constant 0 : index
      %c0_12 = arith.constant 0 : index
      %c0_13 = arith.constant 0 : index
      %c0_14 = arith.constant 0 : index
      %25 = vector.load %arg6[%c0_11, %c0_12, %c0_13, %c0_14] : memref<1x8x8x4xbf16, #tpu.memory_space<vmem>>, vector<1x8x8x4xbf16>
      %26 = vector.shape_cast %25 : vector<1x8x8x4xbf16> to vector<8x8x4xbf16>
      %27 = vector.shape_cast %24 : vector<8x8x4xbf16> to vector<1x8x8x4xbf16>
      tpu.vector_store %arg6[%c0_11, %c0_12, %c0_13, %c0_14], %27 {strides = array<i32>} : memref<1x8x8x4xbf16, #tpu.memory_space<vmem>>, vector<1x8x8x4xbf16>,
    } else {
    }
    return
  }
  func.func @transform_0(%arg0: i32, %arg1: i32) -> (i32, i32, i32, i32) {
    %c1_i32 = arith.constant 1 : i32
    %0 = arith.subi %c1_i32, %arg0 : i32
    %1 = arith.muli %arg1, %0 : i32
    %c1_i32_0 = arith.constant 1 : i32
    %2 = arith.muli %c1_i32_0, %arg0 : i32
    %3 = arith.addi %1, %2 : i32
    %c0_i32 = arith.constant 0 : i32
    %c0_i32_1 = arith.constant 0 : i32
    %c0_i32_2 = arith.constant 0 : i32
    %c0_i32_3 = arith.constant 0 : i32
    return %3, %c0_i32, %c0_i32_1, %c0_i32_2 : i32, i32, i32, i32
  }
  func.func @transform_1(%arg0: i32, %arg1: i32) -> (i32, i32) {
    %c0_i32 = arith.constant 0 : i32
    %c0_i32_0 = arith.constant 0 : i32
    %c0_i32_1 = arith.constant 0 : i32
    return %c0_i32, %c0_i32_0 : i32, i32
  }
  func.func @transform_2(%arg0: i32, %arg1: i32) -> (i32, i32) {
    %c0_i32 = arith.constant 0 : i32
    %c0_i32_0 = arith.constant 0 : i32
    %c0_i32_1 = arith.constant 0 : i32
    return %c0_i32, %c0_i32_0 : i32, i32
  }
  func.func @transform_3(%arg0: i32, %arg1: i32) -> (i32, i32) {
    %c0_i32 = arith.constant 0 : i32
    %c0_i32_0 = arith.constant 0 : i32
    %c0_i32_1 = arith.constant 0 : i32
    return %c0_i32, %c0_i32_0 : i32, i32
  }
  func.func @transform_4(%arg0: i32, %arg1: i32) -> (i32, i32, i32, i32) {
    %0 = arith.muli %arg0, %arg1 : i32
    %c0_i32 = arith.constant 0 : i32
    %c0_i32_0 = arith.constant 0 : i32
    %c0_i32_1 = arith.constant 0 : i32
    %c0_i32_2 = arith.constant 0 : i32
    return %0, %c0_i32, %c0_i32_0, %c0_i32_1 : i32, i32, i32, i32
  }
}

module attributes {stable_mosaic.version = 11 : i64} {
  func.func @kernel(%arg0: i32, %arg1: i32, %arg2: memref<1x8x8x4xbf16, #tpu.memory_space<vmem>>, %arg3: memref<36x8xbf16, #tpu.memory_space<vmem>>, %arg4: memref<1x8xf32, #tpu.memory_space<vmem>>, %arg5: memref<1x8xf32, #tpu.memory_space<vmem>>, %arg6: memref<1x4x4x8xbf16, #tpu.memory_space<vmem>>, %arg7: memref<10x25x4xbf16, #tpu.memory_space<vmem>>, %arg8: memref<2x64x8xf32, #tpu.memory_space<vmem>>, %arg9: memref<1x8xf32, #tpu.memory_space<vmem>>, %arg10: memref<1x8xf32, #tpu.memory_space<vmem>>, %arg11: memref<1x8xf32, #tpu.memory_space<vmem>>) attributes {dimension_semantics = [#tpu.dimension_semantics<arbitrary>, #tpu.dimension_semantics<arbitrary>], iteration_bounds = array<i64: 2, 2>, scalar_prefetch = 0 : i64, scratch_operands = 5 : i64, tpu.core_type = #tpu.core_type<tc>, window_params = [{transform_indices = @transform_0, window_bounds = array<i64: 1, 8, 8, 4>}, {pipeline_mode = #tpu.pipeline_mode<synchronous>, transform_indices = @transform_1, window_bounds = array<i64: 36, 8>}, {pipeline_mode = #tpu.pipeline_mode<synchronous>, transform_indices = @transform_2, window_bounds = array<i64: 1, 8>}, {pipeline_mode = #tpu.pipeline_mode<synchronous>, transform_indices = @transform_3, window_bounds = array<i64: 1, 8>}, {transform_indices = @transform_4, window_bounds = array<i64: 1, 4, 4, 8>}]} {
    %c0_i32 = arith.constant 0 : i32
    %0 = arith.cmpi eq, %arg0, %c0_i32 : i32
    %1 = arith.extui %0 : i1 to i32
    %c0_i32_0 = arith.constant 0 : i32
    %2 = arith.cmpi ne, %1, %c0_i32_0 : i32
    scf.if %2 {
      %c0_i32_2 = arith.constant 0 : i32
      %6 = arith.cmpi eq, %arg1, %c0_i32_2 : i32
      %7 = arith.extui %6 : i1 to i32
      %c0_i32_3 = arith.constant 0 : i32
      %8 = arith.cmpi ne, %7, %c0_i32_3 : i32
      scf.if %8 {
        %cst_20 = arith.constant 0.000000e+00 : bf16
        %43 = vector.broadcast %cst_20 : bf16 to vector<10x25x4xbf16>
        %c0_21 = arith.constant 0 : index
        %c0_22 = arith.constant 0 : index
        %c0_23 = arith.constant 0 : index
        %44 = vector.load %arg7[%c0_21, %c0_22, %c0_23] : memref<10x25x4xbf16, #tpu.memory_space<vmem>>, vector<10x25x4xbf16>
        tpu.vector_store %arg7[%c0_21, %c0_22, %c0_23], %43 {strides = array<i32>} : memref<10x25x4xbf16, #tpu.memory_space<vmem>>, vector<10x25x4xbf16>,
        %cst_24 = arith.constant 0.000000e+00 : f32
        %45 = vector.broadcast %cst_24 : f32 to vector<1x8xf32>
        %c0_25 = arith.constant 0 : index
        %c0_26 = arith.constant 0 : index
        %46 = vector.load %arg9[%c0_25, %c0_26] : memref<1x8xf32, #tpu.memory_space<vmem>>, vector<1x8xf32>
        tpu.vector_store %arg9[%c0_25, %c0_26], %45 {strides = array<i32>} : memref<1x8xf32, #tpu.memory_space<vmem>>, vector<1x8xf32>,
      } else {
      }
      %c0 = arith.constant 0 : index
      %c0_4 = arith.constant 0 : index
      %c0_5 = arith.constant 0 : index
      %c0_6 = arith.constant 0 : index
      %9 = vector.load %arg2[%c0, %c0_4, %c0_5, %c0_6] : memref<1x8x8x4xbf16, #tpu.memory_space<vmem>>, vector<1x8x8x4xbf16>
      %10 = vector.shape_cast %9 : vector<1x8x8x4xbf16> to vector<8x8x4xbf16>
      %c1 = arith.constant 1 : index
      %c16 = arith.constant 16 : index
      %c0_7 = arith.constant 0 : index
      %11 = vector.load %arg7[%c1, %c16, %c0_7] : memref<10x25x4xbf16, #tpu.memory_space<vmem>>, vector<8x8x4xbf16>
      tpu.vector_store %arg7[%c1, %c16, %c0_7], %10 {strides = array<i32>} : memref<10x25x4xbf16, #tpu.memory_space<vmem>>, vector<8x8x4xbf16>,
      %c0_8 = arith.constant 0 : index
      %c0_9 = arith.constant 0 : index
      %c0_10 = arith.constant 0 : index
      %12 = vector.load %arg7[%c0_8, %c0_9, %c0_10] : memref<10x25x4xbf16, #tpu.memory_space<vmem>>, vector<10x25x4xbf16>
      %13 = vector.extract_strided_slice %12 {offsets = [0, 15, 0], sizes = [8, 8, 4], strides = [1, 1, 1]} : vector<10x25x4xbf16> to vector<8x8x4xbf16>
      %14 = vector.shape_cast %13 : vector<8x8x4xbf16> to vector<64x4xbf16>
      %15 = vector.extract_strided_slice %12 {offsets = [0, 16, 0], sizes = [8, 8, 4], strides = [1, 1, 1]} : vector<10x25x4xbf16> to vector<8x8x4xbf16>
      %16 = vector.shape_cast %15 : vector<8x8x4xbf16> to vector<64x4xbf16>
      %17 = vector.extract_strided_slice %12 {offsets = [0, 17, 0], sizes = [8, 8, 4], strides = [1, 1, 1]} : vector<10x25x4xbf16> to vector<8x8x4xbf16>
      %18 = vector.shape_cast %17 : vector<8x8x4xbf16> to vector<64x4xbf16>
      %19 = vector.extract_strided_slice %12 {offsets = [1, 15, 0], sizes = [8, 8, 4], strides = [1, 1, 1]} : vector<10x25x4xbf16> to vector<8x8x4xbf16>
      %20 = vector.shape_cast %19 : vector<8x8x4xbf16> to vector<64x4xbf16>
      %21 = vector.extract_strided_slice %12 {offsets = [1, 16, 0], sizes = [8, 8, 4], strides = [1, 1, 1]} : vector<10x25x4xbf16> to vector<8x8x4xbf16>
      %22 = vector.shape_cast %21 : vector<8x8x4xbf16> to vector<64x4xbf16>
      %23 = vector.extract_strided_slice %12 {offsets = [1, 17, 0], sizes = [8, 8, 4], strides = [1, 1, 1]} : vector<10x25x4xbf16> to vector<8x8x4xbf16>
      %24 = vector.shape_cast %23 : vector<8x8x4xbf16> to vector<64x4xbf16>
      %25 = vector.extract_strided_slice %12 {offsets = [2, 15, 0], sizes = [8, 8, 4], strides = [1, 1, 1]} : vector<10x25x4xbf16> to vector<8x8x4xbf16>
      %26 = vector.shape_cast %25 : vector<8x8x4xbf16> to vector<64x4xbf16>
      %27 = vector.extract_strided_slice %12 {offsets = [2, 16, 0], sizes = [8, 8, 4], strides = [1, 1, 1]} : vector<10x25x4xbf16> to vector<8x8x4xbf16>
      %28 = vector.shape_cast %27 : vector<8x8x4xbf16> to vector<64x4xbf16>
      %29 = vector.extract_strided_slice %12 {offsets = [2, 17, 0], sizes = [8, 8, 4], strides = [1, 1, 1]} : vector<10x25x4xbf16> to vector<8x8x4xbf16>
      %30 = vector.shape_cast %29 : vector<8x8x4xbf16> to vector<64x4xbf16>
      %31 = tpu.concatenate %14, %16, %18, %20, %22, %24, %26, %28, %30 in 1 : vector<64x4xbf16>, vector<64x4xbf16>, vector<64x4xbf16>, vector<64x4xbf16>, vector<64x4xbf16>, vector<64x4xbf16>, vector<64x4xbf16>, vector<64x4xbf16>, vector<64x4xbf16> -> vector<64x36xbf16>
      %c0_11 = arith.constant 0 : index
      %c0_12 = arith.constant 0 : index
      %32 = vector.load %arg3[%c0_11, %c0_12] : memref<36x8xbf16, #tpu.memory_space<vmem>>, vector<36x8xbf16>
      %cst = arith.constant dense<0.000000e+00> : vector<64x8xf32>
      %33 = tpu.matmul %31, %32, %cst {dimension_numbers = #tpu.dot_dimension_numbers<[1], [0], [0], [1], [0, 0, 1, 1], [], []>} : vector<64x36xbf16>, vector<36x8xbf16>, vector<64x8xf32> -> vector<64x8xf32>
      %34 = arith.index_cast %arg1 : i32 to index
      %c0_13 = arith.constant 0 : index
      %c0_14 = arith.constant 0 : index
      %35 = vector.load %arg8[%34, %c0_13, %c0_14] : memref<2x64x8xf32, #tpu.memory_space<vmem>>, vector<1x64x8xf32>
      %36 = vector.shape_cast %35 : vector<1x64x8xf32> to vector<64x8xf32>
      %37 = vector.shape_cast %33 : vector<64x8xf32> to vector<1x64x8xf32>
      tpu.vector_store %arg8[%34, %c0_13, %c0_14], %37 {strides = array<i32>} : memref<2x64x8xf32, #tpu.memory_space<vmem>>, vector<1x64x8xf32>,
      %c0_15 = arith.constant 0 : index
      %c0_16 = arith.constant 0 : index
      %38 = vector.load %arg9[%c0_15, %c0_16] : memref<1x8xf32, #tpu.memory_space<vmem>>, vector<1x8xf32>
      %cst_17 = arith.constant dense<0.000000e+00> : vector<8xf32>
      %39 = vector.multi_reduction <add>, %33, %cst_17 [0] : vector<64x8xf32> to vector<8xf32>
      %40 = vector.shape_cast %39 : vector<8xf32> to vector<1x8xf32>
      %41 = arith.addf %38, %40 : vector<1x8xf32>
      %c0_18 = arith.constant 0 : index
      %c0_19 = arith.constant 0 : index
      %42 = vector.load %arg9[%c0_18, %c0_19] : memref<1x8xf32, #tpu.memory_space<vmem>>, vector<1x8xf32>
      tpu.vector_store %arg9[%c0_18, %c0_19], %41 {strides = array<i32>} : memref<1x8xf32, #tpu.memory_space<vmem>>, vector<1x8xf32>,
    } else {
    }
    %c1_i32 = arith.constant 1 : i32
    %3 = arith.cmpi eq, %arg0, %c1_i32 : i32
    %4 = arith.extui %3 : i1 to i32
    %c0_i32_1 = arith.constant 0 : i32
    %5 = arith.cmpi ne, %4, %c0_i32_1 : i32
    scf.if %5 {
      %c0_i32_2 = arith.constant 0 : i32
      %6 = arith.cmpi eq, %arg1, %c0_i32_2 : i32
      %7 = arith.extui %6 : i1 to i32
      %c0_i32_3 = arith.constant 0 : i32
      %8 = arith.cmpi ne, %7, %c0_i32_3 : i32
      scf.if %8 {
        %c0_15 = arith.constant 0 : index
        %c0_16 = arith.constant 0 : index
        %28 = vector.load %arg9[%c0_15, %c0_16] : memref<1x8xf32, #tpu.memory_space<vmem>>, vector<1x8xf32>
        %cst_17 = arith.constant 7.812500e-03 : f32
        %29 = vector.broadcast %cst_17 : f32 to vector<1x8xf32>
        %30 = arith.mulf %28, %29 : vector<1x8xf32>
        %c0_18 = arith.constant 0 : index
        %c0_19 = arith.constant 0 : index
        %c0_20 = arith.constant 0 : index
        %31 = vector.load %arg8[%c0_18, %c0_19, %c0_20] : memref<2x64x8xf32, #tpu.memory_space<vmem>>, vector<2x64x8xf32>
        %32 = vector.shape_cast %30 : vector<1x8xf32> to vector<1x1x8xf32>
        %33 = vector.broadcast %32 : vector<1x1x8xf32> to vector<2x64x8xf32>
        %34 = arith.subf %31, %33 : vector<2x64x8xf32>
        %35 = arith.mulf %34, %34 : vector<2x64x8xf32>
        %cst_21 = arith.constant dense<0.000000e+00> : vector<64x8xf32>
        %36 = vector.multi_reduction <add>, %35, %cst_21 [0] : vector<2x64x8xf32> to vector<64x8xf32>
        %cst_22 = arith.constant dense<0.000000e+00> : vector<8xf32>
        %37 = vector.multi_reduction <add>, %36, %cst_22 [0] : vector<64x8xf32> to vector<8xf32>
        %38 = vector.shape_cast %37 : vector<8xf32> to vector<1x8xf32>
        %cst_23 = arith.constant 7.812500e-03 : f32
        %39 = vector.broadcast %cst_23 : f32 to vector<1x8xf32>
        %40 = arith.mulf %38, %39 : vector<1x8xf32>
        %cst_24 = arith.constant 0.000000e+00 : f32
        %41 = vector.broadcast %cst_24 : f32 to vector<1x8xf32>
        %42 = arith.maximumf %40, %41 : vector<1x8xf32>
        %cst_25 = arith.constant 9.99999974E-6 : f32
        %43 = vector.broadcast %cst_25 : f32 to vector<1x8xf32>
        %44 = arith.addf %42, %43 : vector<1x8xf32>
        %45 = math.rsqrt %44 : vector<1x8xf32>
        %c0_26 = arith.constant 0 : index
        %c0_27 = arith.constant 0 : index
        %46 = vector.load %arg4[%c0_26, %c0_27] : memref<1x8xf32, #tpu.memory_space<vmem>>, vector<1x8xf32>
        %47 = arith.mulf %46, %45 : vector<1x8xf32>
        %c0_28 = arith.constant 0 : index
        %c0_29 = arith.constant 0 : index
        %48 = vector.load %arg10[%c0_28, %c0_29] : memref<1x8xf32, #tpu.memory_space<vmem>>, vector<1x8xf32>
        tpu.vector_store %arg10[%c0_28, %c0_29], %47 {strides = array<i32>} : memref<1x8xf32, #tpu.memory_space<vmem>>, vector<1x8xf32>,
        %c0_30 = arith.constant 0 : index
        %c0_31 = arith.constant 0 : index
        %49 = vector.load %arg5[%c0_30, %c0_31] : memref<1x8xf32, #tpu.memory_space<vmem>>, vector<1x8xf32>
        %50 = arith.mulf %30, %47 : vector<1x8xf32>
        %51 = arith.subf %49, %50 : vector<1x8xf32>
        %c0_32 = arith.constant 0 : index
        %c0_33 = arith.constant 0 : index
        %52 = vector.load %arg11[%c0_32, %c0_33] : memref<1x8xf32, #tpu.memory_space<vmem>>, vector<1x8xf32>
        tpu.vector_store %arg11[%c0_32, %c0_33], %51 {strides = array<i32>} : memref<1x8xf32, #tpu.memory_space<vmem>>, vector<1x8xf32>,
      } else {
      }
      %9 = arith.index_cast %arg1 : i32 to index
      %c0 = arith.constant 0 : index
      %c0_4 = arith.constant 0 : index
      %10 = vector.load %arg8[%9, %c0, %c0_4] : memref<2x64x8xf32, #tpu.memory_space<vmem>>, vector<1x64x8xf32>
      %11 = vector.shape_cast %10 : vector<1x64x8xf32> to vector<64x8xf32>
      %c0_5 = arith.constant 0 : index
      %c0_6 = arith.constant 0 : index
      %12 = vector.load %arg10[%c0_5, %c0_6] : memref<1x8xf32, #tpu.memory_space<vmem>>, vector<1x8xf32>
      %13 = vector.broadcast %12 : vector<1x8xf32> to vector<64x8xf32>
      %14 = arith.mulf %11, %13 : vector<64x8xf32>
      %c0_7 = arith.constant 0 : index
      %c0_8 = arith.constant 0 : index
      %15 = vector.load %arg11[%c0_7, %c0_8] : memref<1x8xf32, #tpu.memory_space<vmem>>, vector<1x8xf32>
      %16 = vector.broadcast %15 : vector<1x8xf32> to vector<64x8xf32>
      %17 = arith.addf %14, %16 : vector<64x8xf32>
      %cst = arith.constant 0.000000e+00 : f32
      %18 = vector.broadcast %cst : f32 to vector<64x8xf32>
      %19 = arith.maximumf %17, %18 : vector<64x8xf32>
      %20 = vector.shape_cast %19 : vector<64x8xf32> to vector<32x2x8xf32>
      %cst_9 = arith.constant dense<0xFF800000> : vector<32x8xf32>
      %21 = vector.multi_reduction <maximumf>, %20, %cst_9 [1] : vector<32x2x8xf32> to vector<32x8xf32>
      %22 = vector.shape_cast %21 : vector<32x8xf32> to vector<4x2x4x8xf32>
      %cst_10 = arith.constant dense<0xFF800000> : vector<4x4x8xf32>
      %23 = vector.multi_reduction <maximumf>, %22, %cst_10 [1] : vector<4x2x4x8xf32> to vector<4x4x8xf32>
      %24 = arith.truncf %23 : vector<4x4x8xf32> to vector<4x4x8xbf16>
      %c0_11 = arith.constant 0 : index
      %c0_12 = arith.constant 0 : index
      %c0_13 = arith.constant 0 : index
      %c0_14 = arith.constant 0 : index
      %25 = vector.load %arg6[%c0_11, %c0_12, %c0_13, %c0_14] : memref<1x4x4x8xbf16, #tpu.memory_space<vmem>>, vector<1x4x4x8xbf16>
      %26 = vector.shape_cast %25 : vector<1x4x4x8xbf16> to vector<4x4x8xbf16>
      %27 = vector.shape_cast %24 : vector<4x4x8xbf16> to vector<1x4x4x8xbf16>
      tpu.vector_store %arg6[%c0_11, %c0_12, %c0_13, %c0_14], %27 {strides = array<i32>} : memref<1x4x4x8xbf16, #tpu.memory_space<vmem>>, vector<1x4x4x8xbf16>,
    } else {
    }
    return
  }
  func.func @transform_0(%arg0: i32, %arg1: i32) -> (i32, i32, i32, i32) {
    %c1_i32 = arith.constant 1 : i32
    %0 = arith.subi %c1_i32, %arg0 : i32
    %1 = arith.muli %arg1, %0 : i32
    %c1_i32_0 = arith.constant 1 : i32
    %2 = arith.muli %c1_i32_0, %arg0 : i32
    %3 = arith.addi %1, %2 : i32
    %c0_i32 = arith.constant 0 : i32
    %c0_i32_1 = arith.constant 0 : i32
    %c0_i32_2 = arith.constant 0 : i32
    %c0_i32_3 = arith.constant 0 : i32
    return %3, %c0_i32, %c0_i32_1, %c0_i32_2 : i32, i32, i32, i32
  }
  func.func @transform_1(%arg0: i32, %arg1: i32) -> (i32, i32) {
    %c0_i32 = arith.constant 0 : i32
    %c0_i32_0 = arith.constant 0 : i32
    %c0_i32_1 = arith.constant 0 : i32
    return %c0_i32, %c0_i32_0 : i32, i32
  }
  func.func @transform_2(%arg0: i32, %arg1: i32) -> (i32, i32) {
    %c0_i32 = arith.constant 0 : i32
    %c0_i32_0 = arith.constant 0 : i32
    %c0_i32_1 = arith.constant 0 : i32
    return %c0_i32, %c0_i32_0 : i32, i32
  }
  func.func @transform_3(%arg0: i32, %arg1: i32) -> (i32, i32) {
    %c0_i32 = arith.constant 0 : i32
    %c0_i32_0 = arith.constant 0 : i32
    %c0_i32_1 = arith.constant 0 : i32
    return %c0_i32, %c0_i32_0 : i32, i32
  }
  func.func @transform_4(%arg0: i32, %arg1: i32) -> (i32, i32, i32, i32) {
    %0 = arith.muli %arg0, %arg1 : i32
    %c0_i32 = arith.constant 0 : i32
    %c0_i32_0 = arith.constant 0 : i32
    %c0_i32_1 = arith.constant 0 : i32
    %c0_i32_2 = arith.constant 0 : i32
    return %0, %c0_i32, %c0_i32_0, %c0_i32_1 : i32, i32, i32, i32
  }
}

module attributes {stable_mosaic.version = 11 : i64} {
  func.func @kernel(%arg0: i32, %arg1: i32, %arg2: memref<1x2x2x16xbf16, #tpu.memory_space<vmem>>, %arg3: memref<144x16xbf16, #tpu.memory_space<vmem>>, %arg4: memref<1x16xf32, #tpu.memory_space<vmem>>, %arg5: memref<1x16xf32, #tpu.memory_space<vmem>>, %arg6: memref<1x2x2x16xbf16, #tpu.memory_space<vmem>>, %arg7: memref<4x19x16xbf16, #tpu.memory_space<vmem>>, %arg8: memref<2x4x16xf32, #tpu.memory_space<vmem>>, %arg9: memref<1x16xf32, #tpu.memory_space<vmem>>, %arg10: memref<1x16xf32, #tpu.memory_space<vmem>>, %arg11: memref<1x16xf32, #tpu.memory_space<vmem>>) attributes {dimension_semantics = [#tpu.dimension_semantics<arbitrary>, #tpu.dimension_semantics<arbitrary>], iteration_bounds = array<i64: 2, 2>, scalar_prefetch = 0 : i64, scratch_operands = 5 : i64, tpu.core_type = #tpu.core_type<tc>, window_params = [{transform_indices = @transform_0, window_bounds = array<i64: 1, 2, 2, 16>}, {pipeline_mode = #tpu.pipeline_mode<synchronous>, transform_indices = @transform_1, window_bounds = array<i64: 144, 16>}, {pipeline_mode = #tpu.pipeline_mode<synchronous>, transform_indices = @transform_2, window_bounds = array<i64: 1, 16>}, {pipeline_mode = #tpu.pipeline_mode<synchronous>, transform_indices = @transform_3, window_bounds = array<i64: 1, 16>}, {transform_indices = @transform_4, window_bounds = array<i64: 1, 2, 2, 16>}]} {
    %c0_i32 = arith.constant 0 : i32
    %0 = arith.cmpi eq, %arg0, %c0_i32 : i32
    %1 = arith.extui %0 : i1 to i32
    %c0_i32_0 = arith.constant 0 : i32
    %2 = arith.cmpi ne, %1, %c0_i32_0 : i32
    scf.if %2 {
      %c0_i32_2 = arith.constant 0 : i32
      %6 = arith.cmpi eq, %arg1, %c0_i32_2 : i32
      %7 = arith.extui %6 : i1 to i32
      %c0_i32_3 = arith.constant 0 : i32
      %8 = arith.cmpi ne, %7, %c0_i32_3 : i32
      scf.if %8 {
        %cst_20 = arith.constant 0.000000e+00 : bf16
        %43 = vector.broadcast %cst_20 : bf16 to vector<4x19x16xbf16>
        %c0_21 = arith.constant 0 : index
        %c0_22 = arith.constant 0 : index
        %c0_23 = arith.constant 0 : index
        %44 = vector.load %arg7[%c0_21, %c0_22, %c0_23] : memref<4x19x16xbf16, #tpu.memory_space<vmem>>, vector<4x19x16xbf16>
        tpu.vector_store %arg7[%c0_21, %c0_22, %c0_23], %43 {strides = array<i32>} : memref<4x19x16xbf16, #tpu.memory_space<vmem>>, vector<4x19x16xbf16>,
        %cst_24 = arith.constant 0.000000e+00 : f32
        %45 = vector.broadcast %cst_24 : f32 to vector<1x16xf32>
        %c0_25 = arith.constant 0 : index
        %c0_26 = arith.constant 0 : index
        %46 = vector.load %arg9[%c0_25, %c0_26] : memref<1x16xf32, #tpu.memory_space<vmem>>, vector<1x16xf32>
        tpu.vector_store %arg9[%c0_25, %c0_26], %45 {strides = array<i32>} : memref<1x16xf32, #tpu.memory_space<vmem>>, vector<1x16xf32>,
      } else {
      }
      %c0 = arith.constant 0 : index
      %c0_4 = arith.constant 0 : index
      %c0_5 = arith.constant 0 : index
      %c0_6 = arith.constant 0 : index
      %9 = vector.load %arg2[%c0, %c0_4, %c0_5, %c0_6] : memref<1x2x2x16xbf16, #tpu.memory_space<vmem>>, vector<1x2x2x16xbf16>
      %10 = vector.shape_cast %9 : vector<1x2x2x16xbf16> to vector<2x2x16xbf16>
      %c1 = arith.constant 1 : index
      %c16 = arith.constant 16 : index
      %c0_7 = arith.constant 0 : index
      %11 = vector.load %arg7[%c1, %c16, %c0_7] : memref<4x19x16xbf16, #tpu.memory_space<vmem>>, vector<2x2x16xbf16>
      tpu.vector_store %arg7[%c1, %c16, %c0_7], %10 {strides = array<i32>} : memref<4x19x16xbf16, #tpu.memory_space<vmem>>, vector<2x2x16xbf16>,
      %c0_8 = arith.constant 0 : index
      %c0_9 = arith.constant 0 : index
      %c0_10 = arith.constant 0 : index
      %12 = vector.load %arg7[%c0_8, %c0_9, %c0_10] : memref<4x19x16xbf16, #tpu.memory_space<vmem>>, vector<4x19x16xbf16>
      %13 = vector.extract_strided_slice %12 {offsets = [0, 15, 0], sizes = [2, 2, 16], strides = [1, 1, 1]} : vector<4x19x16xbf16> to vector<2x2x16xbf16>
      %14 = vector.shape_cast %13 : vector<2x2x16xbf16> to vector<4x16xbf16>
      %15 = vector.extract_strided_slice %12 {offsets = [0, 16, 0], sizes = [2, 2, 16], strides = [1, 1, 1]} : vector<4x19x16xbf16> to vector<2x2x16xbf16>
      %16 = vector.shape_cast %15 : vector<2x2x16xbf16> to vector<4x16xbf16>
      %17 = vector.extract_strided_slice %12 {offsets = [0, 17, 0], sizes = [2, 2, 16], strides = [1, 1, 1]} : vector<4x19x16xbf16> to vector<2x2x16xbf16>
      %18 = vector.shape_cast %17 : vector<2x2x16xbf16> to vector<4x16xbf16>
      %19 = vector.extract_strided_slice %12 {offsets = [1, 15, 0], sizes = [2, 2, 16], strides = [1, 1, 1]} : vector<4x19x16xbf16> to vector<2x2x16xbf16>
      %20 = vector.shape_cast %19 : vector<2x2x16xbf16> to vector<4x16xbf16>
      %21 = vector.extract_strided_slice %12 {offsets = [1, 16, 0], sizes = [2, 2, 16], strides = [1, 1, 1]} : vector<4x19x16xbf16> to vector<2x2x16xbf16>
      %22 = vector.shape_cast %21 : vector<2x2x16xbf16> to vector<4x16xbf16>
      %23 = vector.extract_strided_slice %12 {offsets = [1, 17, 0], sizes = [2, 2, 16], strides = [1, 1, 1]} : vector<4x19x16xbf16> to vector<2x2x16xbf16>
      %24 = vector.shape_cast %23 : vector<2x2x16xbf16> to vector<4x16xbf16>
      %25 = vector.extract_strided_slice %12 {offsets = [2, 15, 0], sizes = [2, 2, 16], strides = [1, 1, 1]} : vector<4x19x16xbf16> to vector<2x2x16xbf16>
      %26 = vector.shape_cast %25 : vector<2x2x16xbf16> to vector<4x16xbf16>
      %27 = vector.extract_strided_slice %12 {offsets = [2, 16, 0], sizes = [2, 2, 16], strides = [1, 1, 1]} : vector<4x19x16xbf16> to vector<2x2x16xbf16>
      %28 = vector.shape_cast %27 : vector<2x2x16xbf16> to vector<4x16xbf16>
      %29 = vector.extract_strided_slice %12 {offsets = [2, 17, 0], sizes = [2, 2, 16], strides = [1, 1, 1]} : vector<4x19x16xbf16> to vector<2x2x16xbf16>
      %30 = vector.shape_cast %29 : vector<2x2x16xbf16> to vector<4x16xbf16>
      %31 = tpu.concatenate %14, %16, %18, %20, %22, %24, %26, %28, %30 in 1 : vector<4x16xbf16>, vector<4x16xbf16>, vector<4x16xbf16>, vector<4x16xbf16>, vector<4x16xbf16>, vector<4x16xbf16>, vector<4x16xbf16>, vector<4x16xbf16>, vector<4x16xbf16> -> vector<4x144xbf16>
      %c0_11 = arith.constant 0 : index
      %c0_12 = arith.constant 0 : index
      %32 = vector.load %arg3[%c0_11, %c0_12] : memref<144x16xbf16, #tpu.memory_space<vmem>>, vector<144x16xbf16>
      %cst = arith.constant dense<0.000000e+00> : vector<4x16xf32>
      %33 = tpu.matmul %31, %32, %cst {dimension_numbers = #tpu.dot_dimension_numbers<[1], [0], [0], [1], [0, 0, 1, 1], [], []>} : vector<4x144xbf16>, vector<144x16xbf16>, vector<4x16xf32> -> vector<4x16xf32>
      %34 = arith.index_cast %arg1 : i32 to index
      %c0_13 = arith.constant 0 : index
      %c0_14 = arith.constant 0 : index
      %35 = vector.load %arg8[%34, %c0_13, %c0_14] : memref<2x4x16xf32, #tpu.memory_space<vmem>>, vector<1x4x16xf32>
      %36 = vector.shape_cast %35 : vector<1x4x16xf32> to vector<4x16xf32>
      %37 = vector.shape_cast %33 : vector<4x16xf32> to vector<1x4x16xf32>
      tpu.vector_store %arg8[%34, %c0_13, %c0_14], %37 {strides = array<i32>} : memref<2x4x16xf32, #tpu.memory_space<vmem>>, vector<1x4x16xf32>,
      %c0_15 = arith.constant 0 : index
      %c0_16 = arith.constant 0 : index
      %38 = vector.load %arg9[%c0_15, %c0_16] : memref<1x16xf32, #tpu.memory_space<vmem>>, vector<1x16xf32>
      %cst_17 = arith.constant dense<0.000000e+00> : vector<16xf32>
      %39 = vector.multi_reduction <add>, %33, %cst_17 [0] : vector<4x16xf32> to vector<16xf32>
      %40 = vector.shape_cast %39 : vector<16xf32> to vector<1x16xf32>
      %41 = arith.addf %38, %40 : vector<1x16xf32>
      %c0_18 = arith.constant 0 : index
      %c0_19 = arith.constant 0 : index
      %42 = vector.load %arg9[%c0_18, %c0_19] : memref<1x16xf32, #tpu.memory_space<vmem>>, vector<1x16xf32>
      tpu.vector_store %arg9[%c0_18, %c0_19], %41 {strides = array<i32>} : memref<1x16xf32, #tpu.memory_space<vmem>>, vector<1x16xf32>,
    } else {
    }
    %c1_i32 = arith.constant 1 : i32
    %3 = arith.cmpi eq, %arg0, %c1_i32 : i32
    %4 = arith.extui %3 : i1 to i32
    %c0_i32_1 = arith.constant 0 : i32
    %5 = arith.cmpi ne, %4, %c0_i32_1 : i32
    scf.if %5 {
      %c0_i32_2 = arith.constant 0 : i32
      %6 = arith.cmpi eq, %arg1, %c0_i32_2 : i32
      %7 = arith.extui %6 : i1 to i32
      %c0_i32_3 = arith.constant 0 : i32
      %8 = arith.cmpi ne, %7, %c0_i32_3 : i32
      scf.if %8 {
        %c0_13 = arith.constant 0 : index
        %c0_14 = arith.constant 0 : index
        %25 = vector.load %arg9[%c0_13, %c0_14] : memref<1x16xf32, #tpu.memory_space<vmem>>, vector<1x16xf32>
        %cst_15 = arith.constant 1.250000e-01 : f32
        %26 = vector.broadcast %cst_15 : f32 to vector<1x16xf32>
        %27 = arith.mulf %25, %26 : vector<1x16xf32>
        %c0_16 = arith.constant 0 : index
        %c0_17 = arith.constant 0 : index
        %c0_18 = arith.constant 0 : index
        %28 = vector.load %arg8[%c0_16, %c0_17, %c0_18] : memref<2x4x16xf32, #tpu.memory_space<vmem>>, vector<2x4x16xf32>
        %29 = vector.shape_cast %27 : vector<1x16xf32> to vector<1x1x16xf32>
        %30 = vector.broadcast %29 : vector<1x1x16xf32> to vector<2x4x16xf32>
        %31 = arith.subf %28, %30 : vector<2x4x16xf32>
        %32 = arith.mulf %31, %31 : vector<2x4x16xf32>
        %cst_19 = arith.constant dense<0.000000e+00> : vector<4x16xf32>
        %33 = vector.multi_reduction <add>, %32, %cst_19 [0] : vector<2x4x16xf32> to vector<4x16xf32>
        %cst_20 = arith.constant dense<0.000000e+00> : vector<16xf32>
        %34 = vector.multi_reduction <add>, %33, %cst_20 [0] : vector<4x16xf32> to vector<16xf32>
        %35 = vector.shape_cast %34 : vector<16xf32> to vector<1x16xf32>
        %cst_21 = arith.constant 1.250000e-01 : f32
        %36 = vector.broadcast %cst_21 : f32 to vector<1x16xf32>
        %37 = arith.mulf %35, %36 : vector<1x16xf32>
        %cst_22 = arith.constant 0.000000e+00 : f32
        %38 = vector.broadcast %cst_22 : f32 to vector<1x16xf32>
        %39 = arith.maximumf %37, %38 : vector<1x16xf32>
        %cst_23 = arith.constant 9.99999974E-6 : f32
        %40 = vector.broadcast %cst_23 : f32 to vector<1x16xf32>
        %41 = arith.addf %39, %40 : vector<1x16xf32>
        %42 = math.rsqrt %41 : vector<1x16xf32>
        %c0_24 = arith.constant 0 : index
        %c0_25 = arith.constant 0 : index
        %43 = vector.load %arg4[%c0_24, %c0_25] : memref<1x16xf32, #tpu.memory_space<vmem>>, vector<1x16xf32>
        %44 = arith.mulf %43, %42 : vector<1x16xf32>
        %c0_26 = arith.constant 0 : index
        %c0_27 = arith.constant 0 : index
        %45 = vector.load %arg10[%c0_26, %c0_27] : memref<1x16xf32, #tpu.memory_space<vmem>>, vector<1x16xf32>
        tpu.vector_store %arg10[%c0_26, %c0_27], %44 {strides = array<i32>} : memref<1x16xf32, #tpu.memory_space<vmem>>, vector<1x16xf32>,
        %c0_28 = arith.constant 0 : index
        %c0_29 = arith.constant 0 : index
        %46 = vector.load %arg5[%c0_28, %c0_29] : memref<1x16xf32, #tpu.memory_space<vmem>>, vector<1x16xf32>
        %47 = arith.mulf %27, %44 : vector<1x16xf32>
        %48 = arith.subf %46, %47 : vector<1x16xf32>
        %c0_30 = arith.constant 0 : index
        %c0_31 = arith.constant 0 : index
        %49 = vector.load %arg11[%c0_30, %c0_31] : memref<1x16xf32, #tpu.memory_space<vmem>>, vector<1x16xf32>
        tpu.vector_store %arg11[%c0_30, %c0_31], %48 {strides = array<i32>} : memref<1x16xf32, #tpu.memory_space<vmem>>, vector<1x16xf32>,
      } else {
      }
      %9 = arith.index_cast %arg1 : i32 to index
      %c0 = arith.constant 0 : index
      %c0_4 = arith.constant 0 : index
      %10 = vector.load %arg8[%9, %c0, %c0_4] : memref<2x4x16xf32, #tpu.memory_space<vmem>>, vector<1x4x16xf32>
      %11 = vector.shape_cast %10 : vector<1x4x16xf32> to vector<4x16xf32>
      %c0_5 = arith.constant 0 : index
      %c0_6 = arith.constant 0 : index
      %12 = vector.load %arg10[%c0_5, %c0_6] : memref<1x16xf32, #tpu.memory_space<vmem>>, vector<1x16xf32>
      %13 = vector.broadcast %12 : vector<1x16xf32> to vector<4x16xf32>
      %14 = arith.mulf %11, %13 : vector<4x16xf32>
      %c0_7 = arith.constant 0 : index
      %c0_8 = arith.constant 0 : index
      %15 = vector.load %arg11[%c0_7, %c0_8] : memref<1x16xf32, #tpu.memory_space<vmem>>, vector<1x16xf32>
      %16 = vector.broadcast %15 : vector<1x16xf32> to vector<4x16xf32>
      %17 = arith.addf %14, %16 : vector<4x16xf32>
      %cst = arith.constant 0.000000e+00 : f32
      %18 = vector.broadcast %cst : f32 to vector<4x16xf32>
      %19 = arith.maximumf %17, %18 : vector<4x16xf32>
      %20 = vector.shape_cast %19 : vector<4x16xf32> to vector<2x2x16xf32>
      %21 = arith.truncf %20 : vector<2x2x16xf32> to vector<2x2x16xbf16>
      %c0_9 = arith.constant 0 : index
      %c0_10 = arith.constant 0 : index
      %c0_11 = arith.constant 0 : index
      %c0_12 = arith.constant 0 : index
      %22 = vector.load %arg6[%c0_9, %c0_10, %c0_11, %c0_12] : memref<1x2x2x16xbf16, #tpu.memory_space<vmem>>, vector<1x2x2x16xbf16>
      %23 = vector.shape_cast %22 : vector<1x2x2x16xbf16> to vector<2x2x16xbf16>
      %24 = vector.shape_cast %21 : vector<2x2x16xbf16> to vector<1x2x2x16xbf16>
      tpu.vector_store %arg6[%c0_9, %c0_10, %c0_11, %c0_12], %24 {strides = array<i32>} : memref<1x2x2x16xbf16, #tpu.memory_space<vmem>>, vector<1x2x2x16xbf16>,
    } else {
    }
    return
  }
  func.func @transform_0(%arg0: i32, %arg1: i32) -> (i32, i32, i32, i32) {
    %c1_i32 = arith.constant 1 : i32
    %0 = arith.subi %c1_i32, %arg0 : i32
    %1 = arith.muli %arg1, %0 : i32
    %c1_i32_0 = arith.constant 1 : i32
    %2 = arith.muli %c1_i32_0, %arg0 : i32
    %3 = arith.addi %1, %2 : i32
    %c0_i32 = arith.constant 0 : i32
    %c0_i32_1 = arith.constant 0 : i32
    %c0_i32_2 = arith.constant 0 : i32
    %c0_i32_3 = arith.constant 0 : i32
    return %3, %c0_i32, %c0_i32_1, %c0_i32_2 : i32, i32, i32, i32
  }
  func.func @transform_1(%arg0: i32, %arg1: i32) -> (i32, i32) {
    %c0_i32 = arith.constant 0 : i32
    %c0_i32_0 = arith.constant 0 : i32
    %c0_i32_1 = arith.constant 0 : i32
    return %c0_i32, %c0_i32_0 : i32, i32
  }
  func.func @transform_2(%arg0: i32, %arg1: i32) -> (i32, i32) {
    %c0_i32 = arith.constant 0 : i32
    %c0_i32_0 = arith.constant 0 : i32
    %c0_i32_1 = arith.constant 0 : i32
    return %c0_i32, %c0_i32_0 : i32, i32
  }
  func.func @transform_3(%arg0: i32, %arg1: i32) -> (i32, i32) {
    %c0_i32 = arith.constant 0 : i32
    %c0_i32_0 = arith.constant 0 : i32
    %c0_i32_1 = arith.constant 0 : i32
    return %c0_i32, %c0_i32_0 : i32, i32
  }
  func.func @transform_4(%arg0: i32, %arg1: i32) -> (i32, i32, i32, i32) {
    %0 = arith.muli %arg0, %arg1 : i32
    %c0_i32 = arith.constant 0 : i32
    %c0_i32_0 = arith.constant 0 : i32
    %c0_i32_1 = arith.constant 0 : i32
    %c0_i32_2 = arith.constant 0 : i32
    return %0, %c0_i32, %c0_i32_0, %c0_i32_1 : i32, i32, i32, i32
  }
}

module attributes {stable_mosaic.version = 11 : i64} {
  func.func @kernel(%arg0: i32, %arg1: i32, %arg2: memref<1x4x4x8xbf16, #tpu.memory_space<vmem>>, %arg3: memref<72x16xbf16, #tpu.memory_space<vmem>>, %arg4: memref<1x16xf32, #tpu.memory_space<vmem>>, %arg5: memref<1x16xf32, #tpu.memory_space<vmem>>, %arg6: memref<1x2x2x16xbf16, #tpu.memory_space<vmem>>, %arg7: memref<6x21x8xbf16, #tpu.memory_space<vmem>>, %arg8: memref<2x16x16xf32, #tpu.memory_space<vmem>>, %arg9: memref<1x16xf32, #tpu.memory_space<vmem>>, %arg10: memref<1x16xf32, #tpu.memory_space<vmem>>, %arg11: memref<1x16xf32, #tpu.memory_space<vmem>>) attributes {dimension_semantics = [#tpu.dimension_semantics<arbitrary>, #tpu.dimension_semantics<arbitrary>], iteration_bounds = array<i64: 2, 2>, scalar_prefetch = 0 : i64, scratch_operands = 5 : i64, tpu.core_type = #tpu.core_type<tc>, window_params = [{transform_indices = @transform_0, window_bounds = array<i64: 1, 4, 4, 8>}, {pipeline_mode = #tpu.pipeline_mode<synchronous>, transform_indices = @transform_1, window_bounds = array<i64: 72, 16>}, {pipeline_mode = #tpu.pipeline_mode<synchronous>, transform_indices = @transform_2, window_bounds = array<i64: 1, 16>}, {pipeline_mode = #tpu.pipeline_mode<synchronous>, transform_indices = @transform_3, window_bounds = array<i64: 1, 16>}, {transform_indices = @transform_4, window_bounds = array<i64: 1, 2, 2, 16>}]} {
    %c0_i32 = arith.constant 0 : i32
    %0 = arith.cmpi eq, %arg0, %c0_i32 : i32
    %1 = arith.extui %0 : i1 to i32
    %c0_i32_0 = arith.constant 0 : i32
    %2 = arith.cmpi ne, %1, %c0_i32_0 : i32
    scf.if %2 {
      %c0_i32_2 = arith.constant 0 : i32
      %6 = arith.cmpi eq, %arg1, %c0_i32_2 : i32
      %7 = arith.extui %6 : i1 to i32
      %c0_i32_3 = arith.constant 0 : i32
      %8 = arith.cmpi ne, %7, %c0_i32_3 : i32
      scf.if %8 {
        %cst_20 = arith.constant 0.000000e+00 : bf16
        %43 = vector.broadcast %cst_20 : bf16 to vector<6x21x8xbf16>
        %c0_21 = arith.constant 0 : index
        %c0_22 = arith.constant 0 : index
        %c0_23 = arith.constant 0 : index
        %44 = vector.load %arg7[%c0_21, %c0_22, %c0_23] : memref<6x21x8xbf16, #tpu.memory_space<vmem>>, vector<6x21x8xbf16>
        tpu.vector_store %arg7[%c0_21, %c0_22, %c0_23], %43 {strides = array<i32>} : memref<6x21x8xbf16, #tpu.memory_space<vmem>>, vector<6x21x8xbf16>,
        %cst_24 = arith.constant 0.000000e+00 : f32
        %45 = vector.broadcast %cst_24 : f32 to vector<1x16xf32>
        %c0_25 = arith.constant 0 : index
        %c0_26 = arith.constant 0 : index
        %46 = vector.load %arg9[%c0_25, %c0_26] : memref<1x16xf32, #tpu.memory_space<vmem>>, vector<1x16xf32>
        tpu.vector_store %arg9[%c0_25, %c0_26], %45 {strides = array<i32>} : memref<1x16xf32, #tpu.memory_space<vmem>>, vector<1x16xf32>,
      } else {
      }
      %c0 = arith.constant 0 : index
      %c0_4 = arith.constant 0 : index
      %c0_5 = arith.constant 0 : index
      %c0_6 = arith.constant 0 : index
      %9 = vector.load %arg2[%c0, %c0_4, %c0_5, %c0_6] : memref<1x4x4x8xbf16, #tpu.memory_space<vmem>>, vector<1x4x4x8xbf16>
      %10 = vector.shape_cast %9 : vector<1x4x4x8xbf16> to vector<4x4x8xbf16>
      %c1 = arith.constant 1 : index
      %c16 = arith.constant 16 : index
      %c0_7 = arith.constant 0 : index
      %11 = vector.load %arg7[%c1, %c16, %c0_7] : memref<6x21x8xbf16, #tpu.memory_space<vmem>>, vector<4x4x8xbf16>
      tpu.vector_store %arg7[%c1, %c16, %c0_7], %10 {strides = array<i32>} : memref<6x21x8xbf16, #tpu.memory_space<vmem>>, vector<4x4x8xbf16>,
      %c0_8 = arith.constant 0 : index
      %c0_9 = arith.constant 0 : index
      %c0_10 = arith.constant 0 : index
      %12 = vector.load %arg7[%c0_8, %c0_9, %c0_10] : memref<6x21x8xbf16, #tpu.memory_space<vmem>>, vector<6x21x8xbf16>
      %13 = vector.extract_strided_slice %12 {offsets = [0, 15, 0], sizes = [4, 4, 8], strides = [1, 1, 1]} : vector<6x21x8xbf16> to vector<4x4x8xbf16>
      %14 = vector.shape_cast %13 : vector<4x4x8xbf16> to vector<16x8xbf16>
      %15 = vector.extract_strided_slice %12 {offsets = [0, 16, 0], sizes = [4, 4, 8], strides = [1, 1, 1]} : vector<6x21x8xbf16> to vector<4x4x8xbf16>
      %16 = vector.shape_cast %15 : vector<4x4x8xbf16> to vector<16x8xbf16>
      %17 = vector.extract_strided_slice %12 {offsets = [0, 17, 0], sizes = [4, 4, 8], strides = [1, 1, 1]} : vector<6x21x8xbf16> to vector<4x4x8xbf16>
      %18 = vector.shape_cast %17 : vector<4x4x8xbf16> to vector<16x8xbf16>
      %19 = vector.extract_strided_slice %12 {offsets = [1, 15, 0], sizes = [4, 4, 8], strides = [1, 1, 1]} : vector<6x21x8xbf16> to vector<4x4x8xbf16>
      %20 = vector.shape_cast %19 : vector<4x4x8xbf16> to vector<16x8xbf16>
      %21 = vector.extract_strided_slice %12 {offsets = [1, 16, 0], sizes = [4, 4, 8], strides = [1, 1, 1]} : vector<6x21x8xbf16> to vector<4x4x8xbf16>
      %22 = vector.shape_cast %21 : vector<4x4x8xbf16> to vector<16x8xbf16>
      %23 = vector.extract_strided_slice %12 {offsets = [1, 17, 0], sizes = [4, 4, 8], strides = [1, 1, 1]} : vector<6x21x8xbf16> to vector<4x4x8xbf16>
      %24 = vector.shape_cast %23 : vector<4x4x8xbf16> to vector<16x8xbf16>
      %25 = vector.extract_strided_slice %12 {offsets = [2, 15, 0], sizes = [4, 4, 8], strides = [1, 1, 1]} : vector<6x21x8xbf16> to vector<4x4x8xbf16>
      %26 = vector.shape_cast %25 : vector<4x4x8xbf16> to vector<16x8xbf16>
      %27 = vector.extract_strided_slice %12 {offsets = [2, 16, 0], sizes = [4, 4, 8], strides = [1, 1, 1]} : vector<6x21x8xbf16> to vector<4x4x8xbf16>
      %28 = vector.shape_cast %27 : vector<4x4x8xbf16> to vector<16x8xbf16>
      %29 = vector.extract_strided_slice %12 {offsets = [2, 17, 0], sizes = [4, 4, 8], strides = [1, 1, 1]} : vector<6x21x8xbf16> to vector<4x4x8xbf16>
      %30 = vector.shape_cast %29 : vector<4x4x8xbf16> to vector<16x8xbf16>
      %31 = tpu.concatenate %14, %16, %18, %20, %22, %24, %26, %28, %30 in 1 : vector<16x8xbf16>, vector<16x8xbf16>, vector<16x8xbf16>, vector<16x8xbf16>, vector<16x8xbf16>, vector<16x8xbf16>, vector<16x8xbf16>, vector<16x8xbf16>, vector<16x8xbf16> -> vector<16x72xbf16>
      %c0_11 = arith.constant 0 : index
      %c0_12 = arith.constant 0 : index
      %32 = vector.load %arg3[%c0_11, %c0_12] : memref<72x16xbf16, #tpu.memory_space<vmem>>, vector<72x16xbf16>
      %cst = arith.constant dense<0.000000e+00> : vector<16x16xf32>
      %33 = tpu.matmul %31, %32, %cst {dimension_numbers = #tpu.dot_dimension_numbers<[1], [0], [0], [1], [0, 0, 1, 1], [], []>} : vector<16x72xbf16>, vector<72x16xbf16>, vector<16x16xf32> -> vector<16x16xf32>
      %34 = arith.index_cast %arg1 : i32 to index
      %c0_13 = arith.constant 0 : index
      %c0_14 = arith.constant 0 : index
      %35 = vector.load %arg8[%34, %c0_13, %c0_14] : memref<2x16x16xf32, #tpu.memory_space<vmem>>, vector<1x16x16xf32>
      %36 = vector.shape_cast %35 : vector<1x16x16xf32> to vector<16x16xf32>
      %37 = vector.shape_cast %33 : vector<16x16xf32> to vector<1x16x16xf32>
      tpu.vector_store %arg8[%34, %c0_13, %c0_14], %37 {strides = array<i32>} : memref<2x16x16xf32, #tpu.memory_space<vmem>>, vector<1x16x16xf32>,
      %c0_15 = arith.constant 0 : index
      %c0_16 = arith.constant 0 : index
      %38 = vector.load %arg9[%c0_15, %c0_16] : memref<1x16xf32, #tpu.memory_space<vmem>>, vector<1x16xf32>
      %cst_17 = arith.constant dense<0.000000e+00> : vector<16xf32>
      %39 = vector.multi_reduction <add>, %33, %cst_17 [0] : vector<16x16xf32> to vector<16xf32>
      %40 = vector.shape_cast %39 : vector<16xf32> to vector<1x16xf32>
      %41 = arith.addf %38, %40 : vector<1x16xf32>
      %c0_18 = arith.constant 0 : index
      %c0_19 = arith.constant 0 : index
      %42 = vector.load %arg9[%c0_18, %c0_19] : memref<1x16xf32, #tpu.memory_space<vmem>>, vector<1x16xf32>
      tpu.vector_store %arg9[%c0_18, %c0_19], %41 {strides = array<i32>} : memref<1x16xf32, #tpu.memory_space<vmem>>, vector<1x16xf32>,
    } else {
    }
    %c1_i32 = arith.constant 1 : i32
    %3 = arith.cmpi eq, %arg0, %c1_i32 : i32
    %4 = arith.extui %3 : i1 to i32
    %c0_i32_1 = arith.constant 0 : i32
    %5 = arith.cmpi ne, %4, %c0_i32_1 : i32
    scf.if %5 {
      %c0_i32_2 = arith.constant 0 : i32
      %6 = arith.cmpi eq, %arg1, %c0_i32_2 : i32
      %7 = arith.extui %6 : i1 to i32
      %c0_i32_3 = arith.constant 0 : i32
      %8 = arith.cmpi ne, %7, %c0_i32_3 : i32
      scf.if %8 {
        %c0_15 = arith.constant 0 : index
        %c0_16 = arith.constant 0 : index
        %28 = vector.load %arg9[%c0_15, %c0_16] : memref<1x16xf32, #tpu.memory_space<vmem>>, vector<1x16xf32>
        %cst_17 = arith.constant 3.125000e-02 : f32
        %29 = vector.broadcast %cst_17 : f32 to vector<1x16xf32>
        %30 = arith.mulf %28, %29 : vector<1x16xf32>
        %c0_18 = arith.constant 0 : index
        %c0_19 = arith.constant 0 : index
        %c0_20 = arith.constant 0 : index
        %31 = vector.load %arg8[%c0_18, %c0_19, %c0_20] : memref<2x16x16xf32, #tpu.memory_space<vmem>>, vector<2x16x16xf32>
        %32 = vector.shape_cast %30 : vector<1x16xf32> to vector<1x1x16xf32>
        %33 = vector.broadcast %32 : vector<1x1x16xf32> to vector<2x16x16xf32>
        %34 = arith.subf %31, %33 : vector<2x16x16xf32>
        %35 = arith.mulf %34, %34 : vector<2x16x16xf32>
        %cst_21 = arith.constant dense<0.000000e+00> : vector<16x16xf32>
        %36 = vector.multi_reduction <add>, %35, %cst_21 [0] : vector<2x16x16xf32> to vector<16x16xf32>
        %cst_22 = arith.constant dense<0.000000e+00> : vector<16xf32>
        %37 = vector.multi_reduction <add>, %36, %cst_22 [0] : vector<16x16xf32> to vector<16xf32>
        %38 = vector.shape_cast %37 : vector<16xf32> to vector<1x16xf32>
        %cst_23 = arith.constant 3.125000e-02 : f32
        %39 = vector.broadcast %cst_23 : f32 to vector<1x16xf32>
        %40 = arith.mulf %38, %39 : vector<1x16xf32>
        %cst_24 = arith.constant 0.000000e+00 : f32
        %41 = vector.broadcast %cst_24 : f32 to vector<1x16xf32>
        %42 = arith.maximumf %40, %41 : vector<1x16xf32>
        %cst_25 = arith.constant 9.99999974E-6 : f32
        %43 = vector.broadcast %cst_25 : f32 to vector<1x16xf32>
        %44 = arith.addf %42, %43 : vector<1x16xf32>
        %45 = math.rsqrt %44 : vector<1x16xf32>
        %c0_26 = arith.constant 0 : index
        %c0_27 = arith.constant 0 : index
        %46 = vector.load %arg4[%c0_26, %c0_27] : memref<1x16xf32, #tpu.memory_space<vmem>>, vector<1x16xf32>
        %47 = arith.mulf %46, %45 : vector<1x16xf32>
        %c0_28 = arith.constant 0 : index
        %c0_29 = arith.constant 0 : index
        %48 = vector.load %arg10[%c0_28, %c0_29] : memref<1x16xf32, #tpu.memory_space<vmem>>, vector<1x16xf32>
        tpu.vector_store %arg10[%c0_28, %c0_29], %47 {strides = array<i32>} : memref<1x16xf32, #tpu.memory_space<vmem>>, vector<1x16xf32>,
        %c0_30 = arith.constant 0 : index
        %c0_31 = arith.constant 0 : index
        %49 = vector.load %arg5[%c0_30, %c0_31] : memref<1x16xf32, #tpu.memory_space<vmem>>, vector<1x16xf32>
        %50 = arith.mulf %30, %47 : vector<1x16xf32>
        %51 = arith.subf %49, %50 : vector<1x16xf32>
        %c0_32 = arith.constant 0 : index
        %c0_33 = arith.constant 0 : index
        %52 = vector.load %arg11[%c0_32, %c0_33] : memref<1x16xf32, #tpu.memory_space<vmem>>, vector<1x16xf32>
        tpu.vector_store %arg11[%c0_32, %c0_33], %51 {strides = array<i32>} : memref<1x16xf32, #tpu.memory_space<vmem>>, vector<1x16xf32>,
      } else {
      }
      %9 = arith.index_cast %arg1 : i32 to index
      %c0 = arith.constant 0 : index
      %c0_4 = arith.constant 0 : index
      %10 = vector.load %arg8[%9, %c0, %c0_4] : memref<2x16x16xf32, #tpu.memory_space<vmem>>, vector<1x16x16xf32>
      %11 = vector.shape_cast %10 : vector<1x16x16xf32> to vector<16x16xf32>
      %c0_5 = arith.constant 0 : index
      %c0_6 = arith.constant 0 : index
      %12 = vector.load %arg10[%c0_5, %c0_6] : memref<1x16xf32, #tpu.memory_space<vmem>>, vector<1x16xf32>
      %13 = vector.broadcast %12 : vector<1x16xf32> to vector<16x16xf32>
      %14 = arith.mulf %11, %13 : vector<16x16xf32>
      %c0_7 = arith.constant 0 : index
      %c0_8 = arith.constant 0 : index
      %15 = vector.load %arg11[%c0_7, %c0_8] : memref<1x16xf32, #tpu.memory_space<vmem>>, vector<1x16xf32>
      %16 = vector.broadcast %15 : vector<1x16xf32> to vector<16x16xf32>
      %17 = arith.addf %14, %16 : vector<16x16xf32>
      %cst = arith.constant 0.000000e+00 : f32
      %18 = vector.broadcast %cst : f32 to vector<16x16xf32>
      %19 = arith.maximumf %17, %18 : vector<16x16xf32>
      %20 = vector.shape_cast %19 : vector<16x16xf32> to vector<8x2x16xf32>
      %cst_9 = arith.constant dense<0xFF800000> : vector<8x16xf32>
      %21 = vector.multi_reduction <maximumf>, %20, %cst_9 [1] : vector<8x2x16xf32> to vector<8x16xf32>
      %22 = vector.shape_cast %21 : vector<8x16xf32> to vector<2x2x2x16xf32>
      %cst_10 = arith.constant dense<0xFF800000> : vector<2x2x16xf32>
      %23 = vector.multi_reduction <maximumf>, %22, %cst_10 [1] : vector<2x2x2x16xf32> to vector<2x2x16xf32>
      %24 = arith.truncf %23 : vector<2x2x16xf32> to vector<2x2x16xbf16>
      %c0_11 = arith.constant 0 : index
      %c0_12 = arith.constant 0 : index
      %c0_13 = arith.constant 0 : index
      %c0_14 = arith.constant 0 : index
      %25 = vector.load %arg6[%c0_11, %c0_12, %c0_13, %c0_14] : memref<1x2x2x16xbf16, #tpu.memory_space<vmem>>, vector<1x2x2x16xbf16>
      %26 = vector.shape_cast %25 : vector<1x2x2x16xbf16> to vector<2x2x16xbf16>
      %27 = vector.shape_cast %24 : vector<2x2x16xbf16> to vector<1x2x2x16xbf16>
      tpu.vector_store %arg6[%c0_11, %c0_12, %c0_13, %c0_14], %27 {strides = array<i32>} : memref<1x2x2x16xbf16, #tpu.memory_space<vmem>>, vector<1x2x2x16xbf16>,
    } else {
    }
    return
  }
  func.func @transform_0(%arg0: i32, %arg1: i32) -> (i32, i32, i32, i32) {
    %c1_i32 = arith.constant 1 : i32
    %0 = arith.subi %c1_i32, %arg0 : i32
    %1 = arith.muli %arg1, %0 : i32
    %c1_i32_0 = arith.constant 1 : i32
    %2 = arith.muli %c1_i32_0, %arg0 : i32
    %3 = arith.addi %1, %2 : i32
    %c0_i32 = arith.constant 0 : i32
    %c0_i32_1 = arith.constant 0 : i32
    %c0_i32_2 = arith.constant 0 : i32
    %c0_i32_3 = arith.constant 0 : i32
    return %3, %c0_i32, %c0_i32_1, %c0_i32_2 : i32, i32, i32, i32
  }
  func.func @transform_1(%arg0: i32, %arg1: i32) -> (i32, i32) {
    %c0_i32 = arith.constant 0 : i32
    %c0_i32_0 = arith.constant 0 : i32
    %c0_i32_1 = arith.constant 0 : i32
    return %c0_i32, %c0_i32_0 : i32, i32
  }
  func.func @transform_2(%arg0: i32, %arg1: i32) -> (i32, i32) {
    %c0_i32 = arith.constant 0 : i32
    %c0_i32_0 = arith.constant 0 : i32
    %c0_i32_1 = arith.constant 0 : i32
    return %c0_i32, %c0_i32_0 : i32, i32
  }
  func.func @transform_3(%arg0: i32, %arg1: i32) -> (i32, i32) {
    %c0_i32 = arith.constant 0 : i32
    %c0_i32_0 = arith.constant 0 : i32
    %c0_i32_1 = arith.constant 0 : i32
    return %c0_i32, %c0_i32_0 : i32, i32
  }
  func.func @transform_4(%arg0: i32, %arg1: i32) -> (i32, i32, i32, i32) {
    %0 = arith.muli %arg0, %arg1 : i32
    %c0_i32 = arith.constant 0 : i32
    %c0_i32_0 = arith.constant 0 : i32
    %c0_i32_1 = arith.constant 0 : i32
    %c0_i32_2 = arith.constant 0 : i32
    return %0, %c0_i32, %c0_i32_0, %c0_i32_1 : i32, i32, i32, i32
  }
}

</mosaic_0001>

<llo_original>
// kernel: unet_encoder.7
$region0: #{unet_encoder.7}
  #allocation0 [shape = 'u32[]', space=smem, size = 0x4, offset = 0x4, fixed_abs, tag = 'smem constant byte address 0x4 - core index']
  #allocation1 [shape = 'u32[144,128]{1,0:T(1,128)}', space=vmem, size = 0x12000, scoped, tag = 'internal scratch']
  #allocation2 [shape = 'bf16[4,19,16]{2,1,0:T(8,128)(2,1)}', space=vmem, size = 0x6000, scoped, tag = 'scratch operand']
  #allocation3 [shape = 'f32[2,4,16]{2,1,0:T(4,128)}', space=vmem, size = 0x1000, scoped, tag = 'scratch operand']
  #allocation4 [shape = 'f32[1,16]{1,0:T(1,128)}', space=vmem, size = 0x200, scoped, tag = 'scratch operand']
  #allocation5 [shape = 'f32[1,16]{1,0:T(1,128)}', space=vmem, size = 0x200, scoped, tag = 'scratch operand']
  #allocation6 [shape = 'f32[1,16]{1,0:T(1,128)}', space=vmem, size = 0x200, scoped, tag = 'scratch operand']
  %s0 = inlined_call_operand.vmem [shape: bf16[2,2,2,16], index: 0, kind: input, shape index: {}]
  %s1 = inlined_call_operand.vmem [shape: bf16[144,16], index: 1, kind: input, shape index: {}]
  %s2 = inlined_call_operand.vmem [shape: f32[1,16], index: 2, kind: input, shape index: {}]
  %s3 = inlined_call_operand.vmem [shape: f32[1,16], index: 3, kind: input, shape index: {}]
  %s4 = inlined_call_operand.vmem [shape: bf16[2,2,2,16], index: 4, kind: output, shape index: {}]
  %s5 = sld [smem:[#allocation0]]
  $region65: #{unet_encoder.7} parent=0
    _
  %s7 = ssub.s32 1, %s5
  %s8 = scalar_select 0, %s7, %s5
  loop: start=0, step=1, limit=6
  $region2: #{unet_encoder.7} parent=0 // loop_pre_header
    _
  $region3: #{unet_encoder.7} parent=0 // loop_header
    %s10 = sphi 0, %s14
    %p11 = scmp.ge.s32.totalorder %s10, 6
    %s17 = sphi 0, %s29
    %s18 = sphi 0, %s25
    %s19 = sphi 0, %s17
    %s20 = sphi 0, %s18
    %s21 = sphi 0, %s19
    %s22 = sphi 0, %s20
    %s38 = sphi 0, %s40
    %s41 = sphi 0, %s38
    %s42 = sphi 0, %s41
    %s58 = sphi 0, %s42
    %s62 = sphi 0, %s62
    %s64 = sphi 0, %s62
    %s65 = sphi 0, %s64
    %s79 = sphi 0, %s65
    %s83 = sphi 0, %s83
    %s85 = sphi 0, %s83
    %s86 = sphi 0, %s85
    %s100 = sphi 0, %s86
    %s104 = sphi 0, %s104
    %s106 = sphi 0, %s104
    %s107 = sphi 0, %s106
    %s121 = sphi 0, %s107
    %s129 = sphi 0, %s131
    %s132 = sphi 0, %s129
    %s133 = sphi 0, %s132
    %s149 = sphi 0, %s133
  $region4: #{unet_encoder.7} parent=0 // loop_header_branch
    %13 = sbr.rel (%p11) target = $region8
  $region5: #{unet_encoder.7} parent=0 // loop_body
    %s15 = ssub.s32 %s10, 1
    %s16 = ssub.s32 %s10, 2
    %s23 = sadd.s32 1, %s18
    %p24 = scmp.ge.s32.totalorder %s23, 2
    %s25 = scalar_select %p24, 0, %s23
    %s26 = sadd.s32 1, %s17
    %s27 = scalar_select %p24, %s26, %s17
    %p28 = scmp.ge.s32.totalorder %s27, 2
    %s29 = scalar_select %p28, 0, %s27
    %s30 = ssub.s32 1, %s17
    %s31 = smul.u32 %s18, %s30
    %s32 = sadd.s32 %s31, %s17
    %s33 = ssub.s32 1, %s29
    %s34 = smul.u32 %s25, %s33
    %s35 = sadd.s32 %s34, %s29
    %s36 = ssub.s32 %s32, %s35
    %p37 = scmp.eq.s32.totalorder %s36, 0
    %s39 = sadd.s32 %s38, 1
    %s40 = scalar_select %p37, %s38, %s39
    %p43 = pneg %p37
    %p44 = scmp.eq.s32.totalorder %s10, 3
    %p45 = por %p43, %p44
    %p46 = scmp.ne.s32.totalorder %s38, %s41
    %p47 = scmp.eq.s32.totalorder %s10, 0
    %p48 = por %p46, %p47
    %p49 = scmp.ne.s32.totalorder %s38, %s41
    %p50 = scmp.eq.s32.totalorder %s15, 3
    %p51 = por %p49, %p50
    %p52 = scmp.ne.s32.totalorder %s41, %s42
    %p53 = scmp.eq.s32.totalorder %s15, 0
    %p54 = por %p52, %p53
    %p55 = scmp.ne.s32.totalorder %s41, %s42
    %p56 = scmp.eq.s32.totalorder %s16, 3
    %p57 = por %p55, %p56
    %p59 = scmp.ne.s32.totalorder %s42, %s58
    %p60 = scmp.eq.s32.totalorder %s16, 0
    %p61 = por %p59, %p60
    %s63 = sadd.s32 %s62, 1
    %p66 = scmp.eq.s32.totalorder %s10, 3
    %p67 = scmp.ne.s32.totalorder %s62, %s64
    %p68 = scmp.eq.s32.totalorder %s10, 0
    %p69 = por %p67, %p68
    %p70 = scmp.ne.s32.totalorder %s62, %s64
    %p71 = scmp.eq.s32.totalorder %s15, 3
    %p72 = por %p70, %p71
    %p73 = scmp.ne.s32.totalorder %s64, %s65
    %p74 = scmp.eq.s32.totalorder %s15, 0
    %p75 = por %p73, %p74
    %p76 = scmp.ne.s32.totalorder %s64, %s65
    %p77 = scmp.eq.s32.totalorder %s16, 3
    %p78 = por %p76, %p77
    %p80 = scmp.ne.s32.totalorder %s65, %s79
    %p81 = scmp.eq.s32.totalorder %s16, 0
    %p82 = por %p80, %p81
    %s84 = sadd.s32 %s83, 1
    %p87 = scmp.eq.s32.totalorder %s10, 3
    %p88 = scmp.ne.s32.totalorder %s83, %s85
    %p89 = scmp.eq.s32.totalorder %s10, 0
    %p90 = por %p88, %p89
    %p91 = scmp.ne.s32.totalorder %s83, %s85
    %p92 = scmp.eq.s32.totalorder %s15, 3
    %p93 = por %p91, %p92
    %p94 = scmp.ne.s32.totalorder %s85, %s86
    %p95 = scmp.eq.s32.totalorder %s15, 0
    %p96 = por %p94, %p95
    %p97 = scmp.ne.s32.totalorder %s85, %s86
    %p98 = scmp.eq.s32.totalorder %s16, 3
    %p99 = por %p97, %p98
    %p101 = scmp.ne.s32.totalorder %s86, %s100
    %p102 = scmp.eq.s32.totalorder %s16, 0
    %p103 = por %p101, %p102
    %s105 = sadd.s32 %s104, 1
    %p108 = scmp.eq.s32.totalorder %s10, 3
    %p109 = scmp.ne.s32.totalorder %s104, %s106
    %p110 = scmp.eq.s32.totalorder %s10, 0
    %p111 = por %p109, %p110
    %p112 = scmp.ne.s32.totalorder %s104, %s106
    %p113 = scmp.eq.s32.totalorder %s15, 3
    %p114 = por %p112, %p113
    %p115 = scmp.ne.s32.totalorder %s106, %s107
    %p116 = scmp.eq.s32.totalorder %s15, 0
    %p117 = por %p115, %p116
    %p118 = scmp.ne.s32.totalorder %s106, %s107
    %p119 = scmp.eq.s32.totalorder %s16, 3
    %p120 = por %p118, %p119
    %p122 = scmp.ne.s32.totalorder %s107, %s121
    %p123 = scmp.eq.s32.totalorder %s16, 0
    %p124 = por %p122, %p123
    %s125 = smul.u32 %s17, %s18
    %s126 = smul.u32 %s29, %s25
    %s127 = ssub.s32 %s125, %s126
    %p128 = scmp.eq.s32.totalorder %s127, 0
    %s130 = sadd.s32 %s129, 1
    %s131 = scalar_select %p128, %s129, %s130
    %p134 = pneg %p128
    %p135 = scmp.eq.s32.totalorder %s10, 3
    %p136 = por %p134, %p135
    %p137 = scmp.ne.s32.totalorder %s129, %s132
    %p138 = scmp.eq.s32.totalorder %s10, 0
    %p139 = por %p137, %p138
    %p140 = scmp.ne.s32.totalorder %s129, %s132
    %p141 = scmp.eq.s32.totalorder %s15, 3
    %p142 = por %p140, %p141
    %p143 = scmp.ne.s32.totalorder %s132, %s133
    %p144 = scmp.eq.s32.totalorder %s15, 0
    %p145 = por %p143, %p144
    %p146 = scmp.ne.s32.totalorder %s132, %s133
    %p147 = scmp.eq.s32.totalorder %s16, 3
    %p148 = por %p146, %p147
    %p150 = scmp.ne.s32.totalorder %s133, %s149
    %p151 = scmp.eq.s32.totalorder %s16, 0
    %p152 = por %p150, %p151
    %p153 = scmp.le.s32.totalorder 1, %s10
    %p154 = scmp.lt.s32.totalorder %s10, 5
    %p155 = pnand %p153, %p154
    %p156 = pneg %p155
    // Predicated region
    $region9: #{unet_encoder.7} parent=5 // pred_check
      _
    $region10: #{unet_encoder.7} parent=5 // pred_check_branch
      %158 = sbr.rel (%p155) target = $region12
    $region11: #{unet_encoder.7} parent=5 // pred_region
      %s159 = ssub.s32 %s10, 1
      // Predicated region
      $region13: #{unet_encoder.7} parent=11 // pred_check
        %p160 = pneg %p75
      $region14: #{unet_encoder.7} parent=11 // pred_check_branch
        %162 = sbr.rel (%p160) target = $region16
      $region15: #{unet_encoder.7} parent=11 // pred_region
        _
      $region16: #{unet_encoder.7} parent=11 // pred_fallthru
        _
      // Predicated region
      $region17: #{unet_encoder.7} parent=11 // pred_check
        %p163 = pneg %p96
      $region18: #{unet_encoder.7} parent=11 // pred_check_branch
        %165 = sbr.rel (%p163) target = $region20
      $region19: #{unet_encoder.7} parent=11 // pred_region
        _
      $region20: #{unet_encoder.7} parent=11 // pred_fallthru
        _
      // Predicated region
      $region21: #{unet_encoder.7} parent=11 // pred_check
        %p166 = pneg %p117
      $region22: #{unet_encoder.7} parent=11 // pred_check_branch
        %168 = sbr.rel (%p166) target = $region24
      $region23: #{unet_encoder.7} parent=11 // pred_region
        _
      $region24: #{unet_encoder.7} parent=11 // pred_fallthru
        _
    $region12: #{unet_encoder.7} parent=5 // pred_fallthru
      _
    %p169 = scmp.lt.s32.totalorder %s10, 4
    // Predicated region
    $region25: #{unet_encoder.7} parent=5 // pred_check
      %p170 = pneg %p169
    $region26: #{unet_encoder.7} parent=5 // pred_check_branch
      %172 = sbr.rel (%p170) target = $region28
    $region27: #{unet_encoder.7} parent=5 // pred_region
      // Predicated region
      $region29: #{unet_encoder.7} parent=27 // pred_check
        %p173 = pneg %p48
      $region30: #{unet_encoder.7} parent=27 // pred_check_branch
        %175 = sbr.rel (%p173) target = $region32
      $region31: #{unet_encoder.7} parent=27 // pred_region
        %s176 = ssub.s32 1, %s17
        %s177 = smul.u32 %s18, %s176
        %s178 = sadd.s32 %s177, %s17
        %p179 = scmp.lt.s32.totalorder %s178, 1
        %s180 = scalar_select %p179, %s178, 1
        %s181 = smul.addr %s180, 2
        %s182 = scalar_lea.vmem %s0, %s181
        %s183 = ssub.s32 1, %s17
        %s184 = smul.u32 %s18, %s183
        %s185 = sadd.s32 %s184, %s17
      $region32: #{unet_encoder.7} parent=27 // pred_fallthru
        _
    $region28: #{unet_encoder.7} parent=5 // pred_fallthru
      _
    %p186 = scmp.le.s32.totalorder 1, %s10
    %p187 = scmp.lt.s32.totalorder %s10, 5
    %p188 = pnand %p186, %p187
    %p189 = pneg %p188
    // Predicated region
    $region33: #{unet_encoder.7} parent=5 // pred_check
      _
    $region34: #{unet_encoder.7} parent=5 // pred_check_branch
      %191 = sbr.rel (%p188) target = $region36
    $region35: #{unet_encoder.7} parent=5 // pred_region
      %s192 = ssub.s32 %s10, 1
      %s193 = ssub.s32 1, %s19
      %s194 = smul.u32 %s20, %s193
      %s195 = sadd.s32 %s194, %s19
      %p196 = scmp.lt.s32.totalorder %s195, 1
      %s197 = scalar_select %p196, %s195, 1
      %s198 = smul.addr %s197, 2
      %s199 = scalar_lea.vmem %s0, %s198
      %p200 = pneg %p54
      %p201 = pneg %p51
      %p202 = pneg %p75
      %p203 = pneg %p72
      %p204 = pneg %p96
      %p205 = pneg %p93
      %p206 = pneg %p117
      %p207 = pneg %p114
      %p208 = pneg %p145
      %p209 = pneg %p142
      %s210 = smul.u32 %s19, %s20
      %p211 = scmp.lt.s32.totalorder %s210, 1
      %s212 = scalar_select %p211, %s210, 1
      %s213 = smul.addr %s212, 2
      %s214 = scalar_lea.vmem %s4, %s213
      %s215 = ssub.s32 1, %s19
      %s216 = smul.u32 %s20, %s215
      %s217 = sadd.s32 %s216, %s19
      %p218 = scmp.lt.s32.totalorder %s217, 1
      %s219 = scalar_select %p218, %s217, 1
      %s220 = smul.addr %s219, 2
      %s221 = scalar_lea.vmem %s0, %s220
      %s222 = ssub.s32 1, %s19
      %s223 = smul.u32 %s20, %s222
      %s224 = sadd.s32 %s223, %s19
      %s225 = smul.u32 %s19, %s20
      %p226 = scmp.lt.s32.totalorder %s225, 1
      %s227 = scalar_select %p226, %s225, 1
      %s228 = smul.addr %s227, 2
      %s229 = scalar_lea.vmem %s4, %s228
      %s230 = smul.u32 %s19, %s20
      %p232 = scmp.eq.s32.totalorder %s19, 0
      // Predicated region
      $region37: #{unet_encoder.7} parent=35 // pred_check
        %p233 = pneg %p232
      $region38: #{unet_encoder.7} parent=35 // pred_check_branch
        %235 = sbr.rel (%p233) target = $region40
      $region39: #{unet_encoder.7} parent=35 // pred_region
        %p236 = scmp.eq.s32.totalorder %s20, 0
        // Predicated region
        $region41: #{unet_encoder.7} parent=39 // pred_check
          %p237 = pneg %p236
        $region42: #{unet_encoder.7} parent=39 // pred_check_branch
          %239 = sbr.rel (%p237) target = $region44
        $region43: #{unet_encoder.7} parent=39 // pred_region
          %vm240 = vcmask 125952
          %241 = vst.msk [vmem:[#allocation2] sm:$0xf] %vm240, 0
          %242 = vst.msk [vmem:[#allocation2 + $0x4] sm:$0xf] %vm240, 0
          %vm243 = vcmask 123904
          %vm244 = vsmask.f32 1280
          %vm245 = vmand %vm243, %vm244
          %v246 = vld [vmem:[#allocation2 + $0x8] sm:$0x3]
          %v247 = vsel %vm245, 0, %v246
          %248 = vst [vmem:[#allocation2 + $0x8] sm:$0x3] %v247
          %249 = vst.msk [vmem:[#allocation2 + $0xc] sm:$0xf] %vm240, 0
          %250 = vst.msk [vmem:[#allocation2 + $0x10] sm:$0xf] %vm240, 0
          %v251 = vld [vmem:[#allocation2 + $0x14] sm:$0x3]
          %v252 = vsel %vm245, 0, %v251
          %253 = vst [vmem:[#allocation2 + $0x14] sm:$0x3] %v252
          %254 = vst.msk [vmem:[#allocation2 + $0x18] sm:$0xf] %vm240, 0
          %255 = vst.msk [vmem:[#allocation2 + $0x1c] sm:$0xf] %vm240, 0
          %v256 = vld [vmem:[#allocation2 + $0x20] sm:$0x3]
          %v257 = vsel %vm245, 0, %v256
          %258 = vst [vmem:[#allocation2 + $0x20] sm:$0x3] %v257
          %259 = vst.msk [vmem:[#allocation2 + $0x24] sm:$0xf] %vm240, 0
          %260 = vst.msk [vmem:[#allocation2 + $0x28] sm:$0xf] %vm240, 0
          %v261 = vld [vmem:[#allocation2 + $0x2c] sm:$0x3]
          %v262 = vsel %vm245, 0, %v261
          %263 = vst [vmem:[#allocation2 + $0x2c] sm:$0x3] %v262
          %vm264 = vcmask 122880
          %265 = vst.msk [vmem:[#allocation4] sm:$0x1] %vm264, 0.0
        $region44: #{unet_encoder.7} parent=39 // pred_fallthru
          _
        %v266 = vld [vmem:[%s221] sm:$0x1]
        %v267 = vld [vmem:[%s221 + $0x1] sm:$0x1]
        %s268 = scalar_lea.vmem [#allocation2], 12
        %vm269 = vcmask 122880
        %270 = vst.msk [vmem:[%s268 + $0x8] sm:$0x1] %vm269, %v266
        %271 = vst.msk [vmem:[%s268 + $0x14] sm:$0x1] %vm269, %v267
        %v272 = vld [vmem:[#allocation2 + $0x4] sm:$0xf]
        %v273 = vld [vmem:[#allocation2 + $0x8] sm:$0x3]
        %v274 = vld [vmem:[#allocation2 + $0x10] sm:$0xf]
        %v275 = vld [vmem:[#allocation2 + $0x14] sm:$0x3]
        %v276 = vld [vmem:[#allocation2 + $0x1c] sm:$0xf]
        %v277 = vld [vmem:[#allocation2 + $0x20] sm:$0x3]
        %v278 = vld [vmem:[#allocation2 + $0x28] sm:$0xf]
        %v279 = vld [vmem:[#allocation2 + $0x2c] sm:$0x3]
        %v285 = vunpack.c.l.s4 1966171168
        %v286 = vunpack.c.0.s8 %v285
        %v287 = vlaneseq
        %v288 = vshrl.u32 %v287, 7
        %v289 = vsub.s32 %v286, %v288
        %v290 = vrot.slane %v272, %v289
        %v291 = vcombine.high %v290, %v290
        %v293 = vunpack.c.l.s4 1966171168
        %v294 = vunpack.c.0.s8 %v293
        %v295 = vlaneseq
        %v296 = vshrl.u32 %v295, 7
        %v297 = vsub.s32 %v294, %v296
        %v298 = vrot.slane %v291, %v297
        %v299 = vcombine.high %v298, %v298
        %v301 = vunpack.c.l.s4 1966171168
        %v302 = vunpack.c.0.s8 %v301
        %v303 = vlaneseq
        %v304 = vshrl.u32 %v303, 7
        %v305 = vsub.s32 %v302, %v304
        %v306 = vrot.slane %v273, %v305
        %v308 = vunpack.c.l.s4 1966171168
        %v309 = vunpack.c.0.s8 %v308
        %v310 = vlaneseq
        %v311 = vshrl.u32 %v310, 7
        %v312 = vsub.s32 %v309, %v311
        %v313 = vrot.slane %v306, %v312
        %v315 = vunpack.c.l.s4 1966171168
        %v316 = vunpack.c.0.s8 %v315
        %v317 = vlaneseq
        %v318 = vshrl.u32 %v317, 7
        %v319 = vsub.s32 %v316, %v318
        %v320 = vrot.slane %v274, %v319
        %v321 = vcombine.high %v320, %v320
        %v323 = vunpack.c.l.s4 1966171168
        %v324 = vunpack.c.0.s8 %v323
        %v325 = vlaneseq
        %v326 = vshrl.u32 %v325, 7
        %v327 = vsub.s32 %v324, %v326
        %v328 = vrot.slane %v321, %v327
        %v329 = vcombine.high %v328, %v328
        %v331 = vunpack.c.l.s4 1966171168
        %v332 = vunpack.c.0.s8 %v331
        %v333 = vlaneseq
        %v334 = vshrl.u32 %v333, 7
        %v335 = vsub.s32 %v332, %v334
        %v336 = vrot.slane %v275, %v335
        %v338 = vunpack.c.l.s4 1966171168
        %v339 = vunpack.c.0.s8 %v338
        %v340 = vlaneseq
        %v341 = vshrl.u32 %v340, 7
        %v342 = vsub.s32 %v339, %v341
        %v343 = vrot.slane %v336, %v342
        %vm344 = vsmask.f32 256
        %vm345 = vsmask.f32 1284
        %vm346 = vmor %vm344, %vm345
        %vm347 = vsmask.f32 2312
        %vm348 = vmor %vm346, %vm347
        %vm349 = vsmask.f32 3340
        %vm350 = vmor %vm348, %vm349
        %vm351 = vsmask.f32 4368
        %vm352 = vmor %vm350, %vm351
        %vm353 = vsmask.f32 5396
        %vm354 = vmor %vm352, %vm353
        %vm355 = vsmask.f32 6424
        %vm356 = vmor %vm354, %vm355
        %vm357 = vsmask.f32 7452
        %vm358 = vmor %vm356, %vm357
        %v360 = vshrl.u32 %v299, 16
        %v362 = vrot.slane %v360, 7
        %v363 = vrot.slane %v362, 1
        %v365 = vshll.u32 %v313, 16
        %v367 = vsel %vm358, %v363, %v365
        %v369 = vshrl.u32 %v329, 16
        %v371 = vrot.slane %v369, 7
        %v372 = vrot.slane %v371, 1
        %v374 = vshll.u32 %v343, 16
        %v376 = vsel %vm358, %v372, %v374
        %v377 = vcombine.high %v306, %v306
        %v379 = vunpack.c.l.s4 1966171168
        %v380 = vunpack.c.0.s8 %v379
        %v381 = vlaneseq
        %v382 = vshrl.u32 %v381, 7
        %v383 = vsub.s32 %v380, %v382
        %v384 = vrot.slane %v377, %v383
        %v385 = vcombine.high %v336, %v336
        %v387 = vunpack.c.l.s4 1966171168
        %v388 = vunpack.c.0.s8 %v387
        %v389 = vlaneseq
        %v390 = vshrl.u32 %v389, 7
        %v391 = vsub.s32 %v388, %v390
        %v392 = vrot.slane %v385, %v391
        %v393 = vshrl.u32 %v313, 16
        %v395 = vrot.slane %v393, 7
        %v396 = vrot.slane %v395, 1
        %v398 = vshll.u32 %v384, 16
        %v400 = vsel %vm358, %v396, %v398
        %v401 = vshrl.u32 %v343, 16
        %v403 = vrot.slane %v401, 7
        %v404 = vrot.slane %v403, 1
        %v406 = vshll.u32 %v392, 16
        %v408 = vsel %vm358, %v404, %v406
        %v412 = vunpack.c.l.s4 1966171168
        %v413 = vunpack.c.0.s8 %v412
        %v414 = vlaneseq
        %v415 = vshrl.u32 %v414, 7
        %v416 = vsub.s32 %v413, %v415
        %v417 = vrot.slane %v276, %v416
        %v418 = vcombine.high %v417, %v417
        %v420 = vunpack.c.l.s4 1966171168
        %v421 = vunpack.c.0.s8 %v420
        %v422 = vlaneseq
        %v423 = vshrl.u32 %v422, 7
        %v424 = vsub.s32 %v421, %v423
        %v425 = vrot.slane %v418, %v424
        %v426 = vcombine.high %v425, %v425
        %v428 = vunpack.c.l.s4 1966171168
        %v429 = vunpack.c.0.s8 %v428
        %v430 = vlaneseq
        %v431 = vshrl.u32 %v430, 7
        %v432 = vsub.s32 %v429, %v431
        %v433 = vrot.slane %v277, %v432
        %v435 = vunpack.c.l.s4 1966171168
        %v436 = vunpack.c.0.s8 %v435
        %v437 = vlaneseq
        %v438 = vshrl.u32 %v437, 7
        %v439 = vsub.s32 %v436, %v438
        %v440 = vrot.slane %v433, %v439
        %v442 = vshrl.u32 %v426, 16
        %v444 = vrot.slane %v442, 7
        %v445 = vrot.slane %v444, 1
        %v447 = vshll.u32 %v440, 16
        %v449 = vsel %vm358, %v445, %v447
        %v450 = vcombine.high %v433, %v433
        %v452 = vunpack.c.l.s4 1966171168
        %v453 = vunpack.c.0.s8 %v452
        %v454 = vlaneseq
        %v455 = vshrl.u32 %v454, 7
        %v456 = vsub.s32 %v453, %v455
        %v457 = vrot.slane %v450, %v456
        %v458 = vshrl.u32 %v440, 16
        %v460 = vrot.slane %v458, 7
        %v461 = vrot.slane %v460, 1
        %v463 = vshll.u32 %v457, 16
        %v465 = vsel %vm358, %v461, %v463
        %v469 = vunpack.c.l.s4 1966171168
        %v470 = vunpack.c.0.s8 %v469
        %v471 = vlaneseq
        %v472 = vshrl.u32 %v471, 7
        %v473 = vsub.s32 %v470, %v472
        %v474 = vrot.slane %v278, %v473
        %v475 = vcombine.high %v474, %v474
        %v477 = vunpack.c.l.s4 1966171168
        %v478 = vunpack.c.0.s8 %v477
        %v479 = vlaneseq
        %v480 = vshrl.u32 %v479, 7
        %v481 = vsub.s32 %v478, %v480
        %v482 = vrot.slane %v475, %v481
        %v483 = vcombine.high %v482, %v482
        %v485 = vunpack.c.l.s4 1966171168
        %v486 = vunpack.c.0.s8 %v485
        %v487 = vlaneseq
        %v488 = vshrl.u32 %v487, 7
        %v489 = vsub.s32 %v486, %v488
        %v490 = vrot.slane %v279, %v489
        %v492 = vunpack.c.l.s4 1966171168
        %v493 = vunpack.c.0.s8 %v492
        %v494 = vlaneseq
        %v495 = vshrl.u32 %v494, 7
        %v496 = vsub.s32 %v493, %v495
        %v497 = vrot.slane %v490, %v496
        %v499 = vshrl.u32 %v483, 16
        %v501 = vrot.slane %v499, 7
        %v502 = vrot.slane %v501, 1
        %v504 = vshll.u32 %v497, 16
        %v506 = vsel %vm358, %v502, %v504
        %v507 = vcombine.high %v490, %v490
        %v509 = vunpack.c.l.s4 1966171168
        %v510 = vunpack.c.0.s8 %v509
        %v511 = vlaneseq
        %v512 = vshrl.u32 %v511, 7
        %v513 = vsub.s32 %v510, %v512
        %v514 = vrot.slane %v507, %v513
        %v515 = vshrl.u32 %v497, 16
        %v517 = vrot.slane %v515, 7
        %v518 = vrot.slane %v517, 1
        %v520 = vshll.u32 %v514, 16
        %v522 = vsel %vm358, %v518, %v520
        %v523 = vcombine.low %v367, %v376
        %v525 = vunpack.c.l.s4 1966171168
        %v526 = vunpack.c.0.s8 %v525
        %v527 = vlaneseq
        %v528 = vshrl.u32 %v527, 7
        %v529 = vsub.s32 %v526, %v528
        %v530 = vrot.slane %v523, %v529
        %v532 = vunpack.c.l.s4 1966171168
        %v533 = vunpack.c.0.s8 %v532
        %v534 = vlaneseq
        %v535 = vshrl.u32 %v534, 7
        %v536 = vsub.s32 %v533, %v535
        %v537 = vrot.slane %v530, %v536
        %v538 = vcombine.low %v273, %v275
        %v540 = vunpack.c.l.s4 1966171168
        %v541 = vunpack.c.0.s8 %v540
        %v542 = vlaneseq
        %v543 = vshrl.u32 %v542, 7
        %v544 = vsub.s32 %v541, %v543
        %v545 = vrot.slane %v538, %v544
        %v547 = vunpack.c.l.s4 1966171168
        %v548 = vunpack.c.0.s8 %v547
        %v549 = vlaneseq
        %v550 = vshrl.u32 %v549, 7
        %v551 = vsub.s32 %v548, %v550
        %v552 = vrot.slane %v545, %v551
        %553 = vrot.lane.b32.xlu0 %v552, 16
        %v554 = vpop.permute.xlu0 %553
        %v555 = vcombine.low %v400, %v408
        %v557 = vunpack.c.l.s4 1966171168
        %v558 = vunpack.c.0.s8 %v557
        %v559 = vlaneseq
        %v560 = vshrl.u32 %v559, 7
        %v561 = vsub.s32 %v558, %v560
        %v562 = vrot.slane %v555, %v561
        %v564 = vunpack.c.l.s4 1966171168
        %v565 = vunpack.c.0.s8 %v564
        %v566 = vlaneseq
        %v567 = vshrl.u32 %v566, 7
        %v568 = vsub.s32 %v565, %v567
        %v569 = vrot.slane %v562, %v568
        %570 = vrot.lane.b32.xlu0 %v569, 32
        %v571 = vpop.permute.xlu0 %570
        %v572 = vcombine.low %v376, %v449
        %v574 = vunpack.c.l.s4 1966171168
        %v575 = vunpack.c.0.s8 %v574
        %v576 = vlaneseq
        %v577 = vshrl.u32 %v576, 7
        %v578 = vsub.s32 %v575, %v577
        %v579 = vrot.slane %v572, %v578
        %v581 = vunpack.c.l.s4 1966171168
        %v582 = vunpack.c.0.s8 %v581
        %v583 = vlaneseq
        %v584 = vshrl.u32 %v583, 7
        %v585 = vsub.s32 %v582, %v584
        %v586 = vrot.slane %v579, %v585
        %587 = vrot.lane.b32.xlu0 %v586, 48
        %v588 = vpop.permute.xlu0 %587
        %v589 = vcombine.low %v275, %v277
        %v591 = vunpack.c.l.s4 1966171168
        %v592 = vunpack.c.0.s8 %v591
        %v593 = vlaneseq
        %v594 = vshrl.u32 %v593, 7
        %v595 = vsub.s32 %v592, %v594
        %v596 = vrot.slane %v589, %v595
        %v598 = vunpack.c.l.s4 1966171168
        %v599 = vunpack.c.0.s8 %v598
        %v600 = vlaneseq
        %v601 = vshrl.u32 %v600, 7
        %v602 = vsub.s32 %v599, %v601
        %v603 = vrot.slane %v596, %v602
        %604 = vrot.lane.b32.xlu0 %v603, 64
        %v605 = vpop.permute.xlu0 %604
        %v606 = vcombine.low %v408, %v465
        %v608 = vunpack.c.l.s4 1966171168
        %v609 = vunpack.c.0.s8 %v608
        %v610 = vlaneseq
        %v611 = vshrl.u32 %v610, 7
        %v612 = vsub.s32 %v609, %v611
        %v613 = vrot.slane %v606, %v612
        %v615 = vunpack.c.l.s4 1966171168
        %v616 = vunpack.c.0.s8 %v615
        %v617 = vlaneseq
        %v618 = vshrl.u32 %v617, 7
        %v619 = vsub.s32 %v616, %v618
        %v620 = vrot.slane %v613, %v619
        %621 = vrot.lane.b32.xlu0 %v620, 80
        %v622 = vpop.permute.xlu0 %621
        %v623 = vcombine.low %v449, %v506
        %v625 = vunpack.c.l.s4 1966171168
        %v626 = vunpack.c.0.s8 %v625
        %v627 = vlaneseq
        %v628 = vshrl.u32 %v627, 7
        %v629 = vsub.s32 %v626, %v628
        %v630 = vrot.slane %v623, %v629
        %v632 = vunpack.c.l.s4 1966171168
        %v633 = vunpack.c.0.s8 %v632
        %v634 = vlaneseq
        %v635 = vshrl.u32 %v634, 7
        %v636 = vsub.s32 %v633, %v635
        %v637 = vrot.slane %v630, %v636
        %638 = vrot.lane.b32.xlu0 %v637, 96
        %v639 = vpop.permute.xlu0 %638
        %v640 = vcombine.low %v277, %v279
        %v642 = vunpack.c.l.s4 1966171168
        %v643 = vunpack.c.0.s8 %v642
        %v644 = vlaneseq
        %v645 = vshrl.u32 %v644, 7
        %v646 = vsub.s32 %v643, %v645
        %v647 = vrot.slane %v640, %v646
        %v649 = vunpack.c.l.s4 1966171168
        %v650 = vunpack.c.0.s8 %v649
        %v651 = vlaneseq
        %v652 = vshrl.u32 %v651, 7
        %v653 = vsub.s32 %v650, %v652
        %v654 = vrot.slane %v647, %v653
        %655 = vrot.lane.b32.xlu0 %v654, 112
        %v656 = vpop.permute.xlu0 %655
        %v657 = vcombine.low %v465, %v522
        %v659 = vunpack.c.l.s4 1966171168
        %v660 = vunpack.c.0.s8 %v659
        %v661 = vlaneseq
        %v662 = vshrl.u32 %v661, 7
        %v663 = vsub.s32 %v660, %v662
        %v664 = vrot.slane %v657, %v663
        %v666 = vunpack.c.l.s4 1966171168
        %v667 = vunpack.c.0.s8 %v666
        %v668 = vlaneseq
        %v669 = vshrl.u32 %v668, 7
        %v670 = vsub.s32 %v667, %v669
        %v671 = vrot.slane %v664, %v670
        %vm672 = vcmask 130048
        %v675 = vsel %vm672, %v537, %v554
        %vm676 = vcmask 261120
        %v678 = vsel %vm676, %v675, %v571
        %vm679 = vcmask 392192
        %v681 = vsel %vm679, %v678, %v588
        %vm682 = vcmask 523264
        %v684 = vsel %vm682, %v681, %v605
        %vm685 = vcmask 654336
        %v687 = vsel %vm685, %v684, %v622
        %vm688 = vcmask 785408
        %v690 = vsel %vm688, %v687, %v639
        %vm691 = vcmask 916480
        %v693 = vsel %vm691, %v690, %v656
        %v695 = vld [vmem:[%s1] sm:$0xf]
        %v696 = vld [vmem:[%s1 + $0x4] sm:$0xf]
        %v697 = vld [vmem:[%s1 + $0x8] sm:$0xf]
        %v698 = vld [vmem:[%s1 + $0xc] sm:$0xf]
        %v699 = vld [vmem:[%s1 + $0x10] sm:$0xf]
        %v700 = vld [vmem:[%s1 + $0x14] sm:$0xf]
        %v701 = vld [vmem:[%s1 + $0x18] sm:$0xf]
        %v702 = vld [vmem:[%s1 + $0x1c] sm:$0xf]
        %v703 = vld [vmem:[%s1 + $0x20] sm:$0xf]
        %v704 = vld [vmem:[%s1 + $0x24] sm:$0xf]
        %v705 = vld [vmem:[%s1 + $0x28] sm:$0xf]
        %v706 = vld [vmem:[%s1 + $0x2c] sm:$0xf]
        %v707 = vld [vmem:[%s1 + $0x30] sm:$0xf]
        %v708 = vld [vmem:[%s1 + $0x34] sm:$0xf]
        %v709 = vld [vmem:[%s1 + $0x38] sm:$0xf]
        %v710 = vld [vmem:[%s1 + $0x3c] sm:$0xf]
        %v711 = vld [vmem:[%s1 + $0x40] sm:$0xf]
        %v712 = vld [vmem:[%s1 + $0x44] sm:$0xf]
        %v731 = vunpack.c.l.b16 %v695
        %v732 = vunpack.c.l.b16 %v696
        %v733 = vunpack.c.l.b16 %v697
        %v734 = vunpack.c.l.b16 %v698
        %v735 = vunpack.c.l.b16 %v699
        %v736 = vunpack.c.l.b16 %v700
        %v737 = vunpack.c.l.b16 %v701
        %v738 = vunpack.c.l.b16 %v702
        %v739 = vunpack.c.l.b16 %v703
        %v740 = vunpack.c.l.b16 %v704
        %v741 = vunpack.c.l.b16 %v705
        %v742 = vunpack.c.l.b16 %v706
        %v743 = vunpack.c.l.b16 %v707
        %v744 = vunpack.c.l.b16 %v708
        %v745 = vunpack.c.l.b16 %v709
        %v746 = vunpack.c.l.b16 %v710
        %v747 = vunpack.c.l.b16 %v711
        %v748 = vunpack.c.l.b16 %v712
        %v749 = vpack.c.b16 %v732, %v731
        %v750 = vpack.c.b16 %v734, %v733
        %v751 = vpack.c.b16 %v736, %v735
        %v752 = vpack.c.b16 %v738, %v737
        %v753 = vpack.c.b16 %v740, %v739
        %v754 = vpack.c.b16 %v742, %v741
        %v755 = vpack.c.b16 %v744, %v743
        %v756 = vpack.c.b16 %v746, %v745
        %v757 = vpack.c.b16 %v748, %v747
        %v768 = vsel %vm672, %v671, 0
        %770 = vmatprep.subr.bf16.mxu0 0
        %771 = vmatpush1.bf16.msra.mxu0 %v749
        %772 = vmatprep.subr.bf16.mxu0 0
        %773 = vmatpush1.bf16.msra.mxu0 %v750
        %774 = vmatprep.subr.bf16.mxu0 0
        %775 = vmatpush1.bf16.msra.mxu0 %v751
        %776 = vmatprep.subr.bf16.mxu0 0
        %777 = vmatpush1.bf16.msra.mxu0 %v752
        %778 = vmatprep.subr.bf16.mxu0 0
        %779 = vmatpush1.bf16.msra.mxu0 %v753
        %780 = vmatprep.subr.bf16.mxu0 0
        %781 = vmatpush1.bf16.msra.mxu0 %v754
        %782 = vmatprep.subr.bf16.mxu0 0
        %783 = vmatpush1.bf16.msra.mxu0 %v755
        %784 = vmatprep.subr.bf16.mxu0 0
        %785 = vmatpush1.bf16.msra.mxu0 %v756
        %786 = vmatprep.subr.bf16.mxu0 0
        %787 = vmatpush1.bf16.msra.mxu0 %v757
        %788 = vmatprep.subr.bf16.mxu0 0
        %789 = vmatpush1.bf16.msra.mxu0 0
        %790 = vmatprep.subr.bf16.mxu0 0
        %791 = vmatpush1.bf16.msra.mxu0 0
        %792 = vmatprep.subr.bf16.mxu0 0
        %793 = vmatpush1.bf16.msra.mxu0 0
        %794 = vmatprep.subr.bf16.mxu0 0
        %795 = vmatpush1.bf16.msra.mxu0 0
        %796 = vmatprep.subr.bf16.mxu0 0
        %797 = vmatpush1.bf16.msra.mxu0 0
        %798 = vmatprep.subr.bf16.mxu0 0
        %799 = vmatpush1.bf16.msra.mxu0 0
        %800 = vmatprep.subr.bf16.mxu0 0
        %801 = vmatpush1.bf16.msra.mxu0 0
        %802 = vmatprep.mubr.bf16.mxu0 %v768
        %803 = vmatmul.mubr.bf16.gmra.mrb[0].mxu0 %v693
        %v804 = vpop.f32.mrb[0].mxu0
        %v805 = vadd.f32 0.0, %v804
        %v806 = vpop.f32.mrb[0].mxu0
        %v807 = vpop.f32.mrb[0].mxu0
        %v808 = vpop.f32.mrb[0].mxu0
        %809 = vdwg.mxu0
        %s810 = smul.u32 %s20, 4
        %s811 = scalar_lea.vmem [#allocation3], %s810
        %vm812 = vcmask 125952
        %813 = vst.msk [vmem:[%s811] sm:$0xf] %vm812, %v805
        %v814 = vld [vmem:[#allocation4] sm:$0x1]
        %v815 = vsel %vm812, %v805, 0.0
        %v816 = vrot.slane %v815, 4
        %v817 = vadd.f32 %v815, %v816
        %v818 = vrot.slane %v817, 2
        %v819 = vadd.f32 %v817, %v818
        %v820 = vrot.slane %v819, 1
        %v821 = vadd.f32 %v819, %v820
        %v822 = vadd.f32 %v814, %v821
        %823 = vst.msk [vmem:[#allocation4] sm:$0x1] %vm269, %v822
      $region40: #{unet_encoder.7} parent=35 // pred_fallthru
        _
      %p824 = scmp.eq.s32.totalorder %s19, 1
      // Predicated region
      $region45: #{unet_encoder.7} parent=35 // pred_check
        %p825 = pneg %p824
      $region46: #{unet_encoder.7} parent=35 // pred_check_branch
        %827 = sbr.rel (%p825) target = $region48
      $region47: #{unet_encoder.7} parent=35 // pred_region
        %p828 = scmp.eq.s32.totalorder %s20, 0
        // Predicated region
        $region49: #{unet_encoder.7} parent=47 // pred_check
          %p829 = pneg %p828
        $region50: #{unet_encoder.7} parent=47 // pred_check_branch
          %831 = sbr.rel (%p829) target = $region52
        $region51: #{unet_encoder.7} parent=47 // pred_region
          %v832 = vld [vmem:[#allocation4] sm:$0x1]
          %v833 = vmul.f32 %v832, 0.125
          %v834 = vld [vmem:[#allocation3] sm:$0xf]
          %v835 = vld [vmem:[#allocation3 + $0x4] sm:$0xf]
          %v837 = vlaneseq
          %v838 = vshrl.u32 %v837, 7
          %v839 = vsub.s32 0, %v838
          %v840 = vrot.slane %v833, %v839
          %v842 = vsub.f32 %v834, %v840
          %v843 = vsub.f32 %v835, %v840
          %v844 = vmul.f32 %v842, %v842
          %v845 = vmul.f32 %v843, %v843
          %vm846 = vcmask 125952
          %v847 = vsel %vm846, %v844, 0.0
          %v848 = vsel %vm846, %v845, 0.0
          %v849 = vadd.f32 %v847, %v848
          %v850 = vsel %vm846, %v849, 0.0
          %v851 = vrot.slane %v850, 4
          %v852 = vadd.f32 %v850, %v851
          %v853 = vrot.slane %v852, 2
          %v854 = vadd.f32 %v852, %v853
          %v855 = vrot.slane %v854, 1
          %v856 = vadd.f32 %v854, %v855
          %v857 = vmul.f32 %v856, 0.125
          %v858 = vmax.f32 %v857, 0.0
          %v859 = vadd.f32 %v858, 1e-05
          %v860 = vrsqrt.pop %v859
          %v861 = vld [vmem:[%s2] sm:$0x1]
          %v862 = vmul.f32 %v861, %v860
          %vm863 = vcmask 122880
          %864 = vst.msk [vmem:[#allocation5] sm:$0x1] %vm863, %v862
          %v865 = vld [vmem:[%s3] sm:$0x1]
          %v866 = vmul.f32 %v833, %v862
          %v867 = vsub.f32 %v865, %v866
          %868 = vst.msk [vmem:[#allocation6] sm:$0x1] %vm863, %v867
        $region52: #{unet_encoder.7} parent=47 // pred_fallthru
          _
        %s869 = smul.u32 %s20, 4
        %s870 = scalar_lea.vmem [#allocation3], %s869
        %v871 = vld [vmem:[%s870] sm:$0xf]
        %v872 = vld [vmem:[#allocation5] sm:$0x1]
        %v874 = vlaneseq
        %v875 = vshrl.u32 %v874, 7
        %v876 = vsub.s32 0, %v875
        %v877 = vrot.slane %v872, %v876
        %v879 = vmul.f32 %v871, %v877
        %v880 = vld [vmem:[#allocation6] sm:$0x1]
        %v882 = vlaneseq
        %v883 = vshrl.u32 %v882, 7
        %v884 = vsub.s32 0, %v883
        %v885 = vrot.slane %v880, %v884
        %v887 = vadd.f32 %v879, %v885
        %v888 = vmax.f32 %v887, 0.0
        %v891 = vunpack.c.l.s4 1983009808
        %v892 = vunpack.c.0.s8 %v891
        %v893 = vlaneseq
        %v894 = vshrl.u32 %v893, 7
        %v895 = vsub.s32 %v892, %v894
        %v896 = vrot.slane %v888, %v895
        %v897 = vcombine.high %v896, %v896
        %v900 = vpack.c.bf16 %v896, %v896
        %v901 = vpack.c.bf16 %v897, %v897
        %vm902 = vcmask 122880
        %903 = vst.msk [vmem:[%s229] sm:$0x1] %vm902, %v900
        %904 = vst.msk [vmem:[%s229 + $0x1] sm:$0x1] %vm902, %v901
      $region48: #{unet_encoder.7} parent=35 // pred_fallthru
        _
      %s905 = smul.u32 %s19, %s20
      %p906 = scmp.lt.s32.totalorder %s905, 1
      %s907 = scalar_select %p906, %s905, 1
      %s908 = smul.addr %s907, 2
      %s909 = scalar_lea.vmem %s4, %s908
      // Predicated region
      $region53: #{unet_encoder.7} parent=35 // pred_check
        %p910 = pneg %p142
      $region54: #{unet_encoder.7} parent=35 // pred_check_branch
        %912 = sbr.rel (%p910) target = $region56
      $region55: #{unet_encoder.7} parent=35 // pred_region
        %s913 = smul.u32 %s19, %s20
      $region56: #{unet_encoder.7} parent=35 // pred_fallthru
        _
    $region36: #{unet_encoder.7} parent=5 // pred_fallthru
      _
    %p914 = scmp.le.s32.totalorder 2, %s10
    // Predicated region
    $region57: #{unet_encoder.7} parent=5 // pred_check
      %p915 = pneg %p914
    $region58: #{unet_encoder.7} parent=5 // pred_check_branch
      %917 = sbr.rel (%p915) target = $region60
    $region59: #{unet_encoder.7} parent=5 // pred_region
      %s918 = ssub.s32 %s10, 2
      // Predicated region
      $region61: #{unet_encoder.7} parent=59 // pred_check
        %p919 = pneg %p148
      $region62: #{unet_encoder.7} parent=59 // pred_check_branch
        %921 = sbr.rel (%p919) target = $region64
      $region63: #{unet_encoder.7} parent=59 // pred_region
        %s922 = smul.u32 %s21, %s22
        %p923 = scmp.lt.s32.totalorder %s922, 1
        %s924 = scalar_select %p923, %s922, 1
        %s925 = smul.addr %s924, 2
        %s926 = scalar_lea.vmem %s4, %s925
      $region64: #{unet_encoder.7} parent=59 // pred_fallthru
        _
    $region60: #{unet_encoder.7} parent=5 // pred_fallthru
      _
  $region6: #{unet_encoder.7} parent=0 // loop_footer
    %s14 = sadd.s32 1, %s10
  $region7: #{unet_encoder.7} parent=0 // loop_footer_branch
    %9 = sbr.rel target = $region3
  $region8: #{unet_encoder.7} parent=0 // loop_exit
    _

// kernel: unet_encoder.5
$region0: #{unet_encoder.5}
  #allocation0 [shape = 'u32[]', space=smem, size = 0x4, offset = 0x4, fixed_abs, tag = 'smem constant byte address 0x4 - core index']
  #allocation1 [shape = 'u32[144,128]{1,0:T(1,128)}', space=vmem, size = 0x12000, scoped, tag = 'internal scratch']
  #allocation2 [shape = 'bf16[10,25,4]{2,1,0:T(8,128)(2,1)}', space=vmem, size = 0x14000, scoped, tag = 'scratch operand']
  #allocation3 [shape = 'f32[2,64,8]{2,1,0:T(8,128)}', space=vmem, size = 0x10000, scoped, tag = 'scratch operand']
  #allocation4 [shape = 'f32[1,8]{1,0:T(1,128)}', space=vmem, size = 0x200, scoped, tag = 'scratch operand']
  #allocation5 [shape = 'f32[1,8]{1,0:T(1,128)}', space=vmem, size = 0x200, scoped, tag = 'scratch operand']
  #allocation6 [shape = 'f32[1,8]{1,0:T(1,128)}', space=vmem, size = 0x200, scoped, tag = 'scratch operand']
  %s0 = inlined_call_operand.vmem [shape: bf16[2,8,8,4], index: 0, kind: input, shape index: {}]
  %s1 = inlined_call_operand.vmem [shape: bf16[36,8], index: 1, kind: input, shape index: {}]
  %s2 = inlined_call_operand.vmem [shape: f32[1,8], index: 2, kind: input, shape index: {}]
  %s3 = inlined_call_operand.vmem [shape: f32[1,8], index: 3, kind: input, shape index: {}]
  %s4 = inlined_call_operand.vmem [shape: bf16[2,4,4,8], index: 4, kind: output, shape index: {}]
  %s5 = sld [smem:[#allocation0]]
  $region65: #{unet_encoder.5} parent=0
    _
  %s7 = ssub.s32 1, %s5
  %s8 = scalar_select 0, %s7, %s5
  loop: start=0, step=1, limit=6
  $region2: #{unet_encoder.5} parent=0 // loop_pre_header
    _
  $region3: #{unet_encoder.5} parent=0 // loop_header
    %s10 = sphi 0, %s14
    %p11 = scmp.ge.s32.totalorder %s10, 6
    %s17 = sphi 0, %s29
    %s18 = sphi 0, %s25
    %s19 = sphi 0, %s17
    %s20 = sphi 0, %s18
    %s21 = sphi 0, %s19
    %s22 = sphi 0, %s20
    %s38 = sphi 0, %s40
    %s41 = sphi 0, %s38
    %s42 = sphi 0, %s41
    %s58 = sphi 0, %s42
    %s62 = sphi 0, %s62
    %s64 = sphi 0, %s62
    %s65 = sphi 0, %s64
    %s79 = sphi 0, %s65
    %s83 = sphi 0, %s83
    %s85 = sphi 0, %s83
    %s86 = sphi 0, %s85
    %s100 = sphi 0, %s86
    %s104 = sphi 0, %s104
    %s106 = sphi 0, %s104
    %s107 = sphi 0, %s106
    %s121 = sphi 0, %s107
    %s129 = sphi 0, %s131
    %s132 = sphi 0, %s129
    %s133 = sphi 0, %s132
    %s149 = sphi 0, %s133
  $region4: #{unet_encoder.5} parent=0 // loop_header_branch
    %13 = sbr.rel (%p11) target = $region8
  $region5: #{unet_encoder.5} parent=0 // loop_body
    %s15 = ssub.s32 %s10, 1
    %s16 = ssub.s32 %s10, 2
    %s23 = sadd.s32 1, %s18
    %p24 = scmp.ge.s32.totalorder %s23, 2
    %s25 = scalar_select %p24, 0, %s23
    %s26 = sadd.s32 1, %s17
    %s27 = scalar_select %p24, %s26, %s17
    %p28 = scmp.ge.s32.totalorder %s27, 2
    %s29 = scalar_select %p28, 0, %s27
    %s30 = ssub.s32 1, %s17
    %s31 = smul.u32 %s18, %s30
    %s32 = sadd.s32 %s31, %s17
    %s33 = ssub.s32 1, %s29
    %s34 = smul.u32 %s25, %s33
    %s35 = sadd.s32 %s34, %s29
    %s36 = ssub.s32 %s32, %s35
    %p37 = scmp.eq.s32.totalorder %s36, 0
    %s39 = sadd.s32 %s38, 1
    %s40 = scalar_select %p37, %s38, %s39
    %p43 = pneg %p37
    %p44 = scmp.eq.s32.totalorder %s10, 3
    %p45 = por %p43, %p44
    %p46 = scmp.ne.s32.totalorder %s38, %s41
    %p47 = scmp.eq.s32.totalorder %s10, 0
    %p48 = por %p46, %p47
    %p49 = scmp.ne.s32.totalorder %s38, %s41
    %p50 = scmp.eq.s32.totalorder %s15, 3
    %p51 = por %p49, %p50
    %p52 = scmp.ne.s32.totalorder %s41, %s42
    %p53 = scmp.eq.s32.totalorder %s15, 0
    %p54 = por %p52, %p53
    %p55 = scmp.ne.s32.totalorder %s41, %s42
    %p56 = scmp.eq.s32.totalorder %s16, 3
    %p57 = por %p55, %p56
    %p59 = scmp.ne.s32.totalorder %s42, %s58
    %p60 = scmp.eq.s32.totalorder %s16, 0
    %p61 = por %p59, %p60
    %s63 = sadd.s32 %s62, 1
    %p66 = scmp.eq.s32.totalorder %s10, 3
    %p67 = scmp.ne.s32.totalorder %s62, %s64
    %p68 = scmp.eq.s32.totalorder %s10, 0
    %p69 = por %p67, %p68
    %p70 = scmp.ne.s32.totalorder %s62, %s64
    %p71 = scmp.eq.s32.totalorder %s15, 3
    %p72 = por %p70, %p71
    %p73 = scmp.ne.s32.totalorder %s64, %s65
    %p74 = scmp.eq.s32.totalorder %s15, 0
    %p75 = por %p73, %p74
    %p76 = scmp.ne.s32.totalorder %s64, %s65
    %p77 = scmp.eq.s32.totalorder %s16, 3
    %p78 = por %p76, %p77
    %p80 = scmp.ne.s32.totalorder %s65, %s79
    %p81 = scmp.eq.s32.totalorder %s16, 0
    %p82 = por %p80, %p81
    %s84 = sadd.s32 %s83, 1
    %p87 = scmp.eq.s32.totalorder %s10, 3
    %p88 = scmp.ne.s32.totalorder %s83, %s85
    %p89 = scmp.eq.s32.totalorder %s10, 0
    %p90 = por %p88, %p89
    %p91 = scmp.ne.s32.totalorder %s83, %s85
    %p92 = scmp.eq.s32.totalorder %s15, 3
    %p93 = por %p91, %p92
    %p94 = scmp.ne.s32.totalorder %s85, %s86
    %p95 = scmp.eq.s32.totalorder %s15, 0
    %p96 = por %p94, %p95
    %p97 = scmp.ne.s32.totalorder %s85, %s86
    %p98 = scmp.eq.s32.totalorder %s16, 3
    %p99 = por %p97, %p98
    %p101 = scmp.ne.s32.totalorder %s86, %s100
    %p102 = scmp.eq.s32.totalorder %s16, 0
    %p103 = por %p101, %p102
    %s105 = sadd.s32 %s104, 1
    %p108 = scmp.eq.s32.totalorder %s10, 3
    %p109 = scmp.ne.s32.totalorder %s104, %s106
    %p110 = scmp.eq.s32.totalorder %s10, 0
    %p111 = por %p109, %p110
    %p112 = scmp.ne.s32.totalorder %s104, %s106
    %p113 = scmp.eq.s32.totalorder %s15, 3
    %p114 = por %p112, %p113
    %p115 = scmp.ne.s32.totalorder %s106, %s107
    %p116 = scmp.eq.s32.totalorder %s15, 0
    %p117 = por %p115, %p116
    %p118 = scmp.ne.s32.totalorder %s106, %s107
    %p119 = scmp.eq.s32.totalorder %s16, 3
    %p120 = por %p118, %p119
    %p122 = scmp.ne.s32.totalorder %s107, %s121
    %p123 = scmp.eq.s32.totalorder %s16, 0
    %p124 = por %p122, %p123
    %s125 = smul.u32 %s17, %s18
    %s126 = smul.u32 %s29, %s25
    %s127 = ssub.s32 %s125, %s126
    %p128 = scmp.eq.s32.totalorder %s127, 0
    %s130 = sadd.s32 %s129, 1
    %s131 = scalar_select %p128, %s129, %s130
    %p134 = pneg %p128
    %p135 = scmp.eq.s32.totalorder %s10, 3
    %p136 = por %p134, %p135
    %p137 = scmp.ne.s32.totalorder %s129, %s132
    %p138 = scmp.eq.s32.totalorder %s10, 0
    %p139 = por %p137, %p138
    %p140 = scmp.ne.s32.totalorder %s129, %s132
    %p141 = scmp.eq.s32.totalorder %s15, 3
    %p142 = por %p140, %p141
    %p143 = scmp.ne.s32.totalorder %s132, %s133
    %p144 = scmp.eq.s32.totalorder %s15, 0
    %p145 = por %p143, %p144
    %p146 = scmp.ne.s32.totalorder %s132, %s133
    %p147 = scmp.eq.s32.totalorder %s16, 3
    %p148 = por %p146, %p147
    %p150 = scmp.ne.s32.totalorder %s133, %s149
    %p151 = scmp.eq.s32.totalorder %s16, 0
    %p152 = por %p150, %p151
    %p153 = scmp.le.s32.totalorder 1, %s10
    %p154 = scmp.lt.s32.totalorder %s10, 5
    %p155 = pnand %p153, %p154
    %p156 = pneg %p155
    // Predicated region
    $region9: #{unet_encoder.5} parent=5 // pred_check
      _
    $region10: #{unet_encoder.5} parent=5 // pred_check_branch
      %158 = sbr.rel (%p155) target = $region12
    $region11: #{unet_encoder.5} parent=5 // pred_region
      %s159 = ssub.s32 %s10, 1
      // Predicated region
      $region13: #{unet_encoder.5} parent=11 // pred_check
        %p160 = pneg %p75
      $region14: #{unet_encoder.5} parent=11 // pred_check_branch
        %162 = sbr.rel (%p160) target = $region16
      $region15: #{unet_encoder.5} parent=11 // pred_region
        _
      $region16: #{unet_encoder.5} parent=11 // pred_fallthru
        _
      // Predicated region
      $region17: #{unet_encoder.5} parent=11 // pred_check
        %p163 = pneg %p96
      $region18: #{unet_encoder.5} parent=11 // pred_check_branch
        %165 = sbr.rel (%p163) target = $region20
      $region19: #{unet_encoder.5} parent=11 // pred_region
        _
      $region20: #{unet_encoder.5} parent=11 // pred_fallthru
        _
      // Predicated region
      $region21: #{unet_encoder.5} parent=11 // pred_check
        %p166 = pneg %p117
      $region22: #{unet_encoder.5} parent=11 // pred_check_branch
        %168 = sbr.rel (%p166) target = $region24
      $region23: #{unet_encoder.5} parent=11 // pred_region
        _
      $region24: #{unet_encoder.5} parent=11 // pred_fallthru
        _
    $region12: #{unet_encoder.5} parent=5 // pred_fallthru
      _
    %p169 = scmp.lt.s32.totalorder %s10, 4
    // Predicated region
    $region25: #{unet_encoder.5} parent=5 // pred_check
      %p170 = pneg %p169
    $region26: #{unet_encoder.5} parent=5 // pred_check_branch
      %172 = sbr.rel (%p170) target = $region28
    $region27: #{unet_encoder.5} parent=5 // pred_region
      // Predicated region
      $region29: #{unet_encoder.5} parent=27 // pred_check
        %p173 = pneg %p48
      $region30: #{unet_encoder.5} parent=27 // pred_check_branch
        %175 = sbr.rel (%p173) target = $region32
      $region31: #{unet_encoder.5} parent=27 // pred_region
        %s176 = ssub.s32 1, %s17
        %s177 = smul.u32 %s18, %s176
        %s178 = sadd.s32 %s177, %s17
        %p179 = scmp.lt.s32.totalorder %s178, 1
        %s180 = scalar_select %p179, %s178, 1
        %s181 = smul.addr %s180, 8
        %s182 = smul.addr %s181, 4
        %s183 = scalar_lea.vmem %s0, %s182
        %s184 = ssub.s32 1, %s17
        %s185 = smul.u32 %s18, %s184
        %s186 = sadd.s32 %s185, %s17
      $region32: #{unet_encoder.5} parent=27 // pred_fallthru
        _
    $region28: #{unet_encoder.5} parent=5 // pred_fallthru
      _
    %p187 = scmp.le.s32.totalorder 1, %s10
    %p188 = scmp.lt.s32.totalorder %s10, 5
    %p189 = pnand %p187, %p188
    %p190 = pneg %p189
    // Predicated region
    $region33: #{unet_encoder.5} parent=5 // pred_check
      _
    $region34: #{unet_encoder.5} parent=5 // pred_check_branch
      %192 = sbr.rel (%p189) target = $region36
    $region35: #{unet_encoder.5} parent=5 // pred_region
      %s193 = ssub.s32 %s10, 1
      %s194 = ssub.s32 1, %s19
      %s195 = smul.u32 %s20, %s194
      %s196 = sadd.s32 %s195, %s19
      %p197 = scmp.lt.s32.totalorder %s196, 1
      %s198 = scalar_select %p197, %s196, 1
      %s199 = smul.addr %s198, 8
      %s200 = smul.addr %s199, 4
      %s201 = scalar_lea.vmem %s0, %s200
      %p202 = pneg %p54
      %p203 = pneg %p51
      %p204 = pneg %p75
      %p205 = pneg %p72
      %p206 = pneg %p96
      %p207 = pneg %p93
      %p208 = pneg %p117
      %p209 = pneg %p114
      %p210 = pneg %p145
      %p211 = pneg %p142
      %s212 = smul.u32 %s19, %s20
      %p213 = scmp.lt.s32.totalorder %s212, 1
      %s214 = scalar_select %p213, %s212, 1
      %s215 = smul.addr %s214, 4
      %s216 = smul.addr %s215, 2
      %s217 = scalar_lea.vmem %s4, %s216
      %s218 = ssub.s32 1, %s19
      %s219 = smul.u32 %s20, %s218
      %s220 = sadd.s32 %s219, %s19
      %p221 = scmp.lt.s32.totalorder %s220, 1
      %s222 = scalar_select %p221, %s220, 1
      %s223 = smul.addr %s222, 8
      %s224 = smul.addr %s223, 4
      %s225 = scalar_lea.vmem %s0, %s224
      %s226 = ssub.s32 1, %s19
      %s227 = smul.u32 %s20, %s226
      %s228 = sadd.s32 %s227, %s19
      %s229 = smul.u32 %s19, %s20
      %p230 = scmp.lt.s32.totalorder %s229, 1
      %s231 = scalar_select %p230, %s229, 1
      %s232 = smul.addr %s231, 4
      %s233 = smul.addr %s232, 2
      %s234 = scalar_lea.vmem %s4, %s233
      %s235 = smul.u32 %s19, %s20
      %p237 = scmp.eq.s32.totalorder %s19, 0
      // Predicated region
      $region37: #{unet_encoder.5} parent=35 // pred_check
        %p238 = pneg %p237
      $region38: #{unet_encoder.5} parent=35 // pred_check_branch
        %240 = sbr.rel (%p238) target = $region40
      $region39: #{unet_encoder.5} parent=35 // pred_region
        %p241 = scmp.eq.s32.totalorder %s20, 0
        // Predicated region
        $region41: #{unet_encoder.5} parent=39 // pred_check
          %p242 = pneg %p241
        $region42: #{unet_encoder.5} parent=39 // pred_check_branch
          %244 = sbr.rel (%p242) target = $region44
        $region43: #{unet_encoder.5} parent=39 // pred_region
          %vm245 = vcmask 27648
          %246 = vst.msk [vmem:[#allocation2] sm:$0xf] %vm245, 0
          %247 = vst.msk [vmem:[#allocation2 + $0x4] sm:$0xf] %vm245, 0
          %248 = vst.msk [vmem:[#allocation2 + $0x8] sm:$0xf] %vm245, 0
          %vm249 = vcmask 24576
          %vm250 = vsmask.f32 256
          %vm251 = vmand %vm249, %vm250
          %v252 = vld [vmem:[#allocation2 + $0xc] sm:$0x1]
          %v253 = vsel %vm251, 0, %v252
          %254 = vst [vmem:[#allocation2 + $0xc] sm:$0x1] %v253
          %255 = vst.msk [vmem:[#allocation2 + $0x10] sm:$0xf] %vm245, 0
          %256 = vst.msk [vmem:[#allocation2 + $0x14] sm:$0xf] %vm245, 0
          %257 = vst.msk [vmem:[#allocation2 + $0x18] sm:$0xf] %vm245, 0
          %v258 = vld [vmem:[#allocation2 + $0x1c] sm:$0x1]
          %v259 = vsel %vm251, 0, %v258
          %260 = vst [vmem:[#allocation2 + $0x1c] sm:$0x1] %v259
          %261 = vst.msk [vmem:[#allocation2 + $0x20] sm:$0xf] %vm245, 0
          %262 = vst.msk [vmem:[#allocation2 + $0x24] sm:$0xf] %vm245, 0
          %263 = vst.msk [vmem:[#allocation2 + $0x28] sm:$0xf] %vm245, 0
          %v264 = vld [vmem:[#allocation2 + $0x2c] sm:$0x1]
          %v265 = vsel %vm251, 0, %v264
          %266 = vst [vmem:[#allocation2 + $0x2c] sm:$0x1] %v265
          %267 = vst.msk [vmem:[#allocation2 + $0x30] sm:$0xf] %vm245, 0
          %268 = vst.msk [vmem:[#allocation2 + $0x34] sm:$0xf] %vm245, 0
          %269 = vst.msk [vmem:[#allocation2 + $0x38] sm:$0xf] %vm245, 0
          %v270 = vld [vmem:[#allocation2 + $0x3c] sm:$0x1]
          %v271 = vsel %vm251, 0, %v270
          %272 = vst [vmem:[#allocation2 + $0x3c] sm:$0x1] %v271
          %273 = vst.msk [vmem:[#allocation2 + $0x40] sm:$0xf] %vm245, 0
          %274 = vst.msk [vmem:[#allocation2 + $0x44] sm:$0xf] %vm245, 0
          %275 = vst.msk [vmem:[#allocation2 + $0x48] sm:$0xf] %vm245, 0
          %v276 = vld [vmem:[#allocation2 + $0x4c] sm:$0x1]
          %v277 = vsel %vm251, 0, %v276
          %278 = vst [vmem:[#allocation2 + $0x4c] sm:$0x1] %v277
          %279 = vst.msk [vmem:[#allocation2 + $0x50] sm:$0xf] %vm245, 0
          %280 = vst.msk [vmem:[#allocation2 + $0x54] sm:$0xf] %vm245, 0
          %281 = vst.msk [vmem:[#allocation2 + $0x58] sm:$0xf] %vm245, 0
          %v282 = vld [vmem:[#allocation2 + $0x5c] sm:$0x1]
          %v283 = vsel %vm251, 0, %v282
          %284 = vst [vmem:[#allocation2 + $0x5c] sm:$0x1] %v283
          %285 = vst.msk [vmem:[#allocation2 + $0x60] sm:$0xf] %vm245, 0
          %286 = vst.msk [vmem:[#allocation2 + $0x64] sm:$0xf] %vm245, 0
          %287 = vst.msk [vmem:[#allocation2 + $0x68] sm:$0xf] %vm245, 0
          %v288 = vld [vmem:[#allocation2 + $0x6c] sm:$0x1]
          %v289 = vsel %vm251, 0, %v288
          %290 = vst [vmem:[#allocation2 + $0x6c] sm:$0x1] %v289
          %291 = vst.msk [vmem:[#allocation2 + $0x70] sm:$0xf] %vm245, 0
          %292 = vst.msk [vmem:[#allocation2 + $0x74] sm:$0xf] %vm245, 0
          %293 = vst.msk [vmem:[#allocation2 + $0x78] sm:$0xf] %vm245, 0
          %v294 = vld [vmem:[#allocation2 + $0x7c] sm:$0x1]
          %v295 = vsel %vm251, 0, %v294
          %296 = vst [vmem:[#allocation2 + $0x7c] sm:$0x1] %v295
          %297 = vst.msk [vmem:[#allocation2 + $0x80] sm:$0xf] %vm245, 0
          %298 = vst.msk [vmem:[#allocation2 + $0x84] sm:$0xf] %vm245, 0
          %299 = vst.msk [vmem:[#allocation2 + $0x88] sm:$0xf] %vm245, 0
          %v300 = vld [vmem:[#allocation2 + $0x8c] sm:$0x1]
          %v301 = vsel %vm251, 0, %v300
          %302 = vst [vmem:[#allocation2 + $0x8c] sm:$0x1] %v301
          %303 = vst.msk [vmem:[#allocation2 + $0x90] sm:$0xf] %vm245, 0
          %304 = vst.msk [vmem:[#allocation2 + $0x94] sm:$0xf] %vm245, 0
          %305 = vst.msk [vmem:[#allocation2 + $0x98] sm:$0xf] %vm245, 0
          %v306 = vld [vmem:[#allocation2 + $0x9c] sm:$0x1]
          %v307 = vsel %vm251, 0, %v306
          %308 = vst [vmem:[#allocation2 + $0x9c] sm:$0x1] %v307
          %vm309 = vcmask 57344
          %310 = vst.msk [vmem:[#allocation4] sm:$0x1] %vm309, 0.0
        $region44: #{unet_encoder.5} parent=39 // pred_fallthru
          _
        %v311 = vld [vmem:[%s225] sm:$0xf]
        %v312 = vld [vmem:[%s225 + $0x4] sm:$0xf]
        %v313 = vld [vmem:[%s225 + $0x8] sm:$0xf]
        %v314 = vld [vmem:[%s225 + $0xc] sm:$0xf]
        %v315 = vld [vmem:[%s225 + $0x10] sm:$0xf]
        %v316 = vld [vmem:[%s225 + $0x14] sm:$0xf]
        %v317 = vld [vmem:[%s225 + $0x18] sm:$0xf]
        %v318 = vld [vmem:[%s225 + $0x1c] sm:$0xf]
        %s319 = scalar_lea.vmem [#allocation2], 16
        %vm320 = vcmask 27648
        %321 = vst.msk [vmem:[%s319 + $0x8] sm:$0xf] %vm320, %v311
        %322 = vst.msk [vmem:[%s319 + $0x18] sm:$0xf] %vm320, %v312
        %323 = vst.msk [vmem:[%s319 + $0x28] sm:$0xf] %vm320, %v313
        %324 = vst.msk [vmem:[%s319 + $0x38] sm:$0xf] %vm320, %v314
        %325 = vst.msk [vmem:[%s319 + $0x48] sm:$0xf] %vm320, %v315
        %326 = vst.msk [vmem:[%s319 + $0x58] sm:$0xf] %vm320, %v316
        %327 = vst.msk [vmem:[%s319 + $0x68] sm:$0xf] %vm320, %v317
        %328 = vst.msk [vmem:[%s319 + $0x78] sm:$0xf] %vm320, %v318
        %v329 = vld [vmem:[#allocation2 + $0x4] sm:$0xf]
        %v330 = vld [vmem:[#allocation2 + $0x8] sm:$0xf]
        %v331 = vld [vmem:[#allocation2 + $0xc] sm:$0x1]
        %v332 = vld [vmem:[#allocation2 + $0x14] sm:$0xf]
        %v333 = vld [vmem:[#allocation2 + $0x18] sm:$0xf]
        %v334 = vld [vmem:[#allocation2 + $0x1c] sm:$0x1]
        %v335 = vld [vmem:[#allocation2 + $0x24] sm:$0xf]
        %v336 = vld [vmem:[#allocation2 + $0x28] sm:$0xf]
        %v337 = vld [vmem:[#allocation2 + $0x2c] sm:$0x1]
        %v338 = vld [vmem:[#allocation2 + $0x34] sm:$0xf]
        %v339 = vld [vmem:[#allocation2 + $0x38] sm:$0xf]
        %v340 = vld [vmem:[#allocation2 + $0x3c] sm:$0x1]
        %v341 = vld [vmem:[#allocation2 + $0x44] sm:$0xf]
        %v342 = vld [vmem:[#allocation2 + $0x48] sm:$0xf]
        %v343 = vld [vmem:[#allocation2 + $0x4c] sm:$0x1]
        %v344 = vld [vmem:[#allocation2 + $0x54] sm:$0xf]
        %v345 = vld [vmem:[#allocation2 + $0x58] sm:$0xf]
        %v346 = vld [vmem:[#allocation2 + $0x5c] sm:$0x1]
        %v347 = vld [vmem:[#allocation2 + $0x64] sm:$0xf]
        %v348 = vld [vmem:[#allocation2 + $0x68] sm:$0xf]
        %v349 = vld [vmem:[#allocation2 + $0x6c] sm:$0x1]
        %v350 = vld [vmem:[#allocation2 + $0x74] sm:$0xf]
        %v351 = vld [vmem:[#allocation2 + $0x78] sm:$0xf]
        %v352 = vld [vmem:[#allocation2 + $0x7c] sm:$0x1]
        %v353 = vld [vmem:[#allocation2 + $0x84] sm:$0xf]
        %v354 = vld [vmem:[#allocation2 + $0x88] sm:$0xf]
        %v355 = vld [vmem:[#allocation2 + $0x8c] sm:$0x1]
        %v356 = vld [vmem:[#allocation2 + $0x94] sm:$0xf]
        %v357 = vld [vmem:[#allocation2 + $0x98] sm:$0xf]
        %v358 = vld [vmem:[#allocation2 + $0x9c] sm:$0x1]
        %vm359 = vsmask.f32 256
        %vm360 = vsmask.f32 4368
        %vm361 = vmor %vm359, %vm360
        %v363 = vshrl.u32 %v329, 16
        %v365 = vrot.slane %v363, 7
        %v366 = vrot.slane %v365, 4
        %v368 = vshrl.u32 %v330, 16
        %v370 = vrot.slane %v368, 7
        %v371 = vshll.u32 %v330, 16
        %v373 = vor.u32 %v370, %v371
        %v374 = vsel %vm361, %v366, %v373
        %v376 = vshrl.u32 %v332, 16
        %v378 = vrot.slane %v376, 7
        %v379 = vrot.slane %v378, 4
        %v381 = vshrl.u32 %v333, 16
        %v383 = vrot.slane %v381, 7
        %v384 = vshll.u32 %v333, 16
        %v386 = vor.u32 %v383, %v384
        %v387 = vsel %vm361, %v379, %v386
        %v389 = vshrl.u32 %v335, 16
        %v391 = vrot.slane %v389, 7
        %v392 = vrot.slane %v391, 4
        %v394 = vshrl.u32 %v336, 16
        %v396 = vrot.slane %v394, 7
        %v397 = vshll.u32 %v336, 16
        %v399 = vor.u32 %v396, %v397
        %v400 = vsel %vm361, %v392, %v399
        %v402 = vshrl.u32 %v338, 16
        %v404 = vrot.slane %v402, 7
        %v405 = vrot.slane %v404, 4
        %v407 = vshrl.u32 %v339, 16
        %v409 = vrot.slane %v407, 7
        %v410 = vshll.u32 %v339, 16
        %v412 = vor.u32 %v409, %v410
        %v413 = vsel %vm361, %v405, %v412
        %v415 = vshrl.u32 %v341, 16
        %v417 = vrot.slane %v415, 7
        %v418 = vrot.slane %v417, 4
        %v420 = vshrl.u32 %v342, 16
        %v422 = vrot.slane %v420, 7
        %v423 = vshll.u32 %v342, 16
        %v425 = vor.u32 %v422, %v423
        %v426 = vsel %vm361, %v418, %v425
        %v428 = vshrl.u32 %v344, 16
        %v430 = vrot.slane %v428, 7
        %v431 = vrot.slane %v430, 4
        %v433 = vshrl.u32 %v345, 16
        %v435 = vrot.slane %v433, 7
        %v436 = vshll.u32 %v345, 16
        %v438 = vor.u32 %v435, %v436
        %v439 = vsel %vm361, %v431, %v438
        %v441 = vshrl.u32 %v347, 16
        %v443 = vrot.slane %v441, 7
        %v444 = vrot.slane %v443, 4
        %v446 = vshrl.u32 %v348, 16
        %v448 = vrot.slane %v446, 7
        %v449 = vshll.u32 %v348, 16
        %v451 = vor.u32 %v448, %v449
        %v452 = vsel %vm361, %v444, %v451
        %v454 = vshrl.u32 %v350, 16
        %v456 = vrot.slane %v454, 7
        %v457 = vrot.slane %v456, 4
        %v459 = vshrl.u32 %v351, 16
        %v461 = vrot.slane %v459, 7
        %v462 = vshll.u32 %v351, 16
        %v464 = vor.u32 %v461, %v462
        %v465 = vsel %vm361, %v457, %v464
        %vm466 = vsmask.f32 3328
        %vm467 = vsmask.f32 7440
        %vm468 = vmor %vm466, %vm467
        %v469 = vrot.slane %v368, 4
        %v470 = vrot.slane %v371, 5
        %v471 = vor.u32 %v469, %v470
        %v472 = vrot.slane %v471, 4
        %v474 = vshll.u32 %v331, 16
        %v476 = vrot.slane %v474, 5
        %v477 = vsel %vm468, %v472, %v476
        %v478 = vrot.slane %v381, 4
        %v479 = vrot.slane %v384, 5
        %v480 = vor.u32 %v478, %v479
        %v481 = vrot.slane %v480, 4
        %v483 = vshll.u32 %v334, 16
        %v485 = vrot.slane %v483, 5
        %v486 = vsel %vm468, %v481, %v485
        %v487 = vrot.slane %v394, 4
        %v488 = vrot.slane %v397, 5
        %v489 = vor.u32 %v487, %v488
        %v490 = vrot.slane %v489, 4
        %v492 = vshll.u32 %v337, 16
        %v494 = vrot.slane %v492, 5
        %v495 = vsel %vm468, %v490, %v494
        %v496 = vrot.slane %v407, 4
        %v497 = vrot.slane %v410, 5
        %v498 = vor.u32 %v496, %v497
        %v499 = vrot.slane %v498, 4
        %v501 = vshll.u32 %v340, 16
        %v503 = vrot.slane %v501, 5
        %v504 = vsel %vm468, %v499, %v503
        %v505 = vrot.slane %v420, 4
        %v506 = vrot.slane %v423, 5
        %v507 = vor.u32 %v505, %v506
        %v508 = vrot.slane %v507, 4
        %v510 = vshll.u32 %v343, 16
        %v512 = vrot.slane %v510, 5
        %v513 = vsel %vm468, %v508, %v512
        %v514 = vrot.slane %v433, 4
        %v515 = vrot.slane %v436, 5
        %v516 = vor.u32 %v514, %v515
        %v517 = vrot.slane %v516, 4
        %v519 = vshll.u32 %v346, 16
        %v521 = vrot.slane %v519, 5
        %v522 = vsel %vm468, %v517, %v521
        %v523 = vrot.slane %v446, 4
        %v524 = vrot.slane %v449, 5
        %v525 = vor.u32 %v523, %v524
        %v526 = vrot.slane %v525, 4
        %v528 = vshll.u32 %v349, 16
        %v530 = vrot.slane %v528, 5
        %v531 = vsel %vm468, %v526, %v530
        %v532 = vrot.slane %v459, 4
        %v533 = vrot.slane %v462, 5
        %v534 = vor.u32 %v532, %v533
        %v535 = vrot.slane %v534, 4
        %v537 = vshll.u32 %v352, 16
        %v539 = vrot.slane %v537, 5
        %v540 = vsel %vm468, %v535, %v539
        %v542 = vshrl.u32 %v353, 16
        %v544 = vrot.slane %v542, 7
        %v545 = vrot.slane %v544, 4
        %v547 = vshrl.u32 %v354, 16
        %v549 = vrot.slane %v547, 7
        %v550 = vshll.u32 %v354, 16
        %v552 = vor.u32 %v549, %v550
        %v553 = vsel %vm361, %v545, %v552
        %v554 = vrot.slane %v547, 4
        %v555 = vrot.slane %v550, 5
        %v556 = vor.u32 %v554, %v555
        %v557 = vrot.slane %v556, 4
        %v559 = vshll.u32 %v355, 16
        %v561 = vrot.slane %v559, 5
        %v562 = vsel %vm468, %v557, %v561
        %v564 = vshrl.u32 %v356, 16
        %v566 = vrot.slane %v564, 7
        %v567 = vrot.slane %v566, 4
        %v569 = vshrl.u32 %v357, 16
        %v571 = vrot.slane %v569, 7
        %v572 = vshll.u32 %v357, 16
        %v574 = vor.u32 %v571, %v572
        %v575 = vsel %vm361, %v567, %v574
        %v576 = vrot.slane %v569, 4
        %v577 = vrot.slane %v572, 5
        %v578 = vor.u32 %v576, %v577
        %v579 = vrot.slane %v578, 4
        %v581 = vshll.u32 %v358, 16
        %v583 = vrot.slane %v581, 5
        %v584 = vsel %vm468, %v579, %v583
        %v585 = vunpack.c.l.b16 %v374
        %v586 = vunpack.c.l.b16 %v387
        %v587 = vunpack.c.l.b16 %v400
        %v588 = vunpack.c.l.b16 %v413
        %v589 = vunpack.c.l.b16 %v426
        %v590 = vunpack.c.l.b16 %v439
        %v591 = vunpack.c.l.b16 %v452
        %v592 = vunpack.c.l.b16 %v465
        %v593 = vpack.c.b16 %v586, %v585
        %v594 = vpack.c.b16 %v588, %v587
        %v595 = vpack.c.b16 %v590, %v589
        %v596 = vpack.c.b16 %v592, %v591
        %v605 = vunpack.c.l.b16 %v330
        %v606 = vunpack.c.l.b16 %v333
        %v607 = vunpack.c.l.b16 %v336
        %v608 = vunpack.c.l.b16 %v339
        %v609 = vunpack.c.l.b16 %v342
        %v610 = vunpack.c.l.b16 %v345
        %v611 = vunpack.c.l.b16 %v348
        %v612 = vunpack.c.l.b16 %v351
        %v613 = vpack.c.b16 %v606, %v605
        %v614 = vpack.c.b16 %v608, %v607
        %v615 = vpack.c.b16 %v610, %v609
        %v616 = vpack.c.b16 %v612, %v611
        %617 = vrot.lane.b32.xlu0 %v613, 4
        %v618 = vpop.permute.xlu0 %617
        %619 = vrot.lane.b32.xlu0 %v614, 4
        %v620 = vpop.permute.xlu0 %619
        %621 = vrot.lane.b32.xlu0 %v615, 4
        %v622 = vpop.permute.xlu0 %621
        %623 = vrot.lane.b32.xlu0 %v616, 4
        %v624 = vpop.permute.xlu0 %623
        %v625 = vunpack.c.l.b16 %v477
        %v626 = vunpack.c.l.b16 %v486
        %v627 = vunpack.c.l.b16 %v495
        %v628 = vunpack.c.l.b16 %v504
        %v629 = vunpack.c.l.b16 %v513
        %v630 = vunpack.c.l.b16 %v522
        %v631 = vunpack.c.l.b16 %v531
        %v632 = vunpack.c.l.b16 %v540
        %v633 = vpack.c.b16 %v626, %v625
        %v634 = vpack.c.b16 %v628, %v627
        %v635 = vpack.c.b16 %v630, %v629
        %v636 = vpack.c.b16 %v632, %v631
        %637 = vrot.lane.b32.xlu0 %v633, 8
        %v638 = vpop.permute.xlu0 %637
        %639 = vrot.lane.b32.xlu0 %v634, 8
        %v640 = vpop.permute.xlu0 %639
        %641 = vrot.lane.b32.xlu0 %v635, 8
        %v642 = vpop.permute.xlu0 %641
        %643 = vrot.lane.b32.xlu0 %v636, 8
        %v644 = vpop.permute.xlu0 %643
        %v645 = vunpack.c.l.b16 %v553
        %v646 = vpack.c.b16 %v587, %v586
        %v647 = vpack.c.b16 %v589, %v588
        %v648 = vpack.c.b16 %v591, %v590
        %v649 = vpack.c.b16 %v645, %v592
        %650 = vrot.lane.b32.xlu0 %v646, 12
        %v651 = vpop.permute.xlu0 %650
        %652 = vrot.lane.b32.xlu0 %v647, 12
        %v653 = vpop.permute.xlu0 %652
        %654 = vrot.lane.b32.xlu0 %v648, 12
        %v655 = vpop.permute.xlu0 %654
        %656 = vrot.lane.b32.xlu0 %v649, 12
        %v657 = vpop.permute.xlu0 %656
        %v659 = vunpack.c.l.b16 %v354
        %v660 = vpack.c.b16 %v607, %v606
        %v661 = vpack.c.b16 %v609, %v608
        %v662 = vpack.c.b16 %v611, %v610
        %v663 = vpack.c.b16 %v659, %v612
        %664 = vrot.lane.b32.xlu0 %v660, 16
        %v665 = vpop.permute.xlu0 %664
        %666 = vrot.lane.b32.xlu0 %v661, 16
        %v667 = vpop.permute.xlu0 %666
        %668 = vrot.lane.b32.xlu0 %v662, 16
        %v669 = vpop.permute.xlu0 %668
        %670 = vrot.lane.b32.xlu0 %v663, 16
        %v671 = vpop.permute.xlu0 %670
        %v672 = vunpack.c.l.b16 %v562
        %v673 = vpack.c.b16 %v627, %v626
        %v674 = vpack.c.b16 %v629, %v628
        %v675 = vpack.c.b16 %v631, %v630
        %v676 = vpack.c.b16 %v672, %v632
        %677 = vrot.lane.b32.xlu0 %v673, 20
        %v678 = vpop.permute.xlu0 %677
        %679 = vrot.lane.b32.xlu0 %v674, 20
        %v680 = vpop.permute.xlu0 %679
        %681 = vrot.lane.b32.xlu0 %v675, 20
        %v682 = vpop.permute.xlu0 %681
        %683 = vrot.lane.b32.xlu0 %v676, 20
        %v684 = vpop.permute.xlu0 %683
        %v685 = vunpack.c.l.b16 %v575
        %v686 = vpack.c.b16 %v685, %v645
        %687 = vrot.lane.b32.xlu0 %v594, 24
        %v688 = vpop.permute.xlu0 %687
        %689 = vrot.lane.b32.xlu0 %v595, 24
        %v690 = vpop.permute.xlu0 %689
        %691 = vrot.lane.b32.xlu0 %v596, 24
        %v692 = vpop.permute.xlu0 %691
        %693 = vrot.lane.b32.xlu0 %v686, 24
        %v694 = vpop.permute.xlu0 %693
        %v696 = vunpack.c.l.b16 %v357
        %v697 = vpack.c.b16 %v696, %v659
        %698 = vrot.lane.b32.xlu0 %v614, 28
        %v699 = vpop.permute.xlu0 %698
        %700 = vrot.lane.b32.xlu0 %v615, 28
        %v701 = vpop.permute.xlu0 %700
        %702 = vrot.lane.b32.xlu0 %v616, 28
        %v703 = vpop.permute.xlu0 %702
        %704 = vrot.lane.b32.xlu0 %v697, 28
        %v705 = vpop.permute.xlu0 %704
        %v706 = vunpack.c.l.b16 %v584
        %v707 = vpack.c.b16 %v706, %v672
        %708 = vrot.lane.b32.xlu0 %v634, 32
        %v709 = vpop.permute.xlu0 %708
        %710 = vrot.lane.b32.xlu0 %v635, 32
        %v711 = vpop.permute.xlu0 %710
        %712 = vrot.lane.b32.xlu0 %v636, 32
        %v713 = vpop.permute.xlu0 %712
        %714 = vrot.lane.b32.xlu0 %v707, 32
        %v715 = vpop.permute.xlu0 %714
        %vm716 = vcmask 31744
        %v719 = vsel %vm716, %v593, %v618
        %v722 = vsel %vm716, %v594, %v620
        %v725 = vsel %vm716, %v595, %v622
        %v728 = vsel %vm716, %v596, %v624
        %vm729 = vcmask 64512
        %v731 = vsel %vm729, %v719, %v638
        %v733 = vsel %vm729, %v722, %v640
        %v735 = vsel %vm729, %v725, %v642
        %v737 = vsel %vm729, %v728, %v644
        %vm738 = vcmask 97280
        %v740 = vsel %vm738, %v731, %v651
        %v742 = vsel %vm738, %v733, %v653
        %v744 = vsel %vm738, %v735, %v655
        %v746 = vsel %vm738, %v737, %v657
        %vm747 = vcmask 130048
        %v749 = vsel %vm747, %v740, %v665
        %v751 = vsel %vm747, %v742, %v667
        %v753 = vsel %vm747, %v744, %v669
        %v755 = vsel %vm747, %v746, %v671
        %vm756 = vcmask 162816
        %v758 = vsel %vm756, %v749, %v678
        %v760 = vsel %vm756, %v751, %v680
        %v762 = vsel %vm756, %v753, %v682
        %v764 = vsel %vm756, %v755, %v684
        %vm765 = vcmask 195584
        %v767 = vsel %vm765, %v758, %v688
        %v769 = vsel %vm765, %v760, %v690
        %v771 = vsel %vm765, %v762, %v692
        %v773 = vsel %vm765, %v764, %v694
        %vm774 = vcmask 228352
        %v776 = vsel %vm774, %v767, %v699
        %v778 = vsel %vm774, %v769, %v701
        %v780 = vsel %vm774, %v771, %v703
        %v782 = vsel %vm774, %v773, %v705
        %vm783 = vcmask 261120
        %v785 = vsel %vm783, %v776, %v709
        %v787 = vsel %vm783, %v778, %v711
        %v789 = vsel %vm783, %v780, %v713
        %v791 = vsel %vm783, %v782, %v715
        %v792 = vld [vmem:[%s1] sm:$0xf]
        %v793 = vld [vmem:[%s1 + $0x4] sm:$0xf]
        %v794 = vld [vmem:[%s1 + $0x8] sm:$0xf]
        %v795 = vld [vmem:[%s1 + $0xc] sm:$0xf]
        %v796 = vld [vmem:[%s1 + $0x10] sm:$0x3]
        %v802 = vunpack.c.l.b16 %v792
        %v803 = vunpack.c.l.b16 %v793
        %v804 = vunpack.c.l.b16 %v794
        %v805 = vunpack.c.l.b16 %v795
        %v806 = vunpack.c.l.b16 %v796
        %v807 = vpack.c.b16 %v803, %v802
        %v808 = vpack.c.b16 %v805, %v804
        %v809 = vpack.c.b16 %v806, %v806
        %vm812 = vcmask 293888
        %v813 = vsel %vm812, %v785, 0
        %v815 = vsel %vm812, %v787, 0
        %v817 = vsel %vm812, %v789, 0
        %v819 = vsel %vm812, %v791, 0
        %vm821 = vcmask 1041408
        %v823 = vsel %vm821, %v809, 0
        %825 = vmatprep.subr.bf16.mxu0 0
        %826 = vmatpush1.bf16.msra.mxu0 %v807
        %827 = vmatprep.subr.bf16.mxu0 0
        %828 = vmatpush1.bf16.msra.mxu0 %v808
        %829 = vmatprep.subr.bf16.mxu0 0
        %830 = vmatpush1.bf16.msra.mxu0 %v823
        %831 = vmatprep.subr.bf16.mxu0 0
        %832 = vmatpush1.bf16.msra.mxu0 0
        %833 = vmatprep.subr.bf16.mxu0 0
        %834 = vmatpush1.bf16.msra.mxu0 0
        %835 = vmatprep.subr.bf16.mxu0 0
        %836 = vmatpush1.bf16.msra.mxu0 0
        %837 = vmatprep.subr.bf16.mxu0 0
        %838 = vmatpush1.bf16.msra.mxu0 0
        %839 = vmatprep.subr.bf16.mxu0 0
        %840 = vmatpush1.bf16.msra.mxu0 0
        %841 = vmatprep.subr.bf16.mxu0 0
        %842 = vmatpush1.bf16.msra.mxu0 0
        %843 = vmatprep.subr.bf16.mxu0 0
        %844 = vmatpush1.bf16.msra.mxu0 0
        %845 = vmatprep.subr.bf16.mxu0 0
        %846 = vmatpush1.bf16.msra.mxu0 0
        %847 = vmatprep.subr.bf16.mxu0 0
        %848 = vmatpush1.bf16.msra.mxu0 0
        %849 = vmatprep.subr.bf16.mxu0 0
        %850 = vmatpush1.bf16.msra.mxu0 0
        %851 = vmatprep.subr.bf16.mxu0 0
        %852 = vmatpush1.bf16.msra.mxu0 0
        %853 = vmatprep.subr.bf16.mxu0 0
        %854 = vmatpush1.bf16.msra.mxu0 0
        %855 = vmatprep.subr.bf16.mxu0 0
        %856 = vmatpush1.bf16.msra.mxu0 0
        %857 = vmatprep.mubr.bf16.mxu0 0
        %858 = vmatmul.mubr.bf16.gmra.mrb[0].mxu0 %v813
        %v859 = vpop.f32.mrb[0].mxu0
        %v860 = vadd.f32 0.0, %v859
        %v861 = vpop.f32.mrb[0].mxu0
        %v862 = vpop.f32.mrb[0].mxu0
        %v863 = vadd.f32 0.0, %v862
        %v864 = vpop.f32.mrb[0].mxu0
        %865 = vmatprep.mubr.bf16.mxu0 0
        %866 = vmatmul.mubr.bf16.gmra.mrb[0].mxu0 %v815
        %v867 = vpop.f32.mrb[0].mxu0
        %v868 = vadd.f32 0.0, %v867
        %v869 = vpop.f32.mrb[0].mxu0
        %v870 = vpop.f32.mrb[0].mxu0
        %v871 = vadd.f32 0.0, %v870
        %v872 = vpop.f32.mrb[0].mxu0
        %873 = vmatprep.mubr.bf16.mxu0 0
        %874 = vmatmul.mubr.bf16.gmra.mrb[0].mxu0 %v817
        %v875 = vpop.f32.mrb[0].mxu0
        %v876 = vadd.f32 0.0, %v875
        %v877 = vpop.f32.mrb[0].mxu0
        %v878 = vpop.f32.mrb[0].mxu0
        %v879 = vadd.f32 0.0, %v878
        %v880 = vpop.f32.mrb[0].mxu0
        %881 = vmatprep.mubr.bf16.mxu0 0
        %882 = vmatmul.mubr.bf16.gmra.mrb[0].mxu0 %v819
        %v883 = vpop.f32.mrb[0].mxu0
        %v884 = vadd.f32 0.0, %v883
        %v885 = vpop.f32.mrb[0].mxu0
        %v886 = vpop.f32.mrb[0].mxu0
        %v887 = vadd.f32 0.0, %v886
        %v888 = vpop.f32.mrb[0].mxu0
        %889 = vdwg.mxu0
        %s890 = smul.u32 %s20, 64
        %s891 = scalar_lea.vmem [#allocation3], %s890
        %892 = vst.msk [vmem:[%s891] sm:$0xff] %vm729, %v860
        %893 = vst.msk [vmem:[%s891 + $0x8] sm:$0xff] %vm729, %v863
        %894 = vst.msk [vmem:[%s891 + $0x10] sm:$0xff] %vm729, %v868
        %895 = vst.msk [vmem:[%s891 + $0x18] sm:$0xff] %vm729, %v871
        %896 = vst.msk [vmem:[%s891 + $0x20] sm:$0xff] %vm729, %v876
        %897 = vst.msk [vmem:[%s891 + $0x28] sm:$0xff] %vm729, %v879
        %898 = vst.msk [vmem:[%s891 + $0x30] sm:$0xff] %vm729, %v884
        %899 = vst.msk [vmem:[%s891 + $0x38] sm:$0xff] %vm729, %v887
        %v900 = vld [vmem:[#allocation4] sm:$0x1]
        %v901 = vsel %vm729, %v860, 0.0
        %v902 = vsel %vm729, %v863, 0.0
        %v903 = vadd.f32 %v901, %v902
        %v904 = vsel %vm729, %v868, 0.0
        %v905 = vadd.f32 %v903, %v904
        %v906 = vsel %vm729, %v871, 0.0
        %v907 = vadd.f32 %v905, %v906
        %v908 = vsel %vm729, %v876, 0.0
        %v909 = vadd.f32 %v907, %v908
        %v910 = vsel %vm729, %v879, 0.0
        %v911 = vadd.f32 %v909, %v910
        %v912 = vsel %vm729, %v884, 0.0
        %v913 = vadd.f32 %v911, %v912
        %v914 = vsel %vm729, %v887, 0.0
        %v915 = vadd.f32 %v913, %v914
        %v916 = vrot.slane %v915, 4
        %v917 = vadd.f32 %v915, %v916
        %v918 = vrot.slane %v917, 2
        %v919 = vadd.f32 %v917, %v918
        %v920 = vrot.slane %v919, 1
        %v921 = vadd.f32 %v919, %v920
        %v922 = vadd.f32 %v900, %v921
        %vm923 = vcmask 57344
        %924 = vst.msk [vmem:[#allocation4] sm:$0x1] %vm923, %v922
      $region40: #{unet_encoder.5} parent=35 // pred_fallthru
        _
      %p925 = scmp.eq.s32.totalorder %s19, 1
      // Predicated region
      $region45: #{unet_encoder.5} parent=35 // pred_check
        %p926 = pneg %p925
      $region46: #{unet_encoder.5} parent=35 // pred_check_branch
        %928 = sbr.rel (%p926) target = $region48
      $region47: #{unet_encoder.5} parent=35 // pred_region
        %p929 = scmp.eq.s32.totalorder %s20, 0
        // Predicated region
        $region49: #{unet_encoder.5} parent=47 // pred_check
          %p930 = pneg %p929
        $region50: #{unet_encoder.5} parent=47 // pred_check_branch
          %932 = sbr.rel (%p930) target = $region52
        $region51: #{unet_encoder.5} parent=47 // pred_region
          %v933 = vld [vmem:[#allocation4] sm:$0x1]
          %v934 = vmul.f32 %v933, 0.0078125
          %v935 = vld [vmem:[#allocation3] sm:$0xff]
          %v936 = vld [vmem:[#allocation3 + $0x8] sm:$0xff]
          %v937 = vld [vmem:[#allocation3 + $0x10] sm:$0xff]
          %v938 = vld [vmem:[#allocation3 + $0x18] sm:$0xff]
          %v939 = vld [vmem:[#allocation3 + $0x20] sm:$0xff]
          %v940 = vld [vmem:[#allocation3 + $0x28] sm:$0xff]
          %v941 = vld [vmem:[#allocation3 + $0x30] sm:$0xff]
          %v942 = vld [vmem:[#allocation3 + $0x38] sm:$0xff]
          %v943 = vld [vmem:[#allocation3 + $0x40] sm:$0xff]
          %v944 = vld [vmem:[#allocation3 + $0x48] sm:$0xff]
          %v945 = vld [vmem:[#allocation3 + $0x50] sm:$0xff]
          %v946 = vld [vmem:[#allocation3 + $0x58] sm:$0xff]
          %v947 = vld [vmem:[#allocation3 + $0x60] sm:$0xff]
          %v948 = vld [vmem:[#allocation3 + $0x68] sm:$0xff]
          %v949 = vld [vmem:[#allocation3 + $0x70] sm:$0xff]
          %v950 = vld [vmem:[#allocation3 + $0x78] sm:$0xff]
          %v952 = vlaneseq
          %v953 = vshrl.u32 %v952, 7
          %v954 = vsub.s32 0, %v953
          %v955 = vrot.slane %v934, %v954
          %v957 = vsub.f32 %v935, %v955
          %v958 = vsub.f32 %v936, %v955
          %v959 = vsub.f32 %v937, %v955
          %v960 = vsub.f32 %v938, %v955
          %v961 = vsub.f32 %v939, %v955
          %v962 = vsub.f32 %v940, %v955
          %v963 = vsub.f32 %v941, %v955
          %v964 = vsub.f32 %v942, %v955
          %v965 = vsub.f32 %v943, %v955
          %v966 = vsub.f32 %v944, %v955
          %v967 = vsub.f32 %v945, %v955
          %v968 = vsub.f32 %v946, %v955
          %v969 = vsub.f32 %v947, %v955
          %v970 = vsub.f32 %v948, %v955
          %v971 = vsub.f32 %v949, %v955
          %v972 = vsub.f32 %v950, %v955
          %v973 = vmul.f32 %v957, %v957
          %v974 = vmul.f32 %v958, %v958
          %v975 = vmul.f32 %v959, %v959
          %v976 = vmul.f32 %v960, %v960
          %v977 = vmul.f32 %v961, %v961
          %v978 = vmul.f32 %v962, %v962
          %v979 = vmul.f32 %v963, %v963
          %v980 = vmul.f32 %v964, %v964
          %v981 = vmul.f32 %v965, %v965
          %v982 = vmul.f32 %v966, %v966
          %v983 = vmul.f32 %v967, %v967
          %v984 = vmul.f32 %v968, %v968
          %v985 = vmul.f32 %v969, %v969
          %v986 = vmul.f32 %v970, %v970
          %v987 = vmul.f32 %v971, %v971
          %v988 = vmul.f32 %v972, %v972
          %vm989 = vcmask 64512
          %v990 = vsel %vm989, %v973, 0.0
          %v991 = vsel %vm989, %v981, 0.0
          %v992 = vadd.f32 %v990, %v991
          %v993 = vsel %vm989, %v974, 0.0
          %v994 = vsel %vm989, %v982, 0.0
          %v995 = vadd.f32 %v993, %v994
          %v996 = vsel %vm989, %v975, 0.0
          %v997 = vsel %vm989, %v983, 0.0
          %v998 = vadd.f32 %v996, %v997
          %v999 = vsel %vm989, %v976, 0.0
          %v1000 = vsel %vm989, %v984, 0.0
          %v1001 = vadd.f32 %v999, %v1000
          %v1002 = vsel %vm989, %v977, 0.0
          %v1003 = vsel %vm989, %v985, 0.0
          %v1004 = vadd.f32 %v1002, %v1003
          %v1005 = vsel %vm989, %v978, 0.0
          %v1006 = vsel %vm989, %v986, 0.0
          %v1007 = vadd.f32 %v1005, %v1006
          %v1008 = vsel %vm989, %v979, 0.0
          %v1009 = vsel %vm989, %v987, 0.0
          %v1010 = vadd.f32 %v1008, %v1009
          %v1011 = vsel %vm989, %v980, 0.0
          %v1012 = vsel %vm989, %v988, 0.0
          %v1013 = vadd.f32 %v1011, %v1012
          %v1014 = vsel %vm989, %v992, 0.0
          %v1015 = vsel %vm989, %v995, 0.0
          %v1016 = vadd.f32 %v1014, %v1015
          %v1017 = vsel %vm989, %v998, 0.0
          %v1018 = vadd.f32 %v1016, %v1017
          %v1019 = vsel %vm989, %v1001, 0.0
          %v1020 = vadd.f32 %v1018, %v1019
          %v1021 = vsel %vm989, %v1004, 0.0
          %v1022 = vadd.f32 %v1020, %v1021
          %v1023 = vsel %vm989, %v1007, 0.0
          %v1024 = vadd.f32 %v1022, %v1023
          %v1025 = vsel %vm989, %v1010, 0.0
          %v1026 = vadd.f32 %v1024, %v1025
          %v1027 = vsel %vm989, %v1013, 0.0
          %v1028 = vadd.f32 %v1026, %v1027
          %v1029 = vrot.slane %v1028, 4
          %v1030 = vadd.f32 %v1028, %v1029
          %v1031 = vrot.slane %v1030, 2
          %v1032 = vadd.f32 %v1030, %v1031
          %v1033 = vrot.slane %v1032, 1
          %v1034 = vadd.f32 %v1032, %v1033
          %v1035 = vmul.f32 %v1034, 0.0078125
          %v1036 = vmax.f32 %v1035, 0.0
          %v1037 = vadd.f32 %v1036, 1e-05
          %v1038 = vrsqrt.pop %v1037
          %v1039 = vld [vmem:[%s2] sm:$0x1]
          %v1040 = vmul.f32 %v1039, %v1038
          %vm1041 = vcmask 57344
          %1042 = vst.msk [vmem:[#allocation5] sm:$0x1] %vm1041, %v1040
          %v1043 = vld [vmem:[%s3] sm:$0x1]
          %v1044 = vmul.f32 %v934, %v1040
          %v1045 = vsub.f32 %v1043, %v1044
          %1046 = vst.msk [vmem:[#allocation6] sm:$0x1] %vm1041, %v1045
        $region52: #{unet_encoder.5} parent=47 // pred_fallthru
          _
        %s1047 = smul.u32 %s20, 64
        %s1048 = scalar_lea.vmem [#allocation3], %s1047
        %v1049 = vld [vmem:[%s1048] sm:$0xff]
        %v1050 = vld [vmem:[%s1048 + $0x8] sm:$0xff]
        %v1051 = vld [vmem:[%s1048 + $0x10] sm:$0xff]
        %v1052 = vld [vmem:[%s1048 + $0x18] sm:$0xff]
        %v1053 = vld [vmem:[%s1048 + $0x20] sm:$0xff]
        %v1054 = vld [vmem:[%s1048 + $0x28] sm:$0xff]
        %v1055 = vld [vmem:[%s1048 + $0x30] sm:$0xff]
        %v1056 = vld [vmem:[%s1048 + $0x38] sm:$0xff]
        %v1057 = vld [vmem:[#allocation5] sm:$0x1]
        %v1059 = vlaneseq
        %v1060 = vshrl.u32 %v1059, 7
        %v1061 = vsub.s32 0, %v1060
        %v1062 = vrot.slane %v1057, %v1061
        %v1064 = vmul.f32 %v1049, %v1062
        %v1065 = vmul.f32 %v1050, %v1062
        %v1066 = vmul.f32 %v1051, %v1062
        %v1067 = vmul.f32 %v1052, %v1062
        %v1068 = vmul.f32 %v1053, %v1062
        %v1069 = vmul.f32 %v1054, %v1062
        %v1070 = vmul.f32 %v1055, %v1062
        %v1071 = vmul.f32 %v1056, %v1062
        %v1072 = vld [vmem:[#allocation6] sm:$0x1]
        %v1074 = vlaneseq
        %v1075 = vshrl.u32 %v1074, 7
        %v1076 = vsub.s32 0, %v1075
        %v1077 = vrot.slane %v1072, %v1076
        %v1079 = vadd.f32 %v1064, %v1077
        %v1080 = vadd.f32 %v1065, %v1077
        %v1081 = vadd.f32 %v1066, %v1077
        %v1082 = vadd.f32 %v1067, %v1077
        %v1083 = vadd.f32 %v1068, %v1077
        %v1084 = vadd.f32 %v1069, %v1077
        %v1085 = vadd.f32 %v1070, %v1077
        %v1086 = vadd.f32 %v1071, %v1077
        %v1087 = vmax.f32 %v1079, 0.0
        %v1088 = vmax.f32 %v1080, 0.0
        %v1089 = vmax.f32 %v1081, 0.0
        %v1090 = vmax.f32 %v1082, 0.0
        %v1091 = vmax.f32 %v1083, 0.0
        %v1092 = vmax.f32 %v1084, 0.0
        %v1093 = vmax.f32 %v1085, 0.0
        %v1094 = vmax.f32 %v1086, 0.0
        %v1103 = vcombine.high %v1087, %v1087
        %v1105 = vunpack.c.l.s4 1983009808
        %v1106 = vunpack.c.0.s8 %v1105
        %v1107 = vlaneseq
        %v1108 = vshrl.u32 %v1107, 7
        %v1109 = vsub.s32 %v1106, %v1108
        %v1110 = vrot.slane %v1087, %v1109
        %v1112 = vunpack.c.l.s4 1983009808
        %v1113 = vunpack.c.0.s8 %v1112
        %v1114 = vlaneseq
        %v1115 = vshrl.u32 %v1114, 7
        %v1116 = vsub.s32 %v1113, %v1115
        %v1117 = vrot.slane %v1103, %v1116
        %v1118 = vcombine.high %v1110, %v1110
        %v1119 = vcombine.high %v1117, %v1117
        %v1120 = vcombine.high %v1088, %v1088
        %v1122 = vunpack.c.l.s4 1983009808
        %v1123 = vunpack.c.0.s8 %v1122
        %v1124 = vlaneseq
        %v1125 = vshrl.u32 %v1124, 7
        %v1126 = vsub.s32 %v1123, %v1125
        %v1127 = vrot.slane %v1088, %v1126
        %v1129 = vunpack.c.l.s4 1983009808
        %v1130 = vunpack.c.0.s8 %v1129
        %v1131 = vlaneseq
        %v1132 = vshrl.u32 %v1131, 7
        %v1133 = vsub.s32 %v1130, %v1132
        %v1134 = vrot.slane %v1120, %v1133
        %v1135 = vcombine.high %v1127, %v1127
        %v1136 = vcombine.high %v1134, %v1134
        %v1137 = vcombine.high %v1089, %v1089
        %v1139 = vunpack.c.l.s4 1983009808
        %v1140 = vunpack.c.0.s8 %v1139
        %v1141 = vlaneseq
        %v1142 = vshrl.u32 %v1141, 7
        %v1143 = vsub.s32 %v1140, %v1142
        %v1144 = vrot.slane %v1089, %v1143
        %v1146 = vunpack.c.l.s4 1983009808
        %v1147 = vunpack.c.0.s8 %v1146
        %v1148 = vlaneseq
        %v1149 = vshrl.u32 %v1148, 7
        %v1150 = vsub.s32 %v1147, %v1149
        %v1151 = vrot.slane %v1137, %v1150
        %v1152 = vcombine.high %v1144, %v1144
        %v1153 = vcombine.high %v1151, %v1151
        %v1154 = vcombine.high %v1090, %v1090
        %v1156 = vunpack.c.l.s4 1983009808
        %v1157 = vunpack.c.0.s8 %v1156
        %v1158 = vlaneseq
        %v1159 = vshrl.u32 %v1158, 7
        %v1160 = vsub.s32 %v1157, %v1159
        %v1161 = vrot.slane %v1090, %v1160
        %v1163 = vunpack.c.l.s4 1983009808
        %v1164 = vunpack.c.0.s8 %v1163
        %v1165 = vlaneseq
        %v1166 = vshrl.u32 %v1165, 7
        %v1167 = vsub.s32 %v1164, %v1166
        %v1168 = vrot.slane %v1154, %v1167
        %v1169 = vcombine.high %v1161, %v1161
        %v1170 = vcombine.high %v1168, %v1168
        %v1171 = vcombine.high %v1091, %v1091
        %v1173 = vunpack.c.l.s4 1983009808
        %v1174 = vunpack.c.0.s8 %v1173
        %v1175 = vlaneseq
        %v1176 = vshrl.u32 %v1175, 7
        %v1177 = vsub.s32 %v1174, %v1176
        %v1178 = vrot.slane %v1091, %v1177
        %v1180 = vunpack.c.l.s4 1983009808
        %v1181 = vunpack.c.0.s8 %v1180
        %v1182 = vlaneseq
        %v1183 = vshrl.u32 %v1182, 7
        %v1184 = vsub.s32 %v1181, %v1183
        %v1185 = vrot.slane %v1171, %v1184
        %v1186 = vcombine.high %v1178, %v1178
        %v1187 = vcombine.high %v1185, %v1185
        %v1188 = vcombine.high %v1092, %v1092
        %v1190 = vunpack.c.l.s4 1983009808
        %v1191 = vunpack.c.0.s8 %v1190
        %v1192 = vlaneseq
        %v1193 = vshrl.u32 %v1192, 7
        %v1194 = vsub.s32 %v1191, %v1193
        %v1195 = vrot.slane %v1092, %v1194
        %v1197 = vunpack.c.l.s4 1983009808
        %v1198 = vunpack.c.0.s8 %v1197
        %v1199 = vlaneseq
        %v1200 = vshrl.u32 %v1199, 7
        %v1201 = vsub.s32 %v1198, %v1200
        %v1202 = vrot.slane %v1188, %v1201
        %v1203 = vcombine.high %v1195, %v1195
        %v1204 = vcombine.high %v1202, %v1202
        %v1205 = vcombine.high %v1093, %v1093
        %v1207 = vunpack.c.l.s4 1983009808
        %v1208 = vunpack.c.0.s8 %v1207
        %v1209 = vlaneseq
        %v1210 = vshrl.u32 %v1209, 7
        %v1211 = vsub.s32 %v1208, %v1210
        %v1212 = vrot.slane %v1093, %v1211
        %v1214 = vunpack.c.l.s4 1983009808
        %v1215 = vunpack.c.0.s8 %v1214
        %v1216 = vlaneseq
        %v1217 = vshrl.u32 %v1216, 7
        %v1218 = vsub.s32 %v1215, %v1217
        %v1219 = vrot.slane %v1205, %v1218
        %v1220 = vcombine.high %v1212, %v1212
        %v1221 = vcombine.high %v1219, %v1219
        %v1222 = vcombine.high %v1094, %v1094
        %v1224 = vunpack.c.l.s4 1983009808
        %v1225 = vunpack.c.0.s8 %v1224
        %v1226 = vlaneseq
        %v1227 = vshrl.u32 %v1226, 7
        %v1228 = vsub.s32 %v1225, %v1227
        %v1229 = vrot.slane %v1094, %v1228
        %v1231 = vunpack.c.l.s4 1983009808
        %v1232 = vunpack.c.0.s8 %v1231
        %v1233 = vlaneseq
        %v1234 = vshrl.u32 %v1233, 7
        %v1235 = vsub.s32 %v1232, %v1234
        %v1236 = vrot.slane %v1222, %v1235
        %v1237 = vcombine.high %v1229, %v1229
        %v1238 = vcombine.high %v1236, %v1236
        %vm1271 = vcmask 58368
        %v1272 = vsel %vm1271, %v1110, -inf
        %v1273 = vrot.slane %v1272, 4
        %v1274 = vmax.f32 %v1272, %v1273
        %v1275 = vrot.slane %v1274, 2
        %v1276 = vmax.f32 %v1274, %v1275
        %v1277 = vrot.slane %v1276, 1
        %v1278 = vmax.f32 %v1276, %v1277
        %v1279 = vsel %vm1271, %v1118, -inf
        %v1280 = vrot.slane %v1279, 4
        %v1281 = vmax.f32 %v1279, %v1280
        %v1282 = vrot.slane %v1281, 2
        %v1283 = vmax.f32 %v1281, %v1282
        %v1284 = vrot.slane %v1283, 1
        %v1285 = vmax.f32 %v1283, %v1284
        %v1286 = vsel %vm1271, %v1117, -inf
        %v1287 = vrot.slane %v1286, 4
        %v1288 = vmax.f32 %v1286, %v1287
        %v1289 = vrot.slane %v1288, 2
        %v1290 = vmax.f32 %v1288, %v1289
        %v1291 = vrot.slane %v1290, 1
        %v1292 = vmax.f32 %v1290, %v1291
        %v1293 = vsel %vm1271, %v1119, -inf
        %v1294 = vrot.slane %v1293, 4
        %v1295 = vmax.f32 %v1293, %v1294
        %v1296 = vrot.slane %v1295, 2
        %v1297 = vmax.f32 %v1295, %v1296
        %v1298 = vrot.slane %v1297, 1
        %v1299 = vmax.f32 %v1297, %v1298
        %v1300 = vsel %vm1271, %v1127, -inf
        %v1301 = vrot.slane %v1300, 4
        %v1302 = vmax.f32 %v1300, %v1301
        %v1303 = vrot.slane %v1302, 2
        %v1304 = vmax.f32 %v1302, %v1303
        %v1305 = vrot.slane %v1304, 1
        %v1306 = vmax.f32 %v1304, %v1305
        %v1307 = vsel %vm1271, %v1135, -inf
        %v1308 = vrot.slane %v1307, 4
        %v1309 = vmax.f32 %v1307, %v1308
        %v1310 = vrot.slane %v1309, 2
        %v1311 = vmax.f32 %v1309, %v1310
        %v1312 = vrot.slane %v1311, 1
        %v1313 = vmax.f32 %v1311, %v1312
        %v1314 = vsel %vm1271, %v1134, -inf
        %v1315 = vrot.slane %v1314, 4
        %v1316 = vmax.f32 %v1314, %v1315
        %v1317 = vrot.slane %v1316, 2
        %v1318 = vmax.f32 %v1316, %v1317
        %v1319 = vrot.slane %v1318, 1
        %v1320 = vmax.f32 %v1318, %v1319
        %v1321 = vsel %vm1271, %v1136, -inf
        %v1322 = vrot.slane %v1321, 4
        %v1323 = vmax.f32 %v1321, %v1322
        %v1324 = vrot.slane %v1323, 2
        %v1325 = vmax.f32 %v1323, %v1324
        %v1326 = vrot.slane %v1325, 1
        %v1327 = vmax.f32 %v1325, %v1326
        %v1328 = vsel %vm1271, %v1144, -inf
        %v1329 = vrot.slane %v1328, 4
        %v1330 = vmax.f32 %v1328, %v1329
        %v1331 = vrot.slane %v1330, 2
        %v1332 = vmax.f32 %v1330, %v1331
        %v1333 = vrot.slane %v1332, 1
        %v1334 = vmax.f32 %v1332, %v1333
        %v1335 = vsel %vm1271, %v1152, -inf
        %v1336 = vrot.slane %v1335, 4
        %v1337 = vmax.f32 %v1335, %v1336
        %v1338 = vrot.slane %v1337, 2
        %v1339 = vmax.f32 %v1337, %v1338
        %v1340 = vrot.slane %v1339, 1
        %v1341 = vmax.f32 %v1339, %v1340
        %v1342 = vsel %vm1271, %v1151, -inf
        %v1343 = vrot.slane %v1342, 4
        %v1344 = vmax.f32 %v1342, %v1343
        %v1345 = vrot.slane %v1344, 2
        %v1346 = vmax.f32 %v1344, %v1345
        %v1347 = vrot.slane %v1346, 1
        %v1348 = vmax.f32 %v1346, %v1347
        %v1349 = vsel %vm1271, %v1153, -inf
        %v1350 = vrot.slane %v1349, 4
        %v1351 = vmax.f32 %v1349, %v1350
        %v1352 = vrot.slane %v1351, 2
        %v1353 = vmax.f32 %v1351, %v1352
        %v1354 = vrot.slane %v1353, 1
        %v1355 = vmax.f32 %v1353, %v1354
        %v1356 = vsel %vm1271, %v1161, -inf
        %v1357 = vrot.slane %v1356, 4
        %v1358 = vmax.f32 %v1356, %v1357
        %v1359 = vrot.slane %v1358, 2
        %v1360 = vmax.f32 %v1358, %v1359
        %v1361 = vrot.slane %v1360, 1
        %v1362 = vmax.f32 %v1360, %v1361
        %v1363 = vsel %vm1271, %v1169, -inf
        %v1364 = vrot.slane %v1363, 4
        %v1365 = vmax.f32 %v1363, %v1364
        %v1366 = vrot.slane %v1365, 2
        %v1367 = vmax.f32 %v1365, %v1366
        %v1368 = vrot.slane %v1367, 1
        %v1369 = vmax.f32 %v1367, %v1368
        %v1370 = vsel %vm1271, %v1168, -inf
        %v1371 = vrot.slane %v1370, 4
        %v1372 = vmax.f32 %v1370, %v1371
        %v1373 = vrot.slane %v1372, 2
        %v1374 = vmax.f32 %v1372, %v1373
        %v1375 = vrot.slane %v1374, 1
        %v1376 = vmax.f32 %v1374, %v1375
        %v1377 = vsel %vm1271, %v1170, -inf
        %v1378 = vrot.slane %v1377, 4
        %v1379 = vmax.f32 %v1377, %v1378
        %v1380 = vrot.slane %v1379, 2
        %v1381 = vmax.f32 %v1379, %v1380
        %v1382 = vrot.slane %v1381, 1
        %v1383 = vmax.f32 %v1381, %v1382
        %v1384 = vsel %vm1271, %v1178, -inf
        %v1385 = vrot.slane %v1384, 4
        %v1386 = vmax.f32 %v1384, %v1385
        %v1387 = vrot.slane %v1386, 2
        %v1388 = vmax.f32 %v1386, %v1387
        %v1389 = vrot.slane %v1388, 1
        %v1390 = vmax.f32 %v1388, %v1389
        %v1391 = vsel %vm1271, %v1186, -inf
        %v1392 = vrot.slane %v1391, 4
        %v1393 = vmax.f32 %v1391, %v1392
        %v1394 = vrot.slane %v1393, 2
        %v1395 = vmax.f32 %v1393, %v1394
        %v1396 = vrot.slane %v1395, 1
        %v1397 = vmax.f32 %v1395, %v1396
        %v1398 = vsel %vm1271, %v1185, -inf
        %v1399 = vrot.slane %v1398, 4
        %v1400 = vmax.f32 %v1398, %v1399
        %v1401 = vrot.slane %v1400, 2
        %v1402 = vmax.f32 %v1400, %v1401
        %v1403 = vrot.slane %v1402, 1
        %v1404 = vmax.f32 %v1402, %v1403
        %v1405 = vsel %vm1271, %v1187, -inf
        %v1406 = vrot.slane %v1405, 4
        %v1407 = vmax.f32 %v1405, %v1406
        %v1408 = vrot.slane %v1407, 2
        %v1409 = vmax.f32 %v1407, %v1408
        %v1410 = vrot.slane %v1409, 1
        %v1411 = vmax.f32 %v1409, %v1410
        %v1412 = vsel %vm1271, %v1195, -inf
        %v1413 = vrot.slane %v1412, 4
        %v1414 = vmax.f32 %v1412, %v1413
        %v1415 = vrot.slane %v1414, 2
        %v1416 = vmax.f32 %v1414, %v1415
        %v1417 = vrot.slane %v1416, 1
        %v1418 = vmax.f32 %v1416, %v1417
        %v1419 = vsel %vm1271, %v1203, -inf
        %v1420 = vrot.slane %v1419, 4
        %v1421 = vmax.f32 %v1419, %v1420
        %v1422 = vrot.slane %v1421, 2
        %v1423 = vmax.f32 %v1421, %v1422
        %v1424 = vrot.slane %v1423, 1
        %v1425 = vmax.f32 %v1423, %v1424
        %v1426 = vsel %vm1271, %v1202, -inf
        %v1427 = vrot.slane %v1426, 4
        %v1428 = vmax.f32 %v1426, %v1427
        %v1429 = vrot.slane %v1428, 2
        %v1430 = vmax.f32 %v1428, %v1429
        %v1431 = vrot.slane %v1430, 1
        %v1432 = vmax.f32 %v1430, %v1431
        %v1433 = vsel %vm1271, %v1204, -inf
        %v1434 = vrot.slane %v1433, 4
        %v1435 = vmax.f32 %v1433, %v1434
        %v1436 = vrot.slane %v1435, 2
        %v1437 = vmax.f32 %v1435, %v1436
        %v1438 = vrot.slane %v1437, 1
        %v1439 = vmax.f32 %v1437, %v1438
        %v1440 = vsel %vm1271, %v1212, -inf
        %v1441 = vrot.slane %v1440, 4
        %v1442 = vmax.f32 %v1440, %v1441
        %v1443 = vrot.slane %v1442, 2
        %v1444 = vmax.f32 %v1442, %v1443
        %v1445 = vrot.slane %v1444, 1
        %v1446 = vmax.f32 %v1444, %v1445
        %v1447 = vsel %vm1271, %v1220, -inf
        %v1448 = vrot.slane %v1447, 4
        %v1449 = vmax.f32 %v1447, %v1448
        %v1450 = vrot.slane %v1449, 2
        %v1451 = vmax.f32 %v1449, %v1450
        %v1452 = vrot.slane %v1451, 1
        %v1453 = vmax.f32 %v1451, %v1452
        %v1454 = vsel %vm1271, %v1219, -inf
        %v1455 = vrot.slane %v1454, 4
        %v1456 = vmax.f32 %v1454, %v1455
        %v1457 = vrot.slane %v1456, 2
        %v1458 = vmax.f32 %v1456, %v1457
        %v1459 = vrot.slane %v1458, 1
        %v1460 = vmax.f32 %v1458, %v1459
        %v1461 = vsel %vm1271, %v1221, -inf
        %v1462 = vrot.slane %v1461, 4
        %v1463 = vmax.f32 %v1461, %v1462
        %v1464 = vrot.slane %v1463, 2
        %v1465 = vmax.f32 %v1463, %v1464
        %v1466 = vrot.slane %v1465, 1
        %v1467 = vmax.f32 %v1465, %v1466
        %v1468 = vsel %vm1271, %v1229, -inf
        %v1469 = vrot.slane %v1468, 4
        %v1470 = vmax.f32 %v1468, %v1469
        %v1471 = vrot.slane %v1470, 2
        %v1472 = vmax.f32 %v1470, %v1471
        %v1473 = vrot.slane %v1472, 1
        %v1474 = vmax.f32 %v1472, %v1473
        %v1475 = vsel %vm1271, %v1237, -inf
        %v1476 = vrot.slane %v1475, 4
        %v1477 = vmax.f32 %v1475, %v1476
        %v1478 = vrot.slane %v1477, 2
        %v1479 = vmax.f32 %v1477, %v1478
        %v1480 = vrot.slane %v1479, 1
        %v1481 = vmax.f32 %v1479, %v1480
        %v1482 = vsel %vm1271, %v1236, -inf
        %v1483 = vrot.slane %v1482, 4
        %v1484 = vmax.f32 %v1482, %v1483
        %v1485 = vrot.slane %v1484, 2
        %v1486 = vmax.f32 %v1484, %v1485
        %v1487 = vrot.slane %v1486, 1
        %v1488 = vmax.f32 %v1486, %v1487
        %v1489 = vsel %vm1271, %v1238, -inf
        %v1490 = vrot.slane %v1489, 4
        %v1491 = vmax.f32 %v1489, %v1490
        %v1492 = vrot.slane %v1491, 2
        %v1493 = vmax.f32 %v1491, %v1492
        %v1494 = vrot.slane %v1493, 1
        %v1495 = vmax.f32 %v1493, %v1494
        %vm1496 = vcmask 64512
        %v1497 = vsel %vm1496, %v1278, -inf
        %v1498 = vsel %vm1496, %v1306, -inf
        %v1499 = vmax.f32 %v1497, %v1498
        %v1500 = vsel %vm1496, %v1285, -inf
        %v1501 = vsel %vm1496, %v1313, -inf
        %v1502 = vmax.f32 %v1500, %v1501
        %v1503 = vsel %vm1496, %v1292, -inf
        %v1504 = vsel %vm1496, %v1320, -inf
        %v1505 = vmax.f32 %v1503, %v1504
        %v1506 = vsel %vm1496, %v1299, -inf
        %v1507 = vsel %vm1496, %v1327, -inf
        %v1508 = vmax.f32 %v1506, %v1507
        %v1509 = vsel %vm1496, %v1334, -inf
        %v1510 = vsel %vm1496, %v1362, -inf
        %v1511 = vmax.f32 %v1509, %v1510
        %v1512 = vsel %vm1496, %v1341, -inf
        %v1513 = vsel %vm1496, %v1369, -inf
        %v1514 = vmax.f32 %v1512, %v1513
        %v1515 = vsel %vm1496, %v1348, -inf
        %v1516 = vsel %vm1496, %v1376, -inf
        %v1517 = vmax.f32 %v1515, %v1516
        %v1518 = vsel %vm1496, %v1355, -inf
        %v1519 = vsel %vm1496, %v1383, -inf
        %v1520 = vmax.f32 %v1518, %v1519
        %v1521 = vsel %vm1496, %v1390, -inf
        %v1522 = vsel %vm1496, %v1418, -inf
        %v1523 = vmax.f32 %v1521, %v1522
        %v1524 = vsel %vm1496, %v1397, -inf
        %v1525 = vsel %vm1496, %v1425, -inf
        %v1526 = vmax.f32 %v1524, %v1525
        %v1527 = vsel %vm1496, %v1404, -inf
        %v1528 = vsel %vm1496, %v1432, -inf
        %v1529 = vmax.f32 %v1527, %v1528
        %v1530 = vsel %vm1496, %v1411, -inf
        %v1531 = vsel %vm1496, %v1439, -inf
        %v1532 = vmax.f32 %v1530, %v1531
        %v1533 = vsel %vm1496, %v1446, -inf
        %v1534 = vsel %vm1496, %v1474, -inf
        %v1535 = vmax.f32 %v1533, %v1534
        %v1536 = vsel %vm1496, %v1453, -inf
        %v1537 = vsel %vm1496, %v1481, -inf
        %v1538 = vmax.f32 %v1536, %v1537
        %v1539 = vsel %vm1496, %v1460, -inf
        %v1540 = vsel %vm1496, %v1488, -inf
        %v1541 = vmax.f32 %v1539, %v1540
        %v1542 = vsel %vm1496, %v1467, -inf
        %v1543 = vsel %vm1496, %v1495, -inf
        %v1544 = vmax.f32 %v1542, %v1543
        %v1545 = vpack.c.bf16 %v1499, %v1499
        %v1546 = vpack.c.bf16 %v1502, %v1502
        %v1547 = vpack.c.bf16 %v1505, %v1505
        %v1548 = vpack.c.bf16 %v1508, %v1508
        %v1549 = vpack.c.bf16 %v1511, %v1511
        %v1550 = vpack.c.bf16 %v1514, %v1514
        %v1551 = vpack.c.bf16 %v1517, %v1517
        %v1552 = vpack.c.bf16 %v1520, %v1520
        %v1553 = vpack.c.bf16 %v1523, %v1523
        %v1554 = vpack.c.bf16 %v1526, %v1526
        %v1555 = vpack.c.bf16 %v1529, %v1529
        %v1556 = vpack.c.bf16 %v1532, %v1532
        %v1557 = vpack.c.bf16 %v1535, %v1535
        %v1558 = vpack.c.bf16 %v1538, %v1538
        %v1559 = vpack.c.bf16 %v1541, %v1541
        %v1560 = vpack.c.bf16 %v1544, %v1544
        %v1578 = vunpack.c.l.s4 1983009808
        %v1579 = vunpack.c.0.s8 %v1578
        %v1580 = vlaneseq
        %v1581 = vshrl.u32 %v1580, 7
        %v1582 = vsub.s32 %v1579, %v1581
        %v1583 = vrot.slane %v1545, %v1582
        %v1585 = vunpack.c.l.s4 1983009808
        %v1586 = vunpack.c.0.s8 %v1585
        %v1587 = vlaneseq
        %v1588 = vshrl.u32 %v1587, 7
        %v1589 = vsub.s32 %v1586, %v1588
        %v1590 = vrot.slane %v1546, %v1589
        %v1592 = vunpack.c.l.s4 1983009808
        %v1593 = vunpack.c.0.s8 %v1592
        %v1594 = vlaneseq
        %v1595 = vshrl.u32 %v1594, 7
        %v1596 = vsub.s32 %v1593, %v1595
        %v1597 = vrot.slane %v1547, %v1596
        %v1599 = vunpack.c.l.s4 1983009808
        %v1600 = vunpack.c.0.s8 %v1599
        %v1601 = vlaneseq
        %v1602 = vshrl.u32 %v1601, 7
        %v1603 = vsub.s32 %v1600, %v1602
        %v1604 = vrot.slane %v1548, %v1603
        %v1606 = vunpack.c.l.s4 1983009808
        %v1607 = vunpack.c.0.s8 %v1606
        %v1608 = vlaneseq
        %v1609 = vshrl.u32 %v1608, 7
        %v1610 = vsub.s32 %v1607, %v1609
        %v1611 = vrot.slane %v1549, %v1610
        %v1613 = vunpack.c.l.s4 1983009808
        %v1614 = vunpack.c.0.s8 %v1613
        %v1615 = vlaneseq
        %v1616 = vshrl.u32 %v1615, 7
        %v1617 = vsub.s32 %v1614, %v1616
        %v1618 = vrot.slane %v1550, %v1617
        %v1620 = vunpack.c.l.s4 1983009808
        %v1621 = vunpack.c.0.s8 %v1620
        %v1622 = vlaneseq
        %v1623 = vshrl.u32 %v1622, 7
        %v1624 = vsub.s32 %v1621, %v1623
        %v1625 = vrot.slane %v1551, %v1624
        %v1627 = vunpack.c.l.s4 1983009808
        %v1628 = vunpack.c.0.s8 %v1627
        %v1629 = vlaneseq
        %v1630 = vshrl.u32 %v1629, 7
        %v1631 = vsub.s32 %v1628, %v1630
        %v1632 = vrot.slane %v1552, %v1631
        %v1634 = vunpack.c.l.s4 1983009808
        %v1635 = vunpack.c.0.s8 %v1634
        %v1636 = vlaneseq
        %v1637 = vshrl.u32 %v1636, 7
        %v1638 = vsub.s32 %v1635, %v1637
        %v1639 = vrot.slane %v1553, %v1638
        %v1641 = vunpack.c.l.s4 1983009808
        %v1642 = vunpack.c.0.s8 %v1641
        %v1643 = vlaneseq
        %v1644 = vshrl.u32 %v1643, 7
        %v1645 = vsub.s32 %v1642, %v1644
        %v1646 = vrot.slane %v1554, %v1645
        %v1648 = vunpack.c.l.s4 1983009808
        %v1649 = vunpack.c.0.s8 %v1648
        %v1650 = vlaneseq
        %v1651 = vshrl.u32 %v1650, 7
        %v1652 = vsub.s32 %v1649, %v1651
        %v1653 = vrot.slane %v1555, %v1652
        %v1655 = vunpack.c.l.s4 1983009808
        %v1656 = vunpack.c.0.s8 %v1655
        %v1657 = vlaneseq
        %v1658 = vshrl.u32 %v1657, 7
        %v1659 = vsub.s32 %v1656, %v1658
        %v1660 = vrot.slane %v1556, %v1659
        %v1662 = vunpack.c.l.s4 1983009808
        %v1663 = vunpack.c.0.s8 %v1662
        %v1664 = vlaneseq
        %v1665 = vshrl.u32 %v1664, 7
        %v1666 = vsub.s32 %v1663, %v1665
        %v1667 = vrot.slane %v1557, %v1666
        %v1669 = vunpack.c.l.s4 1983009808
        %v1670 = vunpack.c.0.s8 %v1669
        %v1671 = vlaneseq
        %v1672 = vshrl.u32 %v1671, 7
        %v1673 = vsub.s32 %v1670, %v1672
        %v1674 = vrot.slane %v1558, %v1673
        %v1676 = vunpack.c.l.s4 1983009808
        %v1677 = vunpack.c.0.s8 %v1676
        %v1678 = vlaneseq
        %v1679 = vshrl.u32 %v1678, 7
        %v1680 = vsub.s32 %v1677, %v1679
        %v1681 = vrot.slane %v1559, %v1680
        %v1683 = vunpack.c.l.s4 1983009808
        %v1684 = vunpack.c.0.s8 %v1683
        %v1685 = vlaneseq
        %v1686 = vshrl.u32 %v1685, 7
        %v1687 = vsub.s32 %v1684, %v1686
        %v1688 = vrot.slane %v1560, %v1687
        %v1690 = vunpack.c.l.s4 1983009808
        %v1691 = vunpack.c.0.s8 %v1690
        %v1692 = vlaneseq
        %v1693 = vshrl.u32 %v1692, 7
        %v1694 = vsub.s32 %v1691, %v1693
        %v1695 = vrot.slane %v1583, %v1694
        %v1697 = vunpack.c.l.s4 1983009808
        %v1698 = vunpack.c.0.s8 %v1697
        %v1699 = vlaneseq
        %v1700 = vshrl.u32 %v1699, 7
        %v1701 = vsub.s32 %v1698, %v1700
        %v1702 = vrot.slane %v1590, %v1701
        %v1704 = vunpack.c.l.s4 1983009808
        %v1705 = vunpack.c.0.s8 %v1704
        %v1706 = vlaneseq
        %v1707 = vshrl.u32 %v1706, 7
        %v1708 = vsub.s32 %v1705, %v1707
        %v1709 = vrot.slane %v1597, %v1708
        %v1711 = vunpack.c.l.s4 1983009808
        %v1712 = vunpack.c.0.s8 %v1711
        %v1713 = vlaneseq
        %v1714 = vshrl.u32 %v1713, 7
        %v1715 = vsub.s32 %v1712, %v1714
        %v1716 = vrot.slane %v1604, %v1715
        %v1718 = vunpack.c.l.s4 1983009808
        %v1719 = vunpack.c.0.s8 %v1718
        %v1720 = vlaneseq
        %v1721 = vshrl.u32 %v1720, 7
        %v1722 = vsub.s32 %v1719, %v1721
        %v1723 = vrot.slane %v1611, %v1722
        %v1725 = vunpack.c.l.s4 1983009808
        %v1726 = vunpack.c.0.s8 %v1725
        %v1727 = vlaneseq
        %v1728 = vshrl.u32 %v1727, 7
        %v1729 = vsub.s32 %v1726, %v1728
        %v1730 = vrot.slane %v1618, %v1729
        %v1732 = vunpack.c.l.s4 1983009808
        %v1733 = vunpack.c.0.s8 %v1732
        %v1734 = vlaneseq
        %v1735 = vshrl.u32 %v1734, 7
        %v1736 = vsub.s32 %v1733, %v1735
        %v1737 = vrot.slane %v1625, %v1736
        %v1739 = vunpack.c.l.s4 1983009808
        %v1740 = vunpack.c.0.s8 %v1739
        %v1741 = vlaneseq
        %v1742 = vshrl.u32 %v1741, 7
        %v1743 = vsub.s32 %v1740, %v1742
        %v1744 = vrot.slane %v1632, %v1743
        %v1746 = vunpack.c.l.s4 1983009808
        %v1747 = vunpack.c.0.s8 %v1746
        %v1748 = vlaneseq
        %v1749 = vshrl.u32 %v1748, 7
        %v1750 = vsub.s32 %v1747, %v1749
        %v1751 = vrot.slane %v1639, %v1750
        %v1753 = vunpack.c.l.s4 1983009808
        %v1754 = vunpack.c.0.s8 %v1753
        %v1755 = vlaneseq
        %v1756 = vshrl.u32 %v1755, 7
        %v1757 = vsub.s32 %v1754, %v1756
        %v1758 = vrot.slane %v1646, %v1757
        %v1760 = vunpack.c.l.s4 1983009808
        %v1761 = vunpack.c.0.s8 %v1760
        %v1762 = vlaneseq
        %v1763 = vshrl.u32 %v1762, 7
        %v1764 = vsub.s32 %v1761, %v1763
        %v1765 = vrot.slane %v1653, %v1764
        %v1767 = vunpack.c.l.s4 1983009808
        %v1768 = vunpack.c.0.s8 %v1767
        %v1769 = vlaneseq
        %v1770 = vshrl.u32 %v1769, 7
        %v1771 = vsub.s32 %v1768, %v1770
        %v1772 = vrot.slane %v1660, %v1771
        %v1774 = vunpack.c.l.s4 1983009808
        %v1775 = vunpack.c.0.s8 %v1774
        %v1776 = vlaneseq
        %v1777 = vshrl.u32 %v1776, 7
        %v1778 = vsub.s32 %v1775, %v1777
        %v1779 = vrot.slane %v1667, %v1778
        %v1781 = vunpack.c.l.s4 1983009808
        %v1782 = vunpack.c.0.s8 %v1781
        %v1783 = vlaneseq
        %v1784 = vshrl.u32 %v1783, 7
        %v1785 = vsub.s32 %v1782, %v1784
        %v1786 = vrot.slane %v1674, %v1785
        %v1788 = vunpack.c.l.s4 1983009808
        %v1789 = vunpack.c.0.s8 %v1788
        %v1790 = vlaneseq
        %v1791 = vshrl.u32 %v1790, 7
        %v1792 = vsub.s32 %v1789, %v1791
        %v1793 = vrot.slane %v1681, %v1792
        %v1795 = vunpack.c.l.s4 1983009808
        %v1796 = vunpack.c.0.s8 %v1795
        %v1797 = vlaneseq
        %v1798 = vshrl.u32 %v1797, 7
        %v1799 = vsub.s32 %v1796, %v1798
        %v1800 = vrot.slane %v1688, %v1799
        %v1801 = vunpack.c.l.b16 %v1695
        %v1802 = vunpack.c.l.b16 %v1702
        %v1803 = vunpack.c.l.b16 %v1709
        %v1804 = vunpack.c.l.b16 %v1716
        %v1805 = vunpack.c.l.b16 %v1723
        %v1806 = vunpack.c.l.b16 %v1730
        %v1807 = vunpack.c.l.b16 %v1737
        %v1808 = vunpack.c.l.b16 %v1744
        %v1809 = vunpack.c.l.b16 %v1751
        %v1810 = vunpack.c.l.b16 %v1758
        %v1811 = vunpack.c.l.b16 %v1765
        %v1812 = vunpack.c.l.b16 %v1772
        %v1813 = vunpack.c.l.b16 %v1779
        %v1814 = vunpack.c.l.b16 %v1786
        %v1815 = vunpack.c.l.b16 %v1793
        %v1816 = vunpack.c.l.b16 %v1800
        %v1817 = vrot.slane %v1802, 7
        %vm1818 = vcmask 1041409
        %v1819 = vsel %vm1818, %v1817, %v1801
        %v1820 = vrot.slane %v1803, 6
        %vm1821 = vcmask 1042434
        %v1822 = vsel %vm1821, %v1820, %v1819
        %v1823 = vrot.slane %v1804, 5
        %vm1824 = vcmask 1043459
        %v1825 = vsel %vm1824, %v1823, %v1822
        %v1826 = vrot.slane %v1806, 7
        %v1827 = vsel %vm1818, %v1826, %v1805
        %v1828 = vrot.slane %v1807, 6
        %v1829 = vsel %vm1821, %v1828, %v1827
        %v1830 = vrot.slane %v1808, 5
        %v1831 = vsel %vm1824, %v1830, %v1829
        %v1832 = vrot.slane %v1810, 7
        %v1833 = vsel %vm1818, %v1832, %v1809
        %v1834 = vrot.slane %v1811, 6
        %v1835 = vsel %vm1821, %v1834, %v1833
        %v1836 = vrot.slane %v1812, 5
        %v1837 = vsel %vm1824, %v1836, %v1835
        %v1838 = vrot.slane %v1814, 7
        %v1839 = vsel %vm1818, %v1838, %v1813
        %v1840 = vrot.slane %v1815, 6
        %v1841 = vsel %vm1821, %v1840, %v1839
        %v1842 = vrot.slane %v1816, 5
        %v1843 = vsel %vm1824, %v1842, %v1841
        %v1844 = vpack.c.b16 %v1825, %v1825
        %v1845 = vpack.c.b16 %v1831, %v1831
        %v1846 = vpack.c.b16 %v1837, %v1837
        %v1847 = vpack.c.b16 %v1843, %v1843
        %v1849 = vunpack.c.l.s4 1983009808
        %v1850 = vunpack.c.0.s8 %v1849
        %v1851 = vlaneseq
        %v1852 = vshrl.u32 %v1851, 7
        %v1853 = vsub.s32 %v1850, %v1852
        %v1854 = vrot.slane %v1844, %v1853
        %v1856 = vunpack.c.l.s4 1983009808
        %v1857 = vunpack.c.0.s8 %v1856
        %v1858 = vlaneseq
        %v1859 = vshrl.u32 %v1858, 7
        %v1860 = vsub.s32 %v1857, %v1859
        %v1861 = vrot.slane %v1845, %v1860
        %v1863 = vunpack.c.l.s4 1983009808
        %v1864 = vunpack.c.0.s8 %v1863
        %v1865 = vlaneseq
        %v1866 = vshrl.u32 %v1865, 7
        %v1867 = vsub.s32 %v1864, %v1866
        %v1868 = vrot.slane %v1846, %v1867
        %v1870 = vunpack.c.l.s4 1983009808
        %v1871 = vunpack.c.0.s8 %v1870
        %v1872 = vlaneseq
        %v1873 = vshrl.u32 %v1872, 7
        %v1874 = vsub.s32 %v1871, %v1873
        %v1875 = vrot.slane %v1847, %v1874
        %1880 = vst.msk [vmem:[%s234] sm:$0x3] %vm1271, %v1854
        %1881 = vst.msk [vmem:[%s234 + $0x2] sm:$0x3] %vm1271, %v1861
        %1882 = vst.msk [vmem:[%s234 + $0x4] sm:$0x3] %vm1271, %v1868
        %1883 = vst.msk [vmem:[%s234 + $0x6] sm:$0x3] %vm1271, %v1875
      $region48: #{unet_encoder.5} parent=35 // pred_fallthru
        _
      %s1884 = smul.u32 %s19, %s20
      %p1885 = scmp.lt.s32.totalorder %s1884, 1
      %s1886 = scalar_select %p1885, %s1884, 1
      %s1887 = smul.addr %s1886, 4
      %s1888 = smul.addr %s1887, 2
      %s1889 = scalar_lea.vmem %s4, %s1888
      // Predicated region
      $region53: #{unet_encoder.5} parent=35 // pred_check
        %p1890 = pneg %p142
      $region54: #{unet_encoder.5} parent=35 // pred_check_branch
        %1892 = sbr.rel (%p1890) target = $region56
      $region55: #{unet_encoder.5} parent=35 // pred_region
        %s1893 = smul.u32 %s19, %s20
      $region56: #{unet_encoder.5} parent=35 // pred_fallthru
        _
    $region36: #{unet_encoder.5} parent=5 // pred_fallthru
      _
    %p1894 = scmp.le.s32.totalorder 2, %s10
    // Predicated region
    $region57: #{unet_encoder.5} parent=5 // pred_check
      %p1895 = pneg %p1894
    $region58: #{unet_encoder.5} parent=5 // pred_check_branch
      %1897 = sbr.rel (%p1895) target = $region60
    $region59: #{unet_encoder.5} parent=5 // pred_region
      %s1898 = ssub.s32 %s10, 2
      // Predicated region
      $region61: #{unet_encoder.5} parent=59 // pred_check
        %p1899 = pneg %p148
      $region62: #{unet_encoder.5} parent=59 // pred_check_branch
        %1901 = sbr.rel (%p1899) target = $region64
      $region63: #{unet_encoder.5} parent=59 // pred_region
        %s1902 = smul.u32 %s21, %s22
        %p1903 = scmp.lt.s32.totalorder %s1902, 1
        %s1904 = scalar_select %p1903, %s1902, 1
        %s1905 = smul.addr %s1904, 4
        %s1906 = smul.addr %s1905, 2
        %s1907 = scalar_lea.vmem %s4, %s1906
      $region64: #{unet_encoder.5} parent=59 // pred_fallthru
        _
    $region60: #{unet_encoder.5} parent=5 // pred_fallthru
      _
  $region6: #{unet_encoder.5} parent=0 // loop_footer
    %s14 = sadd.s32 1, %s10
  $region7: #{unet_encoder.5} parent=0 // loop_footer_branch
    %9 = sbr.rel target = $region3
  $region8: #{unet_encoder.5} parent=0 // loop_exit
    _

// kernel: unet_encoder.6
$region0: #{unet_encoder.6}
  #allocation0 [shape = 'u32[]', space=smem, size = 0x4, offset = 0x4, fixed_abs, tag = 'smem constant byte address 0x4 - core index']
  #allocation1 [shape = 'u32[144,128]{1,0:T(1,128)}', space=vmem, size = 0x12000, scoped, tag = 'internal scratch']
  #allocation2 [shape = 'bf16[6,21,8]{2,1,0:T(8,128)(2,1)}', space=vmem, size = 0x9000, scoped, tag = 'scratch operand']
  #allocation3 [shape = 'f32[2,16,16]{2,1,0:T(8,128)}', space=vmem, size = 0x4000, scoped, tag = 'scratch operand']
  #allocation4 [shape = 'f32[1,16]{1,0:T(1,128)}', space=vmem, size = 0x200, scoped, tag = 'scratch operand']
  #allocation5 [shape = 'f32[1,16]{1,0:T(1,128)}', space=vmem, size = 0x200, scoped, tag = 'scratch operand']
  #allocation6 [shape = 'f32[1,16]{1,0:T(1,128)}', space=vmem, size = 0x200, scoped, tag = 'scratch operand']
  %s0 = inlined_call_operand.vmem [shape: bf16[2,4,4,8], index: 0, kind: input, shape index: {}]
  %s1 = inlined_call_operand.vmem [shape: bf16[72,16], index: 1, kind: input, shape index: {}]
  %s2 = inlined_call_operand.vmem [shape: f32[1,16], index: 2, kind: input, shape index: {}]
  %s3 = inlined_call_operand.vmem [shape: f32[1,16], index: 3, kind: input, shape index: {}]
  %s4 = inlined_call_operand.vmem [shape: bf16[2,2,2,16], index: 4, kind: output, shape index: {}]
  %s5 = sld [smem:[#allocation0]]
  $region65: #{unet_encoder.6} parent=0
    _
  %s7 = ssub.s32 1, %s5
  %s8 = scalar_select 0, %s7, %s5
  loop: start=0, step=1, limit=6
  $region2: #{unet_encoder.6} parent=0 // loop_pre_header
    _
  $region3: #{unet_encoder.6} parent=0 // loop_header
    %s10 = sphi 0, %s14
    %p11 = scmp.ge.s32.totalorder %s10, 6
    %s17 = sphi 0, %s29
    %s18 = sphi 0, %s25
    %s19 = sphi 0, %s17
    %s20 = sphi 0, %s18
    %s21 = sphi 0, %s19
    %s22 = sphi 0, %s20
    %s38 = sphi 0, %s40
    %s41 = sphi 0, %s38
    %s42 = sphi 0, %s41
    %s58 = sphi 0, %s42
    %s62 = sphi 0, %s62
    %s64 = sphi 0, %s62
    %s65 = sphi 0, %s64
    %s79 = sphi 0, %s65
    %s83 = sphi 0, %s83
    %s85 = sphi 0, %s83
    %s86 = sphi 0, %s85
    %s100 = sphi 0, %s86
    %s104 = sphi 0, %s104
    %s106 = sphi 0, %s104
    %s107 = sphi 0, %s106
    %s121 = sphi 0, %s107
    %s129 = sphi 0, %s131
    %s132 = sphi 0, %s129
    %s133 = sphi 0, %s132
    %s149 = sphi 0, %s133
  $region4: #{unet_encoder.6} parent=0 // loop_header_branch
    %13 = sbr.rel (%p11) target = $region8
  $region5: #{unet_encoder.6} parent=0 // loop_body
    %s15 = ssub.s32 %s10, 1
    %s16 = ssub.s32 %s10, 2
    %s23 = sadd.s32 1, %s18
    %p24 = scmp.ge.s32.totalorder %s23, 2
    %s25 = scalar_select %p24, 0, %s23
    %s26 = sadd.s32 1, %s17
    %s27 = scalar_select %p24, %s26, %s17
    %p28 = scmp.ge.s32.totalorder %s27, 2
    %s29 = scalar_select %p28, 0, %s27
    %s30 = ssub.s32 1, %s17
    %s31 = smul.u32 %s18, %s30
    %s32 = sadd.s32 %s31, %s17
    %s33 = ssub.s32 1, %s29
    %s34 = smul.u32 %s25, %s33
    %s35 = sadd.s32 %s34, %s29
    %s36 = ssub.s32 %s32, %s35
    %p37 = scmp.eq.s32.totalorder %s36, 0
    %s39 = sadd.s32 %s38, 1
    %s40 = scalar_select %p37, %s38, %s39
    %p43 = pneg %p37
    %p44 = scmp.eq.s32.totalorder %s10, 3
    %p45 = por %p43, %p44
    %p46 = scmp.ne.s32.totalorder %s38, %s41
    %p47 = scmp.eq.s32.totalorder %s10, 0
    %p48 = por %p46, %p47
    %p49 = scmp.ne.s32.totalorder %s38, %s41
    %p50 = scmp.eq.s32.totalorder %s15, 3
    %p51 = por %p49, %p50
    %p52 = scmp.ne.s32.totalorder %s41, %s42
    %p53 = scmp.eq.s32.totalorder %s15, 0
    %p54 = por %p52, %p53
    %p55 = scmp.ne.s32.totalorder %s41, %s42
    %p56 = scmp.eq.s32.totalorder %s16, 3
    %p57 = por %p55, %p56
    %p59 = scmp.ne.s32.totalorder %s42, %s58
    %p60 = scmp.eq.s32.totalorder %s16, 0
    %p61 = por %p59, %p60
    %s63 = sadd.s32 %s62, 1
    %p66 = scmp.eq.s32.totalorder %s10, 3
    %p67 = scmp.ne.s32.totalorder %s62, %s64
    %p68 = scmp.eq.s32.totalorder %s10, 0
    %p69 = por %p67, %p68
    %p70 = scmp.ne.s32.totalorder %s62, %s64
    %p71 = scmp.eq.s32.totalorder %s15, 3
    %p72 = por %p70, %p71
    %p73 = scmp.ne.s32.totalorder %s64, %s65
    %p74 = scmp.eq.s32.totalorder %s15, 0
    %p75 = por %p73, %p74
    %p76 = scmp.ne.s32.totalorder %s64, %s65
    %p77 = scmp.eq.s32.totalorder %s16, 3
    %p78 = por %p76, %p77
    %p80 = scmp.ne.s32.totalorder %s65, %s79
    %p81 = scmp.eq.s32.totalorder %s16, 0
    %p82 = por %p80, %p81
    %s84 = sadd.s32 %s83, 1
    %p87 = scmp.eq.s32.totalorder %s10, 3
    %p88 = scmp.ne.s32.totalorder %s83, %s85
    %p89 = scmp.eq.s32.totalorder %s10, 0
    %p90 = por %p88, %p89
    %p91 = scmp.ne.s32.totalorder %s83, %s85
    %p92 = scmp.eq.s32.totalorder %s15, 3
    %p93 = por %p91, %p92
    %p94 = scmp.ne.s32.totalorder %s85, %s86
    %p95 = scmp.eq.s32.totalorder %s15, 0
    %p96 = por %p94, %p95
    %p97 = scmp.ne.s32.totalorder %s85, %s86
    %p98 = scmp.eq.s32.totalorder %s16, 3
    %p99 = por %p97, %p98
    %p101 = scmp.ne.s32.totalorder %s86, %s100
    %p102 = scmp.eq.s32.totalorder %s16, 0
    %p103 = por %p101, %p102
    %s105 = sadd.s32 %s104, 1
    %p108 = scmp.eq.s32.totalorder %s10, 3
    %p109 = scmp.ne.s32.totalorder %s104, %s106
    %p110 = scmp.eq.s32.totalorder %s10, 0
    %p111 = por %p109, %p110
    %p112 = scmp.ne.s32.totalorder %s104, %s106
    %p113 = scmp.eq.s32.totalorder %s15, 3
    %p114 = por %p112, %p113
    %p115 = scmp.ne.s32.totalorder %s106, %s107
    %p116 = scmp.eq.s32.totalorder %s15, 0
    %p117 = por %p115, %p116
    %p118 = scmp.ne.s32.totalorder %s106, %s107
    %p119 = scmp.eq.s32.totalorder %s16, 3
    %p120 = por %p118, %p119
    %p122 = scmp.ne.s32.totalorder %s107, %s121
    %p123 = scmp.eq.s32.totalorder %s16, 0
    %p124 = por %p122, %p123
    %s125 = smul.u32 %s17, %s18
    %s126 = smul.u32 %s29, %s25
    %s127 = ssub.s32 %s125, %s126
    %p128 = scmp.eq.s32.totalorder %s127, 0
    %s130 = sadd.s32 %s129, 1
    %s131 = scalar_select %p128, %s129, %s130
    %p134 = pneg %p128
    %p135 = scmp.eq.s32.totalorder %s10, 3
    %p136 = por %p134, %p135
    %p137 = scmp.ne.s32.totalorder %s129, %s132
    %p138 = scmp.eq.s32.totalorder %s10, 0
    %p139 = por %p137, %p138
    %p140 = scmp.ne.s32.totalorder %s129, %s132
    %p141 = scmp.eq.s32.totalorder %s15, 3
    %p142 = por %p140, %p141
    %p143 = scmp.ne.s32.totalorder %s132, %s133
    %p144 = scmp.eq.s32.totalorder %s15, 0
    %p145 = por %p143, %p144
    %p146 = scmp.ne.s32.totalorder %s132, %s133
    %p147 = scmp.eq.s32.totalorder %s16, 3
    %p148 = por %p146, %p147
    %p150 = scmp.ne.s32.totalorder %s133, %s149
    %p151 = scmp.eq.s32.totalorder %s16, 0
    %p152 = por %p150, %p151
    %p153 = scmp.le.s32.totalorder 1, %s10
    %p154 = scmp.lt.s32.totalorder %s10, 5
    %p155 = pnand %p153, %p154
    %p156 = pneg %p155
    // Predicated region
    $region9: #{unet_encoder.6} parent=5 // pred_check
      _
    $region10: #{unet_encoder.6} parent=5 // pred_check_branch
      %158 = sbr.rel (%p155) target = $region12
    $region11: #{unet_encoder.6} parent=5 // pred_region
      %s159 = ssub.s32 %s10, 1
      // Predicated region
      $region13: #{unet_encoder.6} parent=11 // pred_check
        %p160 = pneg %p75
      $region14: #{unet_encoder.6} parent=11 // pred_check_branch
        %162 = sbr.rel (%p160) target = $region16
      $region15: #{unet_encoder.6} parent=11 // pred_region
        _
      $region16: #{unet_encoder.6} parent=11 // pred_fallthru
        _
      // Predicated region
      $region17: #{unet_encoder.6} parent=11 // pred_check
        %p163 = pneg %p96
      $region18: #{unet_encoder.6} parent=11 // pred_check_branch
        %165 = sbr.rel (%p163) target = $region20
      $region19: #{unet_encoder.6} parent=11 // pred_region
        _
      $region20: #{unet_encoder.6} parent=11 // pred_fallthru
        _
      // Predicated region
      $region21: #{unet_encoder.6} parent=11 // pred_check
        %p166 = pneg %p117
      $region22: #{unet_encoder.6} parent=11 // pred_check_branch
        %168 = sbr.rel (%p166) target = $region24
      $region23: #{unet_encoder.6} parent=11 // pred_region
        _
      $region24: #{unet_encoder.6} parent=11 // pred_fallthru
        _
    $region12: #{unet_encoder.6} parent=5 // pred_fallthru
      _
    %p169 = scmp.lt.s32.totalorder %s10, 4
    // Predicated region
    $region25: #{unet_encoder.6} parent=5 // pred_check
      %p170 = pneg %p169
    $region26: #{unet_encoder.6} parent=5 // pred_check_branch
      %172 = sbr.rel (%p170) target = $region28
    $region27: #{unet_encoder.6} parent=5 // pred_region
      // Predicated region
      $region29: #{unet_encoder.6} parent=27 // pred_check
        %p173 = pneg %p48
      $region30: #{unet_encoder.6} parent=27 // pred_check_branch
        %175 = sbr.rel (%p173) target = $region32
      $region31: #{unet_encoder.6} parent=27 // pred_region
        %s176 = ssub.s32 1, %s17
        %s177 = smul.u32 %s18, %s176
        %s178 = sadd.s32 %s177, %s17
        %p179 = scmp.lt.s32.totalorder %s178, 1
        %s180 = scalar_select %p179, %s178, 1
        %s181 = smul.addr %s180, 4
        %s182 = smul.addr %s181, 2
        %s183 = scalar_lea.vmem %s0, %s182
        %s184 = ssub.s32 1, %s17
        %s185 = smul.u32 %s18, %s184
        %s186 = sadd.s32 %s185, %s17
      $region32: #{unet_encoder.6} parent=27 // pred_fallthru
        _
    $region28: #{unet_encoder.6} parent=5 // pred_fallthru
      _
    %p187 = scmp.le.s32.totalorder 1, %s10
    %p188 = scmp.lt.s32.totalorder %s10, 5
    %p189 = pnand %p187, %p188
    %p190 = pneg %p189
    // Predicated region
    $region33: #{unet_encoder.6} parent=5 // pred_check
      _
    $region34: #{unet_encoder.6} parent=5 // pred_check_branch
      %192 = sbr.rel (%p189) target = $region36
    $region35: #{unet_encoder.6} parent=5 // pred_region
      %s193 = ssub.s32 %s10, 1
      %s194 = ssub.s32 1, %s19
      %s195 = smul.u32 %s20, %s194
      %s196 = sadd.s32 %s195, %s19
      %p197 = scmp.lt.s32.totalorder %s196, 1
      %s198 = scalar_select %p197, %s196, 1
      %s199 = smul.addr %s198, 4
      %s200 = smul.addr %s199, 2
      %s201 = scalar_lea.vmem %s0, %s200
      %p202 = pneg %p54
      %p203 = pneg %p51
      %p204 = pneg %p75
      %p205 = pneg %p72
      %p206 = pneg %p96
      %p207 = pneg %p93
      %p208 = pneg %p117
      %p209 = pneg %p114
      %p210 = pneg %p145
      %p211 = pneg %p142
      %s212 = smul.u32 %s19, %s20
      %p213 = scmp.lt.s32.totalorder %s212, 1
      %s214 = scalar_select %p213, %s212, 1
      %s215 = smul.addr %s214, 2
      %s216 = scalar_lea.vmem %s4, %s215
      %s217 = ssub.s32 1, %s19
      %s218 = smul.u32 %s20, %s217
      %s219 = sadd.s32 %s218, %s19
      %p220 = scmp.lt.s32.totalorder %s219, 1
      %s221 = scalar_select %p220, %s219, 1
      %s222 = smul.addr %s221, 4
      %s223 = smul.addr %s222, 2
      %s224 = scalar_lea.vmem %s0, %s223
      %s225 = ssub.s32 1, %s19
      %s226 = smul.u32 %s20, %s225
      %s227 = sadd.s32 %s226, %s19
      %s228 = smul.u32 %s19, %s20
      %p229 = scmp.lt.s32.totalorder %s228, 1
      %s230 = scalar_select %p229, %s228, 1
      %s231 = smul.addr %s230, 2
      %s232 = scalar_lea.vmem %s4, %s231
      %s233 = smul.u32 %s19, %s20
      %p235 = scmp.eq.s32.totalorder %s19, 0
      // Predicated region
      $region37: #{unet_encoder.6} parent=35 // pred_check
        %p236 = pneg %p235
      $region38: #{unet_encoder.6} parent=35 // pred_check_branch
        %238 = sbr.rel (%p236) target = $region40
      $region39: #{unet_encoder.6} parent=35 // pred_region
        %p239 = scmp.eq.s32.totalorder %s20, 0
        // Predicated region
        $region41: #{unet_encoder.6} parent=39 // pred_check
          %p240 = pneg %p239
        $region42: #{unet_encoder.6} parent=39 // pred_check_branch
          %242 = sbr.rel (%p240) target = $region44
        $region43: #{unet_encoder.6} parent=39 // pred_region
          %vm243 = vcmask 60416
          %244 = vst.msk [vmem:[#allocation2] sm:$0xf] %vm243, 0
          %245 = vst.msk [vmem:[#allocation2 + $0x4] sm:$0xf] %vm243, 0
          %vm246 = vcmask 59392
          %vm247 = vsmask.f32 2304
          %vm248 = vmand %vm246, %vm247
          %v249 = vld [vmem:[#allocation2 + $0x8] sm:$0x7]
          %v250 = vsel %vm248, 0, %v249
          %251 = vst [vmem:[#allocation2 + $0x8] sm:$0x7] %v250
          %252 = vst.msk [vmem:[#allocation2 + $0xc] sm:$0xf] %vm243, 0
          %253 = vst.msk [vmem:[#allocation2 + $0x10] sm:$0xf] %vm243, 0
          %v254 = vld [vmem:[#allocation2 + $0x14] sm:$0x7]
          %v255 = vsel %vm248, 0, %v254
          %256 = vst [vmem:[#allocation2 + $0x14] sm:$0x7] %v255
          %257 = vst.msk [vmem:[#allocation2 + $0x18] sm:$0xf] %vm243, 0
          %258 = vst.msk [vmem:[#allocation2 + $0x1c] sm:$0xf] %vm243, 0
          %v259 = vld [vmem:[#allocation2 + $0x20] sm:$0x7]
          %v260 = vsel %vm248, 0, %v259
          %261 = vst [vmem:[#allocation2 + $0x20] sm:$0x7] %v260
          %262 = vst.msk [vmem:[#allocation2 + $0x24] sm:$0xf] %vm243, 0
          %263 = vst.msk [vmem:[#allocation2 + $0x28] sm:$0xf] %vm243, 0
          %v264 = vld [vmem:[#allocation2 + $0x2c] sm:$0x7]
          %v265 = vsel %vm248, 0, %v264
          %266 = vst [vmem:[#allocation2 + $0x2c] sm:$0x7] %v265
          %267 = vst.msk [vmem:[#allocation2 + $0x30] sm:$0xf] %vm243, 0
          %268 = vst.msk [vmem:[#allocation2 + $0x34] sm:$0xf] %vm243, 0
          %v269 = vld [vmem:[#allocation2 + $0x38] sm:$0x7]
          %v270 = vsel %vm248, 0, %v269
          %271 = vst [vmem:[#allocation2 + $0x38] sm:$0x7] %v270
          %272 = vst.msk [vmem:[#allocation2 + $0x3c] sm:$0xf] %vm243, 0
          %273 = vst.msk [vmem:[#allocation2 + $0x40] sm:$0xf] %vm243, 0
          %v274 = vld [vmem:[#allocation2 + $0x44] sm:$0x7]
          %v275 = vsel %vm248, 0, %v274
          %276 = vst [vmem:[#allocation2 + $0x44] sm:$0x7] %v275
          %vm277 = vcmask 122880
          %278 = vst.msk [vmem:[#allocation4] sm:$0x1] %vm277, 0.0
        $region44: #{unet_encoder.6} parent=39 // pred_fallthru
          _
        %v279 = vld [vmem:[%s224] sm:$0x3]
        %v280 = vld [vmem:[%s224 + $0x2] sm:$0x3]
        %v281 = vld [vmem:[%s224 + $0x4] sm:$0x3]
        %v282 = vld [vmem:[%s224 + $0x6] sm:$0x3]
        %s283 = scalar_lea.vmem [#allocation2], 12
        %vm284 = vcmask 58368
        %285 = vst.msk [vmem:[%s283 + $0x8] sm:$0x3] %vm284, %v279
        %286 = vst.msk [vmem:[%s283 + $0x14] sm:$0x3] %vm284, %v280
        %287 = vst.msk [vmem:[%s283 + $0x20] sm:$0x3] %vm284, %v281
        %288 = vst.msk [vmem:[%s283 + $0x2c] sm:$0x3] %vm284, %v282
        %v289 = vld [vmem:[#allocation2 + $0x4] sm:$0xf]
        %v290 = vld [vmem:[#allocation2 + $0x8] sm:$0x7]
        %v291 = vld [vmem:[#allocation2 + $0x10] sm:$0xf]
        %v292 = vld [vmem:[#allocation2 + $0x14] sm:$0x7]
        %v293 = vld [vmem:[#allocation2 + $0x1c] sm:$0xf]
        %v294 = vld [vmem:[#allocation2 + $0x20] sm:$0x7]
        %v295 = vld [vmem:[#allocation2 + $0x28] sm:$0xf]
        %v296 = vld [vmem:[#allocation2 + $0x2c] sm:$0x7]
        %v297 = vld [vmem:[#allocation2 + $0x34] sm:$0xf]
        %v298 = vld [vmem:[#allocation2 + $0x38] sm:$0x7]
        %v299 = vld [vmem:[#allocation2 + $0x40] sm:$0xf]
        %v300 = vld [vmem:[#allocation2 + $0x44] sm:$0x7]
        %v310 = vunpack.c.l.s4 1983009808
        %v311 = vunpack.c.0.s8 %v310
        %v312 = vlaneseq
        %v313 = vshrl.u32 %v312, 7
        %v314 = vsub.s32 %v311, %v313
        %v315 = vrot.slane %v289, %v314
        %v316 = vcombine.high %v315, %v315
        %v318 = vunpack.c.l.s4 1983009808
        %v319 = vunpack.c.0.s8 %v318
        %v320 = vlaneseq
        %v321 = vshrl.u32 %v320, 7
        %v322 = vsub.s32 %v319, %v321
        %v323 = vrot.slane %v290, %v322
        %v325 = vunpack.c.l.s4 1983009808
        %v326 = vunpack.c.0.s8 %v325
        %v327 = vlaneseq
        %v328 = vshrl.u32 %v327, 7
        %v329 = vsub.s32 %v326, %v328
        %v330 = vrot.slane %v291, %v329
        %v331 = vcombine.high %v330, %v330
        %v333 = vunpack.c.l.s4 1983009808
        %v334 = vunpack.c.0.s8 %v333
        %v335 = vlaneseq
        %v336 = vshrl.u32 %v335, 7
        %v337 = vsub.s32 %v334, %v336
        %v338 = vrot.slane %v292, %v337
        %v340 = vunpack.c.l.s4 1983009808
        %v341 = vunpack.c.0.s8 %v340
        %v342 = vlaneseq
        %v343 = vshrl.u32 %v342, 7
        %v344 = vsub.s32 %v341, %v343
        %v345 = vrot.slane %v293, %v344
        %v346 = vcombine.high %v345, %v345
        %v348 = vunpack.c.l.s4 1983009808
        %v349 = vunpack.c.0.s8 %v348
        %v350 = vlaneseq
        %v351 = vshrl.u32 %v350, 7
        %v352 = vsub.s32 %v349, %v351
        %v353 = vrot.slane %v294, %v352
        %v355 = vunpack.c.l.s4 1983009808
        %v356 = vunpack.c.0.s8 %v355
        %v357 = vlaneseq
        %v358 = vshrl.u32 %v357, 7
        %v359 = vsub.s32 %v356, %v358
        %v360 = vrot.slane %v295, %v359
        %v361 = vcombine.high %v360, %v360
        %v363 = vunpack.c.l.s4 1983009808
        %v364 = vunpack.c.0.s8 %v363
        %v365 = vlaneseq
        %v366 = vshrl.u32 %v365, 7
        %v367 = vsub.s32 %v364, %v366
        %v368 = vrot.slane %v296, %v367
        %vm369 = vsmask.f32 256
        %vm370 = vsmask.f32 2312
        %vm371 = vmor %vm369, %vm370
        %vm372 = vsmask.f32 4368
        %vm373 = vmor %vm371, %vm372
        %vm374 = vsmask.f32 6424
        %vm375 = vmor %vm373, %vm374
        %v377 = vshrl.u32 %v316, 16
        %v379 = vrot.slane %v377, 7
        %v380 = vrot.slane %v379, 2
        %v382 = vshrl.u32 %v323, 16
        %v384 = vrot.slane %v382, 7
        %v385 = vshll.u32 %v323, 16
        %v387 = vor.u32 %v384, %v385
        %v388 = vsel %vm375, %v380, %v387
        %v390 = vshrl.u32 %v331, 16
        %v392 = vrot.slane %v390, 7
        %v393 = vrot.slane %v392, 2
        %v395 = vshrl.u32 %v338, 16
        %v397 = vrot.slane %v395, 7
        %v398 = vshll.u32 %v338, 16
        %v400 = vor.u32 %v397, %v398
        %v401 = vsel %vm375, %v393, %v400
        %v403 = vshrl.u32 %v346, 16
        %v405 = vrot.slane %v403, 7
        %v406 = vrot.slane %v405, 2
        %v408 = vshrl.u32 %v353, 16
        %v410 = vrot.slane %v408, 7
        %v411 = vshll.u32 %v353, 16
        %v413 = vor.u32 %v410, %v411
        %v414 = vsel %vm375, %v406, %v413
        %v416 = vshrl.u32 %v361, 16
        %v418 = vrot.slane %v416, 7
        %v419 = vrot.slane %v418, 2
        %v421 = vshrl.u32 %v368, 16
        %v423 = vrot.slane %v421, 7
        %v424 = vshll.u32 %v368, 16
        %v426 = vor.u32 %v423, %v424
        %v427 = vsel %vm375, %v419, %v426
        %v428 = vcombine.high %v323, %v323
        %v429 = vcombine.high %v338, %v338
        %v430 = vcombine.high %v353, %v353
        %v431 = vcombine.high %v368, %v368
        %vm432 = vsmask.f32 1280
        %vm433 = vsmask.f32 3336
        %vm434 = vmor %vm432, %vm433
        %vm435 = vsmask.f32 5392
        %vm436 = vmor %vm434, %vm435
        %vm437 = vsmask.f32 7448
        %vm438 = vmor %vm436, %vm437
        %v439 = vrot.slane %v382, 6
        %v440 = vrot.slane %v385, 7
        %v441 = vor.u32 %v439, %v440
        %v442 = vrot.slane %v441, 2
        %v444 = vshll.u32 %v428, 16
        %v446 = vrot.slane %v444, 7
        %v447 = vsel %vm438, %v442, %v446
        %v448 = vrot.slane %v395, 6
        %v449 = vrot.slane %v398, 7
        %v450 = vor.u32 %v448, %v449
        %v451 = vrot.slane %v450, 2
        %v453 = vshll.u32 %v429, 16
        %v455 = vrot.slane %v453, 7
        %v456 = vsel %vm438, %v451, %v455
        %v457 = vrot.slane %v408, 6
        %v458 = vrot.slane %v411, 7
        %v459 = vor.u32 %v457, %v458
        %v460 = vrot.slane %v459, 2
        %v462 = vshll.u32 %v430, 16
        %v464 = vrot.slane %v462, 7
        %v465 = vsel %vm438, %v460, %v464
        %v466 = vrot.slane %v421, 6
        %v467 = vrot.slane %v424, 7
        %v468 = vor.u32 %v466, %v467
        %v469 = vrot.slane %v468, 2
        %v471 = vshll.u32 %v431, 16
        %v473 = vrot.slane %v471, 7
        %v474 = vsel %vm438, %v469, %v473
        %v478 = vunpack.c.l.s4 1983009808
        %v479 = vunpack.c.0.s8 %v478
        %v480 = vlaneseq
        %v481 = vshrl.u32 %v480, 7
        %v482 = vsub.s32 %v479, %v481
        %v483 = vrot.slane %v297, %v482
        %v484 = vcombine.high %v483, %v483
        %v486 = vunpack.c.l.s4 1983009808
        %v487 = vunpack.c.0.s8 %v486
        %v488 = vlaneseq
        %v489 = vshrl.u32 %v488, 7
        %v490 = vsub.s32 %v487, %v489
        %v491 = vrot.slane %v298, %v490
        %v493 = vshrl.u32 %v484, 16
        %v495 = vrot.slane %v493, 7
        %v496 = vrot.slane %v495, 2
        %v498 = vshrl.u32 %v491, 16
        %v500 = vrot.slane %v498, 7
        %v501 = vshll.u32 %v491, 16
        %v503 = vor.u32 %v500, %v501
        %v504 = vsel %vm375, %v496, %v503
        %v505 = vcombine.high %v491, %v491
        %v506 = vrot.slane %v498, 6
        %v507 = vrot.slane %v501, 7
        %v508 = vor.u32 %v506, %v507
        %v509 = vrot.slane %v508, 2
        %v511 = vshll.u32 %v505, 16
        %v513 = vrot.slane %v511, 7
        %v514 = vsel %vm438, %v509, %v513
        %v518 = vunpack.c.l.s4 1983009808
        %v519 = vunpack.c.0.s8 %v518
        %v520 = vlaneseq
        %v521 = vshrl.u32 %v520, 7
        %v522 = vsub.s32 %v519, %v521
        %v523 = vrot.slane %v299, %v522
        %v524 = vcombine.high %v523, %v523
        %v526 = vunpack.c.l.s4 1983009808
        %v527 = vunpack.c.0.s8 %v526
        %v528 = vlaneseq
        %v529 = vshrl.u32 %v528, 7
        %v530 = vsub.s32 %v527, %v529
        %v531 = vrot.slane %v300, %v530
        %v533 = vshrl.u32 %v524, 16
        %v535 = vrot.slane %v533, 7
        %v536 = vrot.slane %v535, 2
        %v538 = vshrl.u32 %v531, 16
        %v540 = vrot.slane %v538, 7
        %v541 = vshll.u32 %v531, 16
        %v543 = vor.u32 %v540, %v541
        %v544 = vsel %vm375, %v536, %v543
        %v545 = vcombine.high %v531, %v531
        %v546 = vrot.slane %v538, 6
        %v547 = vrot.slane %v541, 7
        %v548 = vor.u32 %v546, %v547
        %v549 = vrot.slane %v548, 2
        %v551 = vshll.u32 %v545, 16
        %v553 = vrot.slane %v551, 7
        %v554 = vsel %vm438, %v549, %v553
        %v555 = vcombine.low %v388, %v401
        %v556 = vcombine.low %v414, %v427
        %v558 = vunpack.c.l.s4 1983009808
        %v559 = vunpack.c.0.s8 %v558
        %v560 = vlaneseq
        %v561 = vshrl.u32 %v560, 7
        %v562 = vsub.s32 %v559, %v561
        %v563 = vrot.slane %v555, %v562
        %v565 = vunpack.c.l.s4 1983009808
        %v566 = vunpack.c.0.s8 %v565
        %v567 = vlaneseq
        %v568 = vshrl.u32 %v567, 7
        %v569 = vsub.s32 %v566, %v568
        %v570 = vrot.slane %v556, %v569
        %v571 = vcombine.low %v563, %v570
        %v572 = vcombine.low %v290, %v292
        %v573 = vcombine.low %v294, %v296
        %v575 = vunpack.c.l.s4 1983009808
        %v576 = vunpack.c.0.s8 %v575
        %v577 = vlaneseq
        %v578 = vshrl.u32 %v577, 7
        %v579 = vsub.s32 %v576, %v578
        %v580 = vrot.slane %v572, %v579
        %v582 = vunpack.c.l.s4 1983009808
        %v583 = vunpack.c.0.s8 %v582
        %v584 = vlaneseq
        %v585 = vshrl.u32 %v584, 7
        %v586 = vsub.s32 %v583, %v585
        %v587 = vrot.slane %v573, %v586
        %v588 = vcombine.low %v580, %v587
        %589 = vrot.lane.b32.xlu0 %v588, 8
        %v590 = vpop.permute.xlu0 %589
        %v591 = vcombine.low %v447, %v456
        %v592 = vcombine.low %v465, %v474
        %v594 = vunpack.c.l.s4 1983009808
        %v595 = vunpack.c.0.s8 %v594
        %v596 = vlaneseq
        %v597 = vshrl.u32 %v596, 7
        %v598 = vsub.s32 %v595, %v597
        %v599 = vrot.slane %v591, %v598
        %v601 = vunpack.c.l.s4 1983009808
        %v602 = vunpack.c.0.s8 %v601
        %v603 = vlaneseq
        %v604 = vshrl.u32 %v603, 7
        %v605 = vsub.s32 %v602, %v604
        %v606 = vrot.slane %v592, %v605
        %v607 = vcombine.low %v599, %v606
        %608 = vrot.lane.b32.xlu0 %v607, 16
        %v609 = vpop.permute.xlu0 %608
        %v610 = vcombine.low %v401, %v414
        %v611 = vcombine.low %v427, %v504
        %v613 = vunpack.c.l.s4 1983009808
        %v614 = vunpack.c.0.s8 %v613
        %v615 = vlaneseq
        %v616 = vshrl.u32 %v615, 7
        %v617 = vsub.s32 %v614, %v616
        %v618 = vrot.slane %v610, %v617
        %v620 = vunpack.c.l.s4 1983009808
        %v621 = vunpack.c.0.s8 %v620
        %v622 = vlaneseq
        %v623 = vshrl.u32 %v622, 7
        %v624 = vsub.s32 %v621, %v623
        %v625 = vrot.slane %v611, %v624
        %v626 = vcombine.low %v618, %v625
        %627 = vrot.lane.b32.xlu0 %v626, 24
        %v628 = vpop.permute.xlu0 %627
        %v629 = vcombine.low %v292, %v294
        %v630 = vcombine.low %v296, %v298
        %v632 = vunpack.c.l.s4 1983009808
        %v633 = vunpack.c.0.s8 %v632
        %v634 = vlaneseq
        %v635 = vshrl.u32 %v634, 7
        %v636 = vsub.s32 %v633, %v635
        %v637 = vrot.slane %v629, %v636
        %v639 = vunpack.c.l.s4 1983009808
        %v640 = vunpack.c.0.s8 %v639
        %v641 = vlaneseq
        %v642 = vshrl.u32 %v641, 7
        %v643 = vsub.s32 %v640, %v642
        %v644 = vrot.slane %v630, %v643
        %v645 = vcombine.low %v637, %v644
        %646 = vrot.lane.b32.xlu0 %v645, 32
        %v647 = vpop.permute.xlu0 %646
        %v648 = vcombine.low %v456, %v465
        %v649 = vcombine.low %v474, %v514
        %v651 = vunpack.c.l.s4 1983009808
        %v652 = vunpack.c.0.s8 %v651
        %v653 = vlaneseq
        %v654 = vshrl.u32 %v653, 7
        %v655 = vsub.s32 %v652, %v654
        %v656 = vrot.slane %v648, %v655
        %v658 = vunpack.c.l.s4 1983009808
        %v659 = vunpack.c.0.s8 %v658
        %v660 = vlaneseq
        %v661 = vshrl.u32 %v660, 7
        %v662 = vsub.s32 %v659, %v661
        %v663 = vrot.slane %v649, %v662
        %v664 = vcombine.low %v656, %v663
        %665 = vrot.lane.b32.xlu0 %v664, 40
        %v666 = vpop.permute.xlu0 %665
        %v667 = vcombine.low %v504, %v544
        %v669 = vunpack.c.l.s4 1983009808
        %v670 = vunpack.c.0.s8 %v669
        %v671 = vlaneseq
        %v672 = vshrl.u32 %v671, 7
        %v673 = vsub.s32 %v670, %v672
        %v674 = vrot.slane %v667, %v673
        %v675 = vcombine.low %v570, %v674
        %676 = vrot.lane.b32.xlu0 %v675, 48
        %v677 = vpop.permute.xlu0 %676
        %v678 = vcombine.low %v298, %v300
        %v680 = vunpack.c.l.s4 1983009808
        %v681 = vunpack.c.0.s8 %v680
        %v682 = vlaneseq
        %v683 = vshrl.u32 %v682, 7
        %v684 = vsub.s32 %v681, %v683
        %v685 = vrot.slane %v678, %v684
        %v686 = vcombine.low %v587, %v685
        %687 = vrot.lane.b32.xlu0 %v686, 56
        %v688 = vpop.permute.xlu0 %687
        %v689 = vcombine.low %v514, %v554
        %v691 = vunpack.c.l.s4 1983009808
        %v692 = vunpack.c.0.s8 %v691
        %v693 = vlaneseq
        %v694 = vshrl.u32 %v693, 7
        %v695 = vsub.s32 %v692, %v694
        %v696 = vrot.slane %v689, %v695
        %v697 = vcombine.low %v606, %v696
        %698 = vrot.lane.b32.xlu0 %v697, 64
        %v699 = vpop.permute.xlu0 %698
        %vm700 = vcmask 64512
        %v703 = vsel %vm700, %v571, %v590
        %vm704 = vcmask 130048
        %v706 = vsel %vm704, %v703, %v609
        %vm707 = vcmask 195584
        %v709 = vsel %vm707, %v706, %v628
        %vm710 = vcmask 261120
        %v712 = vsel %vm710, %v709, %v647
        %vm713 = vcmask 326656
        %v715 = vsel %vm713, %v712, %v666
        %vm716 = vcmask 392192
        %v718 = vsel %vm716, %v715, %v677
        %vm719 = vcmask 457728
        %v721 = vsel %vm719, %v718, %v688
        %vm722 = vcmask 523264
        %v724 = vsel %vm722, %v721, %v699
        %v725 = vld [vmem:[%s1] sm:$0xf]
        %v726 = vld [vmem:[%s1 + $0x4] sm:$0xf]
        %v727 = vld [vmem:[%s1 + $0x8] sm:$0xf]
        %v728 = vld [vmem:[%s1 + $0xc] sm:$0xf]
        %v729 = vld [vmem:[%s1 + $0x10] sm:$0xf]
        %v730 = vld [vmem:[%s1 + $0x14] sm:$0xf]
        %v731 = vld [vmem:[%s1 + $0x18] sm:$0xf]
        %v732 = vld [vmem:[%s1 + $0x1c] sm:$0xf]
        %v733 = vld [vmem:[%s1 + $0x20] sm:$0xf]
        %v743 = vunpack.c.l.b16 %v725
        %v744 = vunpack.c.l.b16 %v726
        %v745 = vunpack.c.l.b16 %v727
        %v746 = vunpack.c.l.b16 %v728
        %v747 = vunpack.c.l.b16 %v729
        %v748 = vunpack.c.l.b16 %v730
        %v749 = vunpack.c.l.b16 %v731
        %v750 = vunpack.c.l.b16 %v732
        %v751 = vunpack.c.l.b16 %v733
        %v752 = vpack.c.b16 %v744, %v743
        %v753 = vpack.c.b16 %v746, %v745
        %v754 = vpack.c.b16 %v748, %v747
        %v755 = vpack.c.b16 %v750, %v749
        %v756 = vpack.c.b16 %v751, %v751
        %vm761 = vcmask 588800
        %v762 = vsel %vm761, %v724, 0
        %vm764 = vcmask 1043456
        %v766 = vsel %vm764, %v756, 0
        %768 = vmatprep.subr.bf16.mxu0 0
        %769 = vmatpush1.bf16.msra.mxu0 %v752
        %770 = vmatprep.subr.bf16.mxu0 0
        %771 = vmatpush1.bf16.msra.mxu0 %v753
        %772 = vmatprep.subr.bf16.mxu0 0
        %773 = vmatpush1.bf16.msra.mxu0 %v754
        %774 = vmatprep.subr.bf16.mxu0 0
        %775 = vmatpush1.bf16.msra.mxu0 %v755
        %776 = vmatprep.subr.bf16.mxu0 0
        %777 = vmatpush1.bf16.msra.mxu0 %v766
        %778 = vmatprep.subr.bf16.mxu0 0
        %779 = vmatpush1.bf16.msra.mxu0 0
        %780 = vmatprep.subr.bf16.mxu0 0
        %781 = vmatpush1.bf16.msra.mxu0 0
        %782 = vmatprep.subr.bf16.mxu0 0
        %783 = vmatpush1.bf16.msra.mxu0 0
        %784 = vmatprep.subr.bf16.mxu0 0
        %785 = vmatpush1.bf16.msra.mxu0 0
        %786 = vmatprep.subr.bf16.mxu0 0
        %787 = vmatpush1.bf16.msra.mxu0 0
        %788 = vmatprep.subr.bf16.mxu0 0
        %789 = vmatpush1.bf16.msra.mxu0 0
        %790 = vmatprep.subr.bf16.mxu0 0
        %791 = vmatpush1.bf16.msra.mxu0 0
        %792 = vmatprep.subr.bf16.mxu0 0
        %793 = vmatpush1.bf16.msra.mxu0 0
        %794 = vmatprep.subr.bf16.mxu0 0
        %795 = vmatpush1.bf16.msra.mxu0 0
        %796 = vmatprep.subr.bf16.mxu0 0
        %797 = vmatpush1.bf16.msra.mxu0 0
        %798 = vmatprep.subr.bf16.mxu0 0
        %799 = vmatpush1.bf16.msra.mxu0 0
        %800 = vmatprep.mubr.bf16.mxu0 0
        %801 = vmatmul.mubr.bf16.gmra.mrb[0].mxu0 %v762
        %v802 = vpop.f32.mrb[0].mxu0
        %v803 = vadd.f32 0.0, %v802
        %v804 = vpop.f32.mrb[0].mxu0
        %v805 = vpop.f32.mrb[0].mxu0
        %v806 = vadd.f32 0.0, %v805
        %v807 = vpop.f32.mrb[0].mxu0
        %808 = vdwg.mxu0
        %s809 = smul.u32 %s20, 16
        %s810 = scalar_lea.vmem [#allocation3], %s809
        %811 = vst.msk [vmem:[%s810] sm:$0xff] %vm704, %v803
        %812 = vst.msk [vmem:[%s810 + $0x8] sm:$0xff] %vm704, %v806
        %v813 = vld [vmem:[#allocation4] sm:$0x1]
        %v814 = vsel %vm704, %v803, 0.0
        %v815 = vsel %vm704, %v806, 0.0
        %v816 = vadd.f32 %v814, %v815
        %v817 = vrot.slane %v816, 4
        %v818 = vadd.f32 %v816, %v817
        %v819 = vrot.slane %v818, 2
        %v820 = vadd.f32 %v818, %v819
        %v821 = vrot.slane %v820, 1
        %v822 = vadd.f32 %v820, %v821
        %v823 = vadd.f32 %v813, %v822
        %vm824 = vcmask 122880
        %825 = vst.msk [vmem:[#allocation4] sm:$0x1] %vm824, %v823
      $region40: #{unet_encoder.6} parent=35 // pred_fallthru
        _
      %p826 = scmp.eq.s32.totalorder %s19, 1
      // Predicated region
      $region45: #{unet_encoder.6} parent=35 // pred_check
        %p827 = pneg %p826
      $region46: #{unet_encoder.6} parent=35 // pred_check_branch
        %829 = sbr.rel (%p827) target = $region48
      $region47: #{unet_encoder.6} parent=35 // pred_region
        %p830 = scmp.eq.s32.totalorder %s20, 0
        // Predicated region
        $region49: #{unet_encoder.6} parent=47 // pred_check
          %p831 = pneg %p830
        $region50: #{unet_encoder.6} parent=47 // pred_check_branch
          %833 = sbr.rel (%p831) target = $region52
        $region51: #{unet_encoder.6} parent=47 // pred_region
          %v834 = vld [vmem:[#allocation4] sm:$0x1]
          %v835 = vmul.f32 %v834, 0.03125
          %v836 = vld [vmem:[#allocation3] sm:$0xff]
          %v837 = vld [vmem:[#allocation3 + $0x8] sm:$0xff]
          %v838 = vld [vmem:[#allocation3 + $0x10] sm:$0xff]
          %v839 = vld [vmem:[#allocation3 + $0x18] sm:$0xff]
          %v841 = vlaneseq
          %v842 = vshrl.u32 %v841, 7
          %v843 = vsub.s32 0, %v842
          %v844 = vrot.slane %v835, %v843
          %v846 = vsub.f32 %v836, %v844
          %v847 = vsub.f32 %v837, %v844
          %v848 = vsub.f32 %v838, %v844
          %v849 = vsub.f32 %v839, %v844
          %v850 = vmul.f32 %v846, %v846
          %v851 = vmul.f32 %v847, %v847
          %v852 = vmul.f32 %v848, %v848
          %v853 = vmul.f32 %v849, %v849
          %vm854 = vcmask 130048
          %v855 = vsel %vm854, %v850, 0.0
          %v856 = vsel %vm854, %v852, 0.0
          %v857 = vadd.f32 %v855, %v856
          %v858 = vsel %vm854, %v851, 0.0
          %v859 = vsel %vm854, %v853, 0.0
          %v860 = vadd.f32 %v858, %v859
          %v861 = vsel %vm854, %v857, 0.0
          %v862 = vsel %vm854, %v860, 0.0
          %v863 = vadd.f32 %v861, %v862
          %v864 = vrot.slane %v863, 4
          %v865 = vadd.f32 %v863, %v864
          %v866 = vrot.slane %v865, 2
          %v867 = vadd.f32 %v865, %v866
          %v868 = vrot.slane %v867, 1
          %v869 = vadd.f32 %v867, %v868
          %v870 = vmul.f32 %v869, 0.03125
          %v871 = vmax.f32 %v870, 0.0
          %v872 = vadd.f32 %v871, 1e-05
          %v873 = vrsqrt.pop %v872
          %v874 = vld [vmem:[%s2] sm:$0x1]
          %v875 = vmul.f32 %v874, %v873
          %vm876 = vcmask 122880
          %877 = vst.msk [vmem:[#allocation5] sm:$0x1] %vm876, %v875
          %v878 = vld [vmem:[%s3] sm:$0x1]
          %v879 = vmul.f32 %v835, %v875
          %v880 = vsub.f32 %v878, %v879
          %881 = vst.msk [vmem:[#allocation6] sm:$0x1] %vm876, %v880
        $region52: #{unet_encoder.6} parent=47 // pred_fallthru
          _
        %s882 = smul.u32 %s20, 16
        %s883 = scalar_lea.vmem [#allocation3], %s882
        %v884 = vld [vmem:[%s883] sm:$0xff]
        %v885 = vld [vmem:[%s883 + $0x8] sm:$0xff]
        %v886 = vld [vmem:[#allocation5] sm:$0x1]
        %v888 = vlaneseq
        %v889 = vshrl.u32 %v888, 7
        %v890 = vsub.s32 0, %v889
        %v891 = vrot.slane %v886, %v890
        %v893 = vmul.f32 %v884, %v891
        %v894 = vmul.f32 %v885, %v891
        %v895 = vld [vmem:[#allocation6] sm:$0x1]
        %v897 = vlaneseq
        %v898 = vshrl.u32 %v897, 7
        %v899 = vsub.s32 0, %v898
        %v900 = vrot.slane %v895, %v899
        %v902 = vadd.f32 %v893, %v900
        %v903 = vadd.f32 %v894, %v900
        %v904 = vmax.f32 %v902, 0.0
        %v905 = vmax.f32 %v903, 0.0
        %v908 = vcombine.high %v904, %v904
        %v910 = vunpack.c.l.s4 1983009808
        %v911 = vunpack.c.0.s8 %v910
        %v912 = vlaneseq
        %v913 = vshrl.u32 %v912, 7
        %v914 = vsub.s32 %v911, %v913
        %v915 = vrot.slane %v904, %v914
        %v917 = vunpack.c.l.s4 1983009808
        %v918 = vunpack.c.0.s8 %v917
        %v919 = vlaneseq
        %v920 = vshrl.u32 %v919, 7
        %v921 = vsub.s32 %v918, %v920
        %v922 = vrot.slane %v908, %v921
        %v923 = vcombine.high %v915, %v915
        %v924 = vcombine.high %v922, %v922
        %v925 = vcombine.high %v905, %v905
        %v927 = vunpack.c.l.s4 1983009808
        %v928 = vunpack.c.0.s8 %v927
        %v929 = vlaneseq
        %v930 = vshrl.u32 %v929, 7
        %v931 = vsub.s32 %v928, %v930
        %v932 = vrot.slane %v905, %v931
        %v934 = vunpack.c.l.s4 1983009808
        %v935 = vunpack.c.0.s8 %v934
        %v936 = vlaneseq
        %v937 = vshrl.u32 %v936, 7
        %v938 = vsub.s32 %v935, %v937
        %v939 = vrot.slane %v925, %v938
        %v940 = vcombine.high %v932, %v932
        %v941 = vcombine.high %v939, %v939
        %vm950 = vcmask 123904
        %v951 = vsel %vm950, %v915, -inf
        %v952 = vrot.slane %v951, 4
        %v953 = vmax.f32 %v951, %v952
        %v954 = vrot.slane %v953, 2
        %v955 = vmax.f32 %v953, %v954
        %v956 = vrot.slane %v955, 1
        %v957 = vmax.f32 %v955, %v956
        %v958 = vsel %vm950, %v923, -inf
        %v959 = vrot.slane %v958, 4
        %v960 = vmax.f32 %v958, %v959
        %v961 = vrot.slane %v960, 2
        %v962 = vmax.f32 %v960, %v961
        %v963 = vrot.slane %v962, 1
        %v964 = vmax.f32 %v962, %v963
        %v965 = vsel %vm950, %v922, -inf
        %v966 = vrot.slane %v965, 4
        %v967 = vmax.f32 %v965, %v966
        %v968 = vrot.slane %v967, 2
        %v969 = vmax.f32 %v967, %v968
        %v970 = vrot.slane %v969, 1
        %v971 = vmax.f32 %v969, %v970
        %v972 = vsel %vm950, %v924, -inf
        %v973 = vrot.slane %v972, 4
        %v974 = vmax.f32 %v972, %v973
        %v975 = vrot.slane %v974, 2
        %v976 = vmax.f32 %v974, %v975
        %v977 = vrot.slane %v976, 1
        %v978 = vmax.f32 %v976, %v977
        %v979 = vsel %vm950, %v932, -inf
        %v980 = vrot.slane %v979, 4
        %v981 = vmax.f32 %v979, %v980
        %v982 = vrot.slane %v981, 2
        %v983 = vmax.f32 %v981, %v982
        %v984 = vrot.slane %v983, 1
        %v985 = vmax.f32 %v983, %v984
        %v986 = vsel %vm950, %v940, -inf
        %v987 = vrot.slane %v986, 4
        %v988 = vmax.f32 %v986, %v987
        %v989 = vrot.slane %v988, 2
        %v990 = vmax.f32 %v988, %v989
        %v991 = vrot.slane %v990, 1
        %v992 = vmax.f32 %v990, %v991
        %v993 = vsel %vm950, %v939, -inf
        %v994 = vrot.slane %v993, 4
        %v995 = vmax.f32 %v993, %v994
        %v996 = vrot.slane %v995, 2
        %v997 = vmax.f32 %v995, %v996
        %v998 = vrot.slane %v997, 1
        %v999 = vmax.f32 %v997, %v998
        %v1000 = vsel %vm950, %v941, -inf
        %v1001 = vrot.slane %v1000, 4
        %v1002 = vmax.f32 %v1000, %v1001
        %v1003 = vrot.slane %v1002, 2
        %v1004 = vmax.f32 %v1002, %v1003
        %v1005 = vrot.slane %v1004, 1
        %v1006 = vmax.f32 %v1004, %v1005
        %vm1007 = vcmask 130048
        %v1008 = vsel %vm1007, %v957, -inf
        %v1009 = vsel %vm1007, %v971, -inf
        %v1010 = vmax.f32 %v1008, %v1009
        %v1011 = vsel %vm1007, %v964, -inf
        %v1012 = vsel %vm1007, %v978, -inf
        %v1013 = vmax.f32 %v1011, %v1012
        %v1014 = vsel %vm1007, %v985, -inf
        %v1015 = vsel %vm1007, %v999, -inf
        %v1016 = vmax.f32 %v1014, %v1015
        %v1017 = vsel %vm1007, %v992, -inf
        %v1018 = vsel %vm1007, %v1006, -inf
        %v1019 = vmax.f32 %v1017, %v1018
        %v1020 = vpack.c.bf16 %v1010, %v1010
        %v1021 = vpack.c.bf16 %v1013, %v1013
        %v1022 = vpack.c.bf16 %v1016, %v1016
        %v1023 = vpack.c.bf16 %v1019, %v1019
        %v1029 = vunpack.c.l.s4 1966171168
        %v1030 = vunpack.c.0.s8 %v1029
        %v1031 = vlaneseq
        %v1032 = vshrl.u32 %v1031, 7
        %v1033 = vsub.s32 %v1030, %v1032
        %v1034 = vrot.slane %v1020, %v1033
        %v1036 = vunpack.c.l.s4 1966171168
        %v1037 = vunpack.c.0.s8 %v1036
        %v1038 = vlaneseq
        %v1039 = vshrl.u32 %v1038, 7
        %v1040 = vsub.s32 %v1037, %v1039
        %v1041 = vrot.slane %v1034, %v1040
        %v1043 = vunpack.c.l.s4 1966171168
        %v1044 = vunpack.c.0.s8 %v1043
        %v1045 = vlaneseq
        %v1046 = vshrl.u32 %v1045, 7
        %v1047 = vsub.s32 %v1044, %v1046
        %v1048 = vrot.slane %v1021, %v1047
        %v1050 = vunpack.c.l.s4 1966171168
        %v1051 = vunpack.c.0.s8 %v1050
        %v1052 = vlaneseq
        %v1053 = vshrl.u32 %v1052, 7
        %v1054 = vsub.s32 %v1051, %v1053
        %v1055 = vrot.slane %v1048, %v1054
        %v1057 = vunpack.c.l.s4 1966171168
        %v1058 = vunpack.c.0.s8 %v1057
        %v1059 = vlaneseq
        %v1060 = vshrl.u32 %v1059, 7
        %v1061 = vsub.s32 %v1058, %v1060
        %v1062 = vrot.slane %v1022, %v1061
        %v1064 = vunpack.c.l.s4 1966171168
        %v1065 = vunpack.c.0.s8 %v1064
        %v1066 = vlaneseq
        %v1067 = vshrl.u32 %v1066, 7
        %v1068 = vsub.s32 %v1065, %v1067
        %v1069 = vrot.slane %v1062, %v1068
        %v1071 = vunpack.c.l.s4 1966171168
        %v1072 = vunpack.c.0.s8 %v1071
        %v1073 = vlaneseq
        %v1074 = vshrl.u32 %v1073, 7
        %v1075 = vsub.s32 %v1072, %v1074
        %v1076 = vrot.slane %v1023, %v1075
        %v1078 = vunpack.c.l.s4 1966171168
        %v1079 = vunpack.c.0.s8 %v1078
        %v1080 = vlaneseq
        %v1081 = vshrl.u32 %v1080, 7
        %v1082 = vsub.s32 %v1079, %v1081
        %v1083 = vrot.slane %v1076, %v1082
        %v1085 = vunpack.c.l.s4 1935823168
        %v1086 = vunpack.c.0.s8 %v1085
        %v1087 = vlaneseq
        %v1088 = vshrl.u32 %v1087, 7
        %v1089 = vsub.s32 %v1086, %v1088
        %v1090 = vrot.slane %v1041, %v1089
        %v1092 = vunpack.c.l.s4 1935823168
        %v1093 = vunpack.c.0.s8 %v1092
        %v1094 = vlaneseq
        %v1095 = vshrl.u32 %v1094, 7
        %v1096 = vsub.s32 %v1093, %v1095
        %v1097 = vrot.slane %v1090, %v1096
        %v1099 = vunpack.c.l.s4 1935823168
        %v1100 = vunpack.c.0.s8 %v1099
        %v1101 = vlaneseq
        %v1102 = vshrl.u32 %v1101, 7
        %v1103 = vsub.s32 %v1100, %v1102
        %v1104 = vrot.slane %v1055, %v1103
        %v1106 = vunpack.c.l.s4 1935823168
        %v1107 = vunpack.c.0.s8 %v1106
        %v1108 = vlaneseq
        %v1109 = vshrl.u32 %v1108, 7
        %v1110 = vsub.s32 %v1107, %v1109
        %v1111 = vrot.slane %v1104, %v1110
        %v1113 = vunpack.c.l.s4 1935823168
        %v1114 = vunpack.c.0.s8 %v1113
        %v1115 = vlaneseq
        %v1116 = vshrl.u32 %v1115, 7
        %v1117 = vsub.s32 %v1114, %v1116
        %v1118 = vrot.slane %v1069, %v1117
        %v1120 = vunpack.c.l.s4 1935823168
        %v1121 = vunpack.c.0.s8 %v1120
        %v1122 = vlaneseq
        %v1123 = vshrl.u32 %v1122, 7
        %v1124 = vsub.s32 %v1121, %v1123
        %v1125 = vrot.slane %v1118, %v1124
        %v1127 = vunpack.c.l.s4 1935823168
        %v1128 = vunpack.c.0.s8 %v1127
        %v1129 = vlaneseq
        %v1130 = vshrl.u32 %v1129, 7
        %v1131 = vsub.s32 %v1128, %v1130
        %v1132 = vrot.slane %v1083, %v1131
        %v1134 = vunpack.c.l.s4 1935823168
        %v1135 = vunpack.c.0.s8 %v1134
        %v1136 = vlaneseq
        %v1137 = vshrl.u32 %v1136, 7
        %v1138 = vsub.s32 %v1135, %v1137
        %v1139 = vrot.slane %v1132, %v1138
        %v1140 = vunpack.c.l.b16 %v1097
        %v1141 = vunpack.c.l.b16 %v1111
        %v1142 = vunpack.c.l.b16 %v1125
        %v1143 = vunpack.c.l.b16 %v1139
        %v1144 = vrot.slane %v1141, 7
        %vm1145 = vcmask 1041409
        %v1146 = vsel %vm1145, %v1144, %v1140
        %v1147 = vrot.slane %v1143, 7
        %v1148 = vsel %vm1145, %v1147, %v1142
        %v1149 = vpack.c.b16 %v1146, %v1146
        %v1150 = vpack.c.b16 %v1148, %v1148
        %v1152 = vunpack.c.l.s4 1966171168
        %v1153 = vunpack.c.0.s8 %v1152
        %v1154 = vlaneseq
        %v1155 = vshrl.u32 %v1154, 7
        %v1156 = vsub.s32 %v1153, %v1155
        %v1157 = vrot.slane %v1149, %v1156
        %v1159 = vunpack.c.l.s4 1966171168
        %v1160 = vunpack.c.0.s8 %v1159
        %v1161 = vlaneseq
        %v1162 = vshrl.u32 %v1161, 7
        %v1163 = vsub.s32 %v1160, %v1162
        %v1164 = vrot.slane %v1157, %v1163
        %v1166 = vunpack.c.l.s4 1966171168
        %v1167 = vunpack.c.0.s8 %v1166
        %v1168 = vlaneseq
        %v1169 = vshrl.u32 %v1168, 7
        %v1170 = vsub.s32 %v1167, %v1169
        %v1171 = vrot.slane %v1150, %v1170
        %v1173 = vunpack.c.l.s4 1966171168
        %v1174 = vunpack.c.0.s8 %v1173
        %v1175 = vlaneseq
        %v1176 = vshrl.u32 %v1175, 7
        %v1177 = vsub.s32 %v1174, %v1176
        %v1178 = vrot.slane %v1171, %v1177
        %vm1181 = vcmask 122880
        %1182 = vst.msk [vmem:[%s232] sm:$0x1] %vm1181, %v1164
        %1183 = vst.msk [vmem:[%s232 + $0x1] sm:$0x1] %vm1181, %v1178
      $region48: #{unet_encoder.6} parent=35 // pred_fallthru
        _
      %s1184 = smul.u32 %s19, %s20
      %p1185 = scmp.lt.s32.totalorder %s1184, 1
      %s1186 = scalar_select %p1185, %s1184, 1
      %s1187 = smul.addr %s1186, 2
      %s1188 = scalar_lea.vmem %s4, %s1187
      // Predicated region
      $region53: #{unet_encoder.6} parent=35 // pred_check
        %p1189 = pneg %p142
      $region54: #{unet_encoder.6} parent=35 // pred_check_branch
        %1191 = sbr.rel (%p1189) target = $region56
      $region55: #{unet_encoder.6} parent=35 // pred_region
        %s1192 = smul.u32 %s19, %s20
      $region56: #{unet_encoder.6} parent=35 // pred_fallthru
        _
    $region36: #{unet_encoder.6} parent=5 // pred_fallthru
      _
    %p1193 = scmp.le.s32.totalorder 2, %s10
    // Predicated region
    $region57: #{unet_encoder.6} parent=5 // pred_check
      %p1194 = pneg %p1193
    $region58: #{unet_encoder.6} parent=5 // pred_check_branch
      %1196 = sbr.rel (%p1194) target = $region60
    $region59: #{unet_encoder.6} parent=5 // pred_region
      %s1197 = ssub.s32 %s10, 2
      // Predicated region
      $region61: #{unet_encoder.6} parent=59 // pred_check
        %p1198 = pneg %p148
      $region62: #{unet_encoder.6} parent=59 // pred_check_branch
        %1200 = sbr.rel (%p1198) target = $region64
      $region63: #{unet_encoder.6} parent=59 // pred_region
        %s1201 = smul.u32 %s21, %s22
        %p1202 = scmp.lt.s32.totalorder %s1201, 1
        %s1203 = scalar_select %p1202, %s1201, 1
        %s1204 = smul.addr %s1203, 2
        %s1205 = scalar_lea.vmem %s4, %s1204
      $region64: #{unet_encoder.6} parent=59 // pred_fallthru
        _
    $region60: #{unet_encoder.6} parent=5 // pred_fallthru
      _
  $region6: #{unet_encoder.6} parent=0 // loop_footer
    %s14 = sadd.s32 1, %s10
  $region7: #{unet_encoder.6} parent=0 // loop_footer_branch
    %9 = sbr.rel target = $region3
  $region8: #{unet_encoder.6} parent=0 // loop_exit
    _

// kernel: unet_encoder.4
$region0: #{unet_encoder.4}
  #allocation0 [shape = 'u32[]', space=smem, size = 0x4, offset = 0x4, fixed_abs, tag = 'smem constant byte address 0x4 - core index']
  #allocation1 [shape = 'u32[144,128]{1,0:T(1,128)}', space=vmem, size = 0x12000, scoped, tag = 'internal scratch']
  #allocation2 [shape = 'bf16[18,33,3]{2,1,0:T(8,128)(2,1)}', space=vmem, size = 0x2d000, scoped, tag = 'scratch operand']
  #allocation3 [shape = 'f32[2,256,4]{2,1,0:T(8,128)}', space=vmem, size = 0x40000, scoped, tag = 'scratch operand']
  #allocation4 [shape = 'f32[1,4]{1,0:T(1,128)}', space=vmem, size = 0x200, scoped, tag = 'scratch operand']
  #allocation5 [shape = 'f32[1,4]{1,0:T(1,128)}', space=vmem, size = 0x200, scoped, tag = 'scratch operand']
  #allocation6 [shape = 'f32[1,4]{1,0:T(1,128)}', space=vmem, size = 0x200, scoped, tag = 'scratch operand']
  %s0 = inlined_call_operand.vmem [shape: bf16[2,16,16,3], index: 0, kind: input, shape index: {}]
  %s1 = inlined_call_operand.vmem [shape: bf16[27,4], index: 1, kind: input, shape index: {}]
  %s2 = inlined_call_operand.vmem [shape: f32[1,4], index: 2, kind: input, shape index: {}]
  %s3 = inlined_call_operand.vmem [shape: f32[1,4], index: 3, kind: input, shape index: {}]
  %s4 = inlined_call_operand.vmem [shape: bf16[2,8,8,4], index: 4, kind: output, shape index: {}]
  %s5 = sld [smem:[#allocation0]]
  $region65: #{unet_encoder.4} parent=0
    _
  %s7 = ssub.s32 1, %s5
  %s8 = scalar_select 0, %s7, %s5
  loop: start=0, step=1, limit=6
  $region2: #{unet_encoder.4} parent=0 // loop_pre_header
    _
  $region3: #{unet_encoder.4} parent=0 // loop_header
    %s10 = sphi 0, %s14
    %p11 = scmp.ge.s32.totalorder %s10, 6
    %s17 = sphi 0, %s29
    %s18 = sphi 0, %s25
    %s19 = sphi 0, %s17
    %s20 = sphi 0, %s18
    %s21 = sphi 0, %s19
    %s22 = sphi 0, %s20
    %s38 = sphi 0, %s40
    %s41 = sphi 0, %s38
    %s42 = sphi 0, %s41
    %s58 = sphi 0, %s42
    %s62 = sphi 0, %s62
    %s64 = sphi 0, %s62
    %s65 = sphi 0, %s64
    %s79 = sphi 0, %s65
    %s83 = sphi 0, %s83
    %s85 = sphi 0, %s83
    %s86 = sphi 0, %s85
    %s100 = sphi 0, %s86
    %s104 = sphi 0, %s104
    %s106 = sphi 0, %s104
    %s107 = sphi 0, %s106
    %s121 = sphi 0, %s107
    %s129 = sphi 0, %s131
    %s132 = sphi 0, %s129
    %s133 = sphi 0, %s132
    %s149 = sphi 0, %s133
  $region4: #{unet_encoder.4} parent=0 // loop_header_branch
    %13 = sbr.rel (%p11) target = $region8
  $region5: #{unet_encoder.4} parent=0 // loop_body
    %s15 = ssub.s32 %s10, 1
    %s16 = ssub.s32 %s10, 2
    %s23 = sadd.s32 1, %s18
    %p24 = scmp.ge.s32.totalorder %s23, 2
    %s25 = scalar_select %p24, 0, %s23
    %s26 = sadd.s32 1, %s17
    %s27 = scalar_select %p24, %s26, %s17
    %p28 = scmp.ge.s32.totalorder %s27, 2
    %s29 = scalar_select %p28, 0, %s27
    %s30 = ssub.s32 1, %s17
    %s31 = smul.u32 %s18, %s30
    %s32 = sadd.s32 %s31, %s17
    %s33 = ssub.s32 1, %s29
    %s34 = smul.u32 %s25, %s33
    %s35 = sadd.s32 %s34, %s29
    %s36 = ssub.s32 %s32, %s35
    %p37 = scmp.eq.s32.totalorder %s36, 0
    %s39 = sadd.s32 %s38, 1
    %s40 = scalar_select %p37, %s38, %s39
    %p43 = pneg %p37
    %p44 = scmp.eq.s32.totalorder %s10, 3
    %p45 = por %p43, %p44
    %p46 = scmp.ne.s32.totalorder %s38, %s41
    %p47 = scmp.eq.s32.totalorder %s10, 0
    %p48 = por %p46, %p47
    %p49 = scmp.ne.s32.totalorder %s38, %s41
    %p50 = scmp.eq.s32.totalorder %s15, 3
    %p51 = por %p49, %p50
    %p52 = scmp.ne.s32.totalorder %s41, %s42
    %p53 = scmp.eq.s32.totalorder %s15, 0
    %p54 = por %p52, %p53
    %p55 = scmp.ne.s32.totalorder %s41, %s42
    %p56 = scmp.eq.s32.totalorder %s16, 3
    %p57 = por %p55, %p56
    %p59 = scmp.ne.s32.totalorder %s42, %s58
    %p60 = scmp.eq.s32.totalorder %s16, 0
    %p61 = por %p59, %p60
    %s63 = sadd.s32 %s62, 1
    %p66 = scmp.eq.s32.totalorder %s10, 3
    %p67 = scmp.ne.s32.totalorder %s62, %s64
    %p68 = scmp.eq.s32.totalorder %s10, 0
    %p69 = por %p67, %p68
    %p70 = scmp.ne.s32.totalorder %s62, %s64
    %p71 = scmp.eq.s32.totalorder %s15, 3
    %p72 = por %p70, %p71
    %p73 = scmp.ne.s32.totalorder %s64, %s65
    %p74 = scmp.eq.s32.totalorder %s15, 0
    %p75 = por %p73, %p74
    %p76 = scmp.ne.s32.totalorder %s64, %s65
    %p77 = scmp.eq.s32.totalorder %s16, 3
    %p78 = por %p76, %p77
    %p80 = scmp.ne.s32.totalorder %s65, %s79
    %p81 = scmp.eq.s32.totalorder %s16, 0
    %p82 = por %p80, %p81
    %s84 = sadd.s32 %s83, 1
    %p87 = scmp.eq.s32.totalorder %s10, 3
    %p88 = scmp.ne.s32.totalorder %s83, %s85
    %p89 = scmp.eq.s32.totalorder %s10, 0
    %p90 = por %p88, %p89
    %p91 = scmp.ne.s32.totalorder %s83, %s85
    %p92 = scmp.eq.s32.totalorder %s15, 3
    %p93 = por %p91, %p92
    %p94 = scmp.ne.s32.totalorder %s85, %s86
    %p95 = scmp.eq.s32.totalorder %s15, 0
    %p96 = por %p94, %p95
    %p97 = scmp.ne.s32.totalorder %s85, %s86
    %p98 = scmp.eq.s32.totalorder %s16, 3
    %p99 = por %p97, %p98
    %p101 = scmp.ne.s32.totalorder %s86, %s100
    %p102 = scmp.eq.s32.totalorder %s16, 0
    %p103 = por %p101, %p102
    %s105 = sadd.s32 %s104, 1
    %p108 = scmp.eq.s32.totalorder %s10, 3
    %p109 = scmp.ne.s32.totalorder %s104, %s106
    %p110 = scmp.eq.s32.totalorder %s10, 0
    %p111 = por %p109, %p110
    %p112 = scmp.ne.s32.totalorder %s104, %s106
    %p113 = scmp.eq.s32.totalorder %s15, 3
    %p114 = por %p112, %p113
    %p115 = scmp.ne.s32.totalorder %s106, %s107
    %p116 = scmp.eq.s32.totalorder %s15, 0
    %p117 = por %p115, %p116
    %p118 = scmp.ne.s32.totalorder %s106, %s107
    %p119 = scmp.eq.s32.totalorder %s16, 3
    %p120 = por %p118, %p119
    %p122 = scmp.ne.s32.totalorder %s107, %s121
    %p123 = scmp.eq.s32.totalorder %s16, 0
    %p124 = por %p122, %p123
    %s125 = smul.u32 %s17, %s18
    %s126 = smul.u32 %s29, %s25
    %s127 = ssub.s32 %s125, %s126
    %p128 = scmp.eq.s32.totalorder %s127, 0
    %s130 = sadd.s32 %s129, 1
    %s131 = scalar_select %p128, %s129, %s130
    %p134 = pneg %p128
    %p135 = scmp.eq.s32.totalorder %s10, 3
    %p136 = por %p134, %p135
    %p137 = scmp.ne.s32.totalorder %s129, %s132
    %p138 = scmp.eq.s32.totalorder %s10, 0
    %p139 = por %p137, %p138
    %p140 = scmp.ne.s32.totalorder %s129, %s132
    %p141 = scmp.eq.s32.totalorder %s15, 3
    %p142 = por %p140, %p141
    %p143 = scmp.ne.s32.totalorder %s132, %s133
    %p144 = scmp.eq.s32.totalorder %s15, 0
    %p145 = por %p143, %p144
    %p146 = scmp.ne.s32.totalorder %s132, %s133
    %p147 = scmp.eq.s32.totalorder %s16, 3
    %p148 = por %p146, %p147
    %p150 = scmp.ne.s32.totalorder %s133, %s149
    %p151 = scmp.eq.s32.totalorder %s16, 0
    %p152 = por %p150, %p151
    %p153 = scmp.le.s32.totalorder 1, %s10
    %p154 = scmp.lt.s32.totalorder %s10, 5
    %p155 = pnand %p153, %p154
    %p156 = pneg %p155
    // Predicated region
    $region9: #{unet_encoder.4} parent=5 // pred_check
      _
    $region10: #{unet_encoder.4} parent=5 // pred_check_branch
      %158 = sbr.rel (%p155) target = $region12
    $region11: #{unet_encoder.4} parent=5 // pred_region
      %s159 = ssub.s32 %s10, 1
      // Predicated region
      $region13: #{unet_encoder.4} parent=11 // pred_check
        %p160 = pneg %p75
      $region14: #{unet_encoder.4} parent=11 // pred_check_branch
        %162 = sbr.rel (%p160) target = $region16
      $region15: #{unet_encoder.4} parent=11 // pred_region
        _
      $region16: #{unet_encoder.4} parent=11 // pred_fallthru
        _
      // Predicated region
      $region17: #{unet_encoder.4} parent=11 // pred_check
        %p163 = pneg %p96
      $region18: #{unet_encoder.4} parent=11 // pred_check_branch
        %165 = sbr.rel (%p163) target = $region20
      $region19: #{unet_encoder.4} parent=11 // pred_region
        _
      $region20: #{unet_encoder.4} parent=11 // pred_fallthru
        _
      // Predicated region
      $region21: #{unet_encoder.4} parent=11 // pred_check
        %p166 = pneg %p117
      $region22: #{unet_encoder.4} parent=11 // pred_check_branch
        %168 = sbr.rel (%p166) target = $region24
      $region23: #{unet_encoder.4} parent=11 // pred_region
        _
      $region24: #{unet_encoder.4} parent=11 // pred_fallthru
        _
    $region12: #{unet_encoder.4} parent=5 // pred_fallthru
      _
    %p169 = scmp.lt.s32.totalorder %s10, 4
    // Predicated region
    $region25: #{unet_encoder.4} parent=5 // pred_check
      %p170 = pneg %p169
    $region26: #{unet_encoder.4} parent=5 // pred_check_branch
      %172 = sbr.rel (%p170) target = $region28
    $region27: #{unet_encoder.4} parent=5 // pred_region
      // Predicated region
      $region29: #{unet_encoder.4} parent=27 // pred_check
        %p173 = pneg %p48
      $region30: #{unet_encoder.4} parent=27 // pred_check_branch
        %175 = sbr.rel (%p173) target = $region32
      $region31: #{unet_encoder.4} parent=27 // pred_region
        %s176 = ssub.s32 1, %s17
        %s177 = smul.u32 %s18, %s176
        %s178 = sadd.s32 %s177, %s17
        %p179 = scmp.lt.s32.totalorder %s178, 1
        %s180 = scalar_select %p179, %s178, 1
        %s181 = smul.addr %s180, 32
        %s182 = smul.addr %s181, 4
        %s183 = scalar_lea.vmem %s0, %s182
        %s184 = ssub.s32 1, %s17
        %s185 = smul.u32 %s18, %s184
        %s186 = sadd.s32 %s185, %s17
      $region32: #{unet_encoder.4} parent=27 // pred_fallthru
        _
    $region28: #{unet_encoder.4} parent=5 // pred_fallthru
      _
    %p187 = scmp.le.s32.totalorder 1, %s10
    %p188 = scmp.lt.s32.totalorder %s10, 5
    %p189 = pnand %p187, %p188
    %p190 = pneg %p189
    // Predicated region
    $region33: #{unet_encoder.4} parent=5 // pred_check
      _
    $region34: #{unet_encoder.4} parent=5 // pred_check_branch
      %192 = sbr.rel (%p189) target = $region36
    $region35: #{unet_encoder.4} parent=5 // pred_region
      %s193 = ssub.s32 %s10, 1
      %s194 = ssub.s32 1, %s19
      %s195 = smul.u32 %s20, %s194
      %s196 = sadd.s32 %s195, %s19
      %p197 = scmp.lt.s32.totalorder %s196, 1
      %s198 = scalar_select %p197, %s196, 1
      %s199 = smul.addr %s198, 32
      %s200 = smul.addr %s199, 4
      %s201 = scalar_lea.vmem %s0, %s200
      %p202 = pneg %p54
      %p203 = pneg %p51
      %p204 = pneg %p75
      %p205 = pneg %p72
      %p206 = pneg %p96
      %p207 = pneg %p93
      %p208 = pneg %p117
      %p209 = pneg %p114
      %p210 = pneg %p145
      %p211 = pneg %p142
      %s212 = smul.u32 %s19, %s20
      %p213 = scmp.lt.s32.totalorder %s212, 1
      %s214 = scalar_select %p213, %s212, 1
      %s215 = smul.addr %s214, 8
      %s216 = smul.addr %s215, 4
      %s217 = scalar_lea.vmem %s4, %s216
      %s218 = ssub.s32 1, %s19
      %s219 = smul.u32 %s20, %s218
      %s220 = sadd.s32 %s219, %s19
      %p221 = scmp.lt.s32.totalorder %s220, 1
      %s222 = scalar_select %p221, %s220, 1
      %s223 = smul.addr %s222, 32
      %s224 = smul.addr %s223, 4
      %s225 = scalar_lea.vmem %s0, %s224
      %s226 = ssub.s32 1, %s19
      %s227 = smul.u32 %s20, %s226
      %s228 = sadd.s32 %s227, %s19
      %s229 = smul.u32 %s19, %s20
      %p230 = scmp.lt.s32.totalorder %s229, 1
      %s231 = scalar_select %p230, %s229, 1
      %s232 = smul.addr %s231, 8
      %s233 = smul.addr %s232, 4
      %s234 = scalar_lea.vmem %s4, %s233
      %s235 = smul.u32 %s19, %s20
      %p237 = scmp.eq.s32.totalorder %s19, 0
      // Predicated region
      $region37: #{unet_encoder.4} parent=35 // pred_check
        %p238 = pneg %p237
      $region38: #{unet_encoder.4} parent=35 // pred_check_branch
        %240 = sbr.rel (%p238) target = $region40
      $region39: #{unet_encoder.4} parent=35 // pred_region
        %p241 = scmp.eq.s32.totalorder %s20, 0
        // Predicated region
        $region41: #{unet_encoder.4} parent=39 // pred_check
          %p242 = pneg %p241
        $region42: #{unet_encoder.4} parent=39 // pred_check_branch
          %244 = sbr.rel (%p242) target = $region44
        $region43: #{unet_encoder.4} parent=39 // pred_region
          %vm245 = vcmask 19456
          %246 = vst.msk [vmem:[#allocation2] sm:$0xf] %vm245, 0
          %247 = vst.msk [vmem:[#allocation2 + $0x4] sm:$0xf] %vm245, 0
          %248 = vst.msk [vmem:[#allocation2 + $0x8] sm:$0xf] %vm245, 0
          %249 = vst.msk [vmem:[#allocation2 + $0xc] sm:$0xf] %vm245, 0
          %vm250 = vcmask 16384
          %vm251 = vsmask.f32 256
          %vm252 = vmand %vm250, %vm251
          %v253 = vld [vmem:[#allocation2 + $0x10] sm:$0x1]
          %v254 = vsel %vm252, 0, %v253
          %255 = vst [vmem:[#allocation2 + $0x10] sm:$0x1] %v254
          %256 = vst.msk [vmem:[#allocation2 + $0x14] sm:$0xf] %vm245, 0
          %257 = vst.msk [vmem:[#allocation2 + $0x18] sm:$0xf] %vm245, 0
          %258 = vst.msk [vmem:[#allocation2 + $0x1c] sm:$0xf] %vm245, 0
          %259 = vst.msk [vmem:[#allocation2 + $0x20] sm:$0xf] %vm245, 0
          %v260 = vld [vmem:[#allocation2 + $0x24] sm:$0x1]
          %v261 = vsel %vm252, 0, %v260
          %262 = vst [vmem:[#allocation2 + $0x24] sm:$0x1] %v261
          %263 = vst.msk [vmem:[#allocation2 + $0x28] sm:$0xf] %vm245, 0
          %264 = vst.msk [vmem:[#allocation2 + $0x2c] sm:$0xf] %vm245, 0
          %265 = vst.msk [vmem:[#allocation2 + $0x30] sm:$0xf] %vm245, 0
          %266 = vst.msk [vmem:[#allocation2 + $0x34] sm:$0xf] %vm245, 0
          %v267 = vld [vmem:[#allocation2 + $0x38] sm:$0x1]
          %v268 = vsel %vm252, 0, %v267
          %269 = vst [vmem:[#allocation2 + $0x38] sm:$0x1] %v268
          %270 = vst.msk [vmem:[#allocation2 + $0x3c] sm:$0xf] %vm245, 0
          %271 = vst.msk [vmem:[#allocation2 + $0x40] sm:$0xf] %vm245, 0
          %272 = vst.msk [vmem:[#allocation2 + $0x44] sm:$0xf] %vm245, 0
          %273 = vst.msk [vmem:[#allocation2 + $0x48] sm:$0xf] %vm245, 0
          %v274 = vld [vmem:[#allocation2 + $0x4c] sm:$0x1]
          %v275 = vsel %vm252, 0, %v274
          %276 = vst [vmem:[#allocation2 + $0x4c] sm:$0x1] %v275
          %277 = vst.msk [vmem:[#allocation2 + $0x50] sm:$0xf] %vm245, 0
          %278 = vst.msk [vmem:[#allocation2 + $0x54] sm:$0xf] %vm245, 0
          %279 = vst.msk [vmem:[#allocation2 + $0x58] sm:$0xf] %vm245, 0
          %280 = vst.msk [vmem:[#allocation2 + $0x5c] sm:$0xf] %vm245, 0
          %v281 = vld [vmem:[#allocation2 + $0x60] sm:$0x1]
          %v282 = vsel %vm252, 0, %v281
          %283 = vst [vmem:[#allocation2 + $0x60] sm:$0x1] %v282
          %284 = vst.msk [vmem:[#allocation2 + $0x64] sm:$0xf] %vm245, 0
          %285 = vst.msk [vmem:[#allocation2 + $0x68] sm:$0xf] %vm245, 0
          %286 = vst.msk [vmem:[#allocation2 + $0x6c] sm:$0xf] %vm245, 0
          %287 = vst.msk [vmem:[#allocation2 + $0x70] sm:$0xf] %vm245, 0
          %v288 = vld [vmem:[#allocation2 + $0x74] sm:$0x1]
          %v289 = vsel %vm252, 0, %v288
          %290 = vst [vmem:[#allocation2 + $0x74] sm:$0x1] %v289
          %291 = vst.msk [vmem:[#allocation2 + $0x78] sm:$0xf] %vm245, 0
          %292 = vst.msk [vmem:[#allocation2 + $0x7c] sm:$0xf] %vm245, 0
          %293 = vst.msk [vmem:[#allocation2 + $0x80] sm:$0xf] %vm245, 0
          %294 = vst.msk [vmem:[#allocation2 + $0x84] sm:$0xf] %vm245, 0
          %v295 = vld [vmem:[#allocation2 + $0x88] sm:$0x1]
          %v296 = vsel %vm252, 0, %v295
          %297 = vst [vmem:[#allocation2 + $0x88] sm:$0x1] %v296
          %298 = vst.msk [vmem:[#allocation2 + $0x8c] sm:$0xf] %vm245, 0
          %299 = vst.msk [vmem:[#allocation2 + $0x90] sm:$0xf] %vm245, 0
          %300 = vst.msk [vmem:[#allocation2 + $0x94] sm:$0xf] %vm245, 0
          %301 = vst.msk [vmem:[#allocation2 + $0x98] sm:$0xf] %vm245, 0
          %v302 = vld [vmem:[#allocation2 + $0x9c] sm:$0x1]
          %v303 = vsel %vm252, 0, %v302
          %304 = vst [vmem:[#allocation2 + $0x9c] sm:$0x1] %v303
          %305 = vst.msk [vmem:[#allocation2 + $0xa0] sm:$0xf] %vm245, 0
          %306 = vst.msk [vmem:[#allocation2 + $0xa4] sm:$0xf] %vm245, 0
          %307 = vst.msk [vmem:[#allocation2 + $0xa8] sm:$0xf] %vm245, 0
          %308 = vst.msk [vmem:[#allocation2 + $0xac] sm:$0xf] %vm245, 0
          %v309 = vld [vmem:[#allocation2 + $0xb0] sm:$0x1]
          %v310 = vsel %vm252, 0, %v309
          %311 = vst [vmem:[#allocation2 + $0xb0] sm:$0x1] %v310
          %312 = vst.msk [vmem:[#allocation2 + $0xb4] sm:$0xf] %vm245, 0
          %313 = vst.msk [vmem:[#allocation2 + $0xb8] sm:$0xf] %vm245, 0
          %314 = vst.msk [vmem:[#allocation2 + $0xbc] sm:$0xf] %vm245, 0
          %315 = vst.msk [vmem:[#allocation2 + $0xc0] sm:$0xf] %vm245, 0
          %v316 = vld [vmem:[#allocation2 + $0xc4] sm:$0x1]
          %v317 = vsel %vm252, 0, %v316
          %318 = vst [vmem:[#allocation2 + $0xc4] sm:$0x1] %v317
          %319 = vst.msk [vmem:[#allocation2 + $0xc8] sm:$0xf] %vm245, 0
          %320 = vst.msk [vmem:[#allocation2 + $0xcc] sm:$0xf] %vm245, 0
          %321 = vst.msk [vmem:[#allocation2 + $0xd0] sm:$0xf] %vm245, 0
          %322 = vst.msk [vmem:[#allocation2 + $0xd4] sm:$0xf] %vm245, 0
          %v323 = vld [vmem:[#allocation2 + $0xd8] sm:$0x1]
          %v324 = vsel %vm252, 0, %v323
          %325 = vst [vmem:[#allocation2 + $0xd8] sm:$0x1] %v324
          %326 = vst.msk [vmem:[#allocation2 + $0xdc] sm:$0xf] %vm245, 0
          %327 = vst.msk [vmem:[#allocation2 + $0xe0] sm:$0xf] %vm245, 0
          %328 = vst.msk [vmem:[#allocation2 + $0xe4] sm:$0xf] %vm245, 0
          %329 = vst.msk [vmem:[#allocation2 + $0xe8] sm:$0xf] %vm245, 0
          %v330 = vld [vmem:[#allocation2 + $0xec] sm:$0x1]
          %v331 = vsel %vm252, 0, %v330
          %332 = vst [vmem:[#allocation2 + $0xec] sm:$0x1] %v331
          %333 = vst.msk [vmem:[#allocation2 + $0xf0] sm:$0xf] %vm245, 0
          %334 = vst.msk [vmem:[#allocation2 + $0xf4] sm:$0xf] %vm245, 0
          %335 = vst.msk [vmem:[#allocation2 + $0xf8] sm:$0xf] %vm245, 0
          %336 = vst.msk [vmem:[#allocation2 + $0xfc] sm:$0xf] %vm245, 0
          %v337 = vld [vmem:[#allocation2 + $0x100] sm:$0x1]
          %v338 = vsel %vm252, 0, %v337
          %339 = vst [vmem:[#allocation2 + $0x100] sm:$0x1] %v338
          %340 = vst.msk [vmem:[#allocation2 + $0x104] sm:$0xf] %vm245, 0
          %341 = vst.msk [vmem:[#allocation2 + $0x108] sm:$0xf] %vm245, 0
          %342 = vst.msk [vmem:[#allocation2 + $0x10c] sm:$0xf] %vm245, 0
          %343 = vst.msk [vmem:[#allocation2 + $0x110] sm:$0xf] %vm245, 0
          %v344 = vld [vmem:[#allocation2 + $0x114] sm:$0x1]
          %v345 = vsel %vm252, 0, %v344
          %346 = vst [vmem:[#allocation2 + $0x114] sm:$0x1] %v345
          %347 = vst.msk [vmem:[#allocation2 + $0x118] sm:$0xf] %vm245, 0
          %348 = vst.msk [vmem:[#allocation2 + $0x11c] sm:$0xf] %vm245, 0
          %349 = vst.msk [vmem:[#allocation2 + $0x120] sm:$0xf] %vm245, 0
          %350 = vst.msk [vmem:[#allocation2 + $0x124] sm:$0xf] %vm245, 0
          %v351 = vld [vmem:[#allocation2 + $0x128] sm:$0x1]
          %v352 = vsel %vm252, 0, %v351
          %353 = vst [vmem:[#allocation2 + $0x128] sm:$0x1] %v352
          %354 = vst.msk [vmem:[#allocation2 + $0x12c] sm:$0xf] %vm245, 0
          %355 = vst.msk [vmem:[#allocation2 + $0x130] sm:$0xf] %vm245, 0
          %356 = vst.msk [vmem:[#allocation2 + $0x134] sm:$0xf] %vm245, 0
          %357 = vst.msk [vmem:[#allocation2 + $0x138] sm:$0xf] %vm245, 0
          %v358 = vld [vmem:[#allocation2 + $0x13c] sm:$0x1]
          %v359 = vsel %vm252, 0, %v358
          %360 = vst [vmem:[#allocation2 + $0x13c] sm:$0x1] %v359
          %361 = vst.msk [vmem:[#allocation2 + $0x140] sm:$0xf] %vm245, 0
          %362 = vst.msk [vmem:[#allocation2 + $0x144] sm:$0xf] %vm245, 0
          %363 = vst.msk [vmem:[#allocation2 + $0x148] sm:$0xf] %vm245, 0
          %364 = vst.msk [vmem:[#allocation2 + $0x14c] sm:$0xf] %vm245, 0
          %v365 = vld [vmem:[#allocation2 + $0x150] sm:$0x1]
          %v366 = vsel %vm252, 0, %v365
          %367 = vst [vmem:[#allocation2 + $0x150] sm:$0x1] %v366
          %368 = vst.msk [vmem:[#allocation2 + $0x154] sm:$0xf] %vm245, 0
          %369 = vst.msk [vmem:[#allocation2 + $0x158] sm:$0xf] %vm245, 0
          %370 = vst.msk [vmem:[#allocation2 + $0x15c] sm:$0xf] %vm245, 0
          %371 = vst.msk [vmem:[#allocation2 + $0x160] sm:$0xf] %vm245, 0
          %v372 = vld [vmem:[#allocation2 + $0x164] sm:$0x1]
          %v373 = vsel %vm252, 0, %v372
          %374 = vst [vmem:[#allocation2 + $0x164] sm:$0x1] %v373
          %vm375 = vcmask 24576
          %376 = vst.msk [vmem:[#allocation4] sm:$0x1] %vm375, 0.0
        $region44: #{unet_encoder.4} parent=39 // pred_fallthru
          _
        %v377 = vld [vmem:[%s225] sm:$0xf]
        %v378 = vld [vmem:[%s225 + $0x4] sm:$0xf]
        %v379 = vld [vmem:[%s225 + $0x8] sm:$0xf]
        %v380 = vld [vmem:[%s225 + $0xc] sm:$0xf]
        %v381 = vld [vmem:[%s225 + $0x10] sm:$0xf]
        %v382 = vld [vmem:[%s225 + $0x14] sm:$0xf]
        %v383 = vld [vmem:[%s225 + $0x18] sm:$0xf]
        %v384 = vld [vmem:[%s225 + $0x1c] sm:$0xf]
        %v385 = vld [vmem:[%s225 + $0x20] sm:$0xf]
        %v386 = vld [vmem:[%s225 + $0x24] sm:$0xf]
        %v387 = vld [vmem:[%s225 + $0x28] sm:$0xf]
        %v388 = vld [vmem:[%s225 + $0x2c] sm:$0xf]
        %v389 = vld [vmem:[%s225 + $0x30] sm:$0xf]
        %v390 = vld [vmem:[%s225 + $0x34] sm:$0xf]
        %v391 = vld [vmem:[%s225 + $0x38] sm:$0xf]
        %v392 = vld [vmem:[%s225 + $0x3c] sm:$0xf]
        %v393 = vld [vmem:[%s225 + $0x40] sm:$0xf]
        %v394 = vld [vmem:[%s225 + $0x44] sm:$0xf]
        %v395 = vld [vmem:[%s225 + $0x48] sm:$0xf]
        %v396 = vld [vmem:[%s225 + $0x4c] sm:$0xf]
        %v397 = vld [vmem:[%s225 + $0x50] sm:$0xf]
        %v398 = vld [vmem:[%s225 + $0x54] sm:$0xf]
        %v399 = vld [vmem:[%s225 + $0x58] sm:$0xf]
        %v400 = vld [vmem:[%s225 + $0x5c] sm:$0xf]
        %v401 = vld [vmem:[%s225 + $0x60] sm:$0xf]
        %v402 = vld [vmem:[%s225 + $0x64] sm:$0xf]
        %v403 = vld [vmem:[%s225 + $0x68] sm:$0xf]
        %v404 = vld [vmem:[%s225 + $0x6c] sm:$0xf]
        %v405 = vld [vmem:[%s225 + $0x70] sm:$0xf]
        %v406 = vld [vmem:[%s225 + $0x74] sm:$0xf]
        %v407 = vld [vmem:[%s225 + $0x78] sm:$0xf]
        %v408 = vld [vmem:[%s225 + $0x7c] sm:$0xf]
        %s409 = scalar_lea.vmem [#allocation2], 20
        %vm410 = vcmask 19456
        %411 = vst.msk [vmem:[%s409 + $0x8] sm:$0xf] %vm410, %v377
        %412 = vst.msk [vmem:[%s409 + $0xc] sm:$0xf] %vm410, %v378
        %413 = vst.msk [vmem:[%s409 + $0x1c] sm:$0xf] %vm410, %v379
        %414 = vst.msk [vmem:[%s409 + $0x20] sm:$0xf] %vm410, %v380
        %415 = vst.msk [vmem:[%s409 + $0x30] sm:$0xf] %vm410, %v381
        %416 = vst.msk [vmem:[%s409 + $0x34] sm:$0xf] %vm410, %v382
        %417 = vst.msk [vmem:[%s409 + $0x44] sm:$0xf] %vm410, %v383
        %418 = vst.msk [vmem:[%s409 + $0x48] sm:$0xf] %vm410, %v384
        %419 = vst.msk [vmem:[%s409 + $0x58] sm:$0xf] %vm410, %v385
        %420 = vst.msk [vmem:[%s409 + $0x5c] sm:$0xf] %vm410, %v386
        %421 = vst.msk [vmem:[%s409 + $0x6c] sm:$0xf] %vm410, %v387
        %422 = vst.msk [vmem:[%s409 + $0x70] sm:$0xf] %vm410, %v388
        %423 = vst.msk [vmem:[%s409 + $0x80] sm:$0xf] %vm410, %v389
        %424 = vst.msk [vmem:[%s409 + $0x84] sm:$0xf] %vm410, %v390
        %425 = vst.msk [vmem:[%s409 + $0x94] sm:$0xf] %vm410, %v391
        %426 = vst.msk [vmem:[%s409 + $0x98] sm:$0xf] %vm410, %v392
        %427 = vst.msk [vmem:[%s409 + $0xa8] sm:$0xf] %vm410, %v393
        %428 = vst.msk [vmem:[%s409 + $0xac] sm:$0xf] %vm410, %v394
        %429 = vst.msk [vmem:[%s409 + $0xbc] sm:$0xf] %vm410, %v395
        %430 = vst.msk [vmem:[%s409 + $0xc0] sm:$0xf] %vm410, %v396
        %431 = vst.msk [vmem:[%s409 + $0xd0] sm:$0xf] %vm410, %v397
        %432 = vst.msk [vmem:[%s409 + $0xd4] sm:$0xf] %vm410, %v398
        %433 = vst.msk [vmem:[%s409 + $0xe4] sm:$0xf] %vm410, %v399
        %434 = vst.msk [vmem:[%s409 + $0xe8] sm:$0xf] %vm410, %v400
        %435 = vst.msk [vmem:[%s409 + $0xf8] sm:$0xf] %vm410, %v401
        %436 = vst.msk [vmem:[%s409 + $0xfc] sm:$0xf] %vm410, %v402
        %437 = vst.msk [vmem:[%s409 + $0x10c] sm:$0xf] %vm410, %v403
        %438 = vst.msk [vmem:[%s409 + $0x110] sm:$0xf] %vm410, %v404
        %439 = vst.msk [vmem:[%s409 + $0x120] sm:$0xf] %vm410, %v405
        %440 = vst.msk [vmem:[%s409 + $0x124] sm:$0xf] %vm410, %v406
        %441 = vst.msk [vmem:[%s409 + $0x134] sm:$0xf] %vm410, %v407
        %442 = vst.msk [vmem:[%s409 + $0x138] sm:$0xf] %vm410, %v408
        %v443 = vld [vmem:[#allocation2 + $0x4] sm:$0xf]
        %v444 = vld [vmem:[#allocation2 + $0x8] sm:$0xf]
        %v445 = vld [vmem:[#allocation2 + $0xc] sm:$0xf]
        %v446 = vld [vmem:[#allocation2 + $0x10] sm:$0x1]
        %v447 = vld [vmem:[#allocation2 + $0x18] sm:$0xf]
        %v448 = vld [vmem:[#allocation2 + $0x1c] sm:$0xf]
        %v449 = vld [vmem:[#allocation2 + $0x20] sm:$0xf]
        %v450 = vld [vmem:[#allocation2 + $0x24] sm:$0x1]
        %v451 = vld [vmem:[#allocation2 + $0x2c] sm:$0xf]
        %v452 = vld [vmem:[#allocation2 + $0x30] sm:$0xf]
        %v453 = vld [vmem:[#allocation2 + $0x34] sm:$0xf]
        %v454 = vld [vmem:[#allocation2 + $0x38] sm:$0x1]
        %v455 = vld [vmem:[#allocation2 + $0x40] sm:$0xf]
        %v456 = vld [vmem:[#allocation2 + $0x44] sm:$0xf]
        %v457 = vld [vmem:[#allocation2 + $0x48] sm:$0xf]
        %v458 = vld [vmem:[#allocation2 + $0x4c] sm:$0x1]
        %v459 = vld [vmem:[#allocation2 + $0x54] sm:$0xf]
        %v460 = vld [vmem:[#allocation2 + $0x58] sm:$0xf]
        %v461 = vld [vmem:[#allocation2 + $0x5c] sm:$0xf]
        %v462 = vld [vmem:[#allocation2 + $0x60] sm:$0x1]
        %v463 = vld [vmem:[#allocation2 + $0x68] sm:$0xf]
        %v464 = vld [vmem:[#allocation2 + $0x6c] sm:$0xf]
        %v465 = vld [vmem:[#allocation2 + $0x70] sm:$0xf]
        %v466 = vld [vmem:[#allocation2 + $0x74] sm:$0x1]
        %v467 = vld [vmem:[#allocation2 + $0x7c] sm:$0xf]
        %v468 = vld [vmem:[#allocation2 + $0x80] sm:$0xf]
        %v469 = vld [vmem:[#allocation2 + $0x84] sm:$0xf]
        %v470 = vld [vmem:[#allocation2 + $0x88] sm:$0x1]
        %v471 = vld [vmem:[#allocation2 + $0x90] sm:$0xf]
        %v472 = vld [vmem:[#allocation2 + $0x94] sm:$0xf]
        %v473 = vld [vmem:[#allocation2 + $0x98] sm:$0xf]
        %v474 = vld [vmem:[#allocation2 + $0x9c] sm:$0x1]
        %v475 = vld [vmem:[#allocation2 + $0xa4] sm:$0xf]
        %v476 = vld [vmem:[#allocation2 + $0xa8] sm:$0xf]
        %v477 = vld [vmem:[#allocation2 + $0xac] sm:$0xf]
        %v478 = vld [vmem:[#allocation2 + $0xb0] sm:$0x1]
        %v479 = vld [vmem:[#allocation2 + $0xb8] sm:$0xf]
        %v480 = vld [vmem:[#allocation2 + $0xbc] sm:$0xf]
        %v481 = vld [vmem:[#allocation2 + $0xc0] sm:$0xf]
        %v482 = vld [vmem:[#allocation2 + $0xc4] sm:$0x1]
        %v483 = vld [vmem:[#allocation2 + $0xcc] sm:$0xf]
        %v484 = vld [vmem:[#allocation2 + $0xd0] sm:$0xf]
        %v485 = vld [vmem:[#allocation2 + $0xd4] sm:$0xf]
        %v486 = vld [vmem:[#allocation2 + $0xd8] sm:$0x1]
        %v487 = vld [vmem:[#allocation2 + $0xe0] sm:$0xf]
        %v488 = vld [vmem:[#allocation2 + $0xe4] sm:$0xf]
        %v489 = vld [vmem:[#allocation2 + $0xe8] sm:$0xf]
        %v490 = vld [vmem:[#allocation2 + $0xec] sm:$0x1]
        %v491 = vld [vmem:[#allocation2 + $0xf4] sm:$0xf]
        %v492 = vld [vmem:[#allocation2 + $0xf8] sm:$0xf]
        %v493 = vld [vmem:[#allocation2 + $0xfc] sm:$0xf]
        %v494 = vld [vmem:[#allocation2 + $0x100] sm:$0x1]
        %v495 = vld [vmem:[#allocation2 + $0x108] sm:$0xf]
        %v496 = vld [vmem:[#allocation2 + $0x10c] sm:$0xf]
        %v497 = vld [vmem:[#allocation2 + $0x110] sm:$0xf]
        %v498 = vld [vmem:[#allocation2 + $0x114] sm:$0x1]
        %v499 = vld [vmem:[#allocation2 + $0x11c] sm:$0xf]
        %v500 = vld [vmem:[#allocation2 + $0x120] sm:$0xf]
        %v501 = vld [vmem:[#allocation2 + $0x124] sm:$0xf]
        %v502 = vld [vmem:[#allocation2 + $0x128] sm:$0x1]
        %v503 = vld [vmem:[#allocation2 + $0x130] sm:$0xf]
        %v504 = vld [vmem:[#allocation2 + $0x134] sm:$0xf]
        %v505 = vld [vmem:[#allocation2 + $0x138] sm:$0xf]
        %v506 = vld [vmem:[#allocation2 + $0x13c] sm:$0x1]
        %v507 = vld [vmem:[#allocation2 + $0x144] sm:$0xf]
        %v508 = vld [vmem:[#allocation2 + $0x148] sm:$0xf]
        %v509 = vld [vmem:[#allocation2 + $0x14c] sm:$0xf]
        %v510 = vld [vmem:[#allocation2 + $0x150] sm:$0x1]
        %v511 = vld [vmem:[#allocation2 + $0x158] sm:$0xf]
        %v512 = vld [vmem:[#allocation2 + $0x15c] sm:$0xf]
        %v513 = vld [vmem:[#allocation2 + $0x160] sm:$0xf]
        %v514 = vld [vmem:[#allocation2 + $0x164] sm:$0x1]
        %vm515 = vsmask.f32 256
        %vm516 = vsmask.f32 4368
        %vm517 = vmor %vm515, %vm516
        %v519 = vshrl.u32 %v443, 16
        %v521 = vrot.slane %v519, 7
        %v522 = vrot.slane %v521, 4
        %v524 = vshrl.u32 %v444, 16
        %v526 = vrot.slane %v524, 7
        %v527 = vshll.u32 %v444, 16
        %v529 = vor.u32 %v526, %v527
        %v530 = vsel %vm517, %v522, %v529
        %v531 = vrot.slane %v526, 4
        %v533 = vshrl.u32 %v445, 16
        %v535 = vrot.slane %v533, 7
        %v536 = vshll.u32 %v445, 16
        %v538 = vor.u32 %v535, %v536
        %v539 = vsel %vm517, %v531, %v538
        %v541 = vshrl.u32 %v447, 16
        %v543 = vrot.slane %v541, 7
        %v544 = vrot.slane %v543, 4
        %v546 = vshrl.u32 %v448, 16
        %v548 = vrot.slane %v546, 7
        %v549 = vshll.u32 %v448, 16
        %v551 = vor.u32 %v548, %v549
        %v552 = vsel %vm517, %v544, %v551
        %v553 = vrot.slane %v548, 4
        %v555 = vshrl.u32 %v449, 16
        %v557 = vrot.slane %v555, 7
        %v558 = vshll.u32 %v449, 16
        %v560 = vor.u32 %v557, %v558
        %v561 = vsel %vm517, %v553, %v560
        %v563 = vshrl.u32 %v451, 16
        %v565 = vrot.slane %v563, 7
        %v566 = vrot.slane %v565, 4
        %v568 = vshrl.u32 %v452, 16
        %v570 = vrot.slane %v568, 7
        %v571 = vshll.u32 %v452, 16
        %v573 = vor.u32 %v570, %v571
        %v574 = vsel %vm517, %v566, %v573
        %v575 = vrot.slane %v570, 4
        %v577 = vshrl.u32 %v453, 16
        %v579 = vrot.slane %v577, 7
        %v580 = vshll.u32 %v453, 16
        %v582 = vor.u32 %v579, %v580
        %v583 = vsel %vm517, %v575, %v582
        %v585 = vshrl.u32 %v455, 16
        %v587 = vrot.slane %v585, 7
        %v588 = vrot.slane %v587, 4
        %v590 = vshrl.u32 %v456, 16
        %v592 = vrot.slane %v590, 7
        %v593 = vshll.u32 %v456, 16
        %v595 = vor.u32 %v592, %v593
        %v596 = vsel %vm517, %v588, %v595
        %v597 = vrot.slane %v592, 4
        %v599 = vshrl.u32 %v457, 16
        %v601 = vrot.slane %v599, 7
        %v602 = vshll.u32 %v457, 16
        %v604 = vor.u32 %v601, %v602
        %v605 = vsel %vm517, %v597, %v604
        %v607 = vshrl.u32 %v459, 16
        %v609 = vrot.slane %v607, 7
        %v610 = vrot.slane %v609, 4
        %v612 = vshrl.u32 %v460, 16
        %v614 = vrot.slane %v612, 7
        %v615 = vshll.u32 %v460, 16
        %v617 = vor.u32 %v614, %v615
        %v618 = vsel %vm517, %v610, %v617
        %v619 = vrot.slane %v614, 4
        %v621 = vshrl.u32 %v461, 16
        %v623 = vrot.slane %v621, 7
        %v624 = vshll.u32 %v461, 16
        %v626 = vor.u32 %v623, %v624
        %v627 = vsel %vm517, %v619, %v626
        %v629 = vshrl.u32 %v463, 16
        %v631 = vrot.slane %v629, 7
        %v632 = vrot.slane %v631, 4
        %v634 = vshrl.u32 %v464, 16
        %v636 = vrot.slane %v634, 7
        %v637 = vshll.u32 %v464, 16
        %v639 = vor.u32 %v636, %v637
        %v640 = vsel %vm517, %v632, %v639
        %v641 = vrot.slane %v636, 4
        %v643 = vshrl.u32 %v465, 16
        %v645 = vrot.slane %v643, 7
        %v646 = vshll.u32 %v465, 16
        %v648 = vor.u32 %v645, %v646
        %v649 = vsel %vm517, %v641, %v648
        %v651 = vshrl.u32 %v467, 16
        %v653 = vrot.slane %v651, 7
        %v654 = vrot.slane %v653, 4
        %v656 = vshrl.u32 %v468, 16
        %v658 = vrot.slane %v656, 7
        %v659 = vshll.u32 %v468, 16
        %v661 = vor.u32 %v658, %v659
        %v662 = vsel %vm517, %v654, %v661
        %v663 = vrot.slane %v658, 4
        %v665 = vshrl.u32 %v469, 16
        %v667 = vrot.slane %v665, 7
        %v668 = vshll.u32 %v469, 16
        %v670 = vor.u32 %v667, %v668
        %v671 = vsel %vm517, %v663, %v670
        %v673 = vshrl.u32 %v471, 16
        %v675 = vrot.slane %v673, 7
        %v676 = vrot.slane %v675, 4
        %v678 = vshrl.u32 %v472, 16
        %v680 = vrot.slane %v678, 7
        %v681 = vshll.u32 %v472, 16
        %v683 = vor.u32 %v680, %v681
        %v684 = vsel %vm517, %v676, %v683
        %v685 = vrot.slane %v680, 4
        %v687 = vshrl.u32 %v473, 16
        %v689 = vrot.slane %v687, 7
        %v690 = vshll.u32 %v473, 16
        %v692 = vor.u32 %v689, %v690
        %v693 = vsel %vm517, %v685, %v692
        %v695 = vshrl.u32 %v475, 16
        %v697 = vrot.slane %v695, 7
        %v698 = vrot.slane %v697, 4
        %v700 = vshrl.u32 %v476, 16
        %v702 = vrot.slane %v700, 7
        %v703 = vshll.u32 %v476, 16
        %v705 = vor.u32 %v702, %v703
        %v706 = vsel %vm517, %v698, %v705
        %v707 = vrot.slane %v702, 4
        %v709 = vshrl.u32 %v477, 16
        %v711 = vrot.slane %v709, 7
        %v712 = vshll.u32 %v477, 16
        %v714 = vor.u32 %v711, %v712
        %v715 = vsel %vm517, %v707, %v714
        %v717 = vshrl.u32 %v479, 16
        %v719 = vrot.slane %v717, 7
        %v720 = vrot.slane %v719, 4
        %v722 = vshrl.u32 %v480, 16
        %v724 = vrot.slane %v722, 7
        %v725 = vshll.u32 %v480, 16
        %v727 = vor.u32 %v724, %v725
        %v728 = vsel %vm517, %v720, %v727
        %v729 = vrot.slane %v724, 4
        %v731 = vshrl.u32 %v481, 16
        %v733 = vrot.slane %v731, 7
        %v734 = vshll.u32 %v481, 16
        %v736 = vor.u32 %v733, %v734
        %v737 = vsel %vm517, %v729, %v736
        %v739 = vshrl.u32 %v483, 16
        %v741 = vrot.slane %v739, 7
        %v742 = vrot.slane %v741, 4
        %v744 = vshrl.u32 %v484, 16
        %v746 = vrot.slane %v744, 7
        %v747 = vshll.u32 %v484, 16
        %v749 = vor.u32 %v746, %v747
        %v750 = vsel %vm517, %v742, %v749
        %v751 = vrot.slane %v746, 4
        %v753 = vshrl.u32 %v485, 16
        %v755 = vrot.slane %v753, 7
        %v756 = vshll.u32 %v485, 16
        %v758 = vor.u32 %v755, %v756
        %v759 = vsel %vm517, %v751, %v758
        %v761 = vshrl.u32 %v487, 16
        %v763 = vrot.slane %v761, 7
        %v764 = vrot.slane %v763, 4
        %v766 = vshrl.u32 %v488, 16
        %v768 = vrot.slane %v766, 7
        %v769 = vshll.u32 %v488, 16
        %v771 = vor.u32 %v768, %v769
        %v772 = vsel %vm517, %v764, %v771
        %v773 = vrot.slane %v768, 4
        %v775 = vshrl.u32 %v489, 16
        %v777 = vrot.slane %v775, 7
        %v778 = vshll.u32 %v489, 16
        %v780 = vor.u32 %v777, %v778
        %v781 = vsel %vm517, %v773, %v780
        %v783 = vshrl.u32 %v491, 16
        %v785 = vrot.slane %v783, 7
        %v786 = vrot.slane %v785, 4
        %v788 = vshrl.u32 %v492, 16
        %v790 = vrot.slane %v788, 7
        %v791 = vshll.u32 %v492, 16
        %v793 = vor.u32 %v790, %v791
        %v794 = vsel %vm517, %v786, %v793
        %v795 = vrot.slane %v790, 4
        %v797 = vshrl.u32 %v493, 16
        %v799 = vrot.slane %v797, 7
        %v800 = vshll.u32 %v493, 16
        %v802 = vor.u32 %v799, %v800
        %v803 = vsel %vm517, %v795, %v802
        %v805 = vshrl.u32 %v495, 16
        %v807 = vrot.slane %v805, 7
        %v808 = vrot.slane %v807, 4
        %v810 = vshrl.u32 %v496, 16
        %v812 = vrot.slane %v810, 7
        %v813 = vshll.u32 %v496, 16
        %v815 = vor.u32 %v812, %v813
        %v816 = vsel %vm517, %v808, %v815
        %v817 = vrot.slane %v812, 4
        %v819 = vshrl.u32 %v497, 16
        %v821 = vrot.slane %v819, 7
        %v822 = vshll.u32 %v497, 16
        %v824 = vor.u32 %v821, %v822
        %v825 = vsel %vm517, %v817, %v824
        %v827 = vshrl.u32 %v499, 16
        %v829 = vrot.slane %v827, 7
        %v830 = vrot.slane %v829, 4
        %v832 = vshrl.u32 %v500, 16
        %v834 = vrot.slane %v832, 7
        %v835 = vshll.u32 %v500, 16
        %v837 = vor.u32 %v834, %v835
        %v838 = vsel %vm517, %v830, %v837
        %v839 = vrot.slane %v834, 4
        %v841 = vshrl.u32 %v501, 16
        %v843 = vrot.slane %v841, 7
        %v844 = vshll.u32 %v501, 16
        %v846 = vor.u32 %v843, %v844
        %v847 = vsel %vm517, %v839, %v846
        %v849 = vshrl.u32 %v503, 16
        %v851 = vrot.slane %v849, 7
        %v852 = vrot.slane %v851, 4
        %v854 = vshrl.u32 %v504, 16
        %v856 = vrot.slane %v854, 7
        %v857 = vshll.u32 %v504, 16
        %v859 = vor.u32 %v856, %v857
        %v860 = vsel %vm517, %v852, %v859
        %v861 = vrot.slane %v856, 4
        %v863 = vshrl.u32 %v505, 16
        %v865 = vrot.slane %v863, 7
        %v866 = vshll.u32 %v505, 16
        %v868 = vor.u32 %v865, %v866
        %v869 = vsel %vm517, %v861, %v868
        %vm870 = vsmask.f32 3328
        %vm871 = vsmask.f32 7440
        %vm872 = vmor %vm870, %vm871
        %v873 = vrot.slane %v524, 4
        %v874 = vrot.slane %v527, 5
        %v875 = vor.u32 %v873, %v874
        %v876 = vrot.slane %v875, 4
        %v877 = vrot.slane %v536, 5
        %v878 = vsel %vm872, %v876, %v877
        %v879 = vrot.slane %v533, 4
        %v880 = vor.u32 %v879, %v877
        %v881 = vrot.slane %v880, 4
        %v883 = vshll.u32 %v446, 16
        %v885 = vrot.slane %v883, 5
        %v886 = vsel %vm872, %v881, %v885
        %v887 = vrot.slane %v546, 4
        %v888 = vrot.slane %v549, 5
        %v889 = vor.u32 %v887, %v888
        %v890 = vrot.slane %v889, 4
        %v891 = vrot.slane %v558, 5
        %v892 = vsel %vm872, %v890, %v891
        %v893 = vrot.slane %v555, 4
        %v894 = vor.u32 %v893, %v891
        %v895 = vrot.slane %v894, 4
        %v897 = vshll.u32 %v450, 16
        %v899 = vrot.slane %v897, 5
        %v900 = vsel %vm872, %v895, %v899
        %v901 = vrot.slane %v568, 4
        %v902 = vrot.slane %v571, 5
        %v903 = vor.u32 %v901, %v902
        %v904 = vrot.slane %v903, 4
        %v905 = vrot.slane %v580, 5
        %v906 = vsel %vm872, %v904, %v905
        %v907 = vrot.slane %v577, 4
        %v908 = vor.u32 %v907, %v905
        %v909 = vrot.slane %v908, 4
        %v911 = vshll.u32 %v454, 16
        %v913 = vrot.slane %v911, 5
        %v914 = vsel %vm872, %v909, %v913
        %v915 = vrot.slane %v590, 4
        %v916 = vrot.slane %v593, 5
        %v917 = vor.u32 %v915, %v916
        %v918 = vrot.slane %v917, 4
        %v919 = vrot.slane %v602, 5
        %v920 = vsel %vm872, %v918, %v919
        %v921 = vrot.slane %v599, 4
        %v922 = vor.u32 %v921, %v919
        %v923 = vrot.slane %v922, 4
        %v925 = vshll.u32 %v458, 16
        %v927 = vrot.slane %v925, 5
        %v928 = vsel %vm872, %v923, %v927
        %v929 = vrot.slane %v612, 4
        %v930 = vrot.slane %v615, 5
        %v931 = vor.u32 %v929, %v930
        %v932 = vrot.slane %v931, 4
        %v933 = vrot.slane %v624, 5
        %v934 = vsel %vm872, %v932, %v933
        %v935 = vrot.slane %v621, 4
        %v936 = vor.u32 %v935, %v933
        %v937 = vrot.slane %v936, 4
        %v939 = vshll.u32 %v462, 16
        %v941 = vrot.slane %v939, 5
        %v942 = vsel %vm872, %v937, %v941
        %v943 = vrot.slane %v634, 4
        %v944 = vrot.slane %v637, 5
        %v945 = vor.u32 %v943, %v944
        %v946 = vrot.slane %v945, 4
        %v947 = vrot.slane %v646, 5
        %v948 = vsel %vm872, %v946, %v947
        %v949 = vrot.slane %v643, 4
        %v950 = vor.u32 %v949, %v947
        %v951 = vrot.slane %v950, 4
        %v953 = vshll.u32 %v466, 16
        %v955 = vrot.slane %v953, 5
        %v956 = vsel %vm872, %v951, %v955
        %v957 = vrot.slane %v656, 4
        %v958 = vrot.slane %v659, 5
        %v959 = vor.u32 %v957, %v958
        %v960 = vrot.slane %v959, 4
        %v961 = vrot.slane %v668, 5
        %v962 = vsel %vm872, %v960, %v961
        %v963 = vrot.slane %v665, 4
        %v964 = vor.u32 %v963, %v961
        %v965 = vrot.slane %v964, 4
        %v967 = vshll.u32 %v470, 16
        %v969 = vrot.slane %v967, 5
        %v970 = vsel %vm872, %v965, %v969
        %v971 = vrot.slane %v678, 4
        %v972 = vrot.slane %v681, 5
        %v973 = vor.u32 %v971, %v972
        %v974 = vrot.slane %v973, 4
        %v975 = vrot.slane %v690, 5
        %v976 = vsel %vm872, %v974, %v975
        %v977 = vrot.slane %v687, 4
        %v978 = vor.u32 %v977, %v975
        %v979 = vrot.slane %v978, 4
        %v981 = vshll.u32 %v474, 16
        %v983 = vrot.slane %v981, 5
        %v984 = vsel %vm872, %v979, %v983
        %v985 = vrot.slane %v700, 4
        %v986 = vrot.slane %v703, 5
        %v987 = vor.u32 %v985, %v986
        %v988 = vrot.slane %v987, 4
        %v989 = vrot.slane %v712, 5
        %v990 = vsel %vm872, %v988, %v989
        %v991 = vrot.slane %v709, 4
        %v992 = vor.u32 %v991, %v989
        %v993 = vrot.slane %v992, 4
        %v995 = vshll.u32 %v478, 16
        %v997 = vrot.slane %v995, 5
        %v998 = vsel %vm872, %v993, %v997
        %v999 = vrot.slane %v722, 4
        %v1000 = vrot.slane %v725, 5
        %v1001 = vor.u32 %v999, %v1000
        %v1002 = vrot.slane %v1001, 4
        %v1003 = vrot.slane %v734, 5
        %v1004 = vsel %vm872, %v1002, %v1003
        %v1005 = vrot.slane %v731, 4
        %v1006 = vor.u32 %v1005, %v1003
        %v1007 = vrot.slane %v1006, 4
        %v1009 = vshll.u32 %v482, 16
        %v1011 = vrot.slane %v1009, 5
        %v1012 = vsel %vm872, %v1007, %v1011
        %v1013 = vrot.slane %v744, 4
        %v1014 = vrot.slane %v747, 5
        %v1015 = vor.u32 %v1013, %v1014
        %v1016 = vrot.slane %v1015, 4
        %v1017 = vrot.slane %v756, 5
        %v1018 = vsel %vm872, %v1016, %v1017
        %v1019 = vrot.slane %v753, 4
        %v1020 = vor.u32 %v1019, %v1017
        %v1021 = vrot.slane %v1020, 4
        %v1023 = vshll.u32 %v486, 16
        %v1025 = vrot.slane %v1023, 5
        %v1026 = vsel %vm872, %v1021, %v1025
        %v1027 = vrot.slane %v766, 4
        %v1028 = vrot.slane %v769, 5
        %v1029 = vor.u32 %v1027, %v1028
        %v1030 = vrot.slane %v1029, 4
        %v1031 = vrot.slane %v778, 5
        %v1032 = vsel %vm872, %v1030, %v1031
        %v1033 = vrot.slane %v775, 4
        %v1034 = vor.u32 %v1033, %v1031
        %v1035 = vrot.slane %v1034, 4
        %v1037 = vshll.u32 %v490, 16
        %v1039 = vrot.slane %v1037, 5
        %v1040 = vsel %vm872, %v1035, %v1039
        %v1041 = vrot.slane %v788, 4
        %v1042 = vrot.slane %v791, 5
        %v1043 = vor.u32 %v1041, %v1042
        %v1044 = vrot.slane %v1043, 4
        %v1045 = vrot.slane %v800, 5
        %v1046 = vsel %vm872, %v1044, %v1045
        %v1047 = vrot.slane %v797, 4
        %v1048 = vor.u32 %v1047, %v1045
        %v1049 = vrot.slane %v1048, 4
        %v1051 = vshll.u32 %v494, 16
        %v1053 = vrot.slane %v1051, 5
        %v1054 = vsel %vm872, %v1049, %v1053
        %v1055 = vrot.slane %v810, 4
        %v1056 = vrot.slane %v813, 5
        %v1057 = vor.u32 %v1055, %v1056
        %v1058 = vrot.slane %v1057, 4
        %v1059 = vrot.slane %v822, 5
        %v1060 = vsel %vm872, %v1058, %v1059
        %v1061 = vrot.slane %v819, 4
        %v1062 = vor.u32 %v1061, %v1059
        %v1063 = vrot.slane %v1062, 4
        %v1065 = vshll.u32 %v498, 16
        %v1067 = vrot.slane %v1065, 5
        %v1068 = vsel %vm872, %v1063, %v1067
        %v1069 = vrot.slane %v832, 4
        %v1070 = vrot.slane %v835, 5
        %v1071 = vor.u32 %v1069, %v1070
        %v1072 = vrot.slane %v1071, 4
        %v1073 = vrot.slane %v844, 5
        %v1074 = vsel %vm872, %v1072, %v1073
        %v1075 = vrot.slane %v841, 4
        %v1076 = vor.u32 %v1075, %v1073
        %v1077 = vrot.slane %v1076, 4
        %v1079 = vshll.u32 %v502, 16
        %v1081 = vrot.slane %v1079, 5
        %v1082 = vsel %vm872, %v1077, %v1081
        %v1083 = vrot.slane %v854, 4
        %v1084 = vrot.slane %v857, 5
        %v1085 = vor.u32 %v1083, %v1084
        %v1086 = vrot.slane %v1085, 4
        %v1087 = vrot.slane %v866, 5
        %v1088 = vsel %vm872, %v1086, %v1087
        %v1089 = vrot.slane %v863, 4
        %v1090 = vor.u32 %v1089, %v1087
        %v1091 = vrot.slane %v1090, 4
        %v1093 = vshll.u32 %v506, 16
        %v1095 = vrot.slane %v1093, 5
        %v1096 = vsel %vm872, %v1091, %v1095
        %v1098 = vshrl.u32 %v507, 16
        %v1100 = vrot.slane %v1098, 7
        %v1101 = vrot.slane %v1100, 4
        %v1103 = vshrl.u32 %v508, 16
        %v1105 = vrot.slane %v1103, 7
        %v1106 = vshll.u32 %v508, 16
        %v1108 = vor.u32 %v1105, %v1106
        %v1109 = vsel %vm517, %v1101, %v1108
        %v1110 = vrot.slane %v1105, 4
        %v1112 = vshrl.u32 %v509, 16
        %v1114 = vrot.slane %v1112, 7
        %v1115 = vshll.u32 %v509, 16
        %v1117 = vor.u32 %v1114, %v1115
        %v1118 = vsel %vm517, %v1110, %v1117
        %v1119 = vrot.slane %v1103, 4
        %v1120 = vrot.slane %v1106, 5
        %v1121 = vor.u32 %v1119, %v1120
        %v1122 = vrot.slane %v1121, 4
        %v1123 = vrot.slane %v1115, 5
        %v1124 = vsel %vm872, %v1122, %v1123
        %v1125 = vrot.slane %v1112, 4
        %v1126 = vor.u32 %v1125, %v1123
        %v1127 = vrot.slane %v1126, 4
        %v1129 = vshll.u32 %v510, 16
        %v1131 = vrot.slane %v1129, 5
        %v1132 = vsel %vm872, %v1127, %v1131
        %v1134 = vshrl.u32 %v511, 16
        %v1136 = vrot.slane %v1134, 7
        %v1137 = vrot.slane %v1136, 4
        %v1139 = vshrl.u32 %v512, 16
        %v1141 = vrot.slane %v1139, 7
        %v1142 = vshll.u32 %v512, 16
        %v1144 = vor.u32 %v1141, %v1142
        %v1145 = vsel %vm517, %v1137, %v1144
        %v1146 = vrot.slane %v1141, 4
        %v1148 = vshrl.u32 %v513, 16
        %v1150 = vrot.slane %v1148, 7
        %v1151 = vshll.u32 %v513, 16
        %v1153 = vor.u32 %v1150, %v1151
        %v1154 = vsel %vm517, %v1146, %v1153
        %v1155 = vrot.slane %v1139, 4
        %v1156 = vrot.slane %v1142, 5
        %v1157 = vor.u32 %v1155, %v1156
        %v1158 = vrot.slane %v1157, 4
        %v1159 = vrot.slane %v1151, 5
        %v1160 = vsel %vm872, %v1158, %v1159
        %v1161 = vrot.slane %v1148, 4
        %v1162 = vor.u32 %v1161, %v1159
        %v1163 = vrot.slane %v1162, 4
        %v1165 = vshll.u32 %v514, 16
        %v1167 = vrot.slane %v1165, 5
        %v1168 = vsel %vm872, %v1163, %v1167
        %v1169 = vunpack.c.l.b16 %v530
        %v1170 = vunpack.c.l.b16 %v539
        %v1171 = vunpack.c.l.b16 %v552
        %v1172 = vunpack.c.l.b16 %v561
        %v1173 = vunpack.c.l.b16 %v574
        %v1174 = vunpack.c.l.b16 %v583
        %v1175 = vunpack.c.l.b16 %v596
        %v1176 = vunpack.c.l.b16 %v605
        %v1177 = vunpack.c.l.b16 %v618
        %v1178 = vunpack.c.l.b16 %v627
        %v1179 = vunpack.c.l.b16 %v640
        %v1180 = vunpack.c.l.b16 %v649
        %v1181 = vunpack.c.l.b16 %v662
        %v1182 = vunpack.c.l.b16 %v671
        %v1183 = vunpack.c.l.b16 %v684
        %v1184 = vunpack.c.l.b16 %v693
        %v1185 = vunpack.c.l.b16 %v706
        %v1186 = vunpack.c.l.b16 %v715
        %v1187 = vunpack.c.l.b16 %v728
        %v1188 = vunpack.c.l.b16 %v737
        %v1189 = vunpack.c.l.b16 %v750
        %v1190 = vunpack.c.l.b16 %v759
        %v1191 = vunpack.c.l.b16 %v772
        %v1192 = vunpack.c.l.b16 %v781
        %v1193 = vunpack.c.l.b16 %v794
        %v1194 = vunpack.c.l.b16 %v803
        %v1195 = vunpack.c.l.b16 %v816
        %v1196 = vunpack.c.l.b16 %v825
        %v1197 = vunpack.c.l.b16 %v838
        %v1198 = vunpack.c.l.b16 %v847
        %v1199 = vunpack.c.l.b16 %v860
        %v1200 = vunpack.c.l.b16 %v869
        %v1201 = vpack.c.b16 %v1170, %v1169
        %v1202 = vpack.c.b16 %v1172, %v1171
        %v1203 = vpack.c.b16 %v1174, %v1173
        %v1204 = vpack.c.b16 %v1176, %v1175
        %v1205 = vpack.c.b16 %v1178, %v1177
        %v1206 = vpack.c.b16 %v1180, %v1179
        %v1207 = vpack.c.b16 %v1182, %v1181
        %v1208 = vpack.c.b16 %v1184, %v1183
        %v1209 = vpack.c.b16 %v1186, %v1185
        %v1210 = vpack.c.b16 %v1188, %v1187
        %v1211 = vpack.c.b16 %v1190, %v1189
        %v1212 = vpack.c.b16 %v1192, %v1191
        %v1213 = vpack.c.b16 %v1194, %v1193
        %v1214 = vpack.c.b16 %v1196, %v1195
        %v1215 = vpack.c.b16 %v1198, %v1197
        %v1216 = vpack.c.b16 %v1200, %v1199
        %v1249 = vunpack.c.l.b16 %v444
        %v1250 = vunpack.c.l.b16 %v445
        %v1251 = vunpack.c.l.b16 %v448
        %v1252 = vunpack.c.l.b16 %v449
        %v1253 = vunpack.c.l.b16 %v452
        %v1254 = vunpack.c.l.b16 %v453
        %v1255 = vunpack.c.l.b16 %v456
        %v1256 = vunpack.c.l.b16 %v457
        %v1257 = vunpack.c.l.b16 %v460
        %v1258 = vunpack.c.l.b16 %v461
        %v1259 = vunpack.c.l.b16 %v464
        %v1260 = vunpack.c.l.b16 %v465
        %v1261 = vunpack.c.l.b16 %v468
        %v1262 = vunpack.c.l.b16 %v469
        %v1263 = vunpack.c.l.b16 %v472
        %v1264 = vunpack.c.l.b16 %v473
        %v1265 = vunpack.c.l.b16 %v476
        %v1266 = vunpack.c.l.b16 %v477
        %v1267 = vunpack.c.l.b16 %v480
        %v1268 = vunpack.c.l.b16 %v481
        %v1269 = vunpack.c.l.b16 %v484
        %v1270 = vunpack.c.l.b16 %v485
        %v1271 = vunpack.c.l.b16 %v488
        %v1272 = vunpack.c.l.b16 %v489
        %v1273 = vunpack.c.l.b16 %v492
        %v1274 = vunpack.c.l.b16 %v493
        %v1275 = vunpack.c.l.b16 %v496
        %v1276 = vunpack.c.l.b16 %v497
        %v1277 = vunpack.c.l.b16 %v500
        %v1278 = vunpack.c.l.b16 %v501
        %v1279 = vunpack.c.l.b16 %v504
        %v1280 = vunpack.c.l.b16 %v505
        %v1281 = vpack.c.b16 %v1250, %v1249
        %v1282 = vpack.c.b16 %v1252, %v1251
        %v1283 = vpack.c.b16 %v1254, %v1253
        %v1284 = vpack.c.b16 %v1256, %v1255
        %v1285 = vpack.c.b16 %v1258, %v1257
        %v1286 = vpack.c.b16 %v1260, %v1259
        %v1287 = vpack.c.b16 %v1262, %v1261
        %v1288 = vpack.c.b16 %v1264, %v1263
        %v1289 = vpack.c.b16 %v1266, %v1265
        %v1290 = vpack.c.b16 %v1268, %v1267
        %v1291 = vpack.c.b16 %v1270, %v1269
        %v1292 = vpack.c.b16 %v1272, %v1271
        %v1293 = vpack.c.b16 %v1274, %v1273
        %v1294 = vpack.c.b16 %v1276, %v1275
        %v1295 = vpack.c.b16 %v1278, %v1277
        %v1296 = vpack.c.b16 %v1280, %v1279
        %1297 = vrot.lane.b32.xlu0 %v1281, 3
        %v1298 = vpop.permute.xlu0 %1297
        %1299 = vrot.lane.b32.xlu0 %v1282, 3
        %v1300 = vpop.permute.xlu0 %1299
        %1301 = vrot.lane.b32.xlu0 %v1283, 3
        %v1302 = vpop.permute.xlu0 %1301
        %1303 = vrot.lane.b32.xlu0 %v1284, 3
        %v1304 = vpop.permute.xlu0 %1303
        %1305 = vrot.lane.b32.xlu0 %v1285, 3
        %v1306 = vpop.permute.xlu0 %1305
        %1307 = vrot.lane.b32.xlu0 %v1286, 3
        %v1308 = vpop.permute.xlu0 %1307
        %1309 = vrot.lane.b32.xlu0 %v1287, 3
        %v1310 = vpop.permute.xlu0 %1309
        %1311 = vrot.lane.b32.xlu0 %v1288, 3
        %v1312 = vpop.permute.xlu0 %1311
        %1313 = vrot.lane.b32.xlu0 %v1289, 3
        %v1314 = vpop.permute.xlu0 %1313
        %1315 = vrot.lane.b32.xlu0 %v1290, 3
        %v1316 = vpop.permute.xlu0 %1315
        %1317 = vrot.lane.b32.xlu0 %v1291, 3
        %v1318 = vpop.permute.xlu0 %1317
        %1319 = vrot.lane.b32.xlu0 %v1292, 3
        %v1320 = vpop.permute.xlu0 %1319
        %1321 = vrot.lane.b32.xlu0 %v1293, 3
        %v1322 = vpop.permute.xlu0 %1321
        %1323 = vrot.lane.b32.xlu0 %v1294, 3
        %v1324 = vpop.permute.xlu0 %1323
        %1325 = vrot.lane.b32.xlu0 %v1295, 3
        %v1326 = vpop.permute.xlu0 %1325
        %1327 = vrot.lane.b32.xlu0 %v1296, 3
        %v1328 = vpop.permute.xlu0 %1327
        %v1329 = vunpack.c.l.b16 %v878
        %v1330 = vunpack.c.l.b16 %v886
        %v1331 = vunpack.c.l.b16 %v892
        %v1332 = vunpack.c.l.b16 %v900
        %v1333 = vunpack.c.l.b16 %v906
        %v1334 = vunpack.c.l.b16 %v914
        %v1335 = vunpack.c.l.b16 %v920
        %v1336 = vunpack.c.l.b16 %v928
        %v1337 = vunpack.c.l.b16 %v934
        %v1338 = vunpack.c.l.b16 %v942
        %v1339 = vunpack.c.l.b16 %v948
        %v1340 = vunpack.c.l.b16 %v956
        %v1341 = vunpack.c.l.b16 %v962
        %v1342 = vunpack.c.l.b16 %v970
        %v1343 = vunpack.c.l.b16 %v976
        %v1344 = vunpack.c.l.b16 %v984
        %v1345 = vunpack.c.l.b16 %v990
        %v1346 = vunpack.c.l.b16 %v998
        %v1347 = vunpack.c.l.b16 %v1004
        %v1348 = vunpack.c.l.b16 %v1012
        %v1349 = vunpack.c.l.b16 %v1018
        %v1350 = vunpack.c.l.b16 %v1026
        %v1351 = vunpack.c.l.b16 %v1032
        %v1352 = vunpack.c.l.b16 %v1040
        %v1353 = vunpack.c.l.b16 %v1046
        %v1354 = vunpack.c.l.b16 %v1054
        %v1355 = vunpack.c.l.b16 %v1060
        %v1356 = vunpack.c.l.b16 %v1068
        %v1357 = vunpack.c.l.b16 %v1074
        %v1358 = vunpack.c.l.b16 %v1082
        %v1359 = vunpack.c.l.b16 %v1088
        %v1360 = vunpack.c.l.b16 %v1096
        %v1361 = vpack.c.b16 %v1330, %v1329
        %v1362 = vpack.c.b16 %v1332, %v1331
        %v1363 = vpack.c.b16 %v1334, %v1333
        %v1364 = vpack.c.b16 %v1336, %v1335
        %v1365 = vpack.c.b16 %v1338, %v1337
        %v1366 = vpack.c.b16 %v1340, %v1339
        %v1367 = vpack.c.b16 %v1342, %v1341
        %v1368 = vpack.c.b16 %v1344, %v1343
        %v1369 = vpack.c.b16 %v1346, %v1345
        %v1370 = vpack.c.b16 %v1348, %v1347
        %v1371 = vpack.c.b16 %v1350, %v1349
        %v1372 = vpack.c.b16 %v1352, %v1351
        %v1373 = vpack.c.b16 %v1354, %v1353
        %v1374 = vpack.c.b16 %v1356, %v1355
        %v1375 = vpack.c.b16 %v1358, %v1357
        %v1376 = vpack.c.b16 %v1360, %v1359
        %1377 = vrot.lane.b32.xlu0 %v1361, 6
        %v1378 = vpop.permute.xlu0 %1377
        %1379 = vrot.lane.b32.xlu0 %v1362, 6
        %v1380 = vpop.permute.xlu0 %1379
        %1381 = vrot.lane.b32.xlu0 %v1363, 6
        %v1382 = vpop.permute.xlu0 %1381
        %1383 = vrot.lane.b32.xlu0 %v1364, 6
        %v1384 = vpop.permute.xlu0 %1383
        %1385 = vrot.lane.b32.xlu0 %v1365, 6
        %v1386 = vpop.permute.xlu0 %1385
        %1387 = vrot.lane.b32.xlu0 %v1366, 6
        %v1388 = vpop.permute.xlu0 %1387
        %1389 = vrot.lane.b32.xlu0 %v1367, 6
        %v1390 = vpop.permute.xlu0 %1389
        %1391 = vrot.lane.b32.xlu0 %v1368, 6
        %v1392 = vpop.permute.xlu0 %1391
        %1393 = vrot.lane.b32.xlu0 %v1369, 6
        %v1394 = vpop.permute.xlu0 %1393
        %1395 = vrot.lane.b32.xlu0 %v1370, 6
        %v1396 = vpop.permute.xlu0 %1395
        %1397 = vrot.lane.b32.xlu0 %v1371, 6
        %v1398 = vpop.permute.xlu0 %1397
        %1399 = vrot.lane.b32.xlu0 %v1372, 6
        %v1400 = vpop.permute.xlu0 %1399
        %1401 = vrot.lane.b32.xlu0 %v1373, 6
        %v1402 = vpop.permute.xlu0 %1401
        %1403 = vrot.lane.b32.xlu0 %v1374, 6
        %v1404 = vpop.permute.xlu0 %1403
        %1405 = vrot.lane.b32.xlu0 %v1375, 6
        %v1406 = vpop.permute.xlu0 %1405
        %1407 = vrot.lane.b32.xlu0 %v1376, 6
        %v1408 = vpop.permute.xlu0 %1407
        %v1409 = vunpack.c.l.b16 %v1109
        %v1410 = vunpack.c.l.b16 %v1118
        %v1411 = vpack.c.b16 %v1410, %v1409
        %1412 = vrot.lane.b32.xlu0 %v1202, 9
        %v1413 = vpop.permute.xlu0 %1412
        %1414 = vrot.lane.b32.xlu0 %v1203, 9
        %v1415 = vpop.permute.xlu0 %1414
        %1416 = vrot.lane.b32.xlu0 %v1204, 9
        %v1417 = vpop.permute.xlu0 %1416
        %1418 = vrot.lane.b32.xlu0 %v1205, 9
        %v1419 = vpop.permute.xlu0 %1418
        %1420 = vrot.lane.b32.xlu0 %v1206, 9
        %v1421 = vpop.permute.xlu0 %1420
        %1422 = vrot.lane.b32.xlu0 %v1207, 9
        %v1423 = vpop.permute.xlu0 %1422
        %1424 = vrot.lane.b32.xlu0 %v1208, 9
        %v1425 = vpop.permute.xlu0 %1424
        %1426 = vrot.lane.b32.xlu0 %v1209, 9
        %v1427 = vpop.permute.xlu0 %1426
        %1428 = vrot.lane.b32.xlu0 %v1210, 9
        %v1429 = vpop.permute.xlu0 %1428
        %1430 = vrot.lane.b32.xlu0 %v1211, 9
        %v1431 = vpop.permute.xlu0 %1430
        %1432 = vrot.lane.b32.xlu0 %v1212, 9
        %v1433 = vpop.permute.xlu0 %1432
        %1434 = vrot.lane.b32.xlu0 %v1213, 9
        %v1435 = vpop.permute.xlu0 %1434
        %1436 = vrot.lane.b32.xlu0 %v1214, 9
        %v1437 = vpop.permute.xlu0 %1436
        %1438 = vrot.lane.b32.xlu0 %v1215, 9
        %v1439 = vpop.permute.xlu0 %1438
        %1440 = vrot.lane.b32.xlu0 %v1216, 9
        %v1441 = vpop.permute.xlu0 %1440
        %1442 = vrot.lane.b32.xlu0 %v1411, 9
        %v1443 = vpop.permute.xlu0 %1442
        %v1446 = vunpack.c.l.b16 %v508
        %v1447 = vunpack.c.l.b16 %v509
        %v1448 = vpack.c.b16 %v1447, %v1446
        %1449 = vrot.lane.b32.xlu0 %v1282, 12
        %v1450 = vpop.permute.xlu0 %1449
        %1451 = vrot.lane.b32.xlu0 %v1283, 12
        %v1452 = vpop.permute.xlu0 %1451
        %1453 = vrot.lane.b32.xlu0 %v1284, 12
        %v1454 = vpop.permute.xlu0 %1453
        %1455 = vrot.lane.b32.xlu0 %v1285, 12
        %v1456 = vpop.permute.xlu0 %1455
        %1457 = vrot.lane.b32.xlu0 %v1286, 12
        %v1458 = vpop.permute.xlu0 %1457
        %1459 = vrot.lane.b32.xlu0 %v1287, 12
        %v1460 = vpop.permute.xlu0 %1459
        %1461 = vrot.lane.b32.xlu0 %v1288, 12
        %v1462 = vpop.permute.xlu0 %1461
        %1463 = vrot.lane.b32.xlu0 %v1289, 12
        %v1464 = vpop.permute.xlu0 %1463
        %1465 = vrot.lane.b32.xlu0 %v1290, 12
        %v1466 = vpop.permute.xlu0 %1465
        %1467 = vrot.lane.b32.xlu0 %v1291, 12
        %v1468 = vpop.permute.xlu0 %1467
        %1469 = vrot.lane.b32.xlu0 %v1292, 12
        %v1470 = vpop.permute.xlu0 %1469
        %1471 = vrot.lane.b32.xlu0 %v1293, 12
        %v1472 = vpop.permute.xlu0 %1471
        %1473 = vrot.lane.b32.xlu0 %v1294, 12
        %v1474 = vpop.permute.xlu0 %1473
        %1475 = vrot.lane.b32.xlu0 %v1295, 12
        %v1476 = vpop.permute.xlu0 %1475
        %1477 = vrot.lane.b32.xlu0 %v1296, 12
        %v1478 = vpop.permute.xlu0 %1477
        %1479 = vrot.lane.b32.xlu0 %v1448, 12
        %v1480 = vpop.permute.xlu0 %1479
        %v1481 = vunpack.c.l.b16 %v1124
        %v1482 = vunpack.c.l.b16 %v1132
        %v1483 = vpack.c.b16 %v1482, %v1481
        %1484 = vrot.lane.b32.xlu0 %v1362, 15
        %v1485 = vpop.permute.xlu0 %1484
        %1486 = vrot.lane.b32.xlu0 %v1363, 15
        %v1487 = vpop.permute.xlu0 %1486
        %1488 = vrot.lane.b32.xlu0 %v1364, 15
        %v1489 = vpop.permute.xlu0 %1488
        %1490 = vrot.lane.b32.xlu0 %v1365, 15
        %v1491 = vpop.permute.xlu0 %1490
        %1492 = vrot.lane.b32.xlu0 %v1366, 15
        %v1493 = vpop.permute.xlu0 %1492
        %1494 = vrot.lane.b32.xlu0 %v1367, 15
        %v1495 = vpop.permute.xlu0 %1494
        %1496 = vrot.lane.b32.xlu0 %v1368, 15
        %v1497 = vpop.permute.xlu0 %1496
        %1498 = vrot.lane.b32.xlu0 %v1369, 15
        %v1499 = vpop.permute.xlu0 %1498
        %1500 = vrot.lane.b32.xlu0 %v1370, 15
        %v1501 = vpop.permute.xlu0 %1500
        %1502 = vrot.lane.b32.xlu0 %v1371, 15
        %v1503 = vpop.permute.xlu0 %1502
        %1504 = vrot.lane.b32.xlu0 %v1372, 15
        %v1505 = vpop.permute.xlu0 %1504
        %1506 = vrot.lane.b32.xlu0 %v1373, 15
        %v1507 = vpop.permute.xlu0 %1506
        %1508 = vrot.lane.b32.xlu0 %v1374, 15
        %v1509 = vpop.permute.xlu0 %1508
        %1510 = vrot.lane.b32.xlu0 %v1375, 15
        %v1511 = vpop.permute.xlu0 %1510
        %1512 = vrot.lane.b32.xlu0 %v1376, 15
        %v1513 = vpop.permute.xlu0 %1512
        %1514 = vrot.lane.b32.xlu0 %v1483, 15
        %v1515 = vpop.permute.xlu0 %1514
        %v1516 = vunpack.c.l.b16 %v1145
        %v1517 = vunpack.c.l.b16 %v1154
        %v1518 = vpack.c.b16 %v1517, %v1516
        %1519 = vrot.lane.b32.xlu0 %v1203, 18
        %v1520 = vpop.permute.xlu0 %1519
        %1521 = vrot.lane.b32.xlu0 %v1204, 18
        %v1522 = vpop.permute.xlu0 %1521
        %1523 = vrot.lane.b32.xlu0 %v1205, 18
        %v1524 = vpop.permute.xlu0 %1523
        %1525 = vrot.lane.b32.xlu0 %v1206, 18
        %v1526 = vpop.permute.xlu0 %1525
        %1527 = vrot.lane.b32.xlu0 %v1207, 18
        %v1528 = vpop.permute.xlu0 %1527
        %1529 = vrot.lane.b32.xlu0 %v1208, 18
        %v1530 = vpop.permute.xlu0 %1529
        %1531 = vrot.lane.b32.xlu0 %v1209, 18
        %v1532 = vpop.permute.xlu0 %1531
        %1533 = vrot.lane.b32.xlu0 %v1210, 18
        %v1534 = vpop.permute.xlu0 %1533
        %1535 = vrot.lane.b32.xlu0 %v1211, 18
        %v1536 = vpop.permute.xlu0 %1535
        %1537 = vrot.lane.b32.xlu0 %v1212, 18
        %v1538 = vpop.permute.xlu0 %1537
        %1539 = vrot.lane.b32.xlu0 %v1213, 18
        %v1540 = vpop.permute.xlu0 %1539
        %1541 = vrot.lane.b32.xlu0 %v1214, 18
        %v1542 = vpop.permute.xlu0 %1541
        %1543 = vrot.lane.b32.xlu0 %v1215, 18
        %v1544 = vpop.permute.xlu0 %1543
        %1545 = vrot.lane.b32.xlu0 %v1216, 18
        %v1546 = vpop.permute.xlu0 %1545
        %1547 = vrot.lane.b32.xlu0 %v1411, 18
        %v1548 = vpop.permute.xlu0 %1547
        %1549 = vrot.lane.b32.xlu0 %v1518, 18
        %v1550 = vpop.permute.xlu0 %1549
        %v1553 = vunpack.c.l.b16 %v512
        %v1554 = vunpack.c.l.b16 %v513
        %v1555 = vpack.c.b16 %v1554, %v1553
        %1556 = vrot.lane.b32.xlu0 %v1283, 21
        %v1557 = vpop.permute.xlu0 %1556
        %1558 = vrot.lane.b32.xlu0 %v1284, 21
        %v1559 = vpop.permute.xlu0 %1558
        %1560 = vrot.lane.b32.xlu0 %v1285, 21
        %v1561 = vpop.permute.xlu0 %1560
        %1562 = vrot.lane.b32.xlu0 %v1286, 21
        %v1563 = vpop.permute.xlu0 %1562
        %1564 = vrot.lane.b32.xlu0 %v1287, 21
        %v1565 = vpop.permute.xlu0 %1564
        %1566 = vrot.lane.b32.xlu0 %v1288, 21
        %v1567 = vpop.permute.xlu0 %1566
        %1568 = vrot.lane.b32.xlu0 %v1289, 21
        %v1569 = vpop.permute.xlu0 %1568
        %1570 = vrot.lane.b32.xlu0 %v1290, 21
        %v1571 = vpop.permute.xlu0 %1570
        %1572 = vrot.lane.b32.xlu0 %v1291, 21
        %v1573 = vpop.permute.xlu0 %1572
        %1574 = vrot.lane.b32.xlu0 %v1292, 21
        %v1575 = vpop.permute.xlu0 %1574
        %1576 = vrot.lane.b32.xlu0 %v1293, 21
        %v1577 = vpop.permute.xlu0 %1576
        %1578 = vrot.lane.b32.xlu0 %v1294, 21
        %v1579 = vpop.permute.xlu0 %1578
        %1580 = vrot.lane.b32.xlu0 %v1295, 21
        %v1581 = vpop.permute.xlu0 %1580
        %1582 = vrot.lane.b32.xlu0 %v1296, 21
        %v1583 = vpop.permute.xlu0 %1582
        %1584 = vrot.lane.b32.xlu0 %v1448, 21
        %v1585 = vpop.permute.xlu0 %1584
        %1586 = vrot.lane.b32.xlu0 %v1555, 21
        %v1587 = vpop.permute.xlu0 %1586
        %v1588 = vunpack.c.l.b16 %v1160
        %v1589 = vunpack.c.l.b16 %v1168
        %v1590 = vpack.c.b16 %v1589, %v1588
        %1591 = vrot.lane.b32.xlu0 %v1363, 24
        %v1592 = vpop.permute.xlu0 %1591
        %1593 = vrot.lane.b32.xlu0 %v1364, 24
        %v1594 = vpop.permute.xlu0 %1593
        %1595 = vrot.lane.b32.xlu0 %v1365, 24
        %v1596 = vpop.permute.xlu0 %1595
        %1597 = vrot.lane.b32.xlu0 %v1366, 24
        %v1598 = vpop.permute.xlu0 %1597
        %1599 = vrot.lane.b32.xlu0 %v1367, 24
        %v1600 = vpop.permute.xlu0 %1599
        %1601 = vrot.lane.b32.xlu0 %v1368, 24
        %v1602 = vpop.permute.xlu0 %1601
        %1603 = vrot.lane.b32.xlu0 %v1369, 24
        %v1604 = vpop.permute.xlu0 %1603
        %1605 = vrot.lane.b32.xlu0 %v1370, 24
        %v1606 = vpop.permute.xlu0 %1605
        %1607 = vrot.lane.b32.xlu0 %v1371, 24
        %v1608 = vpop.permute.xlu0 %1607
        %1609 = vrot.lane.b32.xlu0 %v1372, 24
        %v1610 = vpop.permute.xlu0 %1609
        %1611 = vrot.lane.b32.xlu0 %v1373, 24
        %v1612 = vpop.permute.xlu0 %1611
        %1613 = vrot.lane.b32.xlu0 %v1374, 24
        %v1614 = vpop.permute.xlu0 %1613
        %1615 = vrot.lane.b32.xlu0 %v1375, 24
        %v1616 = vpop.permute.xlu0 %1615
        %1617 = vrot.lane.b32.xlu0 %v1376, 24
        %v1618 = vpop.permute.xlu0 %1617
        %1619 = vrot.lane.b32.xlu0 %v1483, 24
        %v1620 = vpop.permute.xlu0 %1619
        %1621 = vrot.lane.b32.xlu0 %v1590, 24
        %v1622 = vpop.permute.xlu0 %1621
        %vm1623 = vcmask 23552
        %v1626 = vsel %vm1623, %v1201, %v1298
        %v1629 = vsel %vm1623, %v1202, %v1300
        %v1632 = vsel %vm1623, %v1203, %v1302
        %v1635 = vsel %vm1623, %v1204, %v1304
        %v1638 = vsel %vm1623, %v1205, %v1306
        %v1641 = vsel %vm1623, %v1206, %v1308
        %v1644 = vsel %vm1623, %v1207, %v1310
        %v1647 = vsel %vm1623, %v1208, %v1312
        %v1650 = vsel %vm1623, %v1209, %v1314
        %v1653 = vsel %vm1623, %v1210, %v1316
        %v1656 = vsel %vm1623, %v1211, %v1318
        %v1659 = vsel %vm1623, %v1212, %v1320
        %v1662 = vsel %vm1623, %v1213, %v1322
        %v1665 = vsel %vm1623, %v1214, %v1324
        %v1668 = vsel %vm1623, %v1215, %v1326
        %v1671 = vsel %vm1623, %v1216, %v1328
        %vm1672 = vcmask 48128
        %v1674 = vsel %vm1672, %v1626, %v1378
        %v1676 = vsel %vm1672, %v1629, %v1380
        %v1678 = vsel %vm1672, %v1632, %v1382
        %v1680 = vsel %vm1672, %v1635, %v1384
        %v1682 = vsel %vm1672, %v1638, %v1386
        %v1684 = vsel %vm1672, %v1641, %v1388
        %v1686 = vsel %vm1672, %v1644, %v1390
        %v1688 = vsel %vm1672, %v1647, %v1392
        %v1690 = vsel %vm1672, %v1650, %v1394
        %v1692 = vsel %vm1672, %v1653, %v1396
        %v1694 = vsel %vm1672, %v1656, %v1398
        %v1696 = vsel %vm1672, %v1659, %v1400
        %v1698 = vsel %vm1672, %v1662, %v1402
        %v1700 = vsel %vm1672, %v1665, %v1404
        %v1702 = vsel %vm1672, %v1668, %v1406
        %v1704 = vsel %vm1672, %v1671, %v1408
        %vm1705 = vcmask 72704
        %v1707 = vsel %vm1705, %v1674, %v1413
        %v1709 = vsel %vm1705, %v1676, %v1415
        %v1711 = vsel %vm1705, %v1678, %v1417
        %v1713 = vsel %vm1705, %v1680, %v1419
        %v1715 = vsel %vm1705, %v1682, %v1421
        %v1717 = vsel %vm1705, %v1684, %v1423
        %v1719 = vsel %vm1705, %v1686, %v1425
        %v1721 = vsel %vm1705, %v1688, %v1427
        %v1723 = vsel %vm1705, %v1690, %v1429
        %v1725 = vsel %vm1705, %v1692, %v1431
        %v1727 = vsel %vm1705, %v1694, %v1433
        %v1729 = vsel %vm1705, %v1696, %v1435
        %v1731 = vsel %vm1705, %v1698, %v1437
        %v1733 = vsel %vm1705, %v1700, %v1439
        %v1735 = vsel %vm1705, %v1702, %v1441
        %v1737 = vsel %vm1705, %v1704, %v1443
        %vm1738 = vcmask 97280
        %v1740 = vsel %vm1738, %v1707, %v1450
        %v1742 = vsel %vm1738, %v1709, %v1452
        %v1744 = vsel %vm1738, %v1711, %v1454
        %v1746 = vsel %vm1738, %v1713, %v1456
        %v1748 = vsel %vm1738, %v1715, %v1458
        %v1750 = vsel %vm1738, %v1717, %v1460
        %v1752 = vsel %vm1738, %v1719, %v1462
        %v1754 = vsel %vm1738, %v1721, %v1464
        %v1756 = vsel %vm1738, %v1723, %v1466
        %v1758 = vsel %vm1738, %v1725, %v1468
        %v1760 = vsel %vm1738, %v1727, %v1470
        %v1762 = vsel %vm1738, %v1729, %v1472
        %v1764 = vsel %vm1738, %v1731, %v1474
        %v1766 = vsel %vm1738, %v1733, %v1476
        %v1768 = vsel %vm1738, %v1735, %v1478
        %v1770 = vsel %vm1738, %v1737, %v1480
        %vm1771 = vcmask 121856
        %v1773 = vsel %vm1771, %v1740, %v1485
        %v1775 = vsel %vm1771, %v1742, %v1487
        %v1777 = vsel %vm1771, %v1744, %v1489
        %v1779 = vsel %vm1771, %v1746, %v1491
        %v1781 = vsel %vm1771, %v1748, %v1493
        %v1783 = vsel %vm1771, %v1750, %v1495
        %v1785 = vsel %vm1771, %v1752, %v1497
        %v1787 = vsel %vm1771, %v1754, %v1499
        %v1789 = vsel %vm1771, %v1756, %v1501
        %v1791 = vsel %vm1771, %v1758, %v1503
        %v1793 = vsel %vm1771, %v1760, %v1505
        %v1795 = vsel %vm1771, %v1762, %v1507
        %v1797 = vsel %vm1771, %v1764, %v1509
        %v1799 = vsel %vm1771, %v1766, %v1511
        %v1801 = vsel %vm1771, %v1768, %v1513
        %v1803 = vsel %vm1771, %v1770, %v1515
        %vm1804 = vcmask 146432
        %v1806 = vsel %vm1804, %v1773, %v1520
        %v1808 = vsel %vm1804, %v1775, %v1522
        %v1810 = vsel %vm1804, %v1777, %v1524
        %v1812 = vsel %vm1804, %v1779, %v1526
        %v1814 = vsel %vm1804, %v1781, %v1528
        %v1816 = vsel %vm1804, %v1783, %v1530
        %v1818 = vsel %vm1804, %v1785, %v1532
        %v1820 = vsel %vm1804, %v1787, %v1534
        %v1822 = vsel %vm1804, %v1789, %v1536
        %v1824 = vsel %vm1804, %v1791, %v1538
        %v1826 = vsel %vm1804, %v1793, %v1540
        %v1828 = vsel %vm1804, %v1795, %v1542
        %v1830 = vsel %vm1804, %v1797, %v1544
        %v1832 = vsel %vm1804, %v1799, %v1546
        %v1834 = vsel %vm1804, %v1801, %v1548
        %v1836 = vsel %vm1804, %v1803, %v1550
        %vm1837 = vcmask 171008
        %v1839 = vsel %vm1837, %v1806, %v1557
        %v1841 = vsel %vm1837, %v1808, %v1559
        %v1843 = vsel %vm1837, %v1810, %v1561
        %v1845 = vsel %vm1837, %v1812, %v1563
        %v1847 = vsel %vm1837, %v1814, %v1565
        %v1849 = vsel %vm1837, %v1816, %v1567
        %v1851 = vsel %vm1837, %v1818, %v1569
        %v1853 = vsel %vm1837, %v1820, %v1571
        %v1855 = vsel %vm1837, %v1822, %v1573
        %v1857 = vsel %vm1837, %v1824, %v1575
        %v1859 = vsel %vm1837, %v1826, %v1577
        %v1861 = vsel %vm1837, %v1828, %v1579
        %v1863 = vsel %vm1837, %v1830, %v1581
        %v1865 = vsel %vm1837, %v1832, %v1583
        %v1867 = vsel %vm1837, %v1834, %v1585
        %v1869 = vsel %vm1837, %v1836, %v1587
        %vm1870 = vcmask 195584
        %v1872 = vsel %vm1870, %v1839, %v1592
        %v1874 = vsel %vm1870, %v1841, %v1594
        %v1876 = vsel %vm1870, %v1843, %v1596
        %v1878 = vsel %vm1870, %v1845, %v1598
        %v1880 = vsel %vm1870, %v1847, %v1600
        %v1882 = vsel %vm1870, %v1849, %v1602
        %v1884 = vsel %vm1870, %v1851, %v1604
        %v1886 = vsel %vm1870, %v1853, %v1606
        %v1888 = vsel %vm1870, %v1855, %v1608
        %v1890 = vsel %vm1870, %v1857, %v1610
        %v1892 = vsel %vm1870, %v1859, %v1612
        %v1894 = vsel %vm1870, %v1861, %v1614
        %v1896 = vsel %vm1870, %v1863, %v1616
        %v1898 = vsel %vm1870, %v1865, %v1618
        %v1900 = vsel %vm1870, %v1867, %v1620
        %v1902 = vsel %vm1870, %v1869, %v1622
        %v1903 = vld [vmem:[%s1] sm:$0xf]
        %v1904 = vld [vmem:[%s1 + $0x4] sm:$0xf]
        %v1905 = vld [vmem:[%s1 + $0x8] sm:$0xf]
        %v1906 = vld [vmem:[%s1 + $0xc] sm:$0x3]
        %v1911 = vunpack.c.l.b16 %v1903
        %v1912 = vunpack.c.l.b16 %v1904
        %v1913 = vunpack.c.l.b16 %v1905
        %v1914 = vunpack.c.l.b16 %v1906
        %v1915 = vpack.c.b16 %v1912, %v1911
        %v1916 = vpack.c.b16 %v1914, %v1913
        %vm1918 = vcmask 220160
        %v1919 = vsel %vm1918, %v1872, 0
        %v1921 = vsel %vm1918, %v1874, 0
        %v1923 = vsel %vm1918, %v1876, 0
        %v1925 = vsel %vm1918, %v1878, 0
        %v1927 = vsel %vm1918, %v1880, 0
        %v1929 = vsel %vm1918, %v1882, 0
        %v1931 = vsel %vm1918, %v1884, 0
        %v1933 = vsel %vm1918, %v1886, 0
        %v1935 = vsel %vm1918, %v1888, 0
        %v1937 = vsel %vm1918, %v1890, 0
        %v1939 = vsel %vm1918, %v1892, 0
        %v1941 = vsel %vm1918, %v1894, 0
        %v1943 = vsel %vm1918, %v1896, 0
        %v1945 = vsel %vm1918, %v1898, 0
        %v1947 = vsel %vm1918, %v1900, 0
        %v1949 = vsel %vm1918, %v1902, 0
        %vm1951 = vcmask 1044480
        %vm1952 = vcmask 1045504
        %v1953 = vsel %vm1951, 4294967295, 65535
        %v1954 = vsel %vm1952, %v1953, 0
        %v1956 = vand.u32 %v1916, %v1954
        %1958 = vmatprep.subr.bf16.mxu0 0
        %1959 = vmatpush1.bf16.msra.mxu0 %v1915
        %1960 = vmatprep.subr.bf16.mxu0 0
        %1961 = vmatpush1.bf16.msra.mxu0 %v1956
        %1962 = vmatprep.subr.bf16.mxu0 0
        %1963 = vmatpush1.bf16.msra.mxu0 0
        %1964 = vmatprep.subr.bf16.mxu0 0
        %1965 = vmatpush1.bf16.msra.mxu0 0
        %1966 = vmatprep.subr.bf16.mxu0 0
        %1967 = vmatpush1.bf16.msra.mxu0 0
        %1968 = vmatprep.subr.bf16.mxu0 0
        %1969 = vmatpush1.bf16.msra.mxu0 0
        %1970 = vmatprep.subr.bf16.mxu0 0
        %1971 = vmatpush1.bf16.msra.mxu0 0
        %1972 = vmatprep.subr.bf16.mxu0 0
        %1973 = vmatpush1.bf16.msra.mxu0 0
        %1974 = vmatprep.subr.bf16.mxu0 0
        %1975 = vmatpush1.bf16.msra.mxu0 0
        %1976 = vmatprep.subr.bf16.mxu0 0
        %1977 = vmatpush1.bf16.msra.mxu0 0
        %1978 = vmatprep.subr.bf16.mxu0 0
        %1979 = vmatpush1.bf16.msra.mxu0 0
        %1980 = vmatprep.subr.bf16.mxu0 0
        %1981 = vmatpush1.bf16.msra.mxu0 0
        %1982 = vmatprep.subr.bf16.mxu0 0
        %1983 = vmatpush1.bf16.msra.mxu0 0
        %1984 = vmatprep.subr.bf16.mxu0 0
        %1985 = vmatpush1.bf16.msra.mxu0 0
        %1986 = vmatprep.subr.bf16.mxu0 0
        %1987 = vmatpush1.bf16.msra.mxu0 0
        %1988 = vmatprep.subr.bf16.mxu0 0
        %1989 = vmatpush1.bf16.msra.mxu0 0
        %1990 = vmatprep.mubr.bf16.mxu0 0
        %1991 = vmatmul.mubr.bf16.gmra.mrb[0].mxu0 %v1919
        %v1992 = vpop.f32.mrb[0].mxu0
        %v1993 = vadd.f32 0.0, %v1992
        %v1994 = vpop.f32.mrb[0].mxu0
        %v1995 = vpop.f32.mrb[0].mxu0
        %v1996 = vadd.f32 0.0, %v1995
        %v1997 = vpop.f32.mrb[0].mxu0
        %1998 = vmatprep.mubr.bf16.mxu0 0
        %1999 = vmatmul.mubr.bf16.gmra.mrb[0].mxu0 %v1921
        %v2000 = vpop.f32.mrb[0].mxu0
        %v2001 = vadd.f32 0.0, %v2000
        %v2002 = vpop.f32.mrb[0].mxu0
        %v2003 = vpop.f32.mrb[0].mxu0
        %v2004 = vadd.f32 0.0, %v2003
        %v2005 = vpop.f32.mrb[0].mxu0
        %2006 = vmatprep.mubr.bf16.mxu0 0
        %2007 = vmatmul.mubr.bf16.gmra.mrb[0].mxu0 %v1923
        %v2008 = vpop.f32.mrb[0].mxu0
        %v2009 = vadd.f32 0.0, %v2008
        %v2010 = vpop.f32.mrb[0].mxu0
        %v2011 = vpop.f32.mrb[0].mxu0
        %v2012 = vadd.f32 0.0, %v2011
        %v2013 = vpop.f32.mrb[0].mxu0
        %2014 = vmatprep.mubr.bf16.mxu0 0
        %2015 = vmatmul.mubr.bf16.gmra.mrb[0].mxu0 %v1925
        %v2016 = vpop.f32.mrb[0].mxu0
        %v2017 = vadd.f32 0.0, %v2016
        %v2018 = vpop.f32.mrb[0].mxu0
        %v2019 = vpop.f32.mrb[0].mxu0
        %v2020 = vadd.f32 0.0, %v2019
        %v2021 = vpop.f32.mrb[0].mxu0
        %2022 = vmatprep.mubr.bf16.mxu0 0
        %2023 = vmatmul.mubr.bf16.gmra.mrb[0].mxu0 %v1927
        %v2024 = vpop.f32.mrb[0].mxu0
        %v2025 = vadd.f32 0.0, %v2024
        %v2026 = vpop.f32.mrb[0].mxu0
        %v2027 = vpop.f32.mrb[0].mxu0
        %v2028 = vadd.f32 0.0, %v2027
        %v2029 = vpop.f32.mrb[0].mxu0
        %2030 = vmatprep.mubr.bf16.mxu0 0
        %2031 = vmatmul.mubr.bf16.gmra.mrb[0].mxu0 %v1929
        %v2032 = vpop.f32.mrb[0].mxu0
        %v2033 = vadd.f32 0.0, %v2032
        %v2034 = vpop.f32.mrb[0].mxu0
        %v2035 = vpop.f32.mrb[0].mxu0
        %v2036 = vadd.f32 0.0, %v2035
        %v2037 = vpop.f32.mrb[0].mxu0
        %2038 = vmatprep.mubr.bf16.mxu0 0
        %2039 = vmatmul.mubr.bf16.gmra.mrb[0].mxu0 %v1931
        %v2040 = vpop.f32.mrb[0].mxu0
        %v2041 = vadd.f32 0.0, %v2040
        %v2042 = vpop.f32.mrb[0].mxu0
        %v2043 = vpop.f32.mrb[0].mxu0
        %v2044 = vadd.f32 0.0, %v2043
        %v2045 = vpop.f32.mrb[0].mxu0
        %2046 = vmatprep.mubr.bf16.mxu0 0
        %2047 = vmatmul.mubr.bf16.gmra.mrb[0].mxu0 %v1933
        %v2048 = vpop.f32.mrb[0].mxu0
        %v2049 = vadd.f32 0.0, %v2048
        %v2050 = vpop.f32.mrb[0].mxu0
        %v2051 = vpop.f32.mrb[0].mxu0
        %v2052 = vadd.f32 0.0, %v2051
        %v2053 = vpop.f32.mrb[0].mxu0
        %2054 = vmatprep.mubr.bf16.mxu0 0
        %2055 = vmatmul.mubr.bf16.gmra.mrb[0].mxu0 %v1935
        %v2056 = vpop.f32.mrb[0].mxu0
        %v2057 = vadd.f32 0.0, %v2056
        %v2058 = vpop.f32.mrb[0].mxu0
        %v2059 = vpop.f32.mrb[0].mxu0
        %v2060 = vadd.f32 0.0, %v2059
        %v2061 = vpop.f32.mrb[0].mxu0
        %2062 = vmatprep.mubr.bf16.mxu0 0
        %2063 = vmatmul.mubr.bf16.gmra.mrb[0].mxu0 %v1937
        %v2064 = vpop.f32.mrb[0].mxu0
        %v2065 = vadd.f32 0.0, %v2064
        %v2066 = vpop.f32.mrb[0].mxu0
        %v2067 = vpop.f32.mrb[0].mxu0
        %v2068 = vadd.f32 0.0, %v2067
        %v2069 = vpop.f32.mrb[0].mxu0
        %2070 = vmatprep.mubr.bf16.mxu0 0
        %2071 = vmatmul.mubr.bf16.gmra.mrb[0].mxu0 %v1939
        %v2072 = vpop.f32.mrb[0].mxu0
        %v2073 = vadd.f32 0.0, %v2072
        %v2074 = vpop.f32.mrb[0].mxu0
        %v2075 = vpop.f32.mrb[0].mxu0
        %v2076 = vadd.f32 0.0, %v2075
        %v2077 = vpop.f32.mrb[0].mxu0
        %2078 = vmatprep.mubr.bf16.mxu0 0
        %2079 = vmatmul.mubr.bf16.gmra.mrb[0].mxu0 %v1941
        %v2080 = vpop.f32.mrb[0].mxu0
        %v2081 = vadd.f32 0.0, %v2080
        %v2082 = vpop.f32.mrb[0].mxu0
        %v2083 = vpop.f32.mrb[0].mxu0
        %v2084 = vadd.f32 0.0, %v2083
        %v2085 = vpop.f32.mrb[0].mxu0
        %2086 = vmatprep.mubr.bf16.mxu0 0
        %2087 = vmatmul.mubr.bf16.gmra.mrb[0].mxu0 %v1943
        %v2088 = vpop.f32.mrb[0].mxu0
        %v2089 = vadd.f32 0.0, %v2088
        %v2090 = vpop.f32.mrb[0].mxu0
        %v2091 = vpop.f32.mrb[0].mxu0
        %v2092 = vadd.f32 0.0, %v2091
        %v2093 = vpop.f32.mrb[0].mxu0
        %2094 = vmatprep.mubr.bf16.mxu0 0
        %2095 = vmatmul.mubr.bf16.gmra.mrb[0].mxu0 %v1945
        %v2096 = vpop.f32.mrb[0].mxu0
        %v2097 = vadd.f32 0.0, %v2096
        %v2098 = vpop.f32.mrb[0].mxu0
        %v2099 = vpop.f32.mrb[0].mxu0
        %v2100 = vadd.f32 0.0, %v2099
        %v2101 = vpop.f32.mrb[0].mxu0
        %2102 = vmatprep.mubr.bf16.mxu0 0
        %2103 = vmatmul.mubr.bf16.gmra.mrb[0].mxu0 %v1947
        %v2104 = vpop.f32.mrb[0].mxu0
        %v2105 = vadd.f32 0.0, %v2104
        %v2106 = vpop.f32.mrb[0].mxu0
        %v2107 = vpop.f32.mrb[0].mxu0
        %v2108 = vadd.f32 0.0, %v2107
        %v2109 = vpop.f32.mrb[0].mxu0
        %2110 = vmatprep.mubr.bf16.mxu0 0
        %2111 = vmatmul.mubr.bf16.gmra.mrb[0].mxu0 %v1949
        %v2112 = vpop.f32.mrb[0].mxu0
        %v2113 = vadd.f32 0.0, %v2112
        %v2114 = vpop.f32.mrb[0].mxu0
        %v2115 = vpop.f32.mrb[0].mxu0
        %v2116 = vadd.f32 0.0, %v2115
        %v2117 = vpop.f32.mrb[0].mxu0
        %2118 = vdwg.mxu0
        %s2119 = smul.u32 %s20, 256
        %s2120 = scalar_lea.vmem [#allocation3], %s2119
        %vm2121 = vcmask 31744
        %2122 = vst.msk [vmem:[%s2120] sm:$0xff] %vm2121, %v1993
        %2123 = vst.msk [vmem:[%s2120 + $0x8] sm:$0xff] %vm2121, %v1996
        %2124 = vst.msk [vmem:[%s2120 + $0x10] sm:$0xff] %vm2121, %v2001
        %2125 = vst.msk [vmem:[%s2120 + $0x18] sm:$0xff] %vm2121, %v2004
        %2126 = vst.msk [vmem:[%s2120 + $0x20] sm:$0xff] %vm2121, %v2009
        %2127 = vst.msk [vmem:[%s2120 + $0x28] sm:$0xff] %vm2121, %v2012
        %2128 = vst.msk [vmem:[%s2120 + $0x30] sm:$0xff] %vm2121, %v2017
        %2129 = vst.msk [vmem:[%s2120 + $0x38] sm:$0xff] %vm2121, %v2020
        %2130 = vst.msk [vmem:[%s2120 + $0x40] sm:$0xff] %vm2121, %v2025
        %2131 = vst.msk [vmem:[%s2120 + $0x48] sm:$0xff] %vm2121, %v2028
        %2132 = vst.msk [vmem:[%s2120 + $0x50] sm:$0xff] %vm2121, %v2033
        %2133 = vst.msk [vmem:[%s2120 + $0x58] sm:$0xff] %vm2121, %v2036
        %2134 = vst.msk [vmem:[%s2120 + $0x60] sm:$0xff] %vm2121, %v2041
        %2135 = vst.msk [vmem:[%s2120 + $0x68] sm:$0xff] %vm2121, %v2044
        %2136 = vst.msk [vmem:[%s2120 + $0x70] sm:$0xff] %vm2121, %v2049
        %2137 = vst.msk [vmem:[%s2120 + $0x78] sm:$0xff] %vm2121, %v2052
        %2138 = vst.msk [vmem:[%s2120 + $0x80] sm:$0xff] %vm2121, %v2057
        %2139 = vst.msk [vmem:[%s2120 + $0x88] sm:$0xff] %vm2121, %v2060
        %2140 = vst.msk [vmem:[%s2120 + $0x90] sm:$0xff] %vm2121, %v2065
        %2141 = vst.msk [vmem:[%s2120 + $0x98] sm:$0xff] %vm2121, %v2068
        %2142 = vst.msk [vmem:[%s2120 + $0xa0] sm:$0xff] %vm2121, %v2073
        %2143 = vst.msk [vmem:[%s2120 + $0xa8] sm:$0xff] %vm2121, %v2076
        %2144 = vst.msk [vmem:[%s2120 + $0xb0] sm:$0xff] %vm2121, %v2081
        %2145 = vst.msk [vmem:[%s2120 + $0xb8] sm:$0xff] %vm2121, %v2084
        %2146 = vst.msk [vmem:[%s2120 + $0xc0] sm:$0xff] %vm2121, %v2089
        %2147 = vst.msk [vmem:[%s2120 + $0xc8] sm:$0xff] %vm2121, %v2092
        %2148 = vst.msk [vmem:[%s2120 + $0xd0] sm:$0xff] %vm2121, %v2097
        %2149 = vst.msk [vmem:[%s2120 + $0xd8] sm:$0xff] %vm2121, %v2100
        %2150 = vst.msk [vmem:[%s2120 + $0xe0] sm:$0xff] %vm2121, %v2105
        %2151 = vst.msk [vmem:[%s2120 + $0xe8] sm:$0xff] %vm2121, %v2108
        %2152 = vst.msk [vmem:[%s2120 + $0xf0] sm:$0xff] %vm2121, %v2113
        %2153 = vst.msk [vmem:[%s2120 + $0xf8] sm:$0xff] %vm2121, %v2116
        %v2154 = vld [vmem:[#allocation4] sm:$0x1]
        %v2155 = vsel %vm2121, %v1993, 0.0
        %v2156 = vsel %vm2121, %v1996, 0.0
        %v2157 = vadd.f32 %v2155, %v2156
        %v2158 = vsel %vm2121, %v2001, 0.0
        %v2159 = vadd.f32 %v2157, %v2158
        %v2160 = vsel %vm2121, %v2004, 0.0
        %v2161 = vadd.f32 %v2159, %v2160
        %v2162 = vsel %vm2121, %v2009, 0.0
        %v2163 = vadd.f32 %v2161, %v2162
        %v2164 = vsel %vm2121, %v2012, 0.0
        %v2165 = vadd.f32 %v2163, %v2164
        %v2166 = vsel %vm2121, %v2017, 0.0
        %v2167 = vadd.f32 %v2165, %v2166
        %v2168 = vsel %vm2121, %v2020, 0.0
        %v2169 = vadd.f32 %v2167, %v2168
        %v2170 = vsel %vm2121, %v2025, 0.0
        %v2171 = vadd.f32 %v2169, %v2170
        %v2172 = vsel %vm2121, %v2028, 0.0
        %v2173 = vadd.f32 %v2171, %v2172
        %v2174 = vsel %vm2121, %v2033, 0.0
        %v2175 = vadd.f32 %v2173, %v2174
        %v2176 = vsel %vm2121, %v2036, 0.0
        %v2177 = vadd.f32 %v2175, %v2176
        %v2178 = vsel %vm2121, %v2041, 0.0
        %v2179 = vadd.f32 %v2177, %v2178
        %v2180 = vsel %vm2121, %v2044, 0.0
        %v2181 = vadd.f32 %v2179, %v2180
        %v2182 = vsel %vm2121, %v2049, 0.0
        %v2183 = vadd.f32 %v2181, %v2182
        %v2184 = vsel %vm2121, %v2052, 0.0
        %v2185 = vadd.f32 %v2183, %v2184
        %v2186 = vsel %vm2121, %v2057, 0.0
        %v2187 = vadd.f32 %v2185, %v2186
        %v2188 = vsel %vm2121, %v2060, 0.0
        %v2189 = vadd.f32 %v2187, %v2188
        %v2190 = vsel %vm2121, %v2065, 0.0
        %v2191 = vadd.f32 %v2189, %v2190
        %v2192 = vsel %vm2121, %v2068, 0.0
        %v2193 = vadd.f32 %v2191, %v2192
        %v2194 = vsel %vm2121, %v2073, 0.0
        %v2195 = vadd.f32 %v2193, %v2194
        %v2196 = vsel %vm2121, %v2076, 0.0
        %v2197 = vadd.f32 %v2195, %v2196
        %v2198 = vsel %vm2121, %v2081, 0.0
        %v2199 = vadd.f32 %v2197, %v2198
        %v2200 = vsel %vm2121, %v2084, 0.0
        %v2201 = vadd.f32 %v2199, %v2200
        %v2202 = vsel %vm2121, %v2089, 0.0
        %v2203 = vadd.f32 %v2201, %v2202
        %v2204 = vsel %vm2121, %v2092, 0.0
        %v2205 = vadd.f32 %v2203, %v2204
        %v2206 = vsel %vm2121, %v2097, 0.0
        %v2207 = vadd.f32 %v2205, %v2206
        %v2208 = vsel %vm2121, %v2100, 0.0
        %v2209 = vadd.f32 %v2207, %v2208
        %v2210 = vsel %vm2121, %v2105, 0.0
        %v2211 = vadd.f32 %v2209, %v2210
        %v2212 = vsel %vm2121, %v2108, 0.0
        %v2213 = vadd.f32 %v2211, %v2212
        %v2214 = vsel %vm2121, %v2113, 0.0
        %v2215 = vadd.f32 %v2213, %v2214
        %v2216 = vsel %vm2121, %v2116, 0.0
        %v2217 = vadd.f32 %v2215, %v2216
        %v2218 = vrot.slane %v2217, 4
        %v2219 = vadd.f32 %v2217, %v2218
        %v2220 = vrot.slane %v2219, 2
        %v2221 = vadd.f32 %v2219, %v2220
        %v2222 = vrot.slane %v2221, 1
        %v2223 = vadd.f32 %v2221, %v2222
        %v2224 = vadd.f32 %v2154, %v2223
        %vm2225 = vcmask 24576
        %2226 = vst.msk [vmem:[#allocation4] sm:$0x1] %vm2225, %v2224
      $region40: #{unet_encoder.4} parent=35 // pred_fallthru
        _
      %p2227 = scmp.eq.s32.totalorder %s19, 1
      // Predicated region
      $region45: #{unet_encoder.4} parent=35 // pred_check
        %p2228 = pneg %p2227
      $region46: #{unet_encoder.4} parent=35 // pred_check_branch
        %2230 = sbr.rel (%p2228) target = $region48
      $region47: #{unet_encoder.4} parent=35 // pred_region
        %p2231 = scmp.eq.s32.totalorder %s20, 0
        // Predicated region
        $region49: #{unet_encoder.4} parent=47 // pred_check
          %p2232 = pneg %p2231
        $region50: #{unet_encoder.4} parent=47 // pred_check_branch
          %2234 = sbr.rel (%p2232) target = $region52
        $region51: #{unet_encoder.4} parent=47 // pred_region
          %v2235 = vld [vmem:[#allocation4] sm:$0x1]
          %v2236 = vmul.f32 %v2235, 0.001953125
          %v2237 = vld [vmem:[#allocation3] sm:$0xff]
          %v2238 = vld [vmem:[#allocation3 + $0x8] sm:$0xff]
          %v2239 = vld [vmem:[#allocation3 + $0x10] sm:$0xff]
          %v2240 = vld [vmem:[#allocation3 + $0x18] sm:$0xff]
          %v2241 = vld [vmem:[#allocation3 + $0x20] sm:$0xff]
          %v2242 = vld [vmem:[#allocation3 + $0x28] sm:$0xff]
          %v2243 = vld [vmem:[#allocation3 + $0x30] sm:$0xff]
          %v2244 = vld [vmem:[#allocation3 + $0x38] sm:$0xff]
          %v2245 = vld [vmem:[#allocation3 + $0x40] sm:$0xff]
          %v2246 = vld [vmem:[#allocation3 + $0x48] sm:$0xff]
          %v2247 = vld [vmem:[#allocation3 + $0x50] sm:$0xff]
          %v2248 = vld [vmem:[#allocation3 + $0x58] sm:$0xff]
          %v2249 = vld [vmem:[#allocation3 + $0x60] sm:$0xff]
          %v2250 = vld [vmem:[#allocation3 + $0x68] sm:$0xff]
          %v2251 = vld [vmem:[#allocation3 + $0x70] sm:$0xff]
          %v2252 = vld [vmem:[#allocation3 + $0x78] sm:$0xff]
          %v2253 = vld [vmem:[#allocation3 + $0x80] sm:$0xff]
          %v2254 = vld [vmem:[#allocation3 + $0x88] sm:$0xff]
          %v2255 = vld [vmem:[#allocation3 + $0x90] sm:$0xff]
          %v2256 = vld [vmem:[#allocation3 + $0x98] sm:$0xff]
          %v2257 = vld [vmem:[#allocation3 + $0xa0] sm:$0xff]
          %v2258 = vld [vmem:[#allocation3 + $0xa8] sm:$0xff]
          %v2259 = vld [vmem:[#allocation3 + $0xb0] sm:$0xff]
          %v2260 = vld [vmem:[#allocation3 + $0xb8] sm:$0xff]
          %v2261 = vld [vmem:[#allocation3 + $0xc0] sm:$0xff]
          %v2262 = vld [vmem:[#allocation3 + $0xc8] sm:$0xff]
          %v2263 = vld [vmem:[#allocation3 + $0xd0] sm:$0xff]
          %v2264 = vld [vmem:[#allocation3 + $0xd8] sm:$0xff]
          %v2265 = vld [vmem:[#allocation3 + $0xe0] sm:$0xff]
          %v2266 = vld [vmem:[#allocation3 + $0xe8] sm:$0xff]
          %v2267 = vld [vmem:[#allocation3 + $0xf0] sm:$0xff]
          %v2268 = vld [vmem:[#allocation3 + $0xf8] sm:$0xff]
          %v2269 = vld [vmem:[#allocation3 + $0x100] sm:$0xff]
          %v2270 = vld [vmem:[#allocation3 + $0x108] sm:$0xff]
          %v2271 = vld [vmem:[#allocation3 + $0x110] sm:$0xff]
          %v2272 = vld [vmem:[#allocation3 + $0x118] sm:$0xff]
          %v2273 = vld [vmem:[#allocation3 + $0x120] sm:$0xff]
          %v2274 = vld [vmem:[#allocation3 + $0x128] sm:$0xff]
          %v2275 = vld [vmem:[#allocation3 + $0x130] sm:$0xff]
          %v2276 = vld [vmem:[#allocation3 + $0x138] sm:$0xff]
          %v2277 = vld [vmem:[#allocation3 + $0x140] sm:$0xff]
          %v2278 = vld [vmem:[#allocation3 + $0x148] sm:$0xff]
          %v2279 = vld [vmem:[#allocation3 + $0x150] sm:$0xff]
          %v2280 = vld [vmem:[#allocation3 + $0x158] sm:$0xff]
          %v2281 = vld [vmem:[#allocation3 + $0x160] sm:$0xff]
          %v2282 = vld [vmem:[#allocation3 + $0x168] sm:$0xff]
          %v2283 = vld [vmem:[#allocation3 + $0x170] sm:$0xff]
          %v2284 = vld [vmem:[#allocation3 + $0x178] sm:$0xff]
          %v2285 = vld [vmem:[#allocation3 + $0x180] sm:$0xff]
          %v2286 = vld [vmem:[#allocation3 + $0x188] sm:$0xff]
          %v2287 = vld [vmem:[#allocation3 + $0x190] sm:$0xff]
          %v2288 = vld [vmem:[#allocation3 + $0x198] sm:$0xff]
          %v2289 = vld [vmem:[#allocation3 + $0x1a0] sm:$0xff]
          %v2290 = vld [vmem:[#allocation3 + $0x1a8] sm:$0xff]
          %v2291 = vld [vmem:[#allocation3 + $0x1b0] sm:$0xff]
          %v2292 = vld [vmem:[#allocation3 + $0x1b8] sm:$0xff]
          %v2293 = vld [vmem:[#allocation3 + $0x1c0] sm:$0xff]
          %v2294 = vld [vmem:[#allocation3 + $0x1c8] sm:$0xff]
          %v2295 = vld [vmem:[#allocation3 + $0x1d0] sm:$0xff]
          %v2296 = vld [vmem:[#allocation3 + $0x1d8] sm:$0xff]
          %v2297 = vld [vmem:[#allocation3 + $0x1e0] sm:$0xff]
          %v2298 = vld [vmem:[#allocation3 + $0x1e8] sm:$0xff]
          %v2299 = vld [vmem:[#allocation3 + $0x1f0] sm:$0xff]
          %v2300 = vld [vmem:[#allocation3 + $0x1f8] sm:$0xff]
          %v2302 = vlaneseq
          %v2303 = vshrl.u32 %v2302, 7
          %v2304 = vsub.s32 0, %v2303
          %v2305 = vrot.slane %v2236, %v2304
          %v2307 = vsub.f32 %v2237, %v2305
          %v2308 = vsub.f32 %v2238, %v2305
          %v2309 = vsub.f32 %v2239, %v2305
          %v2310 = vsub.f32 %v2240, %v2305
          %v2311 = vsub.f32 %v2241, %v2305
          %v2312 = vsub.f32 %v2242, %v2305
          %v2313 = vsub.f32 %v2243, %v2305
          %v2314 = vsub.f32 %v2244, %v2305
          %v2315 = vsub.f32 %v2245, %v2305
          %v2316 = vsub.f32 %v2246, %v2305
          %v2317 = vsub.f32 %v2247, %v2305
          %v2318 = vsub.f32 %v2248, %v2305
          %v2319 = vsub.f32 %v2249, %v2305
          %v2320 = vsub.f32 %v2250, %v2305
          %v2321 = vsub.f32 %v2251, %v2305
          %v2322 = vsub.f32 %v2252, %v2305
          %v2323 = vsub.f32 %v2253, %v2305
          %v2324 = vsub.f32 %v2254, %v2305
          %v2325 = vsub.f32 %v2255, %v2305
          %v2326 = vsub.f32 %v2256, %v2305
          %v2327 = vsub.f32 %v2257, %v2305
          %v2328 = vsub.f32 %v2258, %v2305
          %v2329 = vsub.f32 %v2259, %v2305
          %v2330 = vsub.f32 %v2260, %v2305
          %v2331 = vsub.f32 %v2261, %v2305
          %v2332 = vsub.f32 %v2262, %v2305
          %v2333 = vsub.f32 %v2263, %v2305
          %v2334 = vsub.f32 %v2264, %v2305
          %v2335 = vsub.f32 %v2265, %v2305
          %v2336 = vsub.f32 %v2266, %v2305
          %v2337 = vsub.f32 %v2267, %v2305
          %v2338 = vsub.f32 %v2268, %v2305
          %v2339 = vsub.f32 %v2269, %v2305
          %v2340 = vsub.f32 %v2270, %v2305
          %v2341 = vsub.f32 %v2271, %v2305
          %v2342 = vsub.f32 %v2272, %v2305
          %v2343 = vsub.f32 %v2273, %v2305
          %v2344 = vsub.f32 %v2274, %v2305
          %v2345 = vsub.f32 %v2275, %v2305
          %v2346 = vsub.f32 %v2276, %v2305
          %v2347 = vsub.f32 %v2277, %v2305
          %v2348 = vsub.f32 %v2278, %v2305
          %v2349 = vsub.f32 %v2279, %v2305
          %v2350 = vsub.f32 %v2280, %v2305
          %v2351 = vsub.f32 %v2281, %v2305
          %v2352 = vsub.f32 %v2282, %v2305
          %v2353 = vsub.f32 %v2283, %v2305
          %v2354 = vsub.f32 %v2284, %v2305
          %v2355 = vsub.f32 %v2285, %v2305
          %v2356 = vsub.f32 %v2286, %v2305
          %v2357 = vsub.f32 %v2287, %v2305
          %v2358 = vsub.f32 %v2288, %v2305
          %v2359 = vsub.f32 %v2289, %v2305
          %v2360 = vsub.f32 %v2290, %v2305
          %v2361 = vsub.f32 %v2291, %v2305
          %v2362 = vsub.f32 %v2292, %v2305
          %v2363 = vsub.f32 %v2293, %v2305
          %v2364 = vsub.f32 %v2294, %v2305
          %v2365 = vsub.f32 %v2295, %v2305
          %v2366 = vsub.f32 %v2296, %v2305
          %v2367 = vsub.f32 %v2297, %v2305
          %v2368 = vsub.f32 %v2298, %v2305
          %v2369 = vsub.f32 %v2299, %v2305
          %v2370 = vsub.f32 %v2300, %v2305
          %v2371 = vmul.f32 %v2307, %v2307
          %v2372 = vmul.f32 %v2308, %v2308
          %v2373 = vmul.f32 %v2309, %v2309
          %v2374 = vmul.f32 %v2310, %v2310
          %v2375 = vmul.f32 %v2311, %v2311
          %v2376 = vmul.f32 %v2312, %v2312
          %v2377 = vmul.f32 %v2313, %v2313
          %v2378 = vmul.f32 %v2314, %v2314
          %v2379 = vmul.f32 %v2315, %v2315
          %v2380 = vmul.f32 %v2316, %v2316
          %v2381 = vmul.f32 %v2317, %v2317
          %v2382 = vmul.f32 %v2318, %v2318
          %v2383 = vmul.f32 %v2319, %v2319
          %v2384 = vmul.f32 %v2320, %v2320
          %v2385 = vmul.f32 %v2321, %v2321
          %v2386 = vmul.f32 %v2322, %v2322
          %v2387 = vmul.f32 %v2323, %v2323
          %v2388 = vmul.f32 %v2324, %v2324
          %v2389 = vmul.f32 %v2325, %v2325
          %v2390 = vmul.f32 %v2326, %v2326
          %v2391 = vmul.f32 %v2327, %v2327
          %v2392 = vmul.f32 %v2328, %v2328
          %v2393 = vmul.f32 %v2329, %v2329
          %v2394 = vmul.f32 %v2330, %v2330
          %v2395 = vmul.f32 %v2331, %v2331
          %v2396 = vmul.f32 %v2332, %v2332
          %v2397 = vmul.f32 %v2333, %v2333
          %v2398 = vmul.f32 %v2334, %v2334
          %v2399 = vmul.f32 %v2335, %v2335
          %v2400 = vmul.f32 %v2336, %v2336
          %v2401 = vmul.f32 %v2337, %v2337
          %v2402 = vmul.f32 %v2338, %v2338
          %v2403 = vmul.f32 %v2339, %v2339
          %v2404 = vmul.f32 %v2340, %v2340
          %v2405 = vmul.f32 %v2341, %v2341
          %v2406 = vmul.f32 %v2342, %v2342
          %v2407 = vmul.f32 %v2343, %v2343
          %v2408 = vmul.f32 %v2344, %v2344
          %v2409 = vmul.f32 %v2345, %v2345
          %v2410 = vmul.f32 %v2346, %v2346
          %v2411 = vmul.f32 %v2347, %v2347
          %v2412 = vmul.f32 %v2348, %v2348
          %v2413 = vmul.f32 %v2349, %v2349
          %v2414 = vmul.f32 %v2350, %v2350
          %v2415 = vmul.f32 %v2351, %v2351
          %v2416 = vmul.f32 %v2352, %v2352
          %v2417 = vmul.f32 %v2353, %v2353
          %v2418 = vmul.f32 %v2354, %v2354
          %v2419 = vmul.f32 %v2355, %v2355
          %v2420 = vmul.f32 %v2356, %v2356
          %v2421 = vmul.f32 %v2357, %v2357
          %v2422 = vmul.f32 %v2358, %v2358
          %v2423 = vmul.f32 %v2359, %v2359
          %v2424 = vmul.f32 %v2360, %v2360
          %v2425 = vmul.f32 %v2361, %v2361
          %v2426 = vmul.f32 %v2362, %v2362
          %v2427 = vmul.f32 %v2363, %v2363
          %v2428 = vmul.f32 %v2364, %v2364
          %v2429 = vmul.f32 %v2365, %v2365
          %v2430 = vmul.f32 %v2366, %v2366
          %v2431 = vmul.f32 %v2367, %v2367
          %v2432 = vmul.f32 %v2368, %v2368
          %v2433 = vmul.f32 %v2369, %v2369
          %v2434 = vmul.f32 %v2370, %v2370
          %vm2435 = vcmask 31744
          %v2436 = vsel %vm2435, %v2371, 0.0
          %v2437 = vsel %vm2435, %v2403, 0.0
          %v2438 = vadd.f32 %v2436, %v2437
          %v2439 = vsel %vm2435, %v2372, 0.0
          %v2440 = vsel %vm2435, %v2404, 0.0
          %v2441 = vadd.f32 %v2439, %v2440
          %v2442 = vsel %vm2435, %v2373, 0.0
          %v2443 = vsel %vm2435, %v2405, 0.0
          %v2444 = vadd.f32 %v2442, %v2443
          %v2445 = vsel %vm2435, %v2374, 0.0
          %v2446 = vsel %vm2435, %v2406, 0.0
          %v2447 = vadd.f32 %v2445, %v2446
          %v2448 = vsel %vm2435, %v2375, 0.0
          %v2449 = vsel %vm2435, %v2407, 0.0
          %v2450 = vadd.f32 %v2448, %v2449
          %v2451 = vsel %vm2435, %v2376, 0.0
          %v2452 = vsel %vm2435, %v2408, 0.0
          %v2453 = vadd.f32 %v2451, %v2452
          %v2454 = vsel %vm2435, %v2377, 0.0
          %v2455 = vsel %vm2435, %v2409, 0.0
          %v2456 = vadd.f32 %v2454, %v2455
          %v2457 = vsel %vm2435, %v2378, 0.0
          %v2458 = vsel %vm2435, %v2410, 0.0
          %v2459 = vadd.f32 %v2457, %v2458
          %v2460 = vsel %vm2435, %v2379, 0.0
          %v2461 = vsel %vm2435, %v2411, 0.0
          %v2462 = vadd.f32 %v2460, %v2461
          %v2463 = vsel %vm2435, %v2380, 0.0
          %v2464 = vsel %vm2435, %v2412, 0.0
          %v2465 = vadd.f32 %v2463, %v2464
          %v2466 = vsel %vm2435, %v2381, 0.0
          %v2467 = vsel %vm2435, %v2413, 0.0
          %v2468 = vadd.f32 %v2466, %v2467
          %v2469 = vsel %vm2435, %v2382, 0.0
          %v2470 = vsel %vm2435, %v2414, 0.0
          %v2471 = vadd.f32 %v2469, %v2470
          %v2472 = vsel %vm2435, %v2383, 0.0
          %v2473 = vsel %vm2435, %v2415, 0.0
          %v2474 = vadd.f32 %v2472, %v2473
          %v2475 = vsel %vm2435, %v2384, 0.0
          %v2476 = vsel %vm2435, %v2416, 0.0
          %v2477 = vadd.f32 %v2475, %v2476
          %v2478 = vsel %vm2435, %v2385, 0.0
          %v2479 = vsel %vm2435, %v2417, 0.0
          %v2480 = vadd.f32 %v2478, %v2479
          %v2481 = vsel %vm2435, %v2386, 0.0
          %v2482 = vsel %vm2435, %v2418, 0.0
          %v2483 = vadd.f32 %v2481, %v2482
          %v2484 = vsel %vm2435, %v2387, 0.0
          %v2485 = vsel %vm2435, %v2419, 0.0
          %v2486 = vadd.f32 %v2484, %v2485
          %v2487 = vsel %vm2435, %v2388, 0.0
          %v2488 = vsel %vm2435, %v2420, 0.0
          %v2489 = vadd.f32 %v2487, %v2488
          %v2490 = vsel %vm2435, %v2389, 0.0
          %v2491 = vsel %vm2435, %v2421, 0.0
          %v2492 = vadd.f32 %v2490, %v2491
          %v2493 = vsel %vm2435, %v2390, 0.0
          %v2494 = vsel %vm2435, %v2422, 0.0
          %v2495 = vadd.f32 %v2493, %v2494
          %v2496 = vsel %vm2435, %v2391, 0.0
          %v2497 = vsel %vm2435, %v2423, 0.0
          %v2498 = vadd.f32 %v2496, %v2497
          %v2499 = vsel %vm2435, %v2392, 0.0
          %v2500 = vsel %vm2435, %v2424, 0.0
          %v2501 = vadd.f32 %v2499, %v2500
          %v2502 = vsel %vm2435, %v2393, 0.0
          %v2503 = vsel %vm2435, %v2425, 0.0
          %v2504 = vadd.f32 %v2502, %v2503
          %v2505 = vsel %vm2435, %v2394, 0.0
          %v2506 = vsel %vm2435, %v2426, 0.0
          %v2507 = vadd.f32 %v2505, %v2506
          %v2508 = vsel %vm2435, %v2395, 0.0
          %v2509 = vsel %vm2435, %v2427, 0.0
          %v2510 = vadd.f32 %v2508, %v2509
          %v2511 = vsel %vm2435, %v2396, 0.0
          %v2512 = vsel %vm2435, %v2428, 0.0
          %v2513 = vadd.f32 %v2511, %v2512
          %v2514 = vsel %vm2435, %v2397, 0.0
          %v2515 = vsel %vm2435, %v2429, 0.0
          %v2516 = vadd.f32 %v2514, %v2515
          %v2517 = vsel %vm2435, %v2398, 0.0
          %v2518 = vsel %vm2435, %v2430, 0.0
          %v2519 = vadd.f32 %v2517, %v2518
          %v2520 = vsel %vm2435, %v2399, 0.0
          %v2521 = vsel %vm2435, %v2431, 0.0
          %v2522 = vadd.f32 %v2520, %v2521
          %v2523 = vsel %vm2435, %v2400, 0.0
          %v2524 = vsel %vm2435, %v2432, 0.0
          %v2525 = vadd.f32 %v2523, %v2524
          %v2526 = vsel %vm2435, %v2401, 0.0
          %v2527 = vsel %vm2435, %v2433, 0.0
          %v2528 = vadd.f32 %v2526, %v2527
          %v2529 = vsel %vm2435, %v2402, 0.0
          %v2530 = vsel %vm2435, %v2434, 0.0
          %v2531 = vadd.f32 %v2529, %v2530
          %v2532 = vsel %vm2435, %v2438, 0.0
          %v2533 = vsel %vm2435, %v2441, 0.0
          %v2534 = vadd.f32 %v2532, %v2533
          %v2535 = vsel %vm2435, %v2444, 0.0
          %v2536 = vadd.f32 %v2534, %v2535
          %v2537 = vsel %vm2435, %v2447, 0.0
          %v2538 = vadd.f32 %v2536, %v2537
          %v2539 = vsel %vm2435, %v2450, 0.0
          %v2540 = vadd.f32 %v2538, %v2539
          %v2541 = vsel %vm2435, %v2453, 0.0
          %v2542 = vadd.f32 %v2540, %v2541
          %v2543 = vsel %vm2435, %v2456, 0.0
          %v2544 = vadd.f32 %v2542, %v2543
          %v2545 = vsel %vm2435, %v2459, 0.0
          %v2546 = vadd.f32 %v2544, %v2545
          %v2547 = vsel %vm2435, %v2462, 0.0
          %v2548 = vadd.f32 %v2546, %v2547
          %v2549 = vsel %vm2435, %v2465, 0.0
          %v2550 = vadd.f32 %v2548, %v2549
          %v2551 = vsel %vm2435, %v2468, 0.0
          %v2552 = vadd.f32 %v2550, %v2551
          %v2553 = vsel %vm2435, %v2471, 0.0
          %v2554 = vadd.f32 %v2552, %v2553
          %v2555 = vsel %vm2435, %v2474, 0.0
          %v2556 = vadd.f32 %v2554, %v2555
          %v2557 = vsel %vm2435, %v2477, 0.0
          %v2558 = vadd.f32 %v2556, %v2557
          %v2559 = vsel %vm2435, %v2480, 0.0
          %v2560 = vadd.f32 %v2558, %v2559
          %v2561 = vsel %vm2435, %v2483, 0.0
          %v2562 = vadd.f32 %v2560, %v2561
          %v2563 = vsel %vm2435, %v2486, 0.0
          %v2564 = vadd.f32 %v2562, %v2563
          %v2565 = vsel %vm2435, %v2489, 0.0
          %v2566 = vadd.f32 %v2564, %v2565
          %v2567 = vsel %vm2435, %v2492, 0.0
          %v2568 = vadd.f32 %v2566, %v2567
          %v2569 = vsel %vm2435, %v2495, 0.0
          %v2570 = vadd.f32 %v2568, %v2569
          %v2571 = vsel %vm2435, %v2498, 0.0
          %v2572 = vadd.f32 %v2570, %v2571
          %v2573 = vsel %vm2435, %v2501, 0.0
          %v2574 = vadd.f32 %v2572, %v2573
          %v2575 = vsel %vm2435, %v2504, 0.0
          %v2576 = vadd.f32 %v2574, %v2575
          %v2577 = vsel %vm2435, %v2507, 0.0
          %v2578 = vadd.f32 %v2576, %v2577
          %v2579 = vsel %vm2435, %v2510, 0.0
          %v2580 = vadd.f32 %v2578, %v2579
          %v2581 = vsel %vm2435, %v2513, 0.0
          %v2582 = vadd.f32 %v2580, %v2581
          %v2583 = vsel %vm2435, %v2516, 0.0
          %v2584 = vadd.f32 %v2582, %v2583
          %v2585 = vsel %vm2435, %v2519, 0.0
          %v2586 = vadd.f32 %v2584, %v2585
          %v2587 = vsel %vm2435, %v2522, 0.0
          %v2588 = vadd.f32 %v2586, %v2587
          %v2589 = vsel %vm2435, %v2525, 0.0
          %v2590 = vadd.f32 %v2588, %v2589
          %v2591 = vsel %vm2435, %v2528, 0.0
          %v2592 = vadd.f32 %v2590, %v2591
          %v2593 = vsel %vm2435, %v2531, 0.0
          %v2594 = vadd.f32 %v2592, %v2593
          %v2595 = vrot.slane %v2594, 4
          %v2596 = vadd.f32 %v2594, %v2595
          %v2597 = vrot.slane %v2596, 2
          %v2598 = vadd.f32 %v2596, %v2597
          %v2599 = vrot.slane %v2598, 1
          %v2600 = vadd.f32 %v2598, %v2599
          %v2601 = vmul.f32 %v2600, 0.001953125
          %v2602 = vmax.f32 %v2601, 0.0
          %v2603 = vadd.f32 %v2602, 1e-05
          %v2604 = vrsqrt.pop %v2603
          %v2605 = vld [vmem:[%s2] sm:$0x1]
          %v2606 = vmul.f32 %v2605, %v2604
          %vm2607 = vcmask 24576
          %2608 = vst.msk [vmem:[#allocation5] sm:$0x1] %vm2607, %v2606
          %v2609 = vld [vmem:[%s3] sm:$0x1]
          %v2610 = vmul.f32 %v2236, %v2606
          %v2611 = vsub.f32 %v2609, %v2610
          %2612 = vst.msk [vmem:[#allocation6] sm:$0x1] %vm2607, %v2611
        $region52: #{unet_encoder.4} parent=47 // pred_fallthru
          _
        %s2613 = smul.u32 %s20, 256
        %s2614 = scalar_lea.vmem [#allocation3], %s2613
        %v2615 = vld [vmem:[%s2614] sm:$0xff]
        %v2616 = vld [vmem:[%s2614 + $0x8] sm:$0xff]
        %v2617 = vld [vmem:[%s2614 + $0x10] sm:$0xff]
        %v2618 = vld [vmem:[%s2614 + $0x18] sm:$0xff]
        %v2619 = vld [vmem:[%s2614 + $0x20] sm:$0xff]
        %v2620 = vld [vmem:[%s2614 + $0x28] sm:$0xff]
        %v2621 = vld [vmem:[%s2614 + $0x30] sm:$0xff]
        %v2622 = vld [vmem:[%s2614 + $0x38] sm:$0xff]
        %v2623 = vld [vmem:[%s2614 + $0x40] sm:$0xff]
        %v2624 = vld [vmem:[%s2614 + $0x48] sm:$0xff]
        %v2625 = vld [vmem:[%s2614 + $0x50] sm:$0xff]
        %v2626 = vld [vmem:[%s2614 + $0x58] sm:$0xff]
        %v2627 = vld [vmem:[%s2614 + $0x60] sm:$0xff]
        %v2628 = vld [vmem:[%s2614 + $0x68] sm:$0xff]
        %v2629 = vld [vmem:[%s2614 + $0x70] sm:$0xff]
        %v2630 = vld [vmem:[%s2614 + $0x78] sm:$0xff]
        %v2631 = vld [vmem:[%s2614 + $0x80] sm:$0xff]
        %v2632 = vld [vmem:[%s2614 + $0x88] sm:$0xff]
        %v2633 = vld [vmem:[%s2614 + $0x90] sm:$0xff]
        %v2634 = vld [vmem:[%s2614 + $0x98] sm:$0xff]
        %v2635 = vld [vmem:[%s2614 + $0xa0] sm:$0xff]
        %v2636 = vld [vmem:[%s2614 + $0xa8] sm:$0xff]
        %v2637 = vld [vmem:[%s2614 + $0xb0] sm:$0xff]
        %v2638 = vld [vmem:[%s2614 + $0xb8] sm:$0xff]
        %v2639 = vld [vmem:[%s2614 + $0xc0] sm:$0xff]
        %v2640 = vld [vmem:[%s2614 + $0xc8] sm:$0xff]
        %v2641 = vld [vmem:[%s2614 + $0xd0] sm:$0xff]
        %v2642 = vld [vmem:[%s2614 + $0xd8] sm:$0xff]
        %v2643 = vld [vmem:[%s2614 + $0xe0] sm:$0xff]
        %v2644 = vld [vmem:[%s2614 + $0xe8] sm:$0xff]
        %v2645 = vld [vmem:[%s2614 + $0xf0] sm:$0xff]
        %v2646 = vld [vmem:[%s2614 + $0xf8] sm:$0xff]
        %v2647 = vld [vmem:[#allocation5] sm:$0x1]
        %v2649 = vlaneseq
        %v2650 = vshrl.u32 %v2649, 7
        %v2651 = vsub.s32 0, %v2650
        %v2652 = vrot.slane %v2647, %v2651
        %v2654 = vmul.f32 %v2615, %v2652
        %v2655 = vmul.f32 %v2616, %v2652
        %v2656 = vmul.f32 %v2617, %v2652
        %v2657 = vmul.f32 %v2618, %v2652
        %v2658 = vmul.f32 %v2619, %v2652
        %v2659 = vmul.f32 %v2620, %v2652
        %v2660 = vmul.f32 %v2621, %v2652
        %v2661 = vmul.f32 %v2622, %v2652
        %v2662 = vmul.f32 %v2623, %v2652
        %v2663 = vmul.f32 %v2624, %v2652
        %v2664 = vmul.f32 %v2625, %v2652
        %v2665 = vmul.f32 %v2626, %v2652
        %v2666 = vmul.f32 %v2627, %v2652
        %v2667 = vmul.f32 %v2628, %v2652
        %v2668 = vmul.f32 %v2629, %v2652
        %v2669 = vmul.f32 %v2630, %v2652
        %v2670 = vmul.f32 %v2631, %v2652
        %v2671 = vmul.f32 %v2632, %v2652
        %v2672 = vmul.f32 %v2633, %v2652
        %v2673 = vmul.f32 %v2634, %v2652
        %v2674 = vmul.f32 %v2635, %v2652
        %v2675 = vmul.f32 %v2636, %v2652
        %v2676 = vmul.f32 %v2637, %v2652
        %v2677 = vmul.f32 %v2638, %v2652
        %v2678 = vmul.f32 %v2639, %v2652
        %v2679 = vmul.f32 %v2640, %v2652
        %v2680 = vmul.f32 %v2641, %v2652
        %v2681 = vmul.f32 %v2642, %v2652
        %v2682 = vmul.f32 %v2643, %v2652
        %v2683 = vmul.f32 %v2644, %v2652
        %v2684 = vmul.f32 %v2645, %v2652
        %v2685 = vmul.f32 %v2646, %v2652
        %v2686 = vld [vmem:[#allocation6] sm:$0x1]
        %v2688 = vlaneseq
        %v2689 = vshrl.u32 %v2688, 7
        %v2690 = vsub.s32 0, %v2689
        %v2691 = vrot.slane %v2686, %v2690
        %v2693 = vadd.f32 %v2654, %v2691
        %v2694 = vadd.f32 %v2655, %v2691
        %v2695 = vadd.f32 %v2656, %v2691
        %v2696 = vadd.f32 %v2657, %v2691
        %v2697 = vadd.f32 %v2658, %v2691
        %v2698 = vadd.f32 %v2659, %v2691
        %v2699 = vadd.f32 %v2660, %v2691
        %v2700 = vadd.f32 %v2661, %v2691
        %v2701 = vadd.f32 %v2662, %v2691
        %v2702 = vadd.f32 %v2663, %v2691
        %v2703 = vadd.f32 %v2664, %v2691
        %v2704 = vadd.f32 %v2665, %v2691
        %v2705 = vadd.f32 %v2666, %v2691
        %v2706 = vadd.f32 %v2667, %v2691
        %v2707 = vadd.f32 %v2668, %v2691
        %v2708 = vadd.f32 %v2669, %v2691
        %v2709 = vadd.f32 %v2670, %v2691
        %v2710 = vadd.f32 %v2671, %v2691
        %v2711 = vadd.f32 %v2672, %v2691
        %v2712 = vadd.f32 %v2673, %v2691
        %v2713 = vadd.f32 %v2674, %v2691
        %v2714 = vadd.f32 %v2675, %v2691
        %v2715 = vadd.f32 %v2676, %v2691
        %v2716 = vadd.f32 %v2677, %v2691
        %v2717 = vadd.f32 %v2678, %v2691
        %v2718 = vadd.f32 %v2679, %v2691
        %v2719 = vadd.f32 %v2680, %v2691
        %v2720 = vadd.f32 %v2681, %v2691
        %v2721 = vadd.f32 %v2682, %v2691
        %v2722 = vadd.f32 %v2683, %v2691
        %v2723 = vadd.f32 %v2684, %v2691
        %v2724 = vadd.f32 %v2685, %v2691
        %v2725 = vmax.f32 %v2693, 0.0
        %v2726 = vmax.f32 %v2694, 0.0
        %v2727 = vmax.f32 %v2695, 0.0
        %v2728 = vmax.f32 %v2696, 0.0
        %v2729 = vmax.f32 %v2697, 0.0
        %v2730 = vmax.f32 %v2698, 0.0
        %v2731 = vmax.f32 %v2699, 0.0
        %v2732 = vmax.f32 %v2700, 0.0
        %v2733 = vmax.f32 %v2701, 0.0
        %v2734 = vmax.f32 %v2702, 0.0
        %v2735 = vmax.f32 %v2703, 0.0
        %v2736 = vmax.f32 %v2704, 0.0
        %v2737 = vmax.f32 %v2705, 0.0
        %v2738 = vmax.f32 %v2706, 0.0
        %v2739 = vmax.f32 %v2707, 0.0
        %v2740 = vmax.f32 %v2708, 0.0
        %v2741 = vmax.f32 %v2709, 0.0
        %v2742 = vmax.f32 %v2710, 0.0
        %v2743 = vmax.f32 %v2711, 0.0
        %v2744 = vmax.f32 %v2712, 0.0
        %v2745 = vmax.f32 %v2713, 0.0
        %v2746 = vmax.f32 %v2714, 0.0
        %v2747 = vmax.f32 %v2715, 0.0
        %v2748 = vmax.f32 %v2716, 0.0
        %v2749 = vmax.f32 %v2717, 0.0
        %v2750 = vmax.f32 %v2718, 0.0
        %v2751 = vmax.f32 %v2719, 0.0
        %v2752 = vmax.f32 %v2720, 0.0
        %v2753 = vmax.f32 %v2721, 0.0
        %v2754 = vmax.f32 %v2722, 0.0
        %v2755 = vmax.f32 %v2723, 0.0
        %v2756 = vmax.f32 %v2724, 0.0
        %v2789 = vcombine.high %v2725, %v2725
        %v2791 = vunpack.c.l.s4 1983009808
        %v2792 = vunpack.c.0.s8 %v2791
        %v2793 = vlaneseq
        %v2794 = vshrl.u32 %v2793, 7
        %v2795 = vsub.s32 %v2792, %v2794
        %v2796 = vrot.slane %v2725, %v2795
        %v2798 = vunpack.c.l.s4 1983009808
        %v2799 = vunpack.c.0.s8 %v2798
        %v2800 = vlaneseq
        %v2801 = vshrl.u32 %v2800, 7
        %v2802 = vsub.s32 %v2799, %v2801
        %v2803 = vrot.slane %v2789, %v2802
        %v2804 = vcombine.high %v2796, %v2796
        %v2805 = vcombine.high %v2803, %v2803
        %v2806 = vcombine.high %v2726, %v2726
        %v2808 = vunpack.c.l.s4 1983009808
        %v2809 = vunpack.c.0.s8 %v2808
        %v2810 = vlaneseq
        %v2811 = vshrl.u32 %v2810, 7
        %v2812 = vsub.s32 %v2809, %v2811
        %v2813 = vrot.slane %v2726, %v2812
        %v2815 = vunpack.c.l.s4 1983009808
        %v2816 = vunpack.c.0.s8 %v2815
        %v2817 = vlaneseq
        %v2818 = vshrl.u32 %v2817, 7
        %v2819 = vsub.s32 %v2816, %v2818
        %v2820 = vrot.slane %v2806, %v2819
        %v2821 = vcombine.high %v2813, %v2813
        %v2822 = vcombine.high %v2820, %v2820
        %v2823 = vcombine.high %v2727, %v2727
        %v2825 = vunpack.c.l.s4 1983009808
        %v2826 = vunpack.c.0.s8 %v2825
        %v2827 = vlaneseq
        %v2828 = vshrl.u32 %v2827, 7
        %v2829 = vsub.s32 %v2826, %v2828
        %v2830 = vrot.slane %v2727, %v2829
        %v2832 = vunpack.c.l.s4 1983009808
        %v2833 = vunpack.c.0.s8 %v2832
        %v2834 = vlaneseq
        %v2835 = vshrl.u32 %v2834, 7
        %v2836 = vsub.s32 %v2833, %v2835
        %v2837 = vrot.slane %v2823, %v2836
        %v2838 = vcombine.high %v2830, %v2830
        %v2839 = vcombine.high %v2837, %v2837
        %v2840 = vcombine.high %v2728, %v2728
        %v2842 = vunpack.c.l.s4 1983009808
        %v2843 = vunpack.c.0.s8 %v2842
        %v2844 = vlaneseq
        %v2845 = vshrl.u32 %v2844, 7
        %v2846 = vsub.s32 %v2843, %v2845
        %v2847 = vrot.slane %v2728, %v2846
        %v2849 = vunpack.c.l.s4 1983009808
        %v2850 = vunpack.c.0.s8 %v2849
        %v2851 = vlaneseq
        %v2852 = vshrl.u32 %v2851, 7
        %v2853 = vsub.s32 %v2850, %v2852
        %v2854 = vrot.slane %v2840, %v2853
        %v2855 = vcombine.high %v2847, %v2847
        %v2856 = vcombine.high %v2854, %v2854
        %v2857 = vcombine.high %v2729, %v2729
        %v2859 = vunpack.c.l.s4 1983009808
        %v2860 = vunpack.c.0.s8 %v2859
        %v2861 = vlaneseq
        %v2862 = vshrl.u32 %v2861, 7
        %v2863 = vsub.s32 %v2860, %v2862
        %v2864 = vrot.slane %v2729, %v2863
        %v2866 = vunpack.c.l.s4 1983009808
        %v2867 = vunpack.c.0.s8 %v2866
        %v2868 = vlaneseq
        %v2869 = vshrl.u32 %v2868, 7
        %v2870 = vsub.s32 %v2867, %v2869
        %v2871 = vrot.slane %v2857, %v2870
        %v2872 = vcombine.high %v2864, %v2864
        %v2873 = vcombine.high %v2871, %v2871
        %v2874 = vcombine.high %v2730, %v2730
        %v2876 = vunpack.c.l.s4 1983009808
        %v2877 = vunpack.c.0.s8 %v2876
        %v2878 = vlaneseq
        %v2879 = vshrl.u32 %v2878, 7
        %v2880 = vsub.s32 %v2877, %v2879
        %v2881 = vrot.slane %v2730, %v2880
        %v2883 = vunpack.c.l.s4 1983009808
        %v2884 = vunpack.c.0.s8 %v2883
        %v2885 = vlaneseq
        %v2886 = vshrl.u32 %v2885, 7
        %v2887 = vsub.s32 %v2884, %v2886
        %v2888 = vrot.slane %v2874, %v2887
        %v2889 = vcombine.high %v2881, %v2881
        %v2890 = vcombine.high %v2888, %v2888
        %v2891 = vcombine.high %v2731, %v2731
        %v2893 = vunpack.c.l.s4 1983009808
        %v2894 = vunpack.c.0.s8 %v2893
        %v2895 = vlaneseq
        %v2896 = vshrl.u32 %v2895, 7
        %v2897 = vsub.s32 %v2894, %v2896
        %v2898 = vrot.slane %v2731, %v2897
        %v2900 = vunpack.c.l.s4 1983009808
        %v2901 = vunpack.c.0.s8 %v2900
        %v2902 = vlaneseq
        %v2903 = vshrl.u32 %v2902, 7
        %v2904 = vsub.s32 %v2901, %v2903
        %v2905 = vrot.slane %v2891, %v2904
        %v2906 = vcombine.high %v2898, %v2898
        %v2907 = vcombine.high %v2905, %v2905
        %v2908 = vcombine.high %v2732, %v2732
        %v2910 = vunpack.c.l.s4 1983009808
        %v2911 = vunpack.c.0.s8 %v2910
        %v2912 = vlaneseq
        %v2913 = vshrl.u32 %v2912, 7
        %v2914 = vsub.s32 %v2911, %v2913
        %v2915 = vrot.slane %v2732, %v2914
        %v2917 = vunpack.c.l.s4 1983009808
        %v2918 = vunpack.c.0.s8 %v2917
        %v2919 = vlaneseq
        %v2920 = vshrl.u32 %v2919, 7
        %v2921 = vsub.s32 %v2918, %v2920
        %v2922 = vrot.slane %v2908, %v2921
        %v2923 = vcombine.high %v2915, %v2915
        %v2924 = vcombine.high %v2922, %v2922
        %v2925 = vcombine.high %v2733, %v2733
        %v2927 = vunpack.c.l.s4 1983009808
        %v2928 = vunpack.c.0.s8 %v2927
        %v2929 = vlaneseq
        %v2930 = vshrl.u32 %v2929, 7
        %v2931 = vsub.s32 %v2928, %v2930
        %v2932 = vrot.slane %v2733, %v2931
        %v2934 = vunpack.c.l.s4 1983009808
        %v2935 = vunpack.c.0.s8 %v2934
        %v2936 = vlaneseq
        %v2937 = vshrl.u32 %v2936, 7
        %v2938 = vsub.s32 %v2935, %v2937
        %v2939 = vrot.slane %v2925, %v2938
        %v2940 = vcombine.high %v2932, %v2932
        %v2941 = vcombine.high %v2939, %v2939
        %v2942 = vcombine.high %v2734, %v2734
        %v2944 = vunpack.c.l.s4 1983009808
        %v2945 = vunpack.c.0.s8 %v2944
        %v2946 = vlaneseq
        %v2947 = vshrl.u32 %v2946, 7
        %v2948 = vsub.s32 %v2945, %v2947
        %v2949 = vrot.slane %v2734, %v2948
        %v2951 = vunpack.c.l.s4 1983009808
        %v2952 = vunpack.c.0.s8 %v2951
        %v2953 = vlaneseq
        %v2954 = vshrl.u32 %v2953, 7
        %v2955 = vsub.s32 %v2952, %v2954
        %v2956 = vrot.slane %v2942, %v2955
        %v2957 = vcombine.high %v2949, %v2949
        %v2958 = vcombine.high %v2956, %v2956
        %v2959 = vcombine.high %v2735, %v2735
        %v2961 = vunpack.c.l.s4 1983009808
        %v2962 = vunpack.c.0.s8 %v2961
        %v2963 = vlaneseq
        %v2964 = vshrl.u32 %v2963, 7
        %v2965 = vsub.s32 %v2962, %v2964
        %v2966 = vrot.slane %v2735, %v2965
        %v2968 = vunpack.c.l.s4 1983009808
        %v2969 = vunpack.c.0.s8 %v2968
        %v2970 = vlaneseq
        %v2971 = vshrl.u32 %v2970, 7
        %v2972 = vsub.s32 %v2969, %v2971
        %v2973 = vrot.slane %v2959, %v2972
        %v2974 = vcombine.high %v2966, %v2966
        %v2975 = vcombine.high %v2973, %v2973
        %v2976 = vcombine.high %v2736, %v2736
        %v2978 = vunpack.c.l.s4 1983009808
        %v2979 = vunpack.c.0.s8 %v2978
        %v2980 = vlaneseq
        %v2981 = vshrl.u32 %v2980, 7
        %v2982 = vsub.s32 %v2979, %v2981
        %v2983 = vrot.slane %v2736, %v2982
        %v2985 = vunpack.c.l.s4 1983009808
        %v2986 = vunpack.c.0.s8 %v2985
        %v2987 = vlaneseq
        %v2988 = vshrl.u32 %v2987, 7
        %v2989 = vsub.s32 %v2986, %v2988
        %v2990 = vrot.slane %v2976, %v2989
        %v2991 = vcombine.high %v2983, %v2983
        %v2992 = vcombine.high %v2990, %v2990
        %v2993 = vcombine.high %v2737, %v2737
        %v2995 = vunpack.c.l.s4 1983009808
        %v2996 = vunpack.c.0.s8 %v2995
        %v2997 = vlaneseq
        %v2998 = vshrl.u32 %v2997, 7
        %v2999 = vsub.s32 %v2996, %v2998
        %v3000 = vrot.slane %v2737, %v2999
        %v3002 = vunpack.c.l.s4 1983009808
        %v3003 = vunpack.c.0.s8 %v3002
        %v3004 = vlaneseq
        %v3005 = vshrl.u32 %v3004, 7
        %v3006 = vsub.s32 %v3003, %v3005
        %v3007 = vrot.slane %v2993, %v3006
        %v3008 = vcombine.high %v3000, %v3000
        %v3009 = vcombine.high %v3007, %v3007
        %v3010 = vcombine.high %v2738, %v2738
        %v3012 = vunpack.c.l.s4 1983009808
        %v3013 = vunpack.c.0.s8 %v3012
        %v3014 = vlaneseq
        %v3015 = vshrl.u32 %v3014, 7
        %v3016 = vsub.s32 %v3013, %v3015
        %v3017 = vrot.slane %v2738, %v3016
        %v3019 = vunpack.c.l.s4 1983009808
        %v3020 = vunpack.c.0.s8 %v3019
        %v3021 = vlaneseq
        %v3022 = vshrl.u32 %v3021, 7
        %v3023 = vsub.s32 %v3020, %v3022
        %v3024 = vrot.slane %v3010, %v3023
        %v3025 = vcombine.high %v3017, %v3017
        %v3026 = vcombine.high %v3024, %v3024
        %v3027 = vcombine.high %v2739, %v2739
        %v3029 = vunpack.c.l.s4 1983009808
        %v3030 = vunpack.c.0.s8 %v3029
        %v3031 = vlaneseq
        %v3032 = vshrl.u32 %v3031, 7
        %v3033 = vsub.s32 %v3030, %v3032
        %v3034 = vrot.slane %v2739, %v3033
        %v3036 = vunpack.c.l.s4 1983009808
        %v3037 = vunpack.c.0.s8 %v3036
        %v3038 = vlaneseq
        %v3039 = vshrl.u32 %v3038, 7
        %v3040 = vsub.s32 %v3037, %v3039
        %v3041 = vrot.slane %v3027, %v3040
        %v3042 = vcombine.high %v3034, %v3034
        %v3043 = vcombine.high %v3041, %v3041
        %v3044 = vcombine.high %v2740, %v2740
        %v3046 = vunpack.c.l.s4 1983009808
        %v3047 = vunpack.c.0.s8 %v3046
        %v3048 = vlaneseq
        %v3049 = vshrl.u32 %v3048, 7
        %v3050 = vsub.s32 %v3047, %v3049
        %v3051 = vrot.slane %v2740, %v3050
        %v3053 = vunpack.c.l.s4 1983009808
        %v3054 = vunpack.c.0.s8 %v3053
        %v3055 = vlaneseq
        %v3056 = vshrl.u32 %v3055, 7
        %v3057 = vsub.s32 %v3054, %v3056
        %v3058 = vrot.slane %v3044, %v3057
        %v3059 = vcombine.high %v3051, %v3051
        %v3060 = vcombine.high %v3058, %v3058
        %v3061 = vcombine.high %v2741, %v2741
        %v3063 = vunpack.c.l.s4 1983009808
        %v3064 = vunpack.c.0.s8 %v3063
        %v3065 = vlaneseq
        %v3066 = vshrl.u32 %v3065, 7
        %v3067 = vsub.s32 %v3064, %v3066
        %v3068 = vrot.slane %v2741, %v3067
        %v3070 = vunpack.c.l.s4 1983009808
        %v3071 = vunpack.c.0.s8 %v3070
        %v3072 = vlaneseq
        %v3073 = vshrl.u32 %v3072, 7
        %v3074 = vsub.s32 %v3071, %v3073
        %v3075 = vrot.slane %v3061, %v3074
        %v3076 = vcombine.high %v3068, %v3068
        %v3077 = vcombine.high %v3075, %v3075
        %v3078 = vcombine.high %v2742, %v2742
        %v3080 = vunpack.c.l.s4 1983009808
        %v3081 = vunpack.c.0.s8 %v3080
        %v3082 = vlaneseq
        %v3083 = vshrl.u32 %v3082, 7
        %v3084 = vsub.s32 %v3081, %v3083
        %v3085 = vrot.slane %v2742, %v3084
        %v3087 = vunpack.c.l.s4 1983009808
        %v3088 = vunpack.c.0.s8 %v3087
        %v3089 = vlaneseq
        %v3090 = vshrl.u32 %v3089, 7
        %v3091 = vsub.s32 %v3088, %v3090
        %v3092 = vrot.slane %v3078, %v3091
        %v3093 = vcombine.high %v3085, %v3085
        %v3094 = vcombine.high %v3092, %v3092
        %v3095 = vcombine.high %v2743, %v2743
        %v3097 = vunpack.c.l.s4 1983009808
        %v3098 = vunpack.c.0.s8 %v3097
        %v3099 = vlaneseq
        %v3100 = vshrl.u32 %v3099, 7
        %v3101 = vsub.s32 %v3098, %v3100
        %v3102 = vrot.slane %v2743, %v3101
        %v3104 = vunpack.c.l.s4 1983009808
        %v3105 = vunpack.c.0.s8 %v3104
        %v3106 = vlaneseq
        %v3107 = vshrl.u32 %v3106, 7
        %v3108 = vsub.s32 %v3105, %v3107
        %v3109 = vrot.slane %v3095, %v3108
        %v3110 = vcombine.high %v3102, %v3102
        %v3111 = vcombine.high %v3109, %v3109
        %v3112 = vcombine.high %v2744, %v2744
        %v3114 = vunpack.c.l.s4 1983009808
        %v3115 = vunpack.c.0.s8 %v3114
        %v3116 = vlaneseq
        %v3117 = vshrl.u32 %v3116, 7
        %v3118 = vsub.s32 %v3115, %v3117
        %v3119 = vrot.slane %v2744, %v3118
        %v3121 = vunpack.c.l.s4 1983009808
        %v3122 = vunpack.c.0.s8 %v3121
        %v3123 = vlaneseq
        %v3124 = vshrl.u32 %v3123, 7
        %v3125 = vsub.s32 %v3122, %v3124
        %v3126 = vrot.slane %v3112, %v3125
        %v3127 = vcombine.high %v3119, %v3119
        %v3128 = vcombine.high %v3126, %v3126
        %v3129 = vcombine.high %v2745, %v2745
        %v3131 = vunpack.c.l.s4 1983009808
        %v3132 = vunpack.c.0.s8 %v3131
        %v3133 = vlaneseq
        %v3134 = vshrl.u32 %v3133, 7
        %v3135 = vsub.s32 %v3132, %v3134
        %v3136 = vrot.slane %v2745, %v3135
        %v3138 = vunpack.c.l.s4 1983009808
        %v3139 = vunpack.c.0.s8 %v3138
        %v3140 = vlaneseq
        %v3141 = vshrl.u32 %v3140, 7
        %v3142 = vsub.s32 %v3139, %v3141
        %v3143 = vrot.slane %v3129, %v3142
        %v3144 = vcombine.high %v3136, %v3136
        %v3145 = vcombine.high %v3143, %v3143
        %v3146 = vcombine.high %v2746, %v2746
        %v3148 = vunpack.c.l.s4 1983009808
        %v3149 = vunpack.c.0.s8 %v3148
        %v3150 = vlaneseq
        %v3151 = vshrl.u32 %v3150, 7
        %v3152 = vsub.s32 %v3149, %v3151
        %v3153 = vrot.slane %v2746, %v3152
        %v3155 = vunpack.c.l.s4 1983009808
        %v3156 = vunpack.c.0.s8 %v3155
        %v3157 = vlaneseq
        %v3158 = vshrl.u32 %v3157, 7
        %v3159 = vsub.s32 %v3156, %v3158
        %v3160 = vrot.slane %v3146, %v3159
        %v3161 = vcombine.high %v3153, %v3153
        %v3162 = vcombine.high %v3160, %v3160
        %v3163 = vcombine.high %v2747, %v2747
        %v3165 = vunpack.c.l.s4 1983009808
        %v3166 = vunpack.c.0.s8 %v3165
        %v3167 = vlaneseq
        %v3168 = vshrl.u32 %v3167, 7
        %v3169 = vsub.s32 %v3166, %v3168
        %v3170 = vrot.slane %v2747, %v3169
        %v3172 = vunpack.c.l.s4 1983009808
        %v3173 = vunpack.c.0.s8 %v3172
        %v3174 = vlaneseq
        %v3175 = vshrl.u32 %v3174, 7
        %v3176 = vsub.s32 %v3173, %v3175
        %v3177 = vrot.slane %v3163, %v3176
        %v3178 = vcombine.high %v3170, %v3170
        %v3179 = vcombine.high %v3177, %v3177
        %v3180 = vcombine.high %v2748, %v2748
        %v3182 = vunpack.c.l.s4 1983009808
        %v3183 = vunpack.c.0.s8 %v3182
        %v3184 = vlaneseq
        %v3185 = vshrl.u32 %v3184, 7
        %v3186 = vsub.s32 %v3183, %v3185
        %v3187 = vrot.slane %v2748, %v3186
        %v3189 = vunpack.c.l.s4 1983009808
        %v3190 = vunpack.c.0.s8 %v3189
        %v3191 = vlaneseq
        %v3192 = vshrl.u32 %v3191, 7
        %v3193 = vsub.s32 %v3190, %v3192
        %v3194 = vrot.slane %v3180, %v3193
        %v3195 = vcombine.high %v3187, %v3187
        %v3196 = vcombine.high %v3194, %v3194
        %v3197 = vcombine.high %v2749, %v2749
        %v3199 = vunpack.c.l.s4 1983009808
        %v3200 = vunpack.c.0.s8 %v3199
        %v3201 = vlaneseq
        %v3202 = vshrl.u32 %v3201, 7
        %v3203 = vsub.s32 %v3200, %v3202
        %v3204 = vrot.slane %v2749, %v3203
        %v3206 = vunpack.c.l.s4 1983009808
        %v3207 = vunpack.c.0.s8 %v3206
        %v3208 = vlaneseq
        %v3209 = vshrl.u32 %v3208, 7
        %v3210 = vsub.s32 %v3207, %v3209
        %v3211 = vrot.slane %v3197, %v3210
        %v3212 = vcombine.high %v3204, %v3204
        %v3213 = vcombine.high %v3211, %v3211
        %v3214 = vcombine.high %v2750, %v2750
        %v3216 = vunpack.c.l.s4 1983009808
        %v3217 = vunpack.c.0.s8 %v3216
        %v3218 = vlaneseq
        %v3219 = vshrl.u32 %v3218, 7
        %v3220 = vsub.s32 %v3217, %v3219
        %v3221 = vrot.slane %v2750, %v3220
        %v3223 = vunpack.c.l.s4 1983009808
        %v3224 = vunpack.c.0.s8 %v3223
        %v3225 = vlaneseq
        %v3226 = vshrl.u32 %v3225, 7
        %v3227 = vsub.s32 %v3224, %v3226
        %v3228 = vrot.slane %v3214, %v3227
        %v3229 = vcombine.high %v3221, %v3221
        %v3230 = vcombine.high %v3228, %v3228
        %v3231 = vcombine.high %v2751, %v2751
        %v3233 = vunpack.c.l.s4 1983009808
        %v3234 = vunpack.c.0.s8 %v3233
        %v3235 = vlaneseq
        %v3236 = vshrl.u32 %v3235, 7
        %v3237 = vsub.s32 %v3234, %v3236
        %v3238 = vrot.slane %v2751, %v3237
        %v3240 = vunpack.c.l.s4 1983009808
        %v3241 = vunpack.c.0.s8 %v3240
        %v3242 = vlaneseq
        %v3243 = vshrl.u32 %v3242, 7
        %v3244 = vsub.s32 %v3241, %v3243
        %v3245 = vrot.slane %v3231, %v3244
        %v3246 = vcombine.high %v3238, %v3238
        %v3247 = vcombine.high %v3245, %v3245
        %v3248 = vcombine.high %v2752, %v2752
        %v3250 = vunpack.c.l.s4 1983009808
        %v3251 = vunpack.c.0.s8 %v3250
        %v3252 = vlaneseq
        %v3253 = vshrl.u32 %v3252, 7
        %v3254 = vsub.s32 %v3251, %v3253
        %v3255 = vrot.slane %v2752, %v3254
        %v3257 = vunpack.c.l.s4 1983009808
        %v3258 = vunpack.c.0.s8 %v3257
        %v3259 = vlaneseq
        %v3260 = vshrl.u32 %v3259, 7
        %v3261 = vsub.s32 %v3258, %v3260
        %v3262 = vrot.slane %v3248, %v3261
        %v3263 = vcombine.high %v3255, %v3255
        %v3264 = vcombine.high %v3262, %v3262
        %v3265 = vcombine.high %v2753, %v2753
        %v3267 = vunpack.c.l.s4 1983009808
        %v3268 = vunpack.c.0.s8 %v3267
        %v3269 = vlaneseq
        %v3270 = vshrl.u32 %v3269, 7
        %v3271 = vsub.s32 %v3268, %v3270
        %v3272 = vrot.slane %v2753, %v3271
        %v3274 = vunpack.c.l.s4 1983009808
        %v3275 = vunpack.c.0.s8 %v3274
        %v3276 = vlaneseq
        %v3277 = vshrl.u32 %v3276, 7
        %v3278 = vsub.s32 %v3275, %v3277
        %v3279 = vrot.slane %v3265, %v3278
        %v3280 = vcombine.high %v3272, %v3272
        %v3281 = vcombine.high %v3279, %v3279
        %v3282 = vcombine.high %v2754, %v2754
        %v3284 = vunpack.c.l.s4 1983009808
        %v3285 = vunpack.c.0.s8 %v3284
        %v3286 = vlaneseq
        %v3287 = vshrl.u32 %v3286, 7
        %v3288 = vsub.s32 %v3285, %v3287
        %v3289 = vrot.slane %v2754, %v3288
        %v3291 = vunpack.c.l.s4 1983009808
        %v3292 = vunpack.c.0.s8 %v3291
        %v3293 = vlaneseq
        %v3294 = vshrl.u32 %v3293, 7
        %v3295 = vsub.s32 %v3292, %v3294
        %v3296 = vrot.slane %v3282, %v3295
        %v3297 = vcombine.high %v3289, %v3289
        %v3298 = vcombine.high %v3296, %v3296
        %v3299 = vcombine.high %v2755, %v2755
        %v3301 = vunpack.c.l.s4 1983009808
        %v3302 = vunpack.c.0.s8 %v3301
        %v3303 = vlaneseq
        %v3304 = vshrl.u32 %v3303, 7
        %v3305 = vsub.s32 %v3302, %v3304
        %v3306 = vrot.slane %v2755, %v3305
        %v3308 = vunpack.c.l.s4 1983009808
        %v3309 = vunpack.c.0.s8 %v3308
        %v3310 = vlaneseq
        %v3311 = vshrl.u32 %v3310, 7
        %v3312 = vsub.s32 %v3309, %v3311
        %v3313 = vrot.slane %v3299, %v3312
        %v3314 = vcombine.high %v3306, %v3306
        %v3315 = vcombine.high %v3313, %v3313
        %v3316 = vcombine.high %v2756, %v2756
        %v3318 = vunpack.c.l.s4 1983009808
        %v3319 = vunpack.c.0.s8 %v3318
        %v3320 = vlaneseq
        %v3321 = vshrl.u32 %v3320, 7
        %v3322 = vsub.s32 %v3319, %v3321
        %v3323 = vrot.slane %v2756, %v3322
        %v3325 = vunpack.c.l.s4 1983009808
        %v3326 = vunpack.c.0.s8 %v3325
        %v3327 = vlaneseq
        %v3328 = vshrl.u32 %v3327, 7
        %v3329 = vsub.s32 %v3326, %v3328
        %v3330 = vrot.slane %v3316, %v3329
        %v3331 = vcombine.high %v3323, %v3323
        %v3332 = vcombine.high %v3330, %v3330
        %vm3461 = vcmask 25600
        %v3462 = vsel %vm3461, %v2796, -inf
        %v3463 = vrot.slane %v3462, 4
        %v3464 = vmax.f32 %v3462, %v3463
        %v3465 = vrot.slane %v3464, 2
        %v3466 = vmax.f32 %v3464, %v3465
        %v3467 = vrot.slane %v3466, 1
        %v3468 = vmax.f32 %v3466, %v3467
        %v3469 = vsel %vm3461, %v2804, -inf
        %v3470 = vrot.slane %v3469, 4
        %v3471 = vmax.f32 %v3469, %v3470
        %v3472 = vrot.slane %v3471, 2
        %v3473 = vmax.f32 %v3471, %v3472
        %v3474 = vrot.slane %v3473, 1
        %v3475 = vmax.f32 %v3473, %v3474
        %v3476 = vsel %vm3461, %v2803, -inf
        %v3477 = vrot.slane %v3476, 4
        %v3478 = vmax.f32 %v3476, %v3477
        %v3479 = vrot.slane %v3478, 2
        %v3480 = vmax.f32 %v3478, %v3479
        %v3481 = vrot.slane %v3480, 1
        %v3482 = vmax.f32 %v3480, %v3481
        %v3483 = vsel %vm3461, %v2805, -inf
        %v3484 = vrot.slane %v3483, 4
        %v3485 = vmax.f32 %v3483, %v3484
        %v3486 = vrot.slane %v3485, 2
        %v3487 = vmax.f32 %v3485, %v3486
        %v3488 = vrot.slane %v3487, 1
        %v3489 = vmax.f32 %v3487, %v3488
        %v3490 = vsel %vm3461, %v2813, -inf
        %v3491 = vrot.slane %v3490, 4
        %v3492 = vmax.f32 %v3490, %v3491
        %v3493 = vrot.slane %v3492, 2
        %v3494 = vmax.f32 %v3492, %v3493
        %v3495 = vrot.slane %v3494, 1
        %v3496 = vmax.f32 %v3494, %v3495
        %v3497 = vsel %vm3461, %v2821, -inf
        %v3498 = vrot.slane %v3497, 4
        %v3499 = vmax.f32 %v3497, %v3498
        %v3500 = vrot.slane %v3499, 2
        %v3501 = vmax.f32 %v3499, %v3500
        %v3502 = vrot.slane %v3501, 1
        %v3503 = vmax.f32 %v3501, %v3502
        %v3504 = vsel %vm3461, %v2820, -inf
        %v3505 = vrot.slane %v3504, 4
        %v3506 = vmax.f32 %v3504, %v3505
        %v3507 = vrot.slane %v3506, 2
        %v3508 = vmax.f32 %v3506, %v3507
        %v3509 = vrot.slane %v3508, 1
        %v3510 = vmax.f32 %v3508, %v3509
        %v3511 = vsel %vm3461, %v2822, -inf
        %v3512 = vrot.slane %v3511, 4
        %v3513 = vmax.f32 %v3511, %v3512
        %v3514 = vrot.slane %v3513, 2
        %v3515 = vmax.f32 %v3513, %v3514
        %v3516 = vrot.slane %v3515, 1
        %v3517 = vmax.f32 %v3515, %v3516
        %v3518 = vsel %vm3461, %v2830, -inf
        %v3519 = vrot.slane %v3518, 4
        %v3520 = vmax.f32 %v3518, %v3519
        %v3521 = vrot.slane %v3520, 2
        %v3522 = vmax.f32 %v3520, %v3521
        %v3523 = vrot.slane %v3522, 1
        %v3524 = vmax.f32 %v3522, %v3523
        %v3525 = vsel %vm3461, %v2838, -inf
        %v3526 = vrot.slane %v3525, 4
        %v3527 = vmax.f32 %v3525, %v3526
        %v3528 = vrot.slane %v3527, 2
        %v3529 = vmax.f32 %v3527, %v3528
        %v3530 = vrot.slane %v3529, 1
        %v3531 = vmax.f32 %v3529, %v3530
        %v3532 = vsel %vm3461, %v2837, -inf
        %v3533 = vrot.slane %v3532, 4
        %v3534 = vmax.f32 %v3532, %v3533
        %v3535 = vrot.slane %v3534, 2
        %v3536 = vmax.f32 %v3534, %v3535
        %v3537 = vrot.slane %v3536, 1
        %v3538 = vmax.f32 %v3536, %v3537
        %v3539 = vsel %vm3461, %v2839, -inf
        %v3540 = vrot.slane %v3539, 4
        %v3541 = vmax.f32 %v3539, %v3540
        %v3542 = vrot.slane %v3541, 2
        %v3543 = vmax.f32 %v3541, %v3542
        %v3544 = vrot.slane %v3543, 1
        %v3545 = vmax.f32 %v3543, %v3544
        %v3546 = vsel %vm3461, %v2847, -inf
        %v3547 = vrot.slane %v3546, 4
        %v3548 = vmax.f32 %v3546, %v3547
        %v3549 = vrot.slane %v3548, 2
        %v3550 = vmax.f32 %v3548, %v3549
        %v3551 = vrot.slane %v3550, 1
        %v3552 = vmax.f32 %v3550, %v3551
        %v3553 = vsel %vm3461, %v2855, -inf
        %v3554 = vrot.slane %v3553, 4
        %v3555 = vmax.f32 %v3553, %v3554
        %v3556 = vrot.slane %v3555, 2
        %v3557 = vmax.f32 %v3555, %v3556
        %v3558 = vrot.slane %v3557, 1
        %v3559 = vmax.f32 %v3557, %v3558
        %v3560 = vsel %vm3461, %v2854, -inf
        %v3561 = vrot.slane %v3560, 4
        %v3562 = vmax.f32 %v3560, %v3561
        %v3563 = vrot.slane %v3562, 2
        %v3564 = vmax.f32 %v3562, %v3563
        %v3565 = vrot.slane %v3564, 1
        %v3566 = vmax.f32 %v3564, %v3565
        %v3567 = vsel %vm3461, %v2856, -inf
        %v3568 = vrot.slane %v3567, 4
        %v3569 = vmax.f32 %v3567, %v3568
        %v3570 = vrot.slane %v3569, 2
        %v3571 = vmax.f32 %v3569, %v3570
        %v3572 = vrot.slane %v3571, 1
        %v3573 = vmax.f32 %v3571, %v3572
        %v3574 = vsel %vm3461, %v2864, -inf
        %v3575 = vrot.slane %v3574, 4
        %v3576 = vmax.f32 %v3574, %v3575
        %v3577 = vrot.slane %v3576, 2
        %v3578 = vmax.f32 %v3576, %v3577
        %v3579 = vrot.slane %v3578, 1
        %v3580 = vmax.f32 %v3578, %v3579
        %v3581 = vsel %vm3461, %v2872, -inf
        %v3582 = vrot.slane %v3581, 4
        %v3583 = vmax.f32 %v3581, %v3582
        %v3584 = vrot.slane %v3583, 2
        %v3585 = vmax.f32 %v3583, %v3584
        %v3586 = vrot.slane %v3585, 1
        %v3587 = vmax.f32 %v3585, %v3586
        %v3588 = vsel %vm3461, %v2871, -inf
        %v3589 = vrot.slane %v3588, 4
        %v3590 = vmax.f32 %v3588, %v3589
        %v3591 = vrot.slane %v3590, 2
        %v3592 = vmax.f32 %v3590, %v3591
        %v3593 = vrot.slane %v3592, 1
        %v3594 = vmax.f32 %v3592, %v3593
        %v3595 = vsel %vm3461, %v2873, -inf
        %v3596 = vrot.slane %v3595, 4
        %v3597 = vmax.f32 %v3595, %v3596
        %v3598 = vrot.slane %v3597, 2
        %v3599 = vmax.f32 %v3597, %v3598
        %v3600 = vrot.slane %v3599, 1
        %v3601 = vmax.f32 %v3599, %v3600
        %v3602 = vsel %vm3461, %v2881, -inf
        %v3603 = vrot.slane %v3602, 4
        %v3604 = vmax.f32 %v3602, %v3603
        %v3605 = vrot.slane %v3604, 2
        %v3606 = vmax.f32 %v3604, %v3605
        %v3607 = vrot.slane %v3606, 1
        %v3608 = vmax.f32 %v3606, %v3607
        %v3609 = vsel %vm3461, %v2889, -inf
        %v3610 = vrot.slane %v3609, 4
        %v3611 = vmax.f32 %v3609, %v3610
        %v3612 = vrot.slane %v3611, 2
        %v3613 = vmax.f32 %v3611, %v3612
        %v3614 = vrot.slane %v3613, 1
        %v3615 = vmax.f32 %v3613, %v3614
        %v3616 = vsel %vm3461, %v2888, -inf
        %v3617 = vrot.slane %v3616, 4
        %v3618 = vmax.f32 %v3616, %v3617
        %v3619 = vrot.slane %v3618, 2
        %v3620 = vmax.f32 %v3618, %v3619
        %v3621 = vrot.slane %v3620, 1
        %v3622 = vmax.f32 %v3620, %v3621
        %v3623 = vsel %vm3461, %v2890, -inf
        %v3624 = vrot.slane %v3623, 4
        %v3625 = vmax.f32 %v3623, %v3624
        %v3626 = vrot.slane %v3625, 2
        %v3627 = vmax.f32 %v3625, %v3626
        %v3628 = vrot.slane %v3627, 1
        %v3629 = vmax.f32 %v3627, %v3628
        %v3630 = vsel %vm3461, %v2898, -inf
        %v3631 = vrot.slane %v3630, 4
        %v3632 = vmax.f32 %v3630, %v3631
        %v3633 = vrot.slane %v3632, 2
        %v3634 = vmax.f32 %v3632, %v3633
        %v3635 = vrot.slane %v3634, 1
        %v3636 = vmax.f32 %v3634, %v3635
        %v3637 = vsel %vm3461, %v2906, -inf
        %v3638 = vrot.slane %v3637, 4
        %v3639 = vmax.f32 %v3637, %v3638
        %v3640 = vrot.slane %v3639, 2
        %v3641 = vmax.f32 %v3639, %v3640
        %v3642 = vrot.slane %v3641, 1
        %v3643 = vmax.f32 %v3641, %v3642
        %v3644 = vsel %vm3461, %v2905, -inf
        %v3645 = vrot.slane %v3644, 4
        %v3646 = vmax.f32 %v3644, %v3645
        %v3647 = vrot.slane %v3646, 2
        %v3648 = vmax.f32 %v3646, %v3647
        %v3649 = vrot.slane %v3648, 1
        %v3650 = vmax.f32 %v3648, %v3649
        %v3651 = vsel %vm3461, %v2907, -inf
        %v3652 = vrot.slane %v3651, 4
        %v3653 = vmax.f32 %v3651, %v3652
        %v3654 = vrot.slane %v3653, 2
        %v3655 = vmax.f32 %v3653, %v3654
        %v3656 = vrot.slane %v3655, 1
        %v3657 = vmax.f32 %v3655, %v3656
        %v3658 = vsel %vm3461, %v2915, -inf
        %v3659 = vrot.slane %v3658, 4
        %v3660 = vmax.f32 %v3658, %v3659
        %v3661 = vrot.slane %v3660, 2
        %v3662 = vmax.f32 %v3660, %v3661
        %v3663 = vrot.slane %v3662, 1
        %v3664 = vmax.f32 %v3662, %v3663
        %v3665 = vsel %vm3461, %v2923, -inf
        %v3666 = vrot.slane %v3665, 4
        %v3667 = vmax.f32 %v3665, %v3666
        %v3668 = vrot.slane %v3667, 2
        %v3669 = vmax.f32 %v3667, %v3668
        %v3670 = vrot.slane %v3669, 1
        %v3671 = vmax.f32 %v3669, %v3670
        %v3672 = vsel %vm3461, %v2922, -inf
        %v3673 = vrot.slane %v3672, 4
        %v3674 = vmax.f32 %v3672, %v3673
        %v3675 = vrot.slane %v3674, 2
        %v3676 = vmax.f32 %v3674, %v3675
        %v3677 = vrot.slane %v3676, 1
        %v3678 = vmax.f32 %v3676, %v3677
        %v3679 = vsel %vm3461, %v2924, -inf
        %v3680 = vrot.slane %v3679, 4
        %v3681 = vmax.f32 %v3679, %v3680
        %v3682 = vrot.slane %v3681, 2
        %v3683 = vmax.f32 %v3681, %v3682
        %v3684 = vrot.slane %v3683, 1
        %v3685 = vmax.f32 %v3683, %v3684
        %v3686 = vsel %vm3461, %v2932, -inf
        %v3687 = vrot.slane %v3686, 4
        %v3688 = vmax.f32 %v3686, %v3687
        %v3689 = vrot.slane %v3688, 2
        %v3690 = vmax.f32 %v3688, %v3689
        %v3691 = vrot.slane %v3690, 1
        %v3692 = vmax.f32 %v3690, %v3691
        %v3693 = vsel %vm3461, %v2940, -inf
        %v3694 = vrot.slane %v3693, 4
        %v3695 = vmax.f32 %v3693, %v3694
        %v3696 = vrot.slane %v3695, 2
        %v3697 = vmax.f32 %v3695, %v3696
        %v3698 = vrot.slane %v3697, 1
        %v3699 = vmax.f32 %v3697, %v3698
        %v3700 = vsel %vm3461, %v2939, -inf
        %v3701 = vrot.slane %v3700, 4
        %v3702 = vmax.f32 %v3700, %v3701
        %v3703 = vrot.slane %v3702, 2
        %v3704 = vmax.f32 %v3702, %v3703
        %v3705 = vrot.slane %v3704, 1
        %v3706 = vmax.f32 %v3704, %v3705
        %v3707 = vsel %vm3461, %v2941, -inf
        %v3708 = vrot.slane %v3707, 4
        %v3709 = vmax.f32 %v3707, %v3708
        %v3710 = vrot.slane %v3709, 2
        %v3711 = vmax.f32 %v3709, %v3710
        %v3712 = vrot.slane %v3711, 1
        %v3713 = vmax.f32 %v3711, %v3712
        %v3714 = vsel %vm3461, %v2949, -inf
        %v3715 = vrot.slane %v3714, 4
        %v3716 = vmax.f32 %v3714, %v3715
        %v3717 = vrot.slane %v3716, 2
        %v3718 = vmax.f32 %v3716, %v3717
        %v3719 = vrot.slane %v3718, 1
        %v3720 = vmax.f32 %v3718, %v3719
        %v3721 = vsel %vm3461, %v2957, -inf
        %v3722 = vrot.slane %v3721, 4
        %v3723 = vmax.f32 %v3721, %v3722
        %v3724 = vrot.slane %v3723, 2
        %v3725 = vmax.f32 %v3723, %v3724
        %v3726 = vrot.slane %v3725, 1
        %v3727 = vmax.f32 %v3725, %v3726
        %v3728 = vsel %vm3461, %v2956, -inf
        %v3729 = vrot.slane %v3728, 4
        %v3730 = vmax.f32 %v3728, %v3729
        %v3731 = vrot.slane %v3730, 2
        %v3732 = vmax.f32 %v3730, %v3731
        %v3733 = vrot.slane %v3732, 1
        %v3734 = vmax.f32 %v3732, %v3733
        %v3735 = vsel %vm3461, %v2958, -inf
        %v3736 = vrot.slane %v3735, 4
        %v3737 = vmax.f32 %v3735, %v3736
        %v3738 = vrot.slane %v3737, 2
        %v3739 = vmax.f32 %v3737, %v3738
        %v3740 = vrot.slane %v3739, 1
        %v3741 = vmax.f32 %v3739, %v3740
        %v3742 = vsel %vm3461, %v2966, -inf
        %v3743 = vrot.slane %v3742, 4
        %v3744 = vmax.f32 %v3742, %v3743
        %v3745 = vrot.slane %v3744, 2
        %v3746 = vmax.f32 %v3744, %v3745
        %v3747 = vrot.slane %v3746, 1
        %v3748 = vmax.f32 %v3746, %v3747
        %v3749 = vsel %vm3461, %v2974, -inf
        %v3750 = vrot.slane %v3749, 4
        %v3751 = vmax.f32 %v3749, %v3750
        %v3752 = vrot.slane %v3751, 2
        %v3753 = vmax.f32 %v3751, %v3752
        %v3754 = vrot.slane %v3753, 1
        %v3755 = vmax.f32 %v3753, %v3754
        %v3756 = vsel %vm3461, %v2973, -inf
        %v3757 = vrot.slane %v3756, 4
        %v3758 = vmax.f32 %v3756, %v3757
        %v3759 = vrot.slane %v3758, 2
        %v3760 = vmax.f32 %v3758, %v3759
        %v3761 = vrot.slane %v3760, 1
        %v3762 = vmax.f32 %v3760, %v3761
        %v3763 = vsel %vm3461, %v2975, -inf
        %v3764 = vrot.slane %v3763, 4
        %v3765 = vmax.f32 %v3763, %v3764
        %v3766 = vrot.slane %v3765, 2
        %v3767 = vmax.f32 %v3765, %v3766
        %v3768 = vrot.slane %v3767, 1
        %v3769 = vmax.f32 %v3767, %v3768
        %v3770 = vsel %vm3461, %v2983, -inf
        %v3771 = vrot.slane %v3770, 4
        %v3772 = vmax.f32 %v3770, %v3771
        %v3773 = vrot.slane %v3772, 2
        %v3774 = vmax.f32 %v3772, %v3773
        %v3775 = vrot.slane %v3774, 1
        %v3776 = vmax.f32 %v3774, %v3775
        %v3777 = vsel %vm3461, %v2991, -inf
        %v3778 = vrot.slane %v3777, 4
        %v3779 = vmax.f32 %v3777, %v3778
        %v3780 = vrot.slane %v3779, 2
        %v3781 = vmax.f32 %v3779, %v3780
        %v3782 = vrot.slane %v3781, 1
        %v3783 = vmax.f32 %v3781, %v3782
        %v3784 = vsel %vm3461, %v2990, -inf
        %v3785 = vrot.slane %v3784, 4
        %v3786 = vmax.f32 %v3784, %v3785
        %v3787 = vrot.slane %v3786, 2
        %v3788 = vmax.f32 %v3786, %v3787
        %v3789 = vrot.slane %v3788, 1
        %v3790 = vmax.f32 %v3788, %v3789
        %v3791 = vsel %vm3461, %v2992, -inf
        %v3792 = vrot.slane %v3791, 4
        %v3793 = vmax.f32 %v3791, %v3792
        %v3794 = vrot.slane %v3793, 2
        %v3795 = vmax.f32 %v3793, %v3794
        %v3796 = vrot.slane %v3795, 1
        %v3797 = vmax.f32 %v3795, %v3796
        %v3798 = vsel %vm3461, %v3000, -inf
        %v3799 = vrot.slane %v3798, 4
        %v3800 = vmax.f32 %v3798, %v3799
        %v3801 = vrot.slane %v3800, 2
        %v3802 = vmax.f32 %v3800, %v3801
        %v3803 = vrot.slane %v3802, 1
        %v3804 = vmax.f32 %v3802, %v3803
        %v3805 = vsel %vm3461, %v3008, -inf
        %v3806 = vrot.slane %v3805, 4
        %v3807 = vmax.f32 %v3805, %v3806
        %v3808 = vrot.slane %v3807, 2
        %v3809 = vmax.f32 %v3807, %v3808
        %v3810 = vrot.slane %v3809, 1
        %v3811 = vmax.f32 %v3809, %v3810
        %v3812 = vsel %vm3461, %v3007, -inf
        %v3813 = vrot.slane %v3812, 4
        %v3814 = vmax.f32 %v3812, %v3813
        %v3815 = vrot.slane %v3814, 2
        %v3816 = vmax.f32 %v3814, %v3815
        %v3817 = vrot.slane %v3816, 1
        %v3818 = vmax.f32 %v3816, %v3817
        %v3819 = vsel %vm3461, %v3009, -inf
        %v3820 = vrot.slane %v3819, 4
        %v3821 = vmax.f32 %v3819, %v3820
        %v3822 = vrot.slane %v3821, 2
        %v3823 = vmax.f32 %v3821, %v3822
        %v3824 = vrot.slane %v3823, 1
        %v3825 = vmax.f32 %v3823, %v3824
        %v3826 = vsel %vm3461, %v3017, -inf
        %v3827 = vrot.slane %v3826, 4
        %v3828 = vmax.f32 %v3826, %v3827
        %v3829 = vrot.slane %v3828, 2
        %v3830 = vmax.f32 %v3828, %v3829
        %v3831 = vrot.slane %v3830, 1
        %v3832 = vmax.f32 %v3830, %v3831
        %v3833 = vsel %vm3461, %v3025, -inf
        %v3834 = vrot.slane %v3833, 4
        %v3835 = vmax.f32 %v3833, %v3834
        %v3836 = vrot.slane %v3835, 2
        %v3837 = vmax.f32 %v3835, %v3836
        %v3838 = vrot.slane %v3837, 1
        %v3839 = vmax.f32 %v3837, %v3838
        %v3840 = vsel %vm3461, %v3024, -inf
        %v3841 = vrot.slane %v3840, 4
        %v3842 = vmax.f32 %v3840, %v3841
        %v3843 = vrot.slane %v3842, 2
        %v3844 = vmax.f32 %v3842, %v3843
        %v3845 = vrot.slane %v3844, 1
        %v3846 = vmax.f32 %v3844, %v3845
        %v3847 = vsel %vm3461, %v3026, -inf
        %v3848 = vrot.slane %v3847, 4
        %v3849 = vmax.f32 %v3847, %v3848
        %v3850 = vrot.slane %v3849, 2
        %v3851 = vmax.f32 %v3849, %v3850
        %v3852 = vrot.slane %v3851, 1
        %v3853 = vmax.f32 %v3851, %v3852
        %v3854 = vsel %vm3461, %v3034, -inf
        %v3855 = vrot.slane %v3854, 4
        %v3856 = vmax.f32 %v3854, %v3855
        %v3857 = vrot.slane %v3856, 2
        %v3858 = vmax.f32 %v3856, %v3857
        %v3859 = vrot.slane %v3858, 1
        %v3860 = vmax.f32 %v3858, %v3859
        %v3861 = vsel %vm3461, %v3042, -inf
        %v3862 = vrot.slane %v3861, 4
        %v3863 = vmax.f32 %v3861, %v3862
        %v3864 = vrot.slane %v3863, 2
        %v3865 = vmax.f32 %v3863, %v3864
        %v3866 = vrot.slane %v3865, 1
        %v3867 = vmax.f32 %v3865, %v3866
        %v3868 = vsel %vm3461, %v3041, -inf
        %v3869 = vrot.slane %v3868, 4
        %v3870 = vmax.f32 %v3868, %v3869
        %v3871 = vrot.slane %v3870, 2
        %v3872 = vmax.f32 %v3870, %v3871
        %v3873 = vrot.slane %v3872, 1
        %v3874 = vmax.f32 %v3872, %v3873
        %v3875 = vsel %vm3461, %v3043, -inf
        %v3876 = vrot.slane %v3875, 4
        %v3877 = vmax.f32 %v3875, %v3876
        %v3878 = vrot.slane %v3877, 2
        %v3879 = vmax.f32 %v3877, %v3878
        %v3880 = vrot.slane %v3879, 1
        %v3881 = vmax.f32 %v3879, %v3880
        %v3882 = vsel %vm3461, %v3051, -inf
        %v3883 = vrot.slane %v3882, 4
        %v3884 = vmax.f32 %v3882, %v3883
        %v3885 = vrot.slane %v3884, 2
        %v3886 = vmax.f32 %v3884, %v3885
        %v3887 = vrot.slane %v3886, 1
        %v3888 = vmax.f32 %v3886, %v3887
        %v3889 = vsel %vm3461, %v3059, -inf
        %v3890 = vrot.slane %v3889, 4
        %v3891 = vmax.f32 %v3889, %v3890
        %v3892 = vrot.slane %v3891, 2
        %v3893 = vmax.f32 %v3891, %v3892
        %v3894 = vrot.slane %v3893, 1
        %v3895 = vmax.f32 %v3893, %v3894
        %v3896 = vsel %vm3461, %v3058, -inf
        %v3897 = vrot.slane %v3896, 4
        %v3898 = vmax.f32 %v3896, %v3897
        %v3899 = vrot.slane %v3898, 2
        %v3900 = vmax.f32 %v3898, %v3899
        %v3901 = vrot.slane %v3900, 1
        %v3902 = vmax.f32 %v3900, %v3901
        %v3903 = vsel %vm3461, %v3060, -inf
        %v3904 = vrot.slane %v3903, 4
        %v3905 = vmax.f32 %v3903, %v3904
        %v3906 = vrot.slane %v3905, 2
        %v3907 = vmax.f32 %v3905, %v3906
        %v3908 = vrot.slane %v3907, 1
        %v3909 = vmax.f32 %v3907, %v3908
        %v3910 = vsel %vm3461, %v3068, -inf
        %v3911 = vrot.slane %v3910, 4
        %v3912 = vmax.f32 %v3910, %v3911
        %v3913 = vrot.slane %v3912, 2
        %v3914 = vmax.f32 %v3912, %v3913
        %v3915 = vrot.slane %v3914, 1
        %v3916 = vmax.f32 %v3914, %v3915
        %v3917 = vsel %vm3461, %v3076, -inf
        %v3918 = vrot.slane %v3917, 4
        %v3919 = vmax.f32 %v3917, %v3918
        %v3920 = vrot.slane %v3919, 2
        %v3921 = vmax.f32 %v3919, %v3920
        %v3922 = vrot.slane %v3921, 1
        %v3923 = vmax.f32 %v3921, %v3922
        %v3924 = vsel %vm3461, %v3075, -inf
        %v3925 = vrot.slane %v3924, 4
        %v3926 = vmax.f32 %v3924, %v3925
        %v3927 = vrot.slane %v3926, 2
        %v3928 = vmax.f32 %v3926, %v3927
        %v3929 = vrot.slane %v3928, 1
        %v3930 = vmax.f32 %v3928, %v3929
        %v3931 = vsel %vm3461, %v3077, -inf
        %v3932 = vrot.slane %v3931, 4
        %v3933 = vmax.f32 %v3931, %v3932
        %v3934 = vrot.slane %v3933, 2
        %v3935 = vmax.f32 %v3933, %v3934
        %v3936 = vrot.slane %v3935, 1
        %v3937 = vmax.f32 %v3935, %v3936
        %v3938 = vsel %vm3461, %v3085, -inf
        %v3939 = vrot.slane %v3938, 4
        %v3940 = vmax.f32 %v3938, %v3939
        %v3941 = vrot.slane %v3940, 2
        %v3942 = vmax.f32 %v3940, %v3941
        %v3943 = vrot.slane %v3942, 1
        %v3944 = vmax.f32 %v3942, %v3943
        %v3945 = vsel %vm3461, %v3093, -inf
        %v3946 = vrot.slane %v3945, 4
        %v3947 = vmax.f32 %v3945, %v3946
        %v3948 = vrot.slane %v3947, 2
        %v3949 = vmax.f32 %v3947, %v3948
        %v3950 = vrot.slane %v3949, 1
        %v3951 = vmax.f32 %v3949, %v3950
        %v3952 = vsel %vm3461, %v3092, -inf
        %v3953 = vrot.slane %v3952, 4
        %v3954 = vmax.f32 %v3952, %v3953
        %v3955 = vrot.slane %v3954, 2
        %v3956 = vmax.f32 %v3954, %v3955
        %v3957 = vrot.slane %v3956, 1
        %v3958 = vmax.f32 %v3956, %v3957
        %v3959 = vsel %vm3461, %v3094, -inf
        %v3960 = vrot.slane %v3959, 4
        %v3961 = vmax.f32 %v3959, %v3960
        %v3962 = vrot.slane %v3961, 2
        %v3963 = vmax.f32 %v3961, %v3962
        %v3964 = vrot.slane %v3963, 1
        %v3965 = vmax.f32 %v3963, %v3964
        %v3966 = vsel %vm3461, %v3102, -inf
        %v3967 = vrot.slane %v3966, 4
        %v3968 = vmax.f32 %v3966, %v3967
        %v3969 = vrot.slane %v3968, 2
        %v3970 = vmax.f32 %v3968, %v3969
        %v3971 = vrot.slane %v3970, 1
        %v3972 = vmax.f32 %v3970, %v3971
        %v3973 = vsel %vm3461, %v3110, -inf
        %v3974 = vrot.slane %v3973, 4
        %v3975 = vmax.f32 %v3973, %v3974
        %v3976 = vrot.slane %v3975, 2
        %v3977 = vmax.f32 %v3975, %v3976
        %v3978 = vrot.slane %v3977, 1
        %v3979 = vmax.f32 %v3977, %v3978
        %v3980 = vsel %vm3461, %v3109, -inf
        %v3981 = vrot.slane %v3980, 4
        %v3982 = vmax.f32 %v3980, %v3981
        %v3983 = vrot.slane %v3982, 2
        %v3984 = vmax.f32 %v3982, %v3983
        %v3985 = vrot.slane %v3984, 1
        %v3986 = vmax.f32 %v3984, %v3985
        %v3987 = vsel %vm3461, %v3111, -inf
        %v3988 = vrot.slane %v3987, 4
        %v3989 = vmax.f32 %v3987, %v3988
        %v3990 = vrot.slane %v3989, 2
        %v3991 = vmax.f32 %v3989, %v3990
        %v3992 = vrot.slane %v3991, 1
        %v3993 = vmax.f32 %v3991, %v3992
        %v3994 = vsel %vm3461, %v3119, -inf
        %v3995 = vrot.slane %v3994, 4
        %v3996 = vmax.f32 %v3994, %v3995
        %v3997 = vrot.slane %v3996, 2
        %v3998 = vmax.f32 %v3996, %v3997
        %v3999 = vrot.slane %v3998, 1
        %v4000 = vmax.f32 %v3998, %v3999
        %v4001 = vsel %vm3461, %v3127, -inf
        %v4002 = vrot.slane %v4001, 4
        %v4003 = vmax.f32 %v4001, %v4002
        %v4004 = vrot.slane %v4003, 2
        %v4005 = vmax.f32 %v4003, %v4004
        %v4006 = vrot.slane %v4005, 1
        %v4007 = vmax.f32 %v4005, %v4006
        %v4008 = vsel %vm3461, %v3126, -inf
        %v4009 = vrot.slane %v4008, 4
        %v4010 = vmax.f32 %v4008, %v4009
        %v4011 = vrot.slane %v4010, 2
        %v4012 = vmax.f32 %v4010, %v4011
        %v4013 = vrot.slane %v4012, 1
        %v4014 = vmax.f32 %v4012, %v4013
        %v4015 = vsel %vm3461, %v3128, -inf
        %v4016 = vrot.slane %v4015, 4
        %v4017 = vmax.f32 %v4015, %v4016
        %v4018 = vrot.slane %v4017, 2
        %v4019 = vmax.f32 %v4017, %v4018
        %v4020 = vrot.slane %v4019, 1
        %v4021 = vmax.f32 %v4019, %v4020
        %v4022 = vsel %vm3461, %v3136, -inf
        %v4023 = vrot.slane %v4022, 4
        %v4024 = vmax.f32 %v4022, %v4023
        %v4025 = vrot.slane %v4024, 2
        %v4026 = vmax.f32 %v4024, %v4025
        %v4027 = vrot.slane %v4026, 1
        %v4028 = vmax.f32 %v4026, %v4027
        %v4029 = vsel %vm3461, %v3144, -inf
        %v4030 = vrot.slane %v4029, 4
        %v4031 = vmax.f32 %v4029, %v4030
        %v4032 = vrot.slane %v4031, 2
        %v4033 = vmax.f32 %v4031, %v4032
        %v4034 = vrot.slane %v4033, 1
        %v4035 = vmax.f32 %v4033, %v4034
        %v4036 = vsel %vm3461, %v3143, -inf
        %v4037 = vrot.slane %v4036, 4
        %v4038 = vmax.f32 %v4036, %v4037
        %v4039 = vrot.slane %v4038, 2
        %v4040 = vmax.f32 %v4038, %v4039
        %v4041 = vrot.slane %v4040, 1
        %v4042 = vmax.f32 %v4040, %v4041
        %v4043 = vsel %vm3461, %v3145, -inf
        %v4044 = vrot.slane %v4043, 4
        %v4045 = vmax.f32 %v4043, %v4044
        %v4046 = vrot.slane %v4045, 2
        %v4047 = vmax.f32 %v4045, %v4046
        %v4048 = vrot.slane %v4047, 1
        %v4049 = vmax.f32 %v4047, %v4048
        %v4050 = vsel %vm3461, %v3153, -inf
        %v4051 = vrot.slane %v4050, 4
        %v4052 = vmax.f32 %v4050, %v4051
        %v4053 = vrot.slane %v4052, 2
        %v4054 = vmax.f32 %v4052, %v4053
        %v4055 = vrot.slane %v4054, 1
        %v4056 = vmax.f32 %v4054, %v4055
        %v4057 = vsel %vm3461, %v3161, -inf
        %v4058 = vrot.slane %v4057, 4
        %v4059 = vmax.f32 %v4057, %v4058
        %v4060 = vrot.slane %v4059, 2
        %v4061 = vmax.f32 %v4059, %v4060
        %v4062 = vrot.slane %v4061, 1
        %v4063 = vmax.f32 %v4061, %v4062
        %v4064 = vsel %vm3461, %v3160, -inf
        %v4065 = vrot.slane %v4064, 4
        %v4066 = vmax.f32 %v4064, %v4065
        %v4067 = vrot.slane %v4066, 2
        %v4068 = vmax.f32 %v4066, %v4067
        %v4069 = vrot.slane %v4068, 1
        %v4070 = vmax.f32 %v4068, %v4069
        %v4071 = vsel %vm3461, %v3162, -inf
        %v4072 = vrot.slane %v4071, 4
        %v4073 = vmax.f32 %v4071, %v4072
        %v4074 = vrot.slane %v4073, 2
        %v4075 = vmax.f32 %v4073, %v4074
        %v4076 = vrot.slane %v4075, 1
        %v4077 = vmax.f32 %v4075, %v4076
        %v4078 = vsel %vm3461, %v3170, -inf
        %v4079 = vrot.slane %v4078, 4
        %v4080 = vmax.f32 %v4078, %v4079
        %v4081 = vrot.slane %v4080, 2
        %v4082 = vmax.f32 %v4080, %v4081
        %v4083 = vrot.slane %v4082, 1
        %v4084 = vmax.f32 %v4082, %v4083
        %v4085 = vsel %vm3461, %v3178, -inf
        %v4086 = vrot.slane %v4085, 4
        %v4087 = vmax.f32 %v4085, %v4086
        %v4088 = vrot.slane %v4087, 2
        %v4089 = vmax.f32 %v4087, %v4088
        %v4090 = vrot.slane %v4089, 1
        %v4091 = vmax.f32 %v4089, %v4090
        %v4092 = vsel %vm3461, %v3177, -inf
        %v4093 = vrot.slane %v4092, 4
        %v4094 = vmax.f32 %v4092, %v4093
        %v4095 = vrot.slane %v4094, 2
        %v4096 = vmax.f32 %v4094, %v4095
        %v4097 = vrot.slane %v4096, 1
        %v4098 = vmax.f32 %v4096, %v4097
        %v4099 = vsel %vm3461, %v3179, -inf
        %v4100 = vrot.slane %v4099, 4
        %v4101 = vmax.f32 %v4099, %v4100
        %v4102 = vrot.slane %v4101, 2
        %v4103 = vmax.f32 %v4101, %v4102
        %v4104 = vrot.slane %v4103, 1
        %v4105 = vmax.f32 %v4103, %v4104
        %v4106 = vsel %vm3461, %v3187, -inf
        %v4107 = vrot.slane %v4106, 4
        %v4108 = vmax.f32 %v4106, %v4107
        %v4109 = vrot.slane %v4108, 2
        %v4110 = vmax.f32 %v4108, %v4109
        %v4111 = vrot.slane %v4110, 1
        %v4112 = vmax.f32 %v4110, %v4111
        %v4113 = vsel %vm3461, %v3195, -inf
        %v4114 = vrot.slane %v4113, 4
        %v4115 = vmax.f32 %v4113, %v4114
        %v4116 = vrot.slane %v4115, 2
        %v4117 = vmax.f32 %v4115, %v4116
        %v4118 = vrot.slane %v4117, 1
        %v4119 = vmax.f32 %v4117, %v4118
        %v4120 = vsel %vm3461, %v3194, -inf
        %v4121 = vrot.slane %v4120, 4
        %v4122 = vmax.f32 %v4120, %v4121
        %v4123 = vrot.slane %v4122, 2
        %v4124 = vmax.f32 %v4122, %v4123
        %v4125 = vrot.slane %v4124, 1
        %v4126 = vmax.f32 %v4124, %v4125
        %v4127 = vsel %vm3461, %v3196, -inf
        %v4128 = vrot.slane %v4127, 4
        %v4129 = vmax.f32 %v4127, %v4128
        %v4130 = vrot.slane %v4129, 2
        %v4131 = vmax.f32 %v4129, %v4130
        %v4132 = vrot.slane %v4131, 1
        %v4133 = vmax.f32 %v4131, %v4132
        %v4134 = vsel %vm3461, %v3204, -inf
        %v4135 = vrot.slane %v4134, 4
        %v4136 = vmax.f32 %v4134, %v4135
        %v4137 = vrot.slane %v4136, 2
        %v4138 = vmax.f32 %v4136, %v4137
        %v4139 = vrot.slane %v4138, 1
        %v4140 = vmax.f32 %v4138, %v4139
        %v4141 = vsel %vm3461, %v3212, -inf
        %v4142 = vrot.slane %v4141, 4
        %v4143 = vmax.f32 %v4141, %v4142
        %v4144 = vrot.slane %v4143, 2
        %v4145 = vmax.f32 %v4143, %v4144
        %v4146 = vrot.slane %v4145, 1
        %v4147 = vmax.f32 %v4145, %v4146
        %v4148 = vsel %vm3461, %v3211, -inf
        %v4149 = vrot.slane %v4148, 4
        %v4150 = vmax.f32 %v4148, %v4149
        %v4151 = vrot.slane %v4150, 2
        %v4152 = vmax.f32 %v4150, %v4151
        %v4153 = vrot.slane %v4152, 1
        %v4154 = vmax.f32 %v4152, %v4153
        %v4155 = vsel %vm3461, %v3213, -inf
        %v4156 = vrot.slane %v4155, 4
        %v4157 = vmax.f32 %v4155, %v4156
        %v4158 = vrot.slane %v4157, 2
        %v4159 = vmax.f32 %v4157, %v4158
        %v4160 = vrot.slane %v4159, 1
        %v4161 = vmax.f32 %v4159, %v4160
        %v4162 = vsel %vm3461, %v3221, -inf
        %v4163 = vrot.slane %v4162, 4
        %v4164 = vmax.f32 %v4162, %v4163
        %v4165 = vrot.slane %v4164, 2
        %v4166 = vmax.f32 %v4164, %v4165
        %v4167 = vrot.slane %v4166, 1
        %v4168 = vmax.f32 %v4166, %v4167
        %v4169 = vsel %vm3461, %v3229, -inf
        %v4170 = vrot.slane %v4169, 4
        %v4171 = vmax.f32 %v4169, %v4170
        %v4172 = vrot.slane %v4171, 2
        %v4173 = vmax.f32 %v4171, %v4172
        %v4174 = vrot.slane %v4173, 1
        %v4175 = vmax.f32 %v4173, %v4174
        %v4176 = vsel %vm3461, %v3228, -inf
        %v4177 = vrot.slane %v4176, 4
        %v4178 = vmax.f32 %v4176, %v4177
        %v4179 = vrot.slane %v4178, 2
        %v4180 = vmax.f32 %v4178, %v4179
        %v4181 = vrot.slane %v4180, 1
        %v4182 = vmax.f32 %v4180, %v4181
        %v4183 = vsel %vm3461, %v3230, -inf
        %v4184 = vrot.slane %v4183, 4
        %v4185 = vmax.f32 %v4183, %v4184
        %v4186 = vrot.slane %v4185, 2
        %v4187 = vmax.f32 %v4185, %v4186
        %v4188 = vrot.slane %v4187, 1
        %v4189 = vmax.f32 %v4187, %v4188
        %v4190 = vsel %vm3461, %v3238, -inf
        %v4191 = vrot.slane %v4190, 4
        %v4192 = vmax.f32 %v4190, %v4191
        %v4193 = vrot.slane %v4192, 2
        %v4194 = vmax.f32 %v4192, %v4193
        %v4195 = vrot.slane %v4194, 1
        %v4196 = vmax.f32 %v4194, %v4195
        %v4197 = vsel %vm3461, %v3246, -inf
        %v4198 = vrot.slane %v4197, 4
        %v4199 = vmax.f32 %v4197, %v4198
        %v4200 = vrot.slane %v4199, 2
        %v4201 = vmax.f32 %v4199, %v4200
        %v4202 = vrot.slane %v4201, 1
        %v4203 = vmax.f32 %v4201, %v4202
        %v4204 = vsel %vm3461, %v3245, -inf
        %v4205 = vrot.slane %v4204, 4
        %v4206 = vmax.f32 %v4204, %v4205
        %v4207 = vrot.slane %v4206, 2
        %v4208 = vmax.f32 %v4206, %v4207
        %v4209 = vrot.slane %v4208, 1
        %v4210 = vmax.f32 %v4208, %v4209
        %v4211 = vsel %vm3461, %v3247, -inf
        %v4212 = vrot.slane %v4211, 4
        %v4213 = vmax.f32 %v4211, %v4212
        %v4214 = vrot.slane %v4213, 2
        %v4215 = vmax.f32 %v4213, %v4214
        %v4216 = vrot.slane %v4215, 1
        %v4217 = vmax.f32 %v4215, %v4216
        %v4218 = vsel %vm3461, %v3255, -inf
        %v4219 = vrot.slane %v4218, 4
        %v4220 = vmax.f32 %v4218, %v4219
        %v4221 = vrot.slane %v4220, 2
        %v4222 = vmax.f32 %v4220, %v4221
        %v4223 = vrot.slane %v4222, 1
        %v4224 = vmax.f32 %v4222, %v4223
        %v4225 = vsel %vm3461, %v3263, -inf
        %v4226 = vrot.slane %v4225, 4
        %v4227 = vmax.f32 %v4225, %v4226
        %v4228 = vrot.slane %v4227, 2
        %v4229 = vmax.f32 %v4227, %v4228
        %v4230 = vrot.slane %v4229, 1
        %v4231 = vmax.f32 %v4229, %v4230
        %v4232 = vsel %vm3461, %v3262, -inf
        %v4233 = vrot.slane %v4232, 4
        %v4234 = vmax.f32 %v4232, %v4233
        %v4235 = vrot.slane %v4234, 2
        %v4236 = vmax.f32 %v4234, %v4235
        %v4237 = vrot.slane %v4236, 1
        %v4238 = vmax.f32 %v4236, %v4237
        %v4239 = vsel %vm3461, %v3264, -inf
        %v4240 = vrot.slane %v4239, 4
        %v4241 = vmax.f32 %v4239, %v4240
        %v4242 = vrot.slane %v4241, 2
        %v4243 = vmax.f32 %v4241, %v4242
        %v4244 = vrot.slane %v4243, 1
        %v4245 = vmax.f32 %v4243, %v4244
        %v4246 = vsel %vm3461, %v3272, -inf
        %v4247 = vrot.slane %v4246, 4
        %v4248 = vmax.f32 %v4246, %v4247
        %v4249 = vrot.slane %v4248, 2
        %v4250 = vmax.f32 %v4248, %v4249
        %v4251 = vrot.slane %v4250, 1
        %v4252 = vmax.f32 %v4250, %v4251
        %v4253 = vsel %vm3461, %v3280, -inf
        %v4254 = vrot.slane %v4253, 4
        %v4255 = vmax.f32 %v4253, %v4254
        %v4256 = vrot.slane %v4255, 2
        %v4257 = vmax.f32 %v4255, %v4256
        %v4258 = vrot.slane %v4257, 1
        %v4259 = vmax.f32 %v4257, %v4258
        %v4260 = vsel %vm3461, %v3279, -inf
        %v4261 = vrot.slane %v4260, 4
        %v4262 = vmax.f32 %v4260, %v4261
        %v4263 = vrot.slane %v4262, 2
        %v4264 = vmax.f32 %v4262, %v4263
        %v4265 = vrot.slane %v4264, 1
        %v4266 = vmax.f32 %v4264, %v4265
        %v4267 = vsel %vm3461, %v3281, -inf
        %v4268 = vrot.slane %v4267, 4
        %v4269 = vmax.f32 %v4267, %v4268
        %v4270 = vrot.slane %v4269, 2
        %v4271 = vmax.f32 %v4269, %v4270
        %v4272 = vrot.slane %v4271, 1
        %v4273 = vmax.f32 %v4271, %v4272
        %v4274 = vsel %vm3461, %v3289, -inf
        %v4275 = vrot.slane %v4274, 4
        %v4276 = vmax.f32 %v4274, %v4275
        %v4277 = vrot.slane %v4276, 2
        %v4278 = vmax.f32 %v4276, %v4277
        %v4279 = vrot.slane %v4278, 1
        %v4280 = vmax.f32 %v4278, %v4279
        %v4281 = vsel %vm3461, %v3297, -inf
        %v4282 = vrot.slane %v4281, 4
        %v4283 = vmax.f32 %v4281, %v4282
        %v4284 = vrot.slane %v4283, 2
        %v4285 = vmax.f32 %v4283, %v4284
        %v4286 = vrot.slane %v4285, 1
        %v4287 = vmax.f32 %v4285, %v4286
        %v4288 = vsel %vm3461, %v3296, -inf
        %v4289 = vrot.slane %v4288, 4
        %v4290 = vmax.f32 %v4288, %v4289
        %v4291 = vrot.slane %v4290, 2
        %v4292 = vmax.f32 %v4290, %v4291
        %v4293 = vrot.slane %v4292, 1
        %v4294 = vmax.f32 %v4292, %v4293
        %v4295 = vsel %vm3461, %v3298, -inf
        %v4296 = vrot.slane %v4295, 4
        %v4297 = vmax.f32 %v4295, %v4296
        %v4298 = vrot.slane %v4297, 2
        %v4299 = vmax.f32 %v4297, %v4298
        %v4300 = vrot.slane %v4299, 1
        %v4301 = vmax.f32 %v4299, %v4300
        %v4302 = vsel %vm3461, %v3306, -inf
        %v4303 = vrot.slane %v4302, 4
        %v4304 = vmax.f32 %v4302, %v4303
        %v4305 = vrot.slane %v4304, 2
        %v4306 = vmax.f32 %v4304, %v4305
        %v4307 = vrot.slane %v4306, 1
        %v4308 = vmax.f32 %v4306, %v4307
        %v4309 = vsel %vm3461, %v3314, -inf
        %v4310 = vrot.slane %v4309, 4
        %v4311 = vmax.f32 %v4309, %v4310
        %v4312 = vrot.slane %v4311, 2
        %v4313 = vmax.f32 %v4311, %v4312
        %v4314 = vrot.slane %v4313, 1
        %v4315 = vmax.f32 %v4313, %v4314
        %v4316 = vsel %vm3461, %v3313, -inf
        %v4317 = vrot.slane %v4316, 4
        %v4318 = vmax.f32 %v4316, %v4317
        %v4319 = vrot.slane %v4318, 2
        %v4320 = vmax.f32 %v4318, %v4319
        %v4321 = vrot.slane %v4320, 1
        %v4322 = vmax.f32 %v4320, %v4321
        %v4323 = vsel %vm3461, %v3315, -inf
        %v4324 = vrot.slane %v4323, 4
        %v4325 = vmax.f32 %v4323, %v4324
        %v4326 = vrot.slane %v4325, 2
        %v4327 = vmax.f32 %v4325, %v4326
        %v4328 = vrot.slane %v4327, 1
        %v4329 = vmax.f32 %v4327, %v4328
        %v4330 = vsel %vm3461, %v3323, -inf
        %v4331 = vrot.slane %v4330, 4
        %v4332 = vmax.f32 %v4330, %v4331
        %v4333 = vrot.slane %v4332, 2
        %v4334 = vmax.f32 %v4332, %v4333
        %v4335 = vrot.slane %v4334, 1
        %v4336 = vmax.f32 %v4334, %v4335
        %v4337 = vsel %vm3461, %v3331, -inf
        %v4338 = vrot.slane %v4337, 4
        %v4339 = vmax.f32 %v4337, %v4338
        %v4340 = vrot.slane %v4339, 2
        %v4341 = vmax.f32 %v4339, %v4340
        %v4342 = vrot.slane %v4341, 1
        %v4343 = vmax.f32 %v4341, %v4342
        %v4344 = vsel %vm3461, %v3330, -inf
        %v4345 = vrot.slane %v4344, 4
        %v4346 = vmax.f32 %v4344, %v4345
        %v4347 = vrot.slane %v4346, 2
        %v4348 = vmax.f32 %v4346, %v4347
        %v4349 = vrot.slane %v4348, 1
        %v4350 = vmax.f32 %v4348, %v4349
        %v4351 = vsel %vm3461, %v3332, -inf
        %v4352 = vrot.slane %v4351, 4
        %v4353 = vmax.f32 %v4351, %v4352
        %v4354 = vrot.slane %v4353, 2
        %v4355 = vmax.f32 %v4353, %v4354
        %v4356 = vrot.slane %v4355, 1
        %v4357 = vmax.f32 %v4355, %v4356
        %vm4358 = vcmask 31744
        %v4359 = vsel %vm4358, %v3468, -inf
        %v4360 = vsel %vm4358, %v3524, -inf
        %v4361 = vmax.f32 %v4359, %v4360
        %v4362 = vsel %vm4358, %v3475, -inf
        %v4363 = vsel %vm4358, %v3531, -inf
        %v4364 = vmax.f32 %v4362, %v4363
        %v4365 = vsel %vm4358, %v3482, -inf
        %v4366 = vsel %vm4358, %v3538, -inf
        %v4367 = vmax.f32 %v4365, %v4366
        %v4368 = vsel %vm4358, %v3489, -inf
        %v4369 = vsel %vm4358, %v3545, -inf
        %v4370 = vmax.f32 %v4368, %v4369
        %v4371 = vsel %vm4358, %v3496, -inf
        %v4372 = vsel %vm4358, %v3552, -inf
        %v4373 = vmax.f32 %v4371, %v4372
        %v4374 = vsel %vm4358, %v3503, -inf
        %v4375 = vsel %vm4358, %v3559, -inf
        %v4376 = vmax.f32 %v4374, %v4375
        %v4377 = vsel %vm4358, %v3510, -inf
        %v4378 = vsel %vm4358, %v3566, -inf
        %v4379 = vmax.f32 %v4377, %v4378
        %v4380 = vsel %vm4358, %v3517, -inf
        %v4381 = vsel %vm4358, %v3573, -inf
        %v4382 = vmax.f32 %v4380, %v4381
        %v4383 = vsel %vm4358, %v3580, -inf
        %v4384 = vsel %vm4358, %v3636, -inf
        %v4385 = vmax.f32 %v4383, %v4384
        %v4386 = vsel %vm4358, %v3587, -inf
        %v4387 = vsel %vm4358, %v3643, -inf
        %v4388 = vmax.f32 %v4386, %v4387
        %v4389 = vsel %vm4358, %v3594, -inf
        %v4390 = vsel %vm4358, %v3650, -inf
        %v4391 = vmax.f32 %v4389, %v4390
        %v4392 = vsel %vm4358, %v3601, -inf
        %v4393 = vsel %vm4358, %v3657, -inf
        %v4394 = vmax.f32 %v4392, %v4393
        %v4395 = vsel %vm4358, %v3608, -inf
        %v4396 = vsel %vm4358, %v3664, -inf
        %v4397 = vmax.f32 %v4395, %v4396
        %v4398 = vsel %vm4358, %v3615, -inf
        %v4399 = vsel %vm4358, %v3671, -inf
        %v4400 = vmax.f32 %v4398, %v4399
        %v4401 = vsel %vm4358, %v3622, -inf
        %v4402 = vsel %vm4358, %v3678, -inf
        %v4403 = vmax.f32 %v4401, %v4402
        %v4404 = vsel %vm4358, %v3629, -inf
        %v4405 = vsel %vm4358, %v3685, -inf
        %v4406 = vmax.f32 %v4404, %v4405
        %v4407 = vsel %vm4358, %v3692, -inf
        %v4408 = vsel %vm4358, %v3748, -inf
        %v4409 = vmax.f32 %v4407, %v4408
        %v4410 = vsel %vm4358, %v3699, -inf
        %v4411 = vsel %vm4358, %v3755, -inf
        %v4412 = vmax.f32 %v4410, %v4411
        %v4413 = vsel %vm4358, %v3706, -inf
        %v4414 = vsel %vm4358, %v3762, -inf
        %v4415 = vmax.f32 %v4413, %v4414
        %v4416 = vsel %vm4358, %v3713, -inf
        %v4417 = vsel %vm4358, %v3769, -inf
        %v4418 = vmax.f32 %v4416, %v4417
        %v4419 = vsel %vm4358, %v3720, -inf
        %v4420 = vsel %vm4358, %v3776, -inf
        %v4421 = vmax.f32 %v4419, %v4420
        %v4422 = vsel %vm4358, %v3727, -inf
        %v4423 = vsel %vm4358, %v3783, -inf
        %v4424 = vmax.f32 %v4422, %v4423
        %v4425 = vsel %vm4358, %v3734, -inf
        %v4426 = vsel %vm4358, %v3790, -inf
        %v4427 = vmax.f32 %v4425, %v4426
        %v4428 = vsel %vm4358, %v3741, -inf
        %v4429 = vsel %vm4358, %v3797, -inf
        %v4430 = vmax.f32 %v4428, %v4429
        %v4431 = vsel %vm4358, %v3804, -inf
        %v4432 = vsel %vm4358, %v3860, -inf
        %v4433 = vmax.f32 %v4431, %v4432
        %v4434 = vsel %vm4358, %v3811, -inf
        %v4435 = vsel %vm4358, %v3867, -inf
        %v4436 = vmax.f32 %v4434, %v4435
        %v4437 = vsel %vm4358, %v3818, -inf
        %v4438 = vsel %vm4358, %v3874, -inf
        %v4439 = vmax.f32 %v4437, %v4438
        %v4440 = vsel %vm4358, %v3825, -inf
        %v4441 = vsel %vm4358, %v3881, -inf
        %v4442 = vmax.f32 %v4440, %v4441
        %v4443 = vsel %vm4358, %v3832, -inf
        %v4444 = vsel %vm4358, %v3888, -inf
        %v4445 = vmax.f32 %v4443, %v4444
        %v4446 = vsel %vm4358, %v3839, -inf
        %v4447 = vsel %vm4358, %v3895, -inf
        %v4448 = vmax.f32 %v4446, %v4447
        %v4449 = vsel %vm4358, %v3846, -inf
        %v4450 = vsel %vm4358, %v3902, -inf
        %v4451 = vmax.f32 %v4449, %v4450
        %v4452 = vsel %vm4358, %v3853, -inf
        %v4453 = vsel %vm4358, %v3909, -inf
        %v4454 = vmax.f32 %v4452, %v4453
        %v4455 = vsel %vm4358, %v3916, -inf
        %v4456 = vsel %vm4358, %v3972, -inf
        %v4457 = vmax.f32 %v4455, %v4456
        %v4458 = vsel %vm4358, %v3923, -inf
        %v4459 = vsel %vm4358, %v3979, -inf
        %v4460 = vmax.f32 %v4458, %v4459
        %v4461 = vsel %vm4358, %v3930, -inf
        %v4462 = vsel %vm4358, %v3986, -inf
        %v4463 = vmax.f32 %v4461, %v4462
        %v4464 = vsel %vm4358, %v3937, -inf
        %v4465 = vsel %vm4358, %v3993, -inf
        %v4466 = vmax.f32 %v4464, %v4465
        %v4467 = vsel %vm4358, %v3944, -inf
        %v4468 = vsel %vm4358, %v4000, -inf
        %v4469 = vmax.f32 %v4467, %v4468
        %v4470 = vsel %vm4358, %v3951, -inf
        %v4471 = vsel %vm4358, %v4007, -inf
        %v4472 = vmax.f32 %v4470, %v4471
        %v4473 = vsel %vm4358, %v3958, -inf
        %v4474 = vsel %vm4358, %v4014, -inf
        %v4475 = vmax.f32 %v4473, %v4474
        %v4476 = vsel %vm4358, %v3965, -inf
        %v4477 = vsel %vm4358, %v4021, -inf
        %v4478 = vmax.f32 %v4476, %v4477
        %v4479 = vsel %vm4358, %v4028, -inf
        %v4480 = vsel %vm4358, %v4084, -inf
        %v4481 = vmax.f32 %v4479, %v4480
        %v4482 = vsel %vm4358, %v4035, -inf
        %v4483 = vsel %vm4358, %v4091, -inf
        %v4484 = vmax.f32 %v4482, %v4483
        %v4485 = vsel %vm4358, %v4042, -inf
        %v4486 = vsel %vm4358, %v4098, -inf
        %v4487 = vmax.f32 %v4485, %v4486
        %v4488 = vsel %vm4358, %v4049, -inf
        %v4489 = vsel %vm4358, %v4105, -inf
        %v4490 = vmax.f32 %v4488, %v4489
        %v4491 = vsel %vm4358, %v4056, -inf
        %v4492 = vsel %vm4358, %v4112, -inf
        %v4493 = vmax.f32 %v4491, %v4492
        %v4494 = vsel %vm4358, %v4063, -inf
        %v4495 = vsel %vm4358, %v4119, -inf
        %v4496 = vmax.f32 %v4494, %v4495
        %v4497 = vsel %vm4358, %v4070, -inf
        %v4498 = vsel %vm4358, %v4126, -inf
        %v4499 = vmax.f32 %v4497, %v4498
        %v4500 = vsel %vm4358, %v4077, -inf
        %v4501 = vsel %vm4358, %v4133, -inf
        %v4502 = vmax.f32 %v4500, %v4501
        %v4503 = vsel %vm4358, %v4140, -inf
        %v4504 = vsel %vm4358, %v4196, -inf
        %v4505 = vmax.f32 %v4503, %v4504
        %v4506 = vsel %vm4358, %v4147, -inf
        %v4507 = vsel %vm4358, %v4203, -inf
        %v4508 = vmax.f32 %v4506, %v4507
        %v4509 = vsel %vm4358, %v4154, -inf
        %v4510 = vsel %vm4358, %v4210, -inf
        %v4511 = vmax.f32 %v4509, %v4510
        %v4512 = vsel %vm4358, %v4161, -inf
        %v4513 = vsel %vm4358, %v4217, -inf
        %v4514 = vmax.f32 %v4512, %v4513
        %v4515 = vsel %vm4358, %v4168, -inf
        %v4516 = vsel %vm4358, %v4224, -inf
        %v4517 = vmax.f32 %v4515, %v4516
        %v4518 = vsel %vm4358, %v4175, -inf
        %v4519 = vsel %vm4358, %v4231, -inf
        %v4520 = vmax.f32 %v4518, %v4519
        %v4521 = vsel %vm4358, %v4182, -inf
        %v4522 = vsel %vm4358, %v4238, -inf
        %v4523 = vmax.f32 %v4521, %v4522
        %v4524 = vsel %vm4358, %v4189, -inf
        %v4525 = vsel %vm4358, %v4245, -inf
        %v4526 = vmax.f32 %v4524, %v4525
        %v4527 = vsel %vm4358, %v4252, -inf
        %v4528 = vsel %vm4358, %v4308, -inf
        %v4529 = vmax.f32 %v4527, %v4528
        %v4530 = vsel %vm4358, %v4259, -inf
        %v4531 = vsel %vm4358, %v4315, -inf
        %v4532 = vmax.f32 %v4530, %v4531
        %v4533 = vsel %vm4358, %v4266, -inf
        %v4534 = vsel %vm4358, %v4322, -inf
        %v4535 = vmax.f32 %v4533, %v4534
        %v4536 = vsel %vm4358, %v4273, -inf
        %v4537 = vsel %vm4358, %v4329, -inf
        %v4538 = vmax.f32 %v4536, %v4537
        %v4539 = vsel %vm4358, %v4280, -inf
        %v4540 = vsel %vm4358, %v4336, -inf
        %v4541 = vmax.f32 %v4539, %v4540
        %v4542 = vsel %vm4358, %v4287, -inf
        %v4543 = vsel %vm4358, %v4343, -inf
        %v4544 = vmax.f32 %v4542, %v4543
        %v4545 = vsel %vm4358, %v4294, -inf
        %v4546 = vsel %vm4358, %v4350, -inf
        %v4547 = vmax.f32 %v4545, %v4546
        %v4548 = vsel %vm4358, %v4301, -inf
        %v4549 = vsel %vm4358, %v4357, -inf
        %v4550 = vmax.f32 %v4548, %v4549
        %v4551 = vpack.c.bf16 %v4361, %v4361
        %v4552 = vpack.c.bf16 %v4364, %v4364
        %v4553 = vpack.c.bf16 %v4367, %v4367
        %v4554 = vpack.c.bf16 %v4370, %v4370
        %v4555 = vpack.c.bf16 %v4373, %v4373
        %v4556 = vpack.c.bf16 %v4376, %v4376
        %v4557 = vpack.c.bf16 %v4379, %v4379
        %v4558 = vpack.c.bf16 %v4382, %v4382
        %v4559 = vpack.c.bf16 %v4385, %v4385
        %v4560 = vpack.c.bf16 %v4388, %v4388
        %v4561 = vpack.c.bf16 %v4391, %v4391
        %v4562 = vpack.c.bf16 %v4394, %v4394
        %v4563 = vpack.c.bf16 %v4397, %v4397
        %v4564 = vpack.c.bf16 %v4400, %v4400
        %v4565 = vpack.c.bf16 %v4403, %v4403
        %v4566 = vpack.c.bf16 %v4406, %v4406
        %v4567 = vpack.c.bf16 %v4409, %v4409
        %v4568 = vpack.c.bf16 %v4412, %v4412
        %v4569 = vpack.c.bf16 %v4415, %v4415
        %v4570 = vpack.c.bf16 %v4418, %v4418
        %v4571 = vpack.c.bf16 %v4421, %v4421
        %v4572 = vpack.c.bf16 %v4424, %v4424
        %v4573 = vpack.c.bf16 %v4427, %v4427
        %v4574 = vpack.c.bf16 %v4430, %v4430
        %v4575 = vpack.c.bf16 %v4433, %v4433
        %v4576 = vpack.c.bf16 %v4436, %v4436
        %v4577 = vpack.c.bf16 %v4439, %v4439
        %v4578 = vpack.c.bf16 %v4442, %v4442
        %v4579 = vpack.c.bf16 %v4445, %v4445
        %v4580 = vpack.c.bf16 %v4448, %v4448
        %v4581 = vpack.c.bf16 %v4451, %v4451
        %v4582 = vpack.c.bf16 %v4454, %v4454
        %v4583 = vpack.c.bf16 %v4457, %v4457
        %v4584 = vpack.c.bf16 %v4460, %v4460
        %v4585 = vpack.c.bf16 %v4463, %v4463
        %v4586 = vpack.c.bf16 %v4466, %v4466
        %v4587 = vpack.c.bf16 %v4469, %v4469
        %v4588 = vpack.c.bf16 %v4472, %v4472
        %v4589 = vpack.c.bf16 %v4475, %v4475
        %v4590 = vpack.c.bf16 %v4478, %v4478
        %v4591 = vpack.c.bf16 %v4481, %v4481
        %v4592 = vpack.c.bf16 %v4484, %v4484
        %v4593 = vpack.c.bf16 %v4487, %v4487
        %v4594 = vpack.c.bf16 %v4490, %v4490
        %v4595 = vpack.c.bf16 %v4493, %v4493
        %v4596 = vpack.c.bf16 %v4496, %v4496
        %v4597 = vpack.c.bf16 %v4499, %v4499
        %v4598 = vpack.c.bf16 %v4502, %v4502
        %v4599 = vpack.c.bf16 %v4505, %v4505
        %v4600 = vpack.c.bf16 %v4508, %v4508
        %v4601 = vpack.c.bf16 %v4511, %v4511
        %v4602 = vpack.c.bf16 %v4514, %v4514
        %v4603 = vpack.c.bf16 %v4517, %v4517
        %v4604 = vpack.c.bf16 %v4520, %v4520
        %v4605 = vpack.c.bf16 %v4523, %v4523
        %v4606 = vpack.c.bf16 %v4526, %v4526
        %v4607 = vpack.c.bf16 %v4529, %v4529
        %v4608 = vpack.c.bf16 %v4532, %v4532
        %v4609 = vpack.c.bf16 %v4535, %v4535
        %v4610 = vpack.c.bf16 %v4538, %v4538
        %v4611 = vpack.c.bf16 %v4541, %v4541
        %v4612 = vpack.c.bf16 %v4544, %v4544
        %v4613 = vpack.c.bf16 %v4547, %v4547
        %v4614 = vpack.c.bf16 %v4550, %v4550
        %v4679 = vunpack.c.l.b16 %v4551
        %v4680 = vunpack.c.l.b16 %v4552
        %v4681 = vunpack.c.l.b16 %v4553
        %v4682 = vunpack.c.l.b16 %v4554
        %v4683 = vunpack.c.l.b16 %v4555
        %v4684 = vunpack.c.l.b16 %v4556
        %v4685 = vunpack.c.l.b16 %v4557
        %v4686 = vunpack.c.l.b16 %v4558
        %v4687 = vunpack.c.l.b16 %v4559
        %v4688 = vunpack.c.l.b16 %v4560
        %v4689 = vunpack.c.l.b16 %v4561
        %v4690 = vunpack.c.l.b16 %v4562
        %v4691 = vunpack.c.l.b16 %v4563
        %v4692 = vunpack.c.l.b16 %v4564
        %v4693 = vunpack.c.l.b16 %v4565
        %v4694 = vunpack.c.l.b16 %v4566
        %v4695 = vunpack.c.l.b16 %v4567
        %v4696 = vunpack.c.l.b16 %v4568
        %v4697 = vunpack.c.l.b16 %v4569
        %v4698 = vunpack.c.l.b16 %v4570
        %v4699 = vunpack.c.l.b16 %v4571
        %v4700 = vunpack.c.l.b16 %v4572
        %v4701 = vunpack.c.l.b16 %v4573
        %v4702 = vunpack.c.l.b16 %v4574
        %v4703 = vunpack.c.l.b16 %v4575
        %v4704 = vunpack.c.l.b16 %v4576
        %v4705 = vunpack.c.l.b16 %v4577
        %v4706 = vunpack.c.l.b16 %v4578
        %v4707 = vunpack.c.l.b16 %v4579
        %v4708 = vunpack.c.l.b16 %v4580
        %v4709 = vunpack.c.l.b16 %v4581
        %v4710 = vunpack.c.l.b16 %v4582
        %v4711 = vunpack.c.l.b16 %v4583
        %v4712 = vunpack.c.l.b16 %v4584
        %v4713 = vunpack.c.l.b16 %v4585
        %v4714 = vunpack.c.l.b16 %v4586
        %v4715 = vunpack.c.l.b16 %v4587
        %v4716 = vunpack.c.l.b16 %v4588
        %v4717 = vunpack.c.l.b16 %v4589
        %v4718 = vunpack.c.l.b16 %v4590
        %v4719 = vunpack.c.l.b16 %v4591
        %v4720 = vunpack.c.l.b16 %v4592
        %v4721 = vunpack.c.l.b16 %v4593
        %v4722 = vunpack.c.l.b16 %v4594
        %v4723 = vunpack.c.l.b16 %v4595
        %v4724 = vunpack.c.l.b16 %v4596
        %v4725 = vunpack.c.l.b16 %v4597
        %v4726 = vunpack.c.l.b16 %v4598
        %v4727 = vunpack.c.l.b16 %v4599
        %v4728 = vunpack.c.l.b16 %v4600
        %v4729 = vunpack.c.l.b16 %v4601
        %v4730 = vunpack.c.l.b16 %v4602
        %v4731 = vunpack.c.l.b16 %v4603
        %v4732 = vunpack.c.l.b16 %v4604
        %v4733 = vunpack.c.l.b16 %v4605
        %v4734 = vunpack.c.l.b16 %v4606
        %v4735 = vunpack.c.l.b16 %v4607
        %v4736 = vunpack.c.l.b16 %v4608
        %v4737 = vunpack.c.l.b16 %v4609
        %v4738 = vunpack.c.l.b16 %v4610
        %v4739 = vunpack.c.l.b16 %v4611
        %v4740 = vunpack.c.l.b16 %v4612
        %v4741 = vunpack.c.l.b16 %v4613
        %v4742 = vunpack.c.l.b16 %v4614
        %v4743 = vpack.c.b16 %v4679, %v4679
        %v4744 = vpack.c.b16 %v4680, %v4680
        %v4745 = vpack.c.b16 %v4681, %v4681
        %v4746 = vpack.c.b16 %v4682, %v4682
        %v4747 = vpack.c.b16 %v4683, %v4683
        %v4748 = vpack.c.b16 %v4684, %v4684
        %v4749 = vpack.c.b16 %v4685, %v4685
        %v4750 = vpack.c.b16 %v4686, %v4686
        %v4751 = vpack.c.b16 %v4687, %v4687
        %v4752 = vpack.c.b16 %v4688, %v4688
        %v4753 = vpack.c.b16 %v4689, %v4689
        %v4754 = vpack.c.b16 %v4690, %v4690
        %v4755 = vpack.c.b16 %v4691, %v4691
        %v4756 = vpack.c.b16 %v4692, %v4692
        %v4757 = vpack.c.b16 %v4693, %v4693
        %v4758 = vpack.c.b16 %v4694, %v4694
        %v4759 = vpack.c.b16 %v4695, %v4695
        %v4760 = vpack.c.b16 %v4696, %v4696
        %v4761 = vpack.c.b16 %v4697, %v4697
        %v4762 = vpack.c.b16 %v4698, %v4698
        %v4763 = vpack.c.b16 %v4699, %v4699
        %v4764 = vpack.c.b16 %v4700, %v4700
        %v4765 = vpack.c.b16 %v4701, %v4701
        %v4766 = vpack.c.b16 %v4702, %v4702
        %v4767 = vpack.c.b16 %v4703, %v4703
        %v4768 = vpack.c.b16 %v4704, %v4704
        %v4769 = vpack.c.b16 %v4705, %v4705
        %v4770 = vpack.c.b16 %v4706, %v4706
        %v4771 = vpack.c.b16 %v4707, %v4707
        %v4772 = vpack.c.b16 %v4708, %v4708
        %v4773 = vpack.c.b16 %v4709, %v4709
        %v4774 = vpack.c.b16 %v4710, %v4710
        %v4775 = vpack.c.b16 %v4711, %v4711
        %v4776 = vpack.c.b16 %v4712, %v4712
        %v4777 = vpack.c.b16 %v4713, %v4713
        %v4778 = vpack.c.b16 %v4714, %v4714
        %v4779 = vpack.c.b16 %v4715, %v4715
        %v4780 = vpack.c.b16 %v4716, %v4716
        %v4781 = vpack.c.b16 %v4717, %v4717
        %v4782 = vpack.c.b16 %v4718, %v4718
        %v4783 = vpack.c.b16 %v4719, %v4719
        %v4784 = vpack.c.b16 %v4720, %v4720
        %v4785 = vpack.c.b16 %v4721, %v4721
        %v4786 = vpack.c.b16 %v4722, %v4722
        %v4787 = vpack.c.b16 %v4723, %v4723
        %v4788 = vpack.c.b16 %v4724, %v4724
        %v4789 = vpack.c.b16 %v4725, %v4725
        %v4790 = vpack.c.b16 %v4726, %v4726
        %v4791 = vpack.c.b16 %v4727, %v4727
        %v4792 = vpack.c.b16 %v4728, %v4728
        %v4793 = vpack.c.b16 %v4729, %v4729
        %v4794 = vpack.c.b16 %v4730, %v4730
        %v4795 = vpack.c.b16 %v4731, %v4731
        %v4796 = vpack.c.b16 %v4732, %v4732
        %v4797 = vpack.c.b16 %v4733, %v4733
        %v4798 = vpack.c.b16 %v4734, %v4734
        %v4799 = vpack.c.b16 %v4735, %v4735
        %v4800 = vpack.c.b16 %v4736, %v4736
        %v4801 = vpack.c.b16 %v4737, %v4737
        %v4802 = vpack.c.b16 %v4738, %v4738
        %v4803 = vpack.c.b16 %v4739, %v4739
        %v4804 = vpack.c.b16 %v4740, %v4740
        %v4805 = vpack.c.b16 %v4741, %v4741
        %v4806 = vpack.c.b16 %v4742, %v4742
        %v4807 = vunpack.c.l.b16 %v4743
        %v4808 = vunpack.c.l.b16 %v4744
        %v4809 = vunpack.c.l.b16 %v4745
        %v4810 = vunpack.c.l.b16 %v4746
        %v4811 = vunpack.c.l.b16 %v4747
        %v4812 = vunpack.c.l.b16 %v4748
        %v4813 = vunpack.c.l.b16 %v4749
        %v4814 = vunpack.c.l.b16 %v4750
        %v4815 = vunpack.c.l.b16 %v4751
        %v4816 = vunpack.c.l.b16 %v4752
        %v4817 = vunpack.c.l.b16 %v4753
        %v4818 = vunpack.c.l.b16 %v4754
        %v4819 = vunpack.c.l.b16 %v4755
        %v4820 = vunpack.c.l.b16 %v4756
        %v4821 = vunpack.c.l.b16 %v4757
        %v4822 = vunpack.c.l.b16 %v4758
        %v4823 = vunpack.c.l.b16 %v4759
        %v4824 = vunpack.c.l.b16 %v4760
        %v4825 = vunpack.c.l.b16 %v4761
        %v4826 = vunpack.c.l.b16 %v4762
        %v4827 = vunpack.c.l.b16 %v4763
        %v4828 = vunpack.c.l.b16 %v4764
        %v4829 = vunpack.c.l.b16 %v4765
        %v4830 = vunpack.c.l.b16 %v4766
        %v4831 = vunpack.c.l.b16 %v4767
        %v4832 = vunpack.c.l.b16 %v4768
        %v4833 = vunpack.c.l.b16 %v4769
        %v4834 = vunpack.c.l.b16 %v4770
        %v4835 = vunpack.c.l.b16 %v4771
        %v4836 = vunpack.c.l.b16 %v4772
        %v4837 = vunpack.c.l.b16 %v4773
        %v4838 = vunpack.c.l.b16 %v4774
        %v4839 = vunpack.c.l.b16 %v4775
        %v4840 = vunpack.c.l.b16 %v4776
        %v4841 = vunpack.c.l.b16 %v4777
        %v4842 = vunpack.c.l.b16 %v4778
        %v4843 = vunpack.c.l.b16 %v4779
        %v4844 = vunpack.c.l.b16 %v4780
        %v4845 = vunpack.c.l.b16 %v4781
        %v4846 = vunpack.c.l.b16 %v4782
        %v4847 = vunpack.c.l.b16 %v4783
        %v4848 = vunpack.c.l.b16 %v4784
        %v4849 = vunpack.c.l.b16 %v4785
        %v4850 = vunpack.c.l.b16 %v4786
        %v4851 = vunpack.c.l.b16 %v4787
        %v4852 = vunpack.c.l.b16 %v4788
        %v4853 = vunpack.c.l.b16 %v4789
        %v4854 = vunpack.c.l.b16 %v4790
        %v4855 = vunpack.c.l.b16 %v4791
        %v4856 = vunpack.c.l.b16 %v4792
        %v4857 = vunpack.c.l.b16 %v4793
        %v4858 = vunpack.c.l.b16 %v4794
        %v4859 = vunpack.c.l.b16 %v4795
        %v4860 = vunpack.c.l.b16 %v4796
        %v4861 = vunpack.c.l.b16 %v4797
        %v4862 = vunpack.c.l.b16 %v4798
        %v4863 = vunpack.c.l.b16 %v4799
        %v4864 = vunpack.c.l.b16 %v4800
        %v4865 = vunpack.c.l.b16 %v4801
        %v4866 = vunpack.c.l.b16 %v4802
        %v4867 = vunpack.c.l.b16 %v4803
        %v4868 = vunpack.c.l.b16 %v4804
        %v4869 = vunpack.c.l.b16 %v4805
        %v4870 = vunpack.c.l.b16 %v4806
        %vm4871 = vcmask 1041409
        %v4872 = vsel %vm4871, %v4808, %v4807
        %vm4873 = vcmask 1042434
        %v4874 = vsel %vm4873, %v4809, %v4872
        %vm4875 = vcmask 1043459
        %v4876 = vsel %vm4875, %v4810, %v4874
        %vm4877 = vcmask 1044484
        %v4878 = vsel %vm4877, %v4811, %v4876
        %vm4879 = vcmask 1045509
        %v4880 = vsel %vm4879, %v4812, %v4878
        %vm4881 = vcmask 1046534
        %v4882 = vsel %vm4881, %v4813, %v4880
        %vm4883 = vcmask 1047559
        %v4884 = vsel %vm4883, %v4814, %v4882
        %v4885 = vsel %vm4871, %v4816, %v4815
        %v4886 = vsel %vm4873, %v4817, %v4885
        %v4887 = vsel %vm4875, %v4818, %v4886
        %v4888 = vsel %vm4877, %v4819, %v4887
        %v4889 = vsel %vm4879, %v4820, %v4888
        %v4890 = vsel %vm4881, %v4821, %v4889
        %v4891 = vsel %vm4883, %v4822, %v4890
        %v4892 = vsel %vm4871, %v4824, %v4823
        %v4893 = vsel %vm4873, %v4825, %v4892
        %v4894 = vsel %vm4875, %v4826, %v4893
        %v4895 = vsel %vm4877, %v4827, %v4894
        %v4896 = vsel %vm4879, %v4828, %v4895
        %v4897 = vsel %vm4881, %v4829, %v4896
        %v4898 = vsel %vm4883, %v4830, %v4897
        %v4899 = vsel %vm4871, %v4832, %v4831
        %v4900 = vsel %vm4873, %v4833, %v4899
        %v4901 = vsel %vm4875, %v4834, %v4900
        %v4902 = vsel %vm4877, %v4835, %v4901
        %v4903 = vsel %vm4879, %v4836, %v4902
        %v4904 = vsel %vm4881, %v4837, %v4903
        %v4905 = vsel %vm4883, %v4838, %v4904
        %v4906 = vsel %vm4871, %v4840, %v4839
        %v4907 = vsel %vm4873, %v4841, %v4906
        %v4908 = vsel %vm4875, %v4842, %v4907
        %v4909 = vsel %vm4877, %v4843, %v4908
        %v4910 = vsel %vm4879, %v4844, %v4909
        %v4911 = vsel %vm4881, %v4845, %v4910
        %v4912 = vsel %vm4883, %v4846, %v4911
        %v4913 = vsel %vm4871, %v4848, %v4847
        %v4914 = vsel %vm4873, %v4849, %v4913
        %v4915 = vsel %vm4875, %v4850, %v4914
        %v4916 = vsel %vm4877, %v4851, %v4915
        %v4917 = vsel %vm4879, %v4852, %v4916
        %v4918 = vsel %vm4881, %v4853, %v4917
        %v4919 = vsel %vm4883, %v4854, %v4918
        %v4920 = vsel %vm4871, %v4856, %v4855
        %v4921 = vsel %vm4873, %v4857, %v4920
        %v4922 = vsel %vm4875, %v4858, %v4921
        %v4923 = vsel %vm4877, %v4859, %v4922
        %v4924 = vsel %vm4879, %v4860, %v4923
        %v4925 = vsel %vm4881, %v4861, %v4924
        %v4926 = vsel %vm4883, %v4862, %v4925
        %v4927 = vsel %vm4871, %v4864, %v4863
        %v4928 = vsel %vm4873, %v4865, %v4927
        %v4929 = vsel %vm4875, %v4866, %v4928
        %v4930 = vsel %vm4877, %v4867, %v4929
        %v4931 = vsel %vm4879, %v4868, %v4930
        %v4932 = vsel %vm4881, %v4869, %v4931
        %v4933 = vsel %vm4883, %v4870, %v4932
        %v4934 = vpack.c.b16 %v4884, %v4884
        %v4935 = vpack.c.b16 %v4891, %v4891
        %v4936 = vpack.c.b16 %v4898, %v4898
        %v4937 = vpack.c.b16 %v4905, %v4905
        %v4938 = vpack.c.b16 %v4912, %v4912
        %v4939 = vpack.c.b16 %v4919, %v4919
        %v4940 = vpack.c.b16 %v4926, %v4926
        %v4941 = vpack.c.b16 %v4933, %v4933
        %vm4950 = vcmask 27648
        %4951 = vst.msk [vmem:[%s234] sm:$0xf] %vm4950, %v4934
        %4952 = vst.msk [vmem:[%s234 + $0x4] sm:$0xf] %vm4950, %v4935
        %4953 = vst.msk [vmem:[%s234 + $0x8] sm:$0xf] %vm4950, %v4936
        %4954 = vst.msk [vmem:[%s234 + $0xc] sm:$0xf] %vm4950, %v4937
        %4955 = vst.msk [vmem:[%s234 + $0x10] sm:$0xf] %vm4950, %v4938
        %4956 = vst.msk [vmem:[%s234 + $0x14] sm:$0xf] %vm4950, %v4939
        %4957 = vst.msk [vmem:[%s234 + $0x18] sm:$0xf] %vm4950, %v4940
        %4958 = vst.msk [vmem:[%s234 + $0x1c] sm:$0xf] %vm4950, %v4941
      $region48: #{unet_encoder.4} parent=35 // pred_fallthru
        _
      %s4959 = smul.u32 %s19, %s20
      %p4960 = scmp.lt.s32.totalorder %s4959, 1
      %s4961 = scalar_select %p4960, %s4959, 1
      %s4962 = smul.addr %s4961, 8
      %s4963 = smul.addr %s4962, 4
      %s4964 = scalar_lea.vmem %s4, %s4963
      // Predicated region
      $region53: #{unet_encoder.4} parent=35 // pred_check
        %p4965 = pneg %p142
      $region54: #{unet_encoder.4} parent=35 // pred_check_branch
        %4967 = sbr.rel (%p4965) target = $region56
      $region55: #{unet_encoder.4} parent=35 // pred_region
        %s4968 = smul.u32 %s19, %s20
      $region56: #{unet_encoder.4} parent=35 // pred_fallthru
        _
    $region36: #{unet_encoder.4} parent=5 // pred_fallthru
      _
    %p4969 = scmp.le.s32.totalorder 2, %s10
    // Predicated region
    $region57: #{unet_encoder.4} parent=5 // pred_check
      %p4970 = pneg %p4969
    $region58: #{unet_encoder.4} parent=5 // pred_check_branch
      %4972 = sbr.rel (%p4970) target = $region60
    $region59: #{unet_encoder.4} parent=5 // pred_region
      %s4973 = ssub.s32 %s10, 2
      // Predicated region
      $region61: #{unet_encoder.4} parent=59 // pred_check
        %p4974 = pneg %p148
      $region62: #{unet_encoder.4} parent=59 // pred_check_branch
        %4976 = sbr.rel (%p4974) target = $region64
      $region63: #{unet_encoder.4} parent=59 // pred_region
        %s4977 = smul.u32 %s21, %s22
        %p4978 = scmp.lt.s32.totalorder %s4977, 1
        %s4979 = scalar_select %p4978, %s4977, 1
        %s4980 = smul.addr %s4979, 8
        %s4981 = smul.addr %s4980, 4
        %s4982 = scalar_lea.vmem %s4, %s4981
      $region64: #{unet_encoder.4} parent=59 // pred_fallthru
        _
    $region60: #{unet_encoder.4} parent=5 // pred_fallthru
      _
  $region6: #{unet_encoder.4} parent=0 // loop_footer
    %s14 = sadd.s32 1, %s10
  $region7: #{unet_encoder.4} parent=0 // loop_footer_branch
    %9 = sbr.rel target = $region3
  $region8: #{unet_encoder.4} parent=0 // loop_exit
    _

</llo_original>
